<compile_context>
chip_gen: v6e
topology: v6e:2x2x1
jax: 0.10.0
libtpu: 0.0.40
codegen_flags: <defaults>
</compile_context>

<pallas_src>
import jax
import jax.numpy as jnp
from jax.experimental import pallas as pl
from jax.experimental.pallas import tpu as pltpu

BN_EPS = 1e-5
_LANE = 128      # output-channel padding target (lane-dense stores)
_SUBLANE = 8


def _round_up(x, m):
    return (x + m - 1) // m * m


# ---------------------------------------------------------------------------
# Pallas kernels (one grid step == one image)
# ---------------------------------------------------------------------------
def _make_kernels(w_img, m_rows):
    """Build conv kernels specialised for image width `w_img` and `m_rows`
    (extended) output rows per image block."""
    wp = w_img + 2                                    # padded width
    tap_offs = [kh * wp + kw for kh in range(3) for kw in range(3)]
    res_off = wp + 1                                  # centre (1,1) window == x

    def _accumulate(x_ref, w_ref):
        # 9 shifted-window matmuls, f32 accumulation on the MXU.
        acc = jnp.zeros((m_rows, w_ref.shape[-1]), jnp.float32)
        for t, off in enumerate(tap_offs):            # static offsets, unrolled
            acc += jnp.dot(x_ref[pl.ds(off, m_rows), :], w_ref[t],
                           preferred_element_type=jnp.float32)
        return acc

    def conv_bn_relu(x_ref, w_ref, b_ref, o_ref):
        y = _accumulate(x_ref, w_ref) + b_ref[...]            # BN scale folded
        o_ref[...] = jnp.maximum(y, 0.0).astype(o_ref.dtype)

    def conv_bn_add_relu(x_ref, w_ref, b_ref, r_ref, o_ref):
        res = r_ref[pl.ds(res_off, m_rows), :].astype(jnp.float32)
        y = _accumulate(x_ref, w_ref) + b_ref[...] + res
        o_ref[...] = jnp.maximum(y, 0.0).astype(o_ref.dtype)

    return conv_bn_relu, conv_bn_add_relu


def _conv_call(kernel, args, *, n_img, m_img, rows_img, cpad, out_dtype,
               with_residual):
    in_specs = [
        pl.BlockSpec((rows_img, cpad), lambda i: (i, 0)),    # padded image
        pl.BlockSpec((9, cpad, cpad), lambda i: (0, 0, 0)),  # per-tap weights
        pl.BlockSpec((1, cpad), lambda i: (0, 0)),           # folded BN bias
    ]
    if with_residual:
        in_specs.append(pl.BlockSpec((rows_img, cpad), lambda i: (i, 0)))
    return pl.pallas_call(
        kernel,
        out_shape=jax.ShapeDtypeStruct((n_img * m_img, cpad), out_dtype),
        grid=(n_img,),
        in_specs=in_specs,
        out_specs=pl.BlockSpec((m_img, cpad), lambda i: (i, 0)),
        compiler_params=pltpu.CompilerParams(
            dimension_semantics=("parallel",),          # shards across v7x TCs
            vmem_limit_bytes=32 * 1024 * 1024,          # safe on v5e/v6e/v7x
        ),
    )(*args)


# ---------------------------------------------------------------------------
# Glue: padding / flattening, weight + BN folding
# ---------------------------------------------------------------------------
def _flatten_padded(x_nhwc, cpad, rows_img, dtype):
    """(N,H,W,C) -> (N*rows_img, cpad): zero-pad spatially (+1 ring) and on the
    channel axis, then flatten each padded image to one pixel per row (plus a
    few zero alignment rows)."""
    n, h, w, c = x_nhwc.shape
    xp = jnp.pad(x_nhwc, ((0, 0), (1, 1), (1, 1), (0, cpad - c)))
    xf = xp.reshape(n, (h + 2) * (w + 2), cpad)
    xf = jnp.pad(xf, ((0, 0), (0, rows_img - (h + 2) * (w + 2)), (0, 0)))
    return xf.reshape(n * rows_img, cpad).astype(dtype)


def _fold_weight(w_oihw, scale, cpad, dtype):
    """PyTorch (Cout,Cin,3,3) -> (9, cpad, cpad) per-tap matrices, kh-major,
    with the BN scale folded into the output columns."""
    cout, cin, _, _ = w_oihw.shape
    wt = jnp.transpose(w_oihw, (2, 3, 1, 0)).reshape(9, cin, cout)
    wt = wt * scale[None, None, :]
    wt = jnp.pad(wt, ((0, 0), (0, cpad - cin), (0, cpad - cout)))
    return wt.astype(dtype)


def _fold_bn(gamma, beta, mean, var, cpad):
    scale = gamma / jnp.sqrt(var + BN_EPS)
    bias = beta - mean * scale
    bias = jnp.pad(bias, (0, cpad - bias.shape[0])).reshape(1, cpad)
    return scale, bias.astype(jnp.float32)


# ---------------------------------------------------------------------------
# BasicBlock forward
# ---------------------------------------------------------------------------
def basic_block_forward(x_nchw, params, compute_dtype=jnp.float32):
    """Pallas BasicBlock.forward (stride=1, downsample=None, use_senet=False).

    compute_dtype: dtype of the MXU operands (activations & folded weights).
        bfloat16 is the fast path on v6e/v7x; BN bias, residual add and ReLU
        always run in float32 (v5e has no bf16 VPU anyway).
    """
    n, cin, h, w = x_nchw.shape
    hid = params["conv1_w"].shape[0]
    assert params["conv1_w"].shape[1] == cin
    # downsample=None => identity residual requires matching channel counts.
    assert cin == hid, "identity residual needs in_channels == hid_channels"

    cpad = max(_LANE, _round_up(max(cin, hid), _LANE))     # lane-dense channels
    wp = w + 2
    m_img = _round_up(h * wp, _SUBLANE)                    # extended out rows
    rows_img = _round_up(m_img + 2 * wp + 2, _SUBLANE)     # input rows / image

    x_nhwc = jnp.transpose(x_nchw, (0, 2, 3, 1)).astype(jnp.float32)

    s1, b1 = _fold_bn(params["bn1_gamma"], params["bn1_beta"],
                      params["bn1_mean"], params["bn1_var"], cpad)
    s2, b2 = _fold_bn(params["bn2_gamma"], params["bn2_beta"],
                      params["bn2_mean"], params["bn2_var"], cpad)
    w1 = _fold_weight(params["conv1_w"], s1, cpad, compute_dtype)
    w2 = _fold_weight(params["conv2_w"], s2, cpad, compute_dtype)

    k_relu, k_add_relu = _make_kernels(w, m_img)

    # conv1 -> bn1 -> relu   (intermediate kept in compute_dtype)
    xf1 = _flatten_padded(x_nhwc, cpad, rows_img, compute_dtype)
    out1 = _conv_call(k_relu, (xf1, w1, b1), n_img=n, m_img=m_img,
                      rows_img=rows_img, cpad=cpad, out_dtype=compute_dtype,
                      with_residual=False)

    # Re-pad the conv1 result for conv2 (cheap XLA slice+pad; junk columns and
    # alignment rows of the extended output are dropped here).
    o1 = out1.reshape(n, m_img, cpad)[:, :h * wp, :]
    o1 = o1.reshape(n, h, wp, cpad)[:, :, :w, :]
    xf2 = jnp.pad(o1, ((0, 0), (1, 1), (1, 1), (0, 0)))
    xf2 = xf2.reshape(n, (h + 2) * wp, cpad)
    xf2 = jnp.pad(xf2, ((0, 0), (0, rows_img - (h + 2) * wp), (0, 0)))
    xf2 = xf2.reshape(n * rows_img, cpad)

    # conv2 -> bn2 -> (+residual) -> relu.  The residual is read straight from
    # the already-padded conv1 input block (its (1,1) window == x).
    out2 = _conv_call(k_add_relu, (xf2, w2, b2, xf1), n_img=n, m_img=m_img,
                      rows_img=rows_img, cpad=cpad, out_dtype=jnp.float32,
                      with_residual=True)

    o2 = out2.reshape(n, m_img, cpad)[:, :h * wp, :]
    o2 = o2.reshape(n, h, wp, cpad)[:, :, :w, :hid]
    return jnp.transpose(o2, (0, 3, 1, 2))                 # back to NCHW


# ---------------------------------------------------------------------------
# Pure-JAX reference for correctness checking
# ---------------------------------------------------------------------------
def _ref_forward(x, params):
    def conv(y, wgt):
        return jax.lax.conv_general_dilated(
            y, wgt, window_strides=(1, 1), padding=((1, 1), (1, 1)),
            dimension_numbers=("NCHW", "OIHW", "NCHW"))

    def bn(y, g, b, m, v):
        g = g[None, :, None, None]; b = b[None, :, None, None]
        m = m[None, :, None, None]; v = v[None, :, None, None]
        return (y - m) / jnp.sqrt(v + BN_EPS) * g + b

    out = jax.nn.relu(bn(conv(x, params["conv1_w"]),
                         params["bn1_gamma"], params["bn1_beta"],
                         params["bn1_mean"], params["bn1_var"]))
    out = bn(conv(out, params["conv2_w"]),
             params["bn2_gamma"], params["bn2_beta"],
             params["bn2_mean"], params["bn2_var"])
    return jax.nn.relu(out + x)


# ---------------------------------------------------------------------------
# Main
# ---------------------------------------------------------------------------
if __name__ == "__main__":
    key = jax.random.PRNGKey(0)
    n, cin, h, w = 2, 4, 16, 16
    hid = 4  # in_channels == hid_channels, stride=1 => downsample=None

    ks = jax.random.split(key, 11)
    x = jax.random.normal(ks[0], (n, cin, h, w), jnp.float32)
    params = {
        "conv1_w": 0.1 * jax.random.normal(ks[1], (hid, cin, 3, 3), jnp.float32),
        "conv2_w": 0.1 * jax.random.normal(ks[2], (hid, hid, 3, 3), jnp.float32),
        "bn1_gamma": jax.random.uniform(ks[3], (hid,), jnp.float32, 0.5, 1.5),
        "bn1_beta": 0.1 * jax.random.normal(ks[4], (hid,), jnp.float32),
        "bn1_mean": 0.1 * jax.random.normal(ks[5], (hid,), jnp.float32),
        "bn1_var": jax.random.uniform(ks[6], (hid,), jnp.float32, 0.5, 1.5),
        "bn2_gamma": jax.random.uniform(ks[7], (hid,), jnp.float32, 0.5, 1.5),
        "bn2_beta": 0.1 * jax.random.normal(ks[8], (hid,), jnp.float32),
        "bn2_mean": 0.1 * jax.random.normal(ks[9], (hid,), jnp.float32),
        "bn2_var": jax.random.uniform(ks[10], (hid,), jnp.float32, 0.5, 1.5),
    }

    fwd = jax.jit(basic_block_forward, static_argnames=("compute_dtype",))
    ref = _ref_forward(x, params)

    # f32 MXU operands: tight check against the XLA reference.
    out_f32 = jax.block_until_ready(fwd(x, params, compute_dtype=jnp.float32))
    assert out_f32.shape == (n, hid, h, w), out_f32.shape
    assert jnp.allclose(out_f32, ref, atol=1e-4, rtol=1e-4), \
        float(jnp.max(jnp.abs(out_f32 - ref)))

    # bf16 MXU operands (v6e/v7x fast path), f32 accumulation/epilogue.
    out_bf16 = jax.block_until_ready(fwd(x, params, compute_dtype=jnp.bfloat16))
    assert jnp.allclose(out_bf16, ref, atol=1.5e-1, rtol=1e-1), \
        float(jnp.max(jnp.abs(out_bf16 - ref)))

    print("KERNEL_OK")
</pallas_src>

<mosaic_0001>
module attributes {stable_mosaic.version = 11 : i64} {
  func.func @conv_bn_relu(%arg0: i32, %arg1: memref<328x128xf32, #tpu.memory_space<vmem>>, %arg2: memref<9x128x128xf32, #tpu.memory_space<vmem>>, %arg3: memref<1x128xf32, #tpu.memory_space<vmem>>, %arg4: memref<288x128xf32, #tpu.memory_space<vmem>>) attributes {dimension_semantics = [#tpu.dimension_semantics<parallel>], iteration_bounds = array<i64: 2>, scalar_prefetch = 0 : i64, scratch_operands = 0 : i64, tpu.core_type = #tpu.core_type<tc>, window_params = [{transform_indices = @transform_0, window_bounds = array<i64: 328, 128>}, {pipeline_mode = #tpu.pipeline_mode<synchronous>, transform_indices = @transform_1, window_bounds = array<i64: 9, 128, 128>}, {pipeline_mode = #tpu.pipeline_mode<synchronous>, transform_indices = @transform_2, window_bounds = array<i64: 1, 128>}, {transform_indices = @transform_3, window_bounds = array<i64: 288, 128>}]} {
    %cst = arith.constant 0.000000e+00 : f32
    %0 = vector.broadcast %cst : f32 to vector<288x128xf32>
    %c0 = arith.constant 0 : index
    %c0_0 = arith.constant 0 : index
    %1 = vector.load %arg1[%c0, %c0_0] : memref<328x128xf32, #tpu.memory_space<vmem>>, vector<288x128xf32>
    %c0_1 = arith.constant 0 : index
    %c0_2 = arith.constant 0 : index
    %c0_3 = arith.constant 0 : index
    %2 = vector.load %arg2[%c0_1, %c0_2, %c0_3] : memref<9x128x128xf32, #tpu.memory_space<vmem>>, vector<1x128x128xf32>
    %3 = vector.shape_cast %2 : vector<1x128x128xf32> to vector<128x128xf32>
    %cst_4 = arith.constant dense<0.000000e+00> : vector<288x128xf32>
    %4 = tpu.matmul %1, %3, %cst_4 {dimension_numbers = #tpu.dot_dimension_numbers<[1], [0], [0], [1], [0, 0, 1, 1], [], []>} : vector<288x128xf32>, vector<128x128xf32>, vector<288x128xf32> -> vector<288x128xf32>
    %5 = arith.addf %0, %4 : vector<288x128xf32>
    %c1 = arith.constant 1 : index
    %c0_5 = arith.constant 0 : index
    %6 = vector.load %arg1[%c1, %c0_5] : memref<328x128xf32, #tpu.memory_space<vmem>>, vector<288x128xf32>
    %c1_6 = arith.constant 1 : index
    %c0_7 = arith.constant 0 : index
    %c0_8 = arith.constant 0 : index
    %7 = vector.load %arg2[%c1_6, %c0_7, %c0_8] : memref<9x128x128xf32, #tpu.memory_space<vmem>>, vector<1x128x128xf32>
    %8 = vector.shape_cast %7 : vector<1x128x128xf32> to vector<128x128xf32>
    %cst_9 = arith.constant dense<0.000000e+00> : vector<288x128xf32>
    %9 = tpu.matmul %6, %8, %cst_9 {dimension_numbers = #tpu.dot_dimension_numbers<[1], [0], [0], [1], [0, 0, 1, 1], [], []>} : vector<288x128xf32>, vector<128x128xf32>, vector<288x128xf32> -> vector<288x128xf32>
    %10 = arith.addf %5, %9 : vector<288x128xf32>
    %c2 = arith.constant 2 : index
    %c0_10 = arith.constant 0 : index
    %11 = vector.load %arg1[%c2, %c0_10] : memref<328x128xf32, #tpu.memory_space<vmem>>, vector<288x128xf32>
    %c2_11 = arith.constant 2 : index
    %c0_12 = arith.constant 0 : index
    %c0_13 = arith.constant 0 : index
    %12 = vector.load %arg2[%c2_11, %c0_12, %c0_13] : memref<9x128x128xf32, #tpu.memory_space<vmem>>, vector<1x128x128xf32>
    %13 = vector.shape_cast %12 : vector<1x128x128xf32> to vector<128x128xf32>
    %cst_14 = arith.constant dense<0.000000e+00> : vector<288x128xf32>
    %14 = tpu.matmul %11, %13, %cst_14 {dimension_numbers = #tpu.dot_dimension_numbers<[1], [0], [0], [1], [0, 0, 1, 1], [], []>} : vector<288x128xf32>, vector<128x128xf32>, vector<288x128xf32> -> vector<288x128xf32>
    %15 = arith.addf %10, %14 : vector<288x128xf32>
    %c18 = arith.constant 18 : index
    %c0_15 = arith.constant 0 : index
    %16 = vector.load %arg1[%c18, %c0_15] : memref<328x128xf32, #tpu.memory_space<vmem>>, vector<288x128xf32>
    %c3 = arith.constant 3 : index
    %c0_16 = arith.constant 0 : index
    %c0_17 = arith.constant 0 : index
    %17 = vector.load %arg2[%c3, %c0_16, %c0_17] : memref<9x128x128xf32, #tpu.memory_space<vmem>>, vector<1x128x128xf32>
    %18 = vector.shape_cast %17 : vector<1x128x128xf32> to vector<128x128xf32>
    %cst_18 = arith.constant dense<0.000000e+00> : vector<288x128xf32>
    %19 = tpu.matmul %16, %18, %cst_18 {dimension_numbers = #tpu.dot_dimension_numbers<[1], [0], [0], [1], [0, 0, 1, 1], [], []>} : vector<288x128xf32>, vector<128x128xf32>, vector<288x128xf32> -> vector<288x128xf32>
    %20 = arith.addf %15, %19 : vector<288x128xf32>
    %c19 = arith.constant 19 : index
    %c0_19 = arith.constant 0 : index
    %21 = vector.load %arg1[%c19, %c0_19] : memref<328x128xf32, #tpu.memory_space<vmem>>, vector<288x128xf32>
    %c4 = arith.constant 4 : index
    %c0_20 = arith.constant 0 : index
    %c0_21 = arith.constant 0 : index
    %22 = vector.load %arg2[%c4, %c0_20, %c0_21] : memref<9x128x128xf32, #tpu.memory_space<vmem>>, vector<1x128x128xf32>
    %23 = vector.shape_cast %22 : vector<1x128x128xf32> to vector<128x128xf32>
    %cst_22 = arith.constant dense<0.000000e+00> : vector<288x128xf32>
    %24 = tpu.matmul %21, %23, %cst_22 {dimension_numbers = #tpu.dot_dimension_numbers<[1], [0], [0], [1], [0, 0, 1, 1], [], []>} : vector<288x128xf32>, vector<128x128xf32>, vector<288x128xf32> -> vector<288x128xf32>
    %25 = arith.addf %20, %24 : vector<288x128xf32>
    %c20 = arith.constant 20 : index
    %c0_23 = arith.constant 0 : index
    %26 = vector.load %arg1[%c20, %c0_23] : memref<328x128xf32, #tpu.memory_space<vmem>>, vector<288x128xf32>
    %c5 = arith.constant 5 : index
    %c0_24 = arith.constant 0 : index
    %c0_25 = arith.constant 0 : index
    %27 = vector.load %arg2[%c5, %c0_24, %c0_25] : memref<9x128x128xf32, #tpu.memory_space<vmem>>, vector<1x128x128xf32>
    %28 = vector.shape_cast %27 : vector<1x128x128xf32> to vector<128x128xf32>
    %cst_26 = arith.constant dense<0.000000e+00> : vector<288x128xf32>
    %29 = tpu.matmul %26, %28, %cst_26 {dimension_numbers = #tpu.dot_dimension_numbers<[1], [0], [0], [1], [0, 0, 1, 1], [], []>} : vector<288x128xf32>, vector<128x128xf32>, vector<288x128xf32> -> vector<288x128xf32>
    %30 = arith.addf %25, %29 : vector<288x128xf32>
    %c36 = arith.constant 36 : index
    %c0_27 = arith.constant 0 : index
    %31 = vector.load %arg1[%c36, %c0_27] : memref<328x128xf32, #tpu.memory_space<vmem>>, vector<288x128xf32>
    %c6 = arith.constant 6 : index
    %c0_28 = arith.constant 0 : index
    %c0_29 = arith.constant 0 : index
    %32 = vector.load %arg2[%c6, %c0_28, %c0_29] : memref<9x128x128xf32, #tpu.memory_space<vmem>>, vector<1x128x128xf32>
    %33 = vector.shape_cast %32 : vector<1x128x128xf32> to vector<128x128xf32>
    %cst_30 = arith.constant dense<0.000000e+00> : vector<288x128xf32>
    %34 = tpu.matmul %31, %33, %cst_30 {dimension_numbers = #tpu.dot_dimension_numbers<[1], [0], [0], [1], [0, 0, 1, 1], [], []>} : vector<288x128xf32>, vector<128x128xf32>, vector<288x128xf32> -> vector<288x128xf32>
    %35 = arith.addf %30, %34 : vector<288x128xf32>
    %c37 = arith.constant 37 : index
    %c0_31 = arith.constant 0 : index
    %36 = vector.load %arg1[%c37, %c0_31] : memref<328x128xf32, #tpu.memory_space<vmem>>, vector<288x128xf32>
    %c7 = arith.constant 7 : index
    %c0_32 = arith.constant 0 : index
    %c0_33 = arith.constant 0 : index
    %37 = vector.load %arg2[%c7, %c0_32, %c0_33] : memref<9x128x128xf32, #tpu.memory_space<vmem>>, vector<1x128x128xf32>
    %38 = vector.shape_cast %37 : vector<1x128x128xf32> to vector<128x128xf32>
    %cst_34 = arith.constant dense<0.000000e+00> : vector<288x128xf32>
    %39 = tpu.matmul %36, %38, %cst_34 {dimension_numbers = #tpu.dot_dimension_numbers<[1], [0], [0], [1], [0, 0, 1, 1], [], []>} : vector<288x128xf32>, vector<128x128xf32>, vector<288x128xf32> -> vector<288x128xf32>
    %40 = arith.addf %35, %39 : vector<288x128xf32>
    %c38 = arith.constant 38 : index
    %c0_35 = arith.constant 0 : index
    %41 = vector.load %arg1[%c38, %c0_35] : memref<328x128xf32, #tpu.memory_space<vmem>>, vector<288x128xf32>
    %c8 = arith.constant 8 : index
    %c0_36 = arith.constant 0 : index
    %c0_37 = arith.constant 0 : index
    %42 = vector.load %arg2[%c8, %c0_36, %c0_37] : memref<9x128x128xf32, #tpu.memory_space<vmem>>, vector<1x128x128xf32>
    %43 = vector.shape_cast %42 : vector<1x128x128xf32> to vector<128x128xf32>
    %cst_38 = arith.constant dense<0.000000e+00> : vector<288x128xf32>
    %44 = tpu.matmul %41, %43, %cst_38 {dimension_numbers = #tpu.dot_dimension_numbers<[1], [0], [0], [1], [0, 0, 1, 1], [], []>} : vector<288x128xf32>, vector<128x128xf32>, vector<288x128xf32> -> vector<288x128xf32>
    %45 = arith.addf %40, %44 : vector<288x128xf32>
    %c0_39 = arith.constant 0 : index
    %c0_40 = arith.constant 0 : index
    %46 = vector.load %arg3[%c0_39, %c0_40] : memref<1x128xf32, #tpu.memory_space<vmem>>, vector<1x128xf32>
    %47 = vector.broadcast %46 : vector<1x128xf32> to vector<288x128xf32>
    %48 = arith.addf %45, %47 : vector<288x128xf32>
    %cst_41 = arith.constant 0.000000e+00 : f32
    %49 = vector.broadcast %cst_41 : f32 to vector<288x128xf32>
    %50 = arith.maximumf %48, %49 : vector<288x128xf32>
    %c0_42 = arith.constant 0 : index
    %c0_43 = arith.constant 0 : index
    %51 = vector.load %arg4[%c0_42, %c0_43] : memref<288x128xf32, #tpu.memory_space<vmem>>, vector<288x128xf32>
    tpu.vector_store %arg4[%c0_42, %c0_43], %50 {strides = array<i32>} : memref<288x128xf32, #tpu.memory_space<vmem>>, vector<288x128xf32>,
    return
  }
  func.func @transform_0(%arg0: i32) -> (i32, i32) {
    %c0_i32 = arith.constant 0 : i32
    %c0_i32_0 = arith.constant 0 : i32
    return %arg0, %c0_i32 : i32, i32
  }
  func.func @transform_1(%arg0: i32) -> (i32, i32, i32) {
    %c0_i32 = arith.constant 0 : i32
    %c0_i32_0 = arith.constant 0 : i32
    %c0_i32_1 = arith.constant 0 : i32
    %c0_i32_2 = arith.constant 0 : i32
    return %c0_i32, %c0_i32_0, %c0_i32_1 : i32, i32, i32
  }
  func.func @transform_2(%arg0: i32) -> (i32, i32) {
    %c0_i32 = arith.constant 0 : i32
    %c0_i32_0 = arith.constant 0 : i32
    %c0_i32_1 = arith.constant 0 : i32
    return %c0_i32, %c0_i32_0 : i32, i32
  }
  func.func @transform_3(%arg0: i32) -> (i32, i32) {
    %c0_i32 = arith.constant 0 : i32
    %c0_i32_0 = arith.constant 0 : i32
    return %arg0, %c0_i32 : i32, i32
  }
}

module attributes {stable_mosaic.version = 11 : i64} {
  func.func @conv_bn_add_relu(%arg0: i32, %arg1: memref<328x128xf32, #tpu.memory_space<vmem>>, %arg2: memref<9x128x128xf32, #tpu.memory_space<vmem>>, %arg3: memref<1x128xf32, #tpu.memory_space<vmem>>, %arg4: memref<328x128xf32, #tpu.memory_space<vmem>>, %arg5: memref<288x128xf32, #tpu.memory_space<vmem>>) attributes {dimension_semantics = [#tpu.dimension_semantics<parallel>], iteration_bounds = array<i64: 2>, scalar_prefetch = 0 : i64, scratch_operands = 0 : i64, tpu.core_type = #tpu.core_type<tc>, window_params = [{transform_indices = @transform_0, window_bounds = array<i64: 328, 128>}, {pipeline_mode = #tpu.pipeline_mode<synchronous>, transform_indices = @transform_1, window_bounds = array<i64: 9, 128, 128>}, {pipeline_mode = #tpu.pipeline_mode<synchronous>, transform_indices = @transform_2, window_bounds = array<i64: 1, 128>}, {transform_indices = @transform_3, window_bounds = array<i64: 328, 128>}, {transform_indices = @transform_4, window_bounds = array<i64: 288, 128>}]} {
    %c19 = arith.constant 19 : index
    %c0 = arith.constant 0 : index
    %0 = vector.load %arg4[%c19, %c0] : memref<328x128xf32, #tpu.memory_space<vmem>>, vector<288x128xf32>
    %cst = arith.constant 0.000000e+00 : f32
    %1 = vector.broadcast %cst : f32 to vector<288x128xf32>
    %c0_0 = arith.constant 0 : index
    %c0_1 = arith.constant 0 : index
    %2 = vector.load %arg1[%c0_0, %c0_1] : memref<328x128xf32, #tpu.memory_space<vmem>>, vector<288x128xf32>
    %c0_2 = arith.constant 0 : index
    %c0_3 = arith.constant 0 : index
    %c0_4 = arith.constant 0 : index
    %3 = vector.load %arg2[%c0_2, %c0_3, %c0_4] : memref<9x128x128xf32, #tpu.memory_space<vmem>>, vector<1x128x128xf32>
    %4 = vector.shape_cast %3 : vector<1x128x128xf32> to vector<128x128xf32>
    %cst_5 = arith.constant dense<0.000000e+00> : vector<288x128xf32>
    %5 = tpu.matmul %2, %4, %cst_5 {dimension_numbers = #tpu.dot_dimension_numbers<[1], [0], [0], [1], [0, 0, 1, 1], [], []>} : vector<288x128xf32>, vector<128x128xf32>, vector<288x128xf32> -> vector<288x128xf32>
    %6 = arith.addf %1, %5 : vector<288x128xf32>
    %c1 = arith.constant 1 : index
    %c0_6 = arith.constant 0 : index
    %7 = vector.load %arg1[%c1, %c0_6] : memref<328x128xf32, #tpu.memory_space<vmem>>, vector<288x128xf32>
    %c1_7 = arith.constant 1 : index
    %c0_8 = arith.constant 0 : index
    %c0_9 = arith.constant 0 : index
    %8 = vector.load %arg2[%c1_7, %c0_8, %c0_9] : memref<9x128x128xf32, #tpu.memory_space<vmem>>, vector<1x128x128xf32>
    %9 = vector.shape_cast %8 : vector<1x128x128xf32> to vector<128x128xf32>
    %cst_10 = arith.constant dense<0.000000e+00> : vector<288x128xf32>
    %10 = tpu.matmul %7, %9, %cst_10 {dimension_numbers = #tpu.dot_dimension_numbers<[1], [0], [0], [1], [0, 0, 1, 1], [], []>} : vector<288x128xf32>, vector<128x128xf32>, vector<288x128xf32> -> vector<288x128xf32>
    %11 = arith.addf %6, %10 : vector<288x128xf32>
    %c2 = arith.constant 2 : index
    %c0_11 = arith.constant 0 : index
    %12 = vector.load %arg1[%c2, %c0_11] : memref<328x128xf32, #tpu.memory_space<vmem>>, vector<288x128xf32>
    %c2_12 = arith.constant 2 : index
    %c0_13 = arith.constant 0 : index
    %c0_14 = arith.constant 0 : index
    %13 = vector.load %arg2[%c2_12, %c0_13, %c0_14] : memref<9x128x128xf32, #tpu.memory_space<vmem>>, vector<1x128x128xf32>
    %14 = vector.shape_cast %13 : vector<1x128x128xf32> to vector<128x128xf32>
    %cst_15 = arith.constant dense<0.000000e+00> : vector<288x128xf32>
    %15 = tpu.matmul %12, %14, %cst_15 {dimension_numbers = #tpu.dot_dimension_numbers<[1], [0], [0], [1], [0, 0, 1, 1], [], []>} : vector<288x128xf32>, vector<128x128xf32>, vector<288x128xf32> -> vector<288x128xf32>
    %16 = arith.addf %11, %15 : vector<288x128xf32>
    %c18 = arith.constant 18 : index
    %c0_16 = arith.constant 0 : index
    %17 = vector.load %arg1[%c18, %c0_16] : memref<328x128xf32, #tpu.memory_space<vmem>>, vector<288x128xf32>
    %c3 = arith.constant 3 : index
    %c0_17 = arith.constant 0 : index
    %c0_18 = arith.constant 0 : index
    %18 = vector.load %arg2[%c3, %c0_17, %c0_18] : memref<9x128x128xf32, #tpu.memory_space<vmem>>, vector<1x128x128xf32>
    %19 = vector.shape_cast %18 : vector<1x128x128xf32> to vector<128x128xf32>
    %cst_19 = arith.constant dense<0.000000e+00> : vector<288x128xf32>
    %20 = tpu.matmul %17, %19, %cst_19 {dimension_numbers = #tpu.dot_dimension_numbers<[1], [0], [0], [1], [0, 0, 1, 1], [], []>} : vector<288x128xf32>, vector<128x128xf32>, vector<288x128xf32> -> vector<288x128xf32>
    %21 = arith.addf %16, %20 : vector<288x128xf32>
    %c19_20 = arith.constant 19 : index
    %c0_21 = arith.constant 0 : index
    %22 = vector.load %arg1[%c19_20, %c0_21] : memref<328x128xf32, #tpu.memory_space<vmem>>, vector<288x128xf32>
    %c4 = arith.constant 4 : index
    %c0_22 = arith.constant 0 : index
    %c0_23 = arith.constant 0 : index
    %23 = vector.load %arg2[%c4, %c0_22, %c0_23] : memref<9x128x128xf32, #tpu.memory_space<vmem>>, vector<1x128x128xf32>
    %24 = vector.shape_cast %23 : vector<1x128x128xf32> to vector<128x128xf32>
    %cst_24 = arith.constant dense<0.000000e+00> : vector<288x128xf32>
    %25 = tpu.matmul %22, %24, %cst_24 {dimension_numbers = #tpu.dot_dimension_numbers<[1], [0], [0], [1], [0, 0, 1, 1], [], []>} : vector<288x128xf32>, vector<128x128xf32>, vector<288x128xf32> -> vector<288x128xf32>
    %26 = arith.addf %21, %25 : vector<288x128xf32>
    %c20 = arith.constant 20 : index
    %c0_25 = arith.constant 0 : index
    %27 = vector.load %arg1[%c20, %c0_25] : memref<328x128xf32, #tpu.memory_space<vmem>>, vector<288x128xf32>
    %c5 = arith.constant 5 : index
    %c0_26 = arith.constant 0 : index
    %c0_27 = arith.constant 0 : index
    %28 = vector.load %arg2[%c5, %c0_26, %c0_27] : memref<9x128x128xf32, #tpu.memory_space<vmem>>, vector<1x128x128xf32>
    %29 = vector.shape_cast %28 : vector<1x128x128xf32> to vector<128x128xf32>
    %cst_28 = arith.constant dense<0.000000e+00> : vector<288x128xf32>
    %30 = tpu.matmul %27, %29, %cst_28 {dimension_numbers = #tpu.dot_dimension_numbers<[1], [0], [0], [1], [0, 0, 1, 1], [], []>} : vector<288x128xf32>, vector<128x128xf32>, vector<288x128xf32> -> vector<288x128xf32>
    %31 = arith.addf %26, %30 : vector<288x128xf32>
    %c36 = arith.constant 36 : index
    %c0_29 = arith.constant 0 : index
    %32 = vector.load %arg1[%c36, %c0_29] : memref<328x128xf32, #tpu.memory_space<vmem>>, vector<288x128xf32>
    %c6 = arith.constant 6 : index
    %c0_30 = arith.constant 0 : index
    %c0_31 = arith.constant 0 : index
    %33 = vector.load %arg2[%c6, %c0_30, %c0_31] : memref<9x128x128xf32, #tpu.memory_space<vmem>>, vector<1x128x128xf32>
    %34 = vector.shape_cast %33 : vector<1x128x128xf32> to vector<128x128xf32>
    %cst_32 = arith.constant dense<0.000000e+00> : vector<288x128xf32>
    %35 = tpu.matmul %32, %34, %cst_32 {dimension_numbers = #tpu.dot_dimension_numbers<[1], [0], [0], [1], [0, 0, 1, 1], [], []>} : vector<288x128xf32>, vector<128x128xf32>, vector<288x128xf32> -> vector<288x128xf32>
    %36 = arith.addf %31, %35 : vector<288x128xf32>
    %c37 = arith.constant 37 : index
    %c0_33 = arith.constant 0 : index
    %37 = vector.load %arg1[%c37, %c0_33] : memref<328x128xf32, #tpu.memory_space<vmem>>, vector<288x128xf32>
    %c7 = arith.constant 7 : index
    %c0_34 = arith.constant 0 : index
    %c0_35 = arith.constant 0 : index
    %38 = vector.load %arg2[%c7, %c0_34, %c0_35] : memref<9x128x128xf32, #tpu.memory_space<vmem>>, vector<1x128x128xf32>
    %39 = vector.shape_cast %38 : vector<1x128x128xf32> to vector<128x128xf32>
    %cst_36 = arith.constant dense<0.000000e+00> : vector<288x128xf32>
    %40 = tpu.matmul %37, %39, %cst_36 {dimension_numbers = #tpu.dot_dimension_numbers<[1], [0], [0], [1], [0, 0, 1, 1], [], []>} : vector<288x128xf32>, vector<128x128xf32>, vector<288x128xf32> -> vector<288x128xf32>
    %41 = arith.addf %36, %40 : vector<288x128xf32>
    %c38 = arith.constant 38 : index
    %c0_37 = arith.constant 0 : index
    %42 = vector.load %arg1[%c38, %c0_37] : memref<328x128xf32, #tpu.memory_space<vmem>>, vector<288x128xf32>
    %c8 = arith.constant 8 : index
    %c0_38 = arith.constant 0 : index
    %c0_39 = arith.constant 0 : index
    %43 = vector.load %arg2[%c8, %c0_38, %c0_39] : memref<9x128x128xf32, #tpu.memory_space<vmem>>, vector<1x128x128xf32>
    %44 = vector.shape_cast %43 : vector<1x128x128xf32> to vector<128x128xf32>
    %cst_40 = arith.constant dense<0.000000e+00> : vector<288x128xf32>
    %45 = tpu.matmul %42, %44, %cst_40 {dimension_numbers = #tpu.dot_dimension_numbers<[1], [0], [0], [1], [0, 0, 1, 1], [], []>} : vector<288x128xf32>, vector<128x128xf32>, vector<288x128xf32> -> vector<288x128xf32>
    %46 = arith.addf %41, %45 : vector<288x128xf32>
    %c0_41 = arith.constant 0 : index
    %c0_42 = arith.constant 0 : index
    %47 = vector.load %arg3[%c0_41, %c0_42] : memref<1x128xf32, #tpu.memory_space<vmem>>, vector<1x128xf32>
    %48 = vector.broadcast %47 : vector<1x128xf32> to vector<288x128xf32>
    %49 = arith.addf %46, %48 : vector<288x128xf32>
    %50 = arith.addf %49, %0 : vector<288x128xf32>
    %cst_43 = arith.constant 0.000000e+00 : f32
    %51 = vector.broadcast %cst_43 : f32 to vector<288x128xf32>
    %52 = arith.maximumf %50, %51 : vector<288x128xf32>
    %c0_44 = arith.constant 0 : index
    %c0_45 = arith.constant 0 : index
    %53 = vector.load %arg5[%c0_44, %c0_45] : memref<288x128xf32, #tpu.memory_space<vmem>>, vector<288x128xf32>
    tpu.vector_store %arg5[%c0_44, %c0_45], %52 {strides = array<i32>} : memref<288x128xf32, #tpu.memory_space<vmem>>, vector<288x128xf32>,
    return
  }
  func.func @transform_0(%arg0: i32) -> (i32, i32) {
    %c0_i32 = arith.constant 0 : i32
    %c0_i32_0 = arith.constant 0 : i32
    return %arg0, %c0_i32 : i32, i32
  }
  func.func @transform_1(%arg0: i32) -> (i32, i32, i32) {
    %c0_i32 = arith.constant 0 : i32
    %c0_i32_0 = arith.constant 0 : i32
    %c0_i32_1 = arith.constant 0 : i32
    %c0_i32_2 = arith.constant 0 : i32
    return %c0_i32, %c0_i32_0, %c0_i32_1 : i32, i32, i32
  }
  func.func @transform_2(%arg0: i32) -> (i32, i32) {
    %c0_i32 = arith.constant 0 : i32
    %c0_i32_0 = arith.constant 0 : i32
    %c0_i32_1 = arith.constant 0 : i32
    return %c0_i32, %c0_i32_0 : i32, i32
  }
  func.func @transform_3(%arg0: i32) -> (i32, i32) {
    %c0_i32 = arith.constant 0 : i32
    %c0_i32_0 = arith.constant 0 : i32
    return %arg0, %c0_i32 : i32, i32
  }
  func.func @transform_4(%arg0: i32) -> (i32, i32) {
    %c0_i32 = arith.constant 0 : i32
    %c0_i32_0 = arith.constant 0 : i32
    return %arg0, %c0_i32 : i32, i32
  }
}

</mosaic_0001>

<llo_original>
// kernel: basic_block_forward.2
$region0: #{basic_block_forward.2}
  #allocation0 [shape = 'u32[]', space=smem, size = 0x4, offset = 0x4, fixed_abs, tag = 'smem constant byte address 0x4 - core index']
  #allocation1 [shape = 'u32[144,128]{1,0:T(1,128)}', space=vmem, size = 0x12000, scoped, tag = 'internal scratch']
  %s0 = inlined_call_operand.vmem [shape: f32[656,128], index: 0, kind: input, shape index: {}]
  %s1 = inlined_call_operand.vmem [shape: f32[9,128,128], index: 1, kind: input, shape index: {}]
  %s2 = inlined_call_operand.vmem [shape: f32[1,128], index: 2, kind: input, shape index: {}]
  %s3 = inlined_call_operand.vmem [shape: f32[576,128], index: 3, kind: output, shape index: {}]
  %s4 = sld [smem:[#allocation0]]
  $region45: #{basic_block_forward.2} parent=0
    _
  %s6 = ssub.s32 1, %s4
  %s7 = scalar_select 0, %s6, %s4
  loop: start=0, step=1, limit=4
  $region2: #{basic_block_forward.2} parent=0 // loop_pre_header
    _
  $region3: #{basic_block_forward.2} parent=0 // loop_header
    %s9 = sphi 0, %s13
    %p10 = scmp.ge.s32.totalorder %s9, 4
    %s19 = sphi 0, %s21
    %s22 = sphi 0, %s19
    %s23 = sphi 0, %s22
    %s39 = sphi 0, %s23
    %s43 = sphi 0, %s43
    %s45 = sphi 0, %s43
    %s46 = sphi 0, %s45
    %s60 = sphi 0, %s46
    %s64 = sphi 0, %s64
    %s66 = sphi 0, %s64
    %s67 = sphi 0, %s66
    %s81 = sphi 0, %s67
    %s87 = sphi 0, %s89
    %s90 = sphi 0, %s87
    %s91 = sphi 0, %s90
    %s107 = sphi 0, %s91
  $region4: #{basic_block_forward.2} parent=0 // loop_header_branch
    %12 = sbr.rel (%p10) target = $region8
  $region5: #{basic_block_forward.2} parent=0 // loop_body
    %s14 = ssub.s32 %s9, 1
    %s15 = ssub.s32 %s9, 2
    %s16 = sadd.s32 %s9, 1
    %s17 = ssub.s32 %s9, %s16
    %p18 = scmp.eq.s32.totalorder %s17, 0
    %s20 = sadd.s32 %s19, 1
    %s21 = scalar_select %p18, %s19, %s20
    %p24 = pneg %p18
    %p25 = scmp.eq.s32.totalorder %s9, 1
    %p26 = por %p24, %p25
    %p27 = scmp.ne.s32.totalorder %s19, %s22
    %p28 = scmp.eq.s32.totalorder %s9, 0
    %p29 = por %p27, %p28
    %p30 = scmp.ne.s32.totalorder %s19, %s22
    %p31 = scmp.eq.s32.totalorder %s14, 1
    %p32 = por %p30, %p31
    %p33 = scmp.ne.s32.totalorder %s22, %s23
    %p34 = scmp.eq.s32.totalorder %s14, 0
    %p35 = por %p33, %p34
    %p36 = scmp.ne.s32.totalorder %s22, %s23
    %p37 = scmp.eq.s32.totalorder %s15, 1
    %p38 = por %p36, %p37
    %p40 = scmp.ne.s32.totalorder %s23, %s39
    %p41 = scmp.eq.s32.totalorder %s15, 0
    %p42 = por %p40, %p41
    %s44 = sadd.s32 %s43, 1
    %p47 = scmp.eq.s32.totalorder %s9, 1
    %p48 = scmp.ne.s32.totalorder %s43, %s45
    %p49 = scmp.eq.s32.totalorder %s9, 0
    %p50 = por %p48, %p49
    %p51 = scmp.ne.s32.totalorder %s43, %s45
    %p52 = scmp.eq.s32.totalorder %s14, 1
    %p53 = por %p51, %p52
    %p54 = scmp.ne.s32.totalorder %s45, %s46
    %p55 = scmp.eq.s32.totalorder %s14, 0
    %p56 = por %p54, %p55
    %p57 = scmp.ne.s32.totalorder %s45, %s46
    %p58 = scmp.eq.s32.totalorder %s15, 1
    %p59 = por %p57, %p58
    %p61 = scmp.ne.s32.totalorder %s46, %s60
    %p62 = scmp.eq.s32.totalorder %s15, 0
    %p63 = por %p61, %p62
    %s65 = sadd.s32 %s64, 1
    %p68 = scmp.eq.s32.totalorder %s9, 1
    %p69 = scmp.ne.s32.totalorder %s64, %s66
    %p70 = scmp.eq.s32.totalorder %s9, 0
    %p71 = por %p69, %p70
    %p72 = scmp.ne.s32.totalorder %s64, %s66
    %p73 = scmp.eq.s32.totalorder %s14, 1
    %p74 = por %p72, %p73
    %p75 = scmp.ne.s32.totalorder %s66, %s67
    %p76 = scmp.eq.s32.totalorder %s14, 0
    %p77 = por %p75, %p76
    %p78 = scmp.ne.s32.totalorder %s66, %s67
    %p79 = scmp.eq.s32.totalorder %s15, 1
    %p80 = por %p78, %p79
    %p82 = scmp.ne.s32.totalorder %s67, %s81
    %p83 = scmp.eq.s32.totalorder %s15, 0
    %p84 = por %p82, %p83
    %s85 = ssub.s32 %s9, %s16
    %p86 = scmp.eq.s32.totalorder %s85, 0
    %s88 = sadd.s32 %s87, 1
    %s89 = scalar_select %p86, %s87, %s88
    %p92 = pneg %p86
    %p93 = scmp.eq.s32.totalorder %s9, 1
    %p94 = por %p92, %p93
    %p95 = scmp.ne.s32.totalorder %s87, %s90
    %p96 = scmp.eq.s32.totalorder %s9, 0
    %p97 = por %p95, %p96
    %p98 = scmp.ne.s32.totalorder %s87, %s90
    %p99 = scmp.eq.s32.totalorder %s14, 1
    %p100 = por %p98, %p99
    %p101 = scmp.ne.s32.totalorder %s90, %s91
    %p102 = scmp.eq.s32.totalorder %s14, 0
    %p103 = por %p101, %p102
    %p104 = scmp.ne.s32.totalorder %s90, %s91
    %p105 = scmp.eq.s32.totalorder %s15, 1
    %p106 = por %p104, %p105
    %p108 = scmp.ne.s32.totalorder %s91, %s107
    %p109 = scmp.eq.s32.totalorder %s15, 0
    %p110 = por %p108, %p109
    %p111 = scmp.le.s32.totalorder 1, %s9
    %p112 = scmp.lt.s32.totalorder %s9, 3
    %p113 = pnand %p111, %p112
    %p114 = pneg %p113
    // Predicated region
    $region9: #{basic_block_forward.2} parent=5 // pred_check
      _
    $region10: #{basic_block_forward.2} parent=5 // pred_check_branch
      %116 = sbr.rel (%p113) target = $region12
    $region11: #{basic_block_forward.2} parent=5 // pred_region
      %s117 = ssub.s32 %s9, 1
      // Predicated region
      $region13: #{basic_block_forward.2} parent=11 // pred_check
        %p118 = pneg %p56
      $region14: #{basic_block_forward.2} parent=11 // pred_check_branch
        %120 = sbr.rel (%p118) target = $region16
      $region15: #{basic_block_forward.2} parent=11 // pred_region
        _
      $region16: #{basic_block_forward.2} parent=11 // pred_fallthru
        _
      // Predicated region
      $region17: #{basic_block_forward.2} parent=11 // pred_check
        %p121 = pneg %p77
      $region18: #{basic_block_forward.2} parent=11 // pred_check_branch
        %123 = sbr.rel (%p121) target = $region20
      $region19: #{basic_block_forward.2} parent=11 // pred_region
        _
      $region20: #{basic_block_forward.2} parent=11 // pred_fallthru
        _
    $region12: #{basic_block_forward.2} parent=5 // pred_fallthru
      _
    %p124 = scmp.lt.s32.totalorder %s9, 2
    // Predicated region
    $region21: #{basic_block_forward.2} parent=5 // pred_check
      %p125 = pneg %p124
    $region22: #{basic_block_forward.2} parent=5 // pred_check_branch
      %127 = sbr.rel (%p125) target = $region24
    $region23: #{basic_block_forward.2} parent=5 // pred_region
      // Predicated region
      $region25: #{basic_block_forward.2} parent=23 // pred_check
        %p128 = pneg %p29
      $region26: #{basic_block_forward.2} parent=23 // pred_check_branch
        %130 = sbr.rel (%p128) target = $region28
      $region27: #{basic_block_forward.2} parent=23 // pred_region
        %s131 = smul.u32 41, %s9
        %p132 = scmp.lt.s32.totalorder %s131, 81
        %s133 = scalar_select %p132, %s131, 81
        %s134 = smul.addr %s133, 8
        %s135 = scalar_lea.vmem %s0, %s134
        %s136 = smul.u32 41, %s9
      $region28: #{basic_block_forward.2} parent=23 // pred_fallthru
        _
    $region24: #{basic_block_forward.2} parent=5 // pred_fallthru
      _
    %p137 = scmp.le.s32.totalorder 1, %s9
    %p138 = scmp.lt.s32.totalorder %s9, 3
    %p139 = pnand %p137, %p138
    %p140 = pneg %p139
    // Predicated region
    $region29: #{basic_block_forward.2} parent=5 // pred_check
      _
    $region30: #{basic_block_forward.2} parent=5 // pred_check_branch
      %142 = sbr.rel (%p139) target = $region32
    $region31: #{basic_block_forward.2} parent=5 // pred_region
      %s143 = ssub.s32 %s9, 1
      %s144 = smul.u32 41, %s14
      %p145 = scmp.lt.s32.totalorder %s144, 81
      %s146 = scalar_select %p145, %s144, 81
      %s147 = smul.addr %s146, 8
      %s148 = scalar_lea.vmem %s0, %s147
      %p149 = pneg %p35
      %p150 = pneg %p32
      %p151 = pneg %p56
      %p152 = pneg %p53
      %p153 = pneg %p77
      %p154 = pneg %p74
      %p155 = pneg %p103
      %p156 = pneg %p100
      %s157 = smul.u32 36, %s14
      %p158 = scmp.lt.s32.totalorder %s157, 71
      %s159 = scalar_select %p158, %s157, 71
      %s160 = smul.addr %s159, 8
      %s161 = scalar_lea.vmem %s3, %s160
      %s162 = smul.u32 41, %s14
      %p163 = scmp.lt.s32.totalorder %s162, 81
      %s164 = scalar_select %p163, %s162, 81
      %s165 = smul.addr %s164, 8
      %s166 = scalar_lea.vmem %s0, %s165
      %s167 = smul.u32 41, %s14
      %s168 = smul.u32 36, %s14
      %p169 = scmp.lt.s32.totalorder %s168, 71
      %s170 = scalar_select %p169, %s168, 71
      %s171 = smul.addr %s170, 8
      %s172 = scalar_lea.vmem %s3, %s171
      %s173 = smul.u32 36, %s14
      %v174 = vld [vmem:[%s166] sm:$0xff]
      %v175 = vld [vmem:[%s166 + $0x8] sm:$0xff]
      %v176 = vld [vmem:[%s166 + $0x10] sm:$0xff]
      %v177 = vld [vmem:[%s166 + $0x18] sm:$0xff]
      %v178 = vld [vmem:[%s166 + $0x20] sm:$0xff]
      %v179 = vld [vmem:[%s166 + $0x28] sm:$0xff]
      %v180 = vld [vmem:[%s166 + $0x30] sm:$0xff]
      %v181 = vld [vmem:[%s166 + $0x38] sm:$0xff]
      %v182 = vld [vmem:[%s166 + $0x40] sm:$0xff]
      %v183 = vld [vmem:[%s166 + $0x48] sm:$0xff]
      %v184 = vld [vmem:[%s166 + $0x50] sm:$0xff]
      %v185 = vld [vmem:[%s166 + $0x58] sm:$0xff]
      %v186 = vld [vmem:[%s166 + $0x60] sm:$0xff]
      %v187 = vld [vmem:[%s166 + $0x68] sm:$0xff]
      %v188 = vld [vmem:[%s166 + $0x70] sm:$0xff]
      %v189 = vld [vmem:[%s166 + $0x78] sm:$0xff]
      %v190 = vld [vmem:[%s166 + $0x80] sm:$0xff]
      %v191 = vld [vmem:[%s166 + $0x88] sm:$0xff]
      %v192 = vld [vmem:[%s166 + $0x90] sm:$0xff]
      %v193 = vld [vmem:[%s166 + $0x98] sm:$0xff]
      %v194 = vld [vmem:[%s166 + $0xa0] sm:$0xff]
      %v195 = vld [vmem:[%s166 + $0xa8] sm:$0xff]
      %v196 = vld [vmem:[%s166 + $0xb0] sm:$0xff]
      %v197 = vld [vmem:[%s166 + $0xb8] sm:$0xff]
      %v198 = vld [vmem:[%s166 + $0xc0] sm:$0xff]
      %v199 = vld [vmem:[%s166 + $0xc8] sm:$0xff]
      %v200 = vld [vmem:[%s166 + $0xd0] sm:$0xff]
      %v201 = vld [vmem:[%s166 + $0xd8] sm:$0xff]
      %v202 = vld [vmem:[%s166 + $0xe0] sm:$0xff]
      %v203 = vld [vmem:[%s166 + $0xe8] sm:$0xff]
      %v204 = vld [vmem:[%s166 + $0xf0] sm:$0xff]
      %v205 = vld [vmem:[%s166 + $0xf8] sm:$0xff]
      %v206 = vld [vmem:[%s166 + $0x100] sm:$0xff]
      %v207 = vld [vmem:[%s166 + $0x108] sm:$0xff]
      %v208 = vld [vmem:[%s166 + $0x110] sm:$0xff]
      %v209 = vld [vmem:[%s166 + $0x118] sm:$0xff]
      %v210 = vld [vmem:[%s1] sm:$0xff]
      %v211 = vld [vmem:[%s1 + $0x8] sm:$0xff]
      %v212 = vld [vmem:[%s1 + $0x10] sm:$0xff]
      %v213 = vld [vmem:[%s1 + $0x18] sm:$0xff]
      %v214 = vld [vmem:[%s1 + $0x20] sm:$0xff]
      %v215 = vld [vmem:[%s1 + $0x28] sm:$0xff]
      %v216 = vld [vmem:[%s1 + $0x30] sm:$0xff]
      %v217 = vld [vmem:[%s1 + $0x38] sm:$0xff]
      %v218 = vld [vmem:[%s1 + $0x40] sm:$0xff]
      %v219 = vld [vmem:[%s1 + $0x48] sm:$0xff]
      %v220 = vld [vmem:[%s1 + $0x50] sm:$0xff]
      %v221 = vld [vmem:[%s1 + $0x58] sm:$0xff]
      %v222 = vld [vmem:[%s1 + $0x60] sm:$0xff]
      %v223 = vld [vmem:[%s1 + $0x68] sm:$0xff]
      %v224 = vld [vmem:[%s1 + $0x70] sm:$0xff]
      %v225 = vld [vmem:[%s1 + $0x78] sm:$0xff]
      %v226 = vld [vmem:[%s166 + $0x1] sm:$0xff]
      %v227 = vld [vmem:[%s166 + $0x9] sm:$0xff]
      %v228 = vld [vmem:[%s166 + $0x11] sm:$0xff]
      %v229 = vld [vmem:[%s166 + $0x19] sm:$0xff]
      %v230 = vld [vmem:[%s166 + $0x21] sm:$0xff]
      %v231 = vld [vmem:[%s166 + $0x29] sm:$0xff]
      %v232 = vld [vmem:[%s166 + $0x31] sm:$0xff]
      %v233 = vld [vmem:[%s166 + $0x39] sm:$0xff]
      %v234 = vld [vmem:[%s166 + $0x41] sm:$0xff]
      %v235 = vld [vmem:[%s166 + $0x49] sm:$0xff]
      %v236 = vld [vmem:[%s166 + $0x51] sm:$0xff]
      %v237 = vld [vmem:[%s166 + $0x59] sm:$0xff]
      %v238 = vld [vmem:[%s166 + $0x61] sm:$0xff]
      %v239 = vld [vmem:[%s166 + $0x69] sm:$0xff]
      %v240 = vld [vmem:[%s166 + $0x71] sm:$0xff]
      %v241 = vld [vmem:[%s166 + $0x79] sm:$0xff]
      %v242 = vld [vmem:[%s166 + $0x81] sm:$0xff]
      %v243 = vld [vmem:[%s166 + $0x89] sm:$0xff]
      %v244 = vld [vmem:[%s166 + $0x91] sm:$0xff]
      %v245 = vld [vmem:[%s166 + $0x99] sm:$0xff]
      %v246 = vld [vmem:[%s166 + $0xa1] sm:$0xff]
      %v247 = vld [vmem:[%s166 + $0xa9] sm:$0xff]
      %v248 = vld [vmem:[%s166 + $0xb1] sm:$0xff]
      %v249 = vld [vmem:[%s166 + $0xb9] sm:$0xff]
      %v250 = vld [vmem:[%s166 + $0xc1] sm:$0xff]
      %v251 = vld [vmem:[%s166 + $0xc9] sm:$0xff]
      %v252 = vld [vmem:[%s166 + $0xd1] sm:$0xff]
      %v253 = vld [vmem:[%s166 + $0xd9] sm:$0xff]
      %v254 = vld [vmem:[%s166 + $0xe1] sm:$0xff]
      %v255 = vld [vmem:[%s166 + $0xe9] sm:$0xff]
      %v256 = vld [vmem:[%s166 + $0xf1] sm:$0xff]
      %v257 = vld [vmem:[%s166 + $0xf9] sm:$0xff]
      %v258 = vld [vmem:[%s166 + $0x101] sm:$0xff]
      %v259 = vld [vmem:[%s166 + $0x109] sm:$0xff]
      %v260 = vld [vmem:[%s166 + $0x111] sm:$0xff]
      %v261 = vld [vmem:[%s166 + $0x119] sm:$0xff]
      %s262 = scalar_lea.vmem %s1, 128
      %v263 = vld [vmem:[%s262] sm:$0xff]
      %v264 = vld [vmem:[%s262 + $0x8] sm:$0xff]
      %v265 = vld [vmem:[%s262 + $0x10] sm:$0xff]
      %v266 = vld [vmem:[%s262 + $0x18] sm:$0xff]
      %v267 = vld [vmem:[%s262 + $0x20] sm:$0xff]
      %v268 = vld [vmem:[%s262 + $0x28] sm:$0xff]
      %v269 = vld [vmem:[%s262 + $0x30] sm:$0xff]
      %v270 = vld [vmem:[%s262 + $0x38] sm:$0xff]
      %v271 = vld [vmem:[%s262 + $0x40] sm:$0xff]
      %v272 = vld [vmem:[%s262 + $0x48] sm:$0xff]
      %v273 = vld [vmem:[%s262 + $0x50] sm:$0xff]
      %v274 = vld [vmem:[%s262 + $0x58] sm:$0xff]
      %v275 = vld [vmem:[%s262 + $0x60] sm:$0xff]
      %v276 = vld [vmem:[%s262 + $0x68] sm:$0xff]
      %v277 = vld [vmem:[%s262 + $0x70] sm:$0xff]
      %v278 = vld [vmem:[%s262 + $0x78] sm:$0xff]
      %279 = vmatprep.subr.mxu0 0.0
      %280 = vmatpush1.msra.mxu0 %v278
      %281 = vmatprep.subr.mxu0 0.0
      %282 = vmatpush1.msra.mxu0 %v277
      %283 = vmatprep.subr.mxu0 0.0
      %284 = vmatpush1.msra.mxu0 %v276
      %285 = vmatprep.subr.mxu0 0.0
      %286 = vmatpush1.msra.mxu0 %v275
      %287 = vmatprep.subr.mxu0 0.0
      %288 = vmatpush1.msra.mxu0 %v274
      %289 = vmatprep.subr.mxu0 0.0
      %290 = vmatpush1.msra.mxu0 %v273
      %291 = vmatprep.subr.mxu0 0.0
      %292 = vmatpush1.msra.mxu0 %v272
      %293 = vmatprep.subr.mxu0 0.0
      %294 = vmatpush1.msra.mxu0 %v271
      %295 = vmatprep.subr.mxu0 0.0
      %296 = vmatpush1.msra.mxu0 %v270
      %297 = vmatprep.subr.mxu0 0.0
      %298 = vmatpush1.msra.mxu0 %v269
      %299 = vmatprep.subr.mxu0 0.0
      %300 = vmatpush1.msra.mxu0 %v268
      %301 = vmatprep.subr.mxu0 0.0
      %302 = vmatpush1.msra.mxu0 %v267
      %303 = vmatprep.subr.mxu0 0.0
      %304 = vmatpush1.msra.mxu0 %v266
      %305 = vmatprep.subr.mxu0 0.0
      %306 = vmatpush1.msra.mxu0 %v265
      %307 = vmatprep.subr.mxu0 0.0
      %308 = vmatpush1.msra.mxu0 %v264
      %309 = vmatprep.subr.mxu0 0.0
      %310 = vmatpush1.msra.mxu0 %v263
      %311 = vmatprep.subr.mxu0 0.0
      %312 = vmatpush2.msra.mxu0 0.0
      %313 = vmatprep.subr.mxu0 0.0
      %314 = vmatpush2.msra.mxu0 0.0
      %315 = vmatprep.subr.mxu0 0.0
      %316 = vmatpush2.msra.mxu0 0.0
      %317 = vmatprep.subr.mxu0 0.0
      %318 = vmatpush2.msra.mxu0 0.0
      %319 = vmatprep.subr.mxu0 0.0
      %320 = vmatpush2.msra.mxu0 0.0
      %321 = vmatprep.subr.mxu0 0.0
      %322 = vmatpush2.msra.mxu0 0.0
      %323 = vmatprep.subr.mxu0 0.0
      %324 = vmatpush2.msra.mxu0 0.0
      %325 = vmatprep.subr.mxu0 0.0
      %326 = vmatpush2.msra.mxu0 0.0
      %327 = vmatprep.subr.mxu0 0.0
      %328 = vmatpush2.msra.mxu0 0.0
      %329 = vmatprep.subr.mxu0 0.0
      %330 = vmatpush2.msra.mxu0 0.0
      %331 = vmatprep.subr.mxu0 0.0
      %332 = vmatpush2.msra.mxu0 0.0
      %333 = vmatprep.subr.mxu0 0.0
      %334 = vmatpush2.msra.mxu0 0.0
      %335 = vmatprep.subr.mxu0 0.0
      %336 = vmatpush2.msra.mxu0 0.0
      %337 = vmatprep.subr.mxu0 0.0
      %338 = vmatpush2.msra.mxu0 0.0
      %339 = vmatprep.subr.mxu0 0.0
      %340 = vmatpush2.msra.mxu0 0.0
      %341 = vmatprep.subr.mxu0 0.0
      %342 = vmatpush2.msra.mxu0 0.0
      %343 = vmatprep.mubr.f32.mxu0 0.0
      %344 = vmatmul.mubr.f32.gmra.mxu0 %v226
      %v345 = vpop.f32.mrf.mxu0
      %v346 = vadd.f32 0.0, %v345
      %v347 = vpop.f32.mrf.mxu0
      %348 = vmatprep.mubr.f32.mxu0 0.0
      %349 = vmatmul.mubr.f32.gmra.mxu0 %v227
      %v350 = vpop.f32.mrf.mxu0
      %v351 = vadd.f32 0.0, %v350
      %v352 = vpop.f32.mrf.mxu0
      %353 = vmatprep.mubr.f32.mxu0 0.0
      %354 = vmatmul.mubr.f32.gmra.mxu0 %v228
      %v355 = vpop.f32.mrf.mxu0
      %v356 = vadd.f32 0.0, %v355
      %v357 = vpop.f32.mrf.mxu0
      %358 = vmatprep.mubr.f32.mxu0 0.0
      %359 = vmatmul.mubr.f32.gmra.mxu0 %v229
      %v360 = vpop.f32.mrf.mxu0
      %v361 = vadd.f32 0.0, %v360
      %v362 = vpop.f32.mrf.mxu0
      %363 = vmatprep.mubr.f32.mxu0 0.0
      %364 = vmatmul.mubr.f32.gmra.mxu0 %v230
      %v365 = vpop.f32.mrf.mxu0
      %v366 = vadd.f32 0.0, %v365
      %v367 = vpop.f32.mrf.mxu0
      %368 = vmatprep.mubr.f32.mxu0 0.0
      %369 = vmatmul.mubr.f32.gmra.mxu0 %v231
      %v370 = vpop.f32.mrf.mxu0
      %v371 = vadd.f32 0.0, %v370
      %v372 = vpop.f32.mrf.mxu0
      %373 = vmatprep.mubr.f32.mxu0 0.0
      %374 = vmatmul.mubr.f32.gmra.mxu0 %v232
      %v375 = vpop.f32.mrf.mxu0
      %v376 = vadd.f32 0.0, %v375
      %v377 = vpop.f32.mrf.mxu0
      %378 = vmatprep.mubr.f32.mxu0 0.0
      %379 = vmatmul.mubr.f32.gmra.mxu0 %v233
      %v380 = vpop.f32.mrf.mxu0
      %v381 = vadd.f32 0.0, %v380
      %v382 = vpop.f32.mrf.mxu0
      %383 = vmatprep.mubr.f32.mxu0 0.0
      %384 = vmatmul.mubr.f32.gmra.mxu0 %v234
      %v385 = vpop.f32.mrf.mxu0
      %v386 = vadd.f32 0.0, %v385
      %v387 = vpop.f32.mrf.mxu0
      %388 = vmatprep.mubr.f32.mxu0 0.0
      %389 = vmatmul.mubr.f32.gmra.mxu0 %v235
      %v390 = vpop.f32.mrf.mxu0
      %v391 = vadd.f32 0.0, %v390
      %v392 = vpop.f32.mrf.mxu0
      %393 = vmatprep.mubr.f32.mxu0 0.0
      %394 = vmatmul.mubr.f32.gmra.mxu0 %v236
      %v395 = vpop.f32.mrf.mxu0
      %v396 = vadd.f32 0.0, %v395
      %v397 = vpop.f32.mrf.mxu0
      %398 = vmatprep.mubr.f32.mxu0 0.0
      %399 = vmatmul.mubr.f32.gmra.mxu0 %v237
      %v400 = vpop.f32.mrf.mxu0
      %v401 = vadd.f32 0.0, %v400
      %v402 = vpop.f32.mrf.mxu0
      %403 = vmatprep.mubr.f32.mxu0 0.0
      %404 = vmatmul.mubr.f32.gmra.mxu0 %v238
      %v405 = vpop.f32.mrf.mxu0
      %v406 = vadd.f32 0.0, %v405
      %v407 = vpop.f32.mrf.mxu0
      %408 = vmatprep.mubr.f32.mxu0 0.0
      %409 = vmatmul.mubr.f32.gmra.mxu0 %v239
      %v410 = vpop.f32.mrf.mxu0
      %v411 = vadd.f32 0.0, %v410
      %v412 = vpop.f32.mrf.mxu0
      %413 = vmatprep.mubr.f32.mxu0 0.0
      %414 = vmatmul.mubr.f32.gmra.mxu0 %v240
      %v415 = vpop.f32.mrf.mxu0
      %v416 = vadd.f32 0.0, %v415
      %v417 = vpop.f32.mrf.mxu0
      %418 = vmatprep.mubr.f32.mxu0 0.0
      %419 = vmatmul.mubr.f32.gmra.mxu0 %v241
      %v420 = vpop.f32.mrf.mxu0
      %v421 = vadd.f32 0.0, %v420
      %v422 = vpop.f32.mrf.mxu0
      %423 = vmatprep.mubr.f32.mxu0 0.0
      %424 = vmatmul.mubr.f32.gmra.mxu0 %v242
      %v425 = vpop.f32.mrf.mxu0
      %v426 = vadd.f32 0.0, %v425
      %v427 = vpop.f32.mrf.mxu0
      %428 = vmatprep.mubr.f32.mxu0 0.0
      %429 = vmatmul.mubr.f32.gmra.mxu0 %v243
      %v430 = vpop.f32.mrf.mxu0
      %v431 = vadd.f32 0.0, %v430
      %v432 = vpop.f32.mrf.mxu0
      %433 = vmatprep.mubr.f32.mxu0 0.0
      %434 = vmatmul.mubr.f32.gmra.mxu0 %v244
      %v435 = vpop.f32.mrf.mxu0
      %v436 = vadd.f32 0.0, %v435
      %v437 = vpop.f32.mrf.mxu0
      %438 = vmatprep.mubr.f32.mxu0 0.0
      %439 = vmatmul.mubr.f32.gmra.mxu0 %v245
      %v440 = vpop.f32.mrf.mxu0
      %v441 = vadd.f32 0.0, %v440
      %v442 = vpop.f32.mrf.mxu0
      %443 = vmatprep.mubr.f32.mxu0 0.0
      %444 = vmatmul.mubr.f32.gmra.mxu0 %v246
      %v445 = vpop.f32.mrf.mxu0
      %v446 = vadd.f32 0.0, %v445
      %v447 = vpop.f32.mrf.mxu0
      %448 = vmatprep.mubr.f32.mxu0 0.0
      %449 = vmatmul.mubr.f32.gmra.mxu0 %v247
      %v450 = vpop.f32.mrf.mxu0
      %v451 = vadd.f32 0.0, %v450
      %v452 = vpop.f32.mrf.mxu0
      %453 = vmatprep.mubr.f32.mxu0 0.0
      %454 = vmatmul.mubr.f32.gmra.mxu0 %v248
      %v455 = vpop.f32.mrf.mxu0
      %v456 = vadd.f32 0.0, %v455
      %v457 = vpop.f32.mrf.mxu0
      %458 = vmatprep.mubr.f32.mxu0 0.0
      %459 = vmatmul.mubr.f32.gmra.mxu0 %v249
      %v460 = vpop.f32.mrf.mxu0
      %v461 = vadd.f32 0.0, %v460
      %v462 = vpop.f32.mrf.mxu0
      %463 = vmatprep.mubr.f32.mxu0 0.0
      %464 = vmatmul.mubr.f32.gmra.mxu0 %v250
      %v465 = vpop.f32.mrf.mxu0
      %v466 = vadd.f32 0.0, %v465
      %v467 = vpop.f32.mrf.mxu0
      %468 = vmatprep.mubr.f32.mxu0 0.0
      %469 = vmatmul.mubr.f32.gmra.mxu0 %v251
      %v470 = vpop.f32.mrf.mxu0
      %v471 = vadd.f32 0.0, %v470
      %v472 = vpop.f32.mrf.mxu0
      %473 = vmatprep.mubr.f32.mxu0 0.0
      %474 = vmatmul.mubr.f32.gmra.mxu0 %v252
      %v475 = vpop.f32.mrf.mxu0
      %v476 = vadd.f32 0.0, %v475
      %v477 = vpop.f32.mrf.mxu0
      %478 = vmatprep.mubr.f32.mxu0 0.0
      %479 = vmatmul.mubr.f32.gmra.mxu0 %v253
      %v480 = vpop.f32.mrf.mxu0
      %v481 = vadd.f32 0.0, %v480
      %v482 = vpop.f32.mrf.mxu0
      %483 = vmatprep.mubr.f32.mxu0 0.0
      %484 = vmatmul.mubr.f32.gmra.mxu0 %v254
      %v485 = vpop.f32.mrf.mxu0
      %v486 = vadd.f32 0.0, %v485
      %v487 = vpop.f32.mrf.mxu0
      %488 = vmatprep.mubr.f32.mxu0 0.0
      %489 = vmatmul.mubr.f32.gmra.mxu0 %v255
      %v490 = vpop.f32.mrf.mxu0
      %v491 = vadd.f32 0.0, %v490
      %v492 = vpop.f32.mrf.mxu0
      %493 = vmatprep.mubr.f32.mxu0 0.0
      %494 = vmatmul.mubr.f32.gmra.mxu0 %v256
      %v495 = vpop.f32.mrf.mxu0
      %v496 = vadd.f32 0.0, %v495
      %v497 = vpop.f32.mrf.mxu0
      %498 = vmatprep.mubr.f32.mxu0 0.0
      %499 = vmatmul.mubr.f32.gmra.mxu0 %v257
      %v500 = vpop.f32.mrf.mxu0
      %v501 = vadd.f32 0.0, %v500
      %v502 = vpop.f32.mrf.mxu0
      %503 = vmatprep.mubr.f32.mxu0 0.0
      %504 = vmatmul.mubr.f32.gmra.mxu0 %v258
      %v505 = vpop.f32.mrf.mxu0
      %v506 = vadd.f32 0.0, %v505
      %v507 = vpop.f32.mrf.mxu0
      %508 = vmatprep.mubr.f32.mxu0 0.0
      %509 = vmatmul.mubr.f32.gmra.mxu0 %v259
      %v510 = vpop.f32.mrf.mxu0
      %v511 = vadd.f32 0.0, %v510
      %v512 = vpop.f32.mrf.mxu0
      %513 = vmatprep.mubr.f32.mxu0 0.0
      %514 = vmatmul.mubr.f32.gmra.mxu0 %v260
      %v515 = vpop.f32.mrf.mxu0
      %v516 = vadd.f32 0.0, %v515
      %v517 = vpop.f32.mrf.mxu0
      %518 = vmatprep.mubr.f32.mxu0 0.0
      %519 = vmatmul.mubr.f32.gmra.mxu0 %v261
      %v520 = vpop.f32.mrf.mxu0
      %v521 = vadd.f32 0.0, %v520
      %v522 = vpop.f32.mrf.mxu0
      %523 = vdwg.mxu0
      %524 = vmatprep.subr.mxu0 0.0
      %525 = vmatpush1.msra.mxu0 %v225
      %526 = vmatprep.subr.mxu0 0.0
      %527 = vmatpush1.msra.mxu0 %v224
      %528 = vmatprep.subr.mxu0 0.0
      %529 = vmatpush1.msra.mxu0 %v223
      %530 = vmatprep.subr.mxu0 0.0
      %531 = vmatpush1.msra.mxu0 %v222
      %532 = vmatprep.subr.mxu0 0.0
      %533 = vmatpush1.msra.mxu0 %v221
      %534 = vmatprep.subr.mxu0 0.0
      %535 = vmatpush1.msra.mxu0 %v220
      %536 = vmatprep.subr.mxu0 0.0
      %537 = vmatpush1.msra.mxu0 %v219
      %538 = vmatprep.subr.mxu0 0.0
      %539 = vmatpush1.msra.mxu0 %v218
      %540 = vmatprep.subr.mxu0 0.0
      %541 = vmatpush1.msra.mxu0 %v217
      %542 = vmatprep.subr.mxu0 0.0
      %543 = vmatpush1.msra.mxu0 %v216
      %544 = vmatprep.subr.mxu0 0.0
      %545 = vmatpush1.msra.mxu0 %v215
      %546 = vmatprep.subr.mxu0 0.0
      %547 = vmatpush1.msra.mxu0 %v214
      %548 = vmatprep.subr.mxu0 0.0
      %549 = vmatpush1.msra.mxu0 %v213
      %550 = vmatprep.subr.mxu0 0.0
      %551 = vmatpush1.msra.mxu0 %v212
      %552 = vmatprep.subr.mxu0 0.0
      %553 = vmatpush1.msra.mxu0 %v211
      %554 = vmatprep.subr.mxu0 0.0
      %555 = vmatpush1.msra.mxu0 %v210
      %556 = vmatprep.subr.mxu0 0.0
      %557 = vmatpush2.msra.mxu0 0.0
      %558 = vmatprep.subr.mxu0 0.0
      %559 = vmatpush2.msra.mxu0 0.0
      %560 = vmatprep.subr.mxu0 0.0
      %561 = vmatpush2.msra.mxu0 0.0
      %562 = vmatprep.subr.mxu0 0.0
      %563 = vmatpush2.msra.mxu0 0.0
      %564 = vmatprep.subr.mxu0 0.0
      %565 = vmatpush2.msra.mxu0 0.0
      %566 = vmatprep.subr.mxu0 0.0
      %567 = vmatpush2.msra.mxu0 0.0
      %568 = vmatprep.subr.mxu0 0.0
      %569 = vmatpush2.msra.mxu0 0.0
      %570 = vmatprep.subr.mxu0 0.0
      %571 = vmatpush2.msra.mxu0 0.0
      %572 = vmatprep.subr.mxu0 0.0
      %573 = vmatpush2.msra.mxu0 0.0
      %574 = vmatprep.subr.mxu0 0.0
      %575 = vmatpush2.msra.mxu0 0.0
      %576 = vmatprep.subr.mxu0 0.0
      %577 = vmatpush2.msra.mxu0 0.0
      %578 = vmatprep.subr.mxu0 0.0
      %579 = vmatpush2.msra.mxu0 0.0
      %580 = vmatprep.subr.mxu0 0.0
      %581 = vmatpush2.msra.mxu0 0.0
      %582 = vmatprep.subr.mxu0 0.0
      %583 = vmatpush2.msra.mxu0 0.0
      %584 = vmatprep.subr.mxu0 0.0
      %585 = vmatpush2.msra.mxu0 0.0
      %586 = vmatprep.subr.mxu0 0.0
      %587 = vmatpush2.msra.mxu0 0.0
      %588 = vmatprep.mubr.f32.mxu0 0.0
      %589 = vmatmul.mubr.f32.gmra.mxu0 %v174
      %v590 = vpop.f32.mrf.mxu0
      %v591 = vadd.f32 %v346, %v590
      %v592 = vpop.f32.mrf.mxu0
      %593 = vmatprep.mubr.f32.mxu0 0.0
      %594 = vmatmul.mubr.f32.gmra.mxu0 %v175
      %v595 = vpop.f32.mrf.mxu0
      %v596 = vadd.f32 %v351, %v595
      %v597 = vpop.f32.mrf.mxu0
      %598 = vmatprep.mubr.f32.mxu0 0.0
      %599 = vmatmul.mubr.f32.gmra.mxu0 %v176
      %v600 = vpop.f32.mrf.mxu0
      %v601 = vadd.f32 %v356, %v600
      %v602 = vpop.f32.mrf.mxu0
      %603 = vmatprep.mubr.f32.mxu0 0.0
      %604 = vmatmul.mubr.f32.gmra.mxu0 %v177
      %v605 = vpop.f32.mrf.mxu0
      %v606 = vadd.f32 %v361, %v605
      %v607 = vpop.f32.mrf.mxu0
      %608 = vmatprep.mubr.f32.mxu0 0.0
      %609 = vmatmul.mubr.f32.gmra.mxu0 %v178
      %v610 = vpop.f32.mrf.mxu0
      %v611 = vadd.f32 %v366, %v610
      %v612 = vpop.f32.mrf.mxu0
      %613 = vmatprep.mubr.f32.mxu0 0.0
      %614 = vmatmul.mubr.f32.gmra.mxu0 %v179
      %v615 = vpop.f32.mrf.mxu0
      %v616 = vadd.f32 %v371, %v615
      %v617 = vpop.f32.mrf.mxu0
      %618 = vmatprep.mubr.f32.mxu0 0.0
      %619 = vmatmul.mubr.f32.gmra.mxu0 %v180
      %v620 = vpop.f32.mrf.mxu0
      %v621 = vadd.f32 %v376, %v620
      %v622 = vpop.f32.mrf.mxu0
      %623 = vmatprep.mubr.f32.mxu0 0.0
      %624 = vmatmul.mubr.f32.gmra.mxu0 %v181
      %v625 = vpop.f32.mrf.mxu0
      %v626 = vadd.f32 %v381, %v625
      %v627 = vpop.f32.mrf.mxu0
      %628 = vmatprep.mubr.f32.mxu0 0.0
      %629 = vmatmul.mubr.f32.gmra.mxu0 %v182
      %v630 = vpop.f32.mrf.mxu0
      %v631 = vadd.f32 %v386, %v630
      %v632 = vpop.f32.mrf.mxu0
      %633 = vmatprep.mubr.f32.mxu0 0.0
      %634 = vmatmul.mubr.f32.gmra.mxu0 %v183
      %v635 = vpop.f32.mrf.mxu0
      %v636 = vadd.f32 %v391, %v635
      %v637 = vpop.f32.mrf.mxu0
      %638 = vmatprep.mubr.f32.mxu0 0.0
      %639 = vmatmul.mubr.f32.gmra.mxu0 %v184
      %v640 = vpop.f32.mrf.mxu0
      %v641 = vadd.f32 %v396, %v640
      %v642 = vpop.f32.mrf.mxu0
      %643 = vmatprep.mubr.f32.mxu0 0.0
      %644 = vmatmul.mubr.f32.gmra.mxu0 %v185
      %v645 = vpop.f32.mrf.mxu0
      %v646 = vadd.f32 %v401, %v645
      %v647 = vpop.f32.mrf.mxu0
      %648 = vmatprep.mubr.f32.mxu0 0.0
      %649 = vmatmul.mubr.f32.gmra.mxu0 %v186
      %v650 = vpop.f32.mrf.mxu0
      %v651 = vadd.f32 %v406, %v650
      %v652 = vpop.f32.mrf.mxu0
      %653 = vmatprep.mubr.f32.mxu0 0.0
      %654 = vmatmul.mubr.f32.gmra.mxu0 %v187
      %v655 = vpop.f32.mrf.mxu0
      %v656 = vadd.f32 %v411, %v655
      %v657 = vpop.f32.mrf.mxu0
      %658 = vmatprep.mubr.f32.mxu0 0.0
      %659 = vmatmul.mubr.f32.gmra.mxu0 %v188
      %v660 = vpop.f32.mrf.mxu0
      %v661 = vadd.f32 %v416, %v660
      %v662 = vpop.f32.mrf.mxu0
      %663 = vmatprep.mubr.f32.mxu0 0.0
      %664 = vmatmul.mubr.f32.gmra.mxu0 %v189
      %v665 = vpop.f32.mrf.mxu0
      %v666 = vadd.f32 %v421, %v665
      %v667 = vpop.f32.mrf.mxu0
      %668 = vmatprep.mubr.f32.mxu0 0.0
      %669 = vmatmul.mubr.f32.gmra.mxu0 %v190
      %v670 = vpop.f32.mrf.mxu0
      %v671 = vadd.f32 %v426, %v670
      %v672 = vpop.f32.mrf.mxu0
      %673 = vmatprep.mubr.f32.mxu0 0.0
      %674 = vmatmul.mubr.f32.gmra.mxu0 %v191
      %v675 = vpop.f32.mrf.mxu0
      %v676 = vadd.f32 %v431, %v675
      %v677 = vpop.f32.mrf.mxu0
      %678 = vmatprep.mubr.f32.mxu0 0.0
      %679 = vmatmul.mubr.f32.gmra.mxu0 %v192
      %v680 = vpop.f32.mrf.mxu0
      %v681 = vadd.f32 %v436, %v680
      %v682 = vpop.f32.mrf.mxu0
      %683 = vmatprep.mubr.f32.mxu0 0.0
      %684 = vmatmul.mubr.f32.gmra.mxu0 %v193
      %v685 = vpop.f32.mrf.mxu0
      %v686 = vadd.f32 %v441, %v685
      %v687 = vpop.f32.mrf.mxu0
      %688 = vmatprep.mubr.f32.mxu0 0.0
      %689 = vmatmul.mubr.f32.gmra.mxu0 %v194
      %v690 = vpop.f32.mrf.mxu0
      %v691 = vadd.f32 %v446, %v690
      %v692 = vpop.f32.mrf.mxu0
      %693 = vmatprep.mubr.f32.mxu0 0.0
      %694 = vmatmul.mubr.f32.gmra.mxu0 %v195
      %v695 = vpop.f32.mrf.mxu0
      %v696 = vadd.f32 %v451, %v695
      %v697 = vpop.f32.mrf.mxu0
      %698 = vmatprep.mubr.f32.mxu0 0.0
      %699 = vmatmul.mubr.f32.gmra.mxu0 %v196
      %v700 = vpop.f32.mrf.mxu0
      %v701 = vadd.f32 %v456, %v700
      %v702 = vpop.f32.mrf.mxu0
      %703 = vmatprep.mubr.f32.mxu0 0.0
      %704 = vmatmul.mubr.f32.gmra.mxu0 %v197
      %v705 = vpop.f32.mrf.mxu0
      %v706 = vadd.f32 %v461, %v705
      %v707 = vpop.f32.mrf.mxu0
      %708 = vmatprep.mubr.f32.mxu0 0.0
      %709 = vmatmul.mubr.f32.gmra.mxu0 %v198
      %v710 = vpop.f32.mrf.mxu0
      %v711 = vadd.f32 %v466, %v710
      %v712 = vpop.f32.mrf.mxu0
      %713 = vmatprep.mubr.f32.mxu0 0.0
      %714 = vmatmul.mubr.f32.gmra.mxu0 %v199
      %v715 = vpop.f32.mrf.mxu0
      %v716 = vadd.f32 %v471, %v715
      %v717 = vpop.f32.mrf.mxu0
      %718 = vmatprep.mubr.f32.mxu0 0.0
      %719 = vmatmul.mubr.f32.gmra.mxu0 %v200
      %v720 = vpop.f32.mrf.mxu0
      %v721 = vadd.f32 %v476, %v720
      %v722 = vpop.f32.mrf.mxu0
      %723 = vmatprep.mubr.f32.mxu0 0.0
      %724 = vmatmul.mubr.f32.gmra.mxu0 %v201
      %v725 = vpop.f32.mrf.mxu0
      %v726 = vadd.f32 %v481, %v725
      %v727 = vpop.f32.mrf.mxu0
      %728 = vmatprep.mubr.f32.mxu0 0.0
      %729 = vmatmul.mubr.f32.gmra.mxu0 %v202
      %v730 = vpop.f32.mrf.mxu0
      %v731 = vadd.f32 %v486, %v730
      %v732 = vpop.f32.mrf.mxu0
      %733 = vmatprep.mubr.f32.mxu0 0.0
      %734 = vmatmul.mubr.f32.gmra.mxu0 %v203
      %v735 = vpop.f32.mrf.mxu0
      %v736 = vadd.f32 %v491, %v735
      %v737 = vpop.f32.mrf.mxu0
      %738 = vmatprep.mubr.f32.mxu0 0.0
      %739 = vmatmul.mubr.f32.gmra.mxu0 %v204
      %v740 = vpop.f32.mrf.mxu0
      %v741 = vadd.f32 %v496, %v740
      %v742 = vpop.f32.mrf.mxu0
      %743 = vmatprep.mubr.f32.mxu0 0.0
      %744 = vmatmul.mubr.f32.gmra.mxu0 %v205
      %v745 = vpop.f32.mrf.mxu0
      %v746 = vadd.f32 %v501, %v745
      %v747 = vpop.f32.mrf.mxu0
      %748 = vmatprep.mubr.f32.mxu0 0.0
      %749 = vmatmul.mubr.f32.gmra.mxu0 %v206
      %v750 = vpop.f32.mrf.mxu0
      %v751 = vadd.f32 %v506, %v750
      %v752 = vpop.f32.mrf.mxu0
      %753 = vmatprep.mubr.f32.mxu0 0.0
      %754 = vmatmul.mubr.f32.gmra.mxu0 %v207
      %v755 = vpop.f32.mrf.mxu0
      %v756 = vadd.f32 %v511, %v755
      %v757 = vpop.f32.mrf.mxu0
      %758 = vmatprep.mubr.f32.mxu0 0.0
      %759 = vmatmul.mubr.f32.gmra.mxu0 %v208
      %v760 = vpop.f32.mrf.mxu0
      %v761 = vadd.f32 %v516, %v760
      %v762 = vpop.f32.mrf.mxu0
      %763 = vmatprep.mubr.f32.mxu0 0.0
      %764 = vmatmul.mubr.f32.gmra.mxu0 %v209
      %v765 = vpop.f32.mrf.mxu0
      %v766 = vadd.f32 %v521, %v765
      %v767 = vpop.f32.mrf.mxu0
      %768 = vdwg.mxu0
      %v769 = vld [vmem:[%s166 + $0x2] sm:$0xff]
      %v770 = vld [vmem:[%s166 + $0xa] sm:$0xff]
      %v771 = vld [vmem:[%s166 + $0x12] sm:$0xff]
      %v772 = vld [vmem:[%s166 + $0x1a] sm:$0xff]
      %v773 = vld [vmem:[%s166 + $0x22] sm:$0xff]
      %v774 = vld [vmem:[%s166 + $0x2a] sm:$0xff]
      %v775 = vld [vmem:[%s166 + $0x32] sm:$0xff]
      %v776 = vld [vmem:[%s166 + $0x3a] sm:$0xff]
      %v777 = vld [vmem:[%s166 + $0x42] sm:$0xff]
      %v778 = vld [vmem:[%s166 + $0x4a] sm:$0xff]
      %v779 = vld [vmem:[%s166 + $0x52] sm:$0xff]
      %v780 = vld [vmem:[%s166 + $0x5a] sm:$0xff]
      %v781 = vld [vmem:[%s166 + $0x62] sm:$0xff]
      %v782 = vld [vmem:[%s166 + $0x6a] sm:$0xff]
      %v783 = vld [vmem:[%s166 + $0x72] sm:$0xff]
      %v784 = vld [vmem:[%s166 + $0x7a] sm:$0xff]
      %v785 = vld [vmem:[%s166 + $0x82] sm:$0xff]
      %v786 = vld [vmem:[%s166 + $0x8a] sm:$0xff]
      %v787 = vld [vmem:[%s166 + $0x92] sm:$0xff]
      %v788 = vld [vmem:[%s166 + $0x9a] sm:$0xff]
      %v789 = vld [vmem:[%s166 + $0xa2] sm:$0xff]
      %v790 = vld [vmem:[%s166 + $0xaa] sm:$0xff]
      %v791 = vld [vmem:[%s166 + $0xb2] sm:$0xff]
      %v792 = vld [vmem:[%s166 + $0xba] sm:$0xff]
      %v793 = vld [vmem:[%s166 + $0xc2] sm:$0xff]
      %v794 = vld [vmem:[%s166 + $0xca] sm:$0xff]
      %v795 = vld [vmem:[%s166 + $0xd2] sm:$0xff]
      %v796 = vld [vmem:[%s166 + $0xda] sm:$0xff]
      %v797 = vld [vmem:[%s166 + $0xe2] sm:$0xff]
      %v798 = vld [vmem:[%s166 + $0xea] sm:$0xff]
      %v799 = vld [vmem:[%s166 + $0xf2] sm:$0xff]
      %v800 = vld [vmem:[%s166 + $0xfa] sm:$0xff]
      %v801 = vld [vmem:[%s166 + $0x102] sm:$0xff]
      %v802 = vld [vmem:[%s166 + $0x10a] sm:$0xff]
      %v803 = vld [vmem:[%s166 + $0x112] sm:$0xff]
      %v804 = vld [vmem:[%s166 + $0x11a] sm:$0xff]
      %s805 = scalar_lea.vmem %s1, 256
      %v806 = vld [vmem:[%s805] sm:$0xff]
      %v807 = vld [vmem:[%s805 + $0x8] sm:$0xff]
      %v808 = vld [vmem:[%s805 + $0x10] sm:$0xff]
      %v809 = vld [vmem:[%s805 + $0x18] sm:$0xff]
      %v810 = vld [vmem:[%s805 + $0x20] sm:$0xff]
      %v811 = vld [vmem:[%s805 + $0x28] sm:$0xff]
      %v812 = vld [vmem:[%s805 + $0x30] sm:$0xff]
      %v813 = vld [vmem:[%s805 + $0x38] sm:$0xff]
      %v814 = vld [vmem:[%s805 + $0x40] sm:$0xff]
      %v815 = vld [vmem:[%s805 + $0x48] sm:$0xff]
      %v816 = vld [vmem:[%s805 + $0x50] sm:$0xff]
      %v817 = vld [vmem:[%s805 + $0x58] sm:$0xff]
      %v818 = vld [vmem:[%s805 + $0x60] sm:$0xff]
      %v819 = vld [vmem:[%s805 + $0x68] sm:$0xff]
      %v820 = vld [vmem:[%s805 + $0x70] sm:$0xff]
      %v821 = vld [vmem:[%s805 + $0x78] sm:$0xff]
      %822 = vmatprep.subr.mxu0 0.0
      %823 = vmatpush1.msra.mxu0 %v821
      %824 = vmatprep.subr.mxu0 0.0
      %825 = vmatpush1.msra.mxu0 %v820
      %826 = vmatprep.subr.mxu0 0.0
      %827 = vmatpush1.msra.mxu0 %v819
      %828 = vmatprep.subr.mxu0 0.0
      %829 = vmatpush1.msra.mxu0 %v818
      %830 = vmatprep.subr.mxu0 0.0
      %831 = vmatpush1.msra.mxu0 %v817
      %832 = vmatprep.subr.mxu0 0.0
      %833 = vmatpush1.msra.mxu0 %v816
      %834 = vmatprep.subr.mxu0 0.0
      %835 = vmatpush1.msra.mxu0 %v815
      %836 = vmatprep.subr.mxu0 0.0
      %837 = vmatpush1.msra.mxu0 %v814
      %838 = vmatprep.subr.mxu0 0.0
      %839 = vmatpush1.msra.mxu0 %v813
      %840 = vmatprep.subr.mxu0 0.0
      %841 = vmatpush1.msra.mxu0 %v812
      %842 = vmatprep.subr.mxu0 0.0
      %843 = vmatpush1.msra.mxu0 %v811
      %844 = vmatprep.subr.mxu0 0.0
      %845 = vmatpush1.msra.mxu0 %v810
      %846 = vmatprep.subr.mxu0 0.0
      %847 = vmatpush1.msra.mxu0 %v809
      %848 = vmatprep.subr.mxu0 0.0
      %849 = vmatpush1.msra.mxu0 %v808
      %850 = vmatprep.subr.mxu0 0.0
      %851 = vmatpush1.msra.mxu0 %v807
      %852 = vmatprep.subr.mxu0 0.0
      %853 = vmatpush1.msra.mxu0 %v806
      %854 = vmatprep.subr.mxu0 0.0
      %855 = vmatpush2.msra.mxu0 0.0
      %856 = vmatprep.subr.mxu0 0.0
      %857 = vmatpush2.msra.mxu0 0.0
      %858 = vmatprep.subr.mxu0 0.0
      %859 = vmatpush2.msra.mxu0 0.0
      %860 = vmatprep.subr.mxu0 0.0
      %861 = vmatpush2.msra.mxu0 0.0
      %862 = vmatprep.subr.mxu0 0.0
      %863 = vmatpush2.msra.mxu0 0.0
      %864 = vmatprep.subr.mxu0 0.0
      %865 = vmatpush2.msra.mxu0 0.0
      %866 = vmatprep.subr.mxu0 0.0
      %867 = vmatpush2.msra.mxu0 0.0
      %868 = vmatprep.subr.mxu0 0.0
      %869 = vmatpush2.msra.mxu0 0.0
      %870 = vmatprep.subr.mxu0 0.0
      %871 = vmatpush2.msra.mxu0 0.0
      %872 = vmatprep.subr.mxu0 0.0
      %873 = vmatpush2.msra.mxu0 0.0
      %874 = vmatprep.subr.mxu0 0.0
      %875 = vmatpush2.msra.mxu0 0.0
      %876 = vmatprep.subr.mxu0 0.0
      %877 = vmatpush2.msra.mxu0 0.0
      %878 = vmatprep.subr.mxu0 0.0
      %879 = vmatpush2.msra.mxu0 0.0
      %880 = vmatprep.subr.mxu0 0.0
      %881 = vmatpush2.msra.mxu0 0.0
      %882 = vmatprep.subr.mxu0 0.0
      %883 = vmatpush2.msra.mxu0 0.0
      %884 = vmatprep.subr.mxu0 0.0
      %885 = vmatpush2.msra.mxu0 0.0
      %886 = vmatprep.mubr.f32.mxu0 0.0
      %887 = vmatmul.mubr.f32.gmra.mxu0 %v769
      %v888 = vpop.f32.mrf.mxu0
      %v889 = vadd.f32 0.0, %v888
      %v890 = vpop.f32.mrf.mxu0
      %891 = vmatprep.mubr.f32.mxu0 0.0
      %892 = vmatmul.mubr.f32.gmra.mxu0 %v770
      %v893 = vpop.f32.mrf.mxu0
      %v894 = vadd.f32 0.0, %v893
      %v895 = vpop.f32.mrf.mxu0
      %896 = vmatprep.mubr.f32.mxu0 0.0
      %897 = vmatmul.mubr.f32.gmra.mxu0 %v771
      %v898 = vpop.f32.mrf.mxu0
      %v899 = vadd.f32 0.0, %v898
      %v900 = vpop.f32.mrf.mxu0
      %901 = vmatprep.mubr.f32.mxu0 0.0
      %902 = vmatmul.mubr.f32.gmra.mxu0 %v772
      %v903 = vpop.f32.mrf.mxu0
      %v904 = vadd.f32 0.0, %v903
      %v905 = vpop.f32.mrf.mxu0
      %906 = vmatprep.mubr.f32.mxu0 0.0
      %907 = vmatmul.mubr.f32.gmra.mxu0 %v773
      %v908 = vpop.f32.mrf.mxu0
      %v909 = vadd.f32 0.0, %v908
      %v910 = vpop.f32.mrf.mxu0
      %911 = vmatprep.mubr.f32.mxu0 0.0
      %912 = vmatmul.mubr.f32.gmra.mxu0 %v774
      %v913 = vpop.f32.mrf.mxu0
      %v914 = vadd.f32 0.0, %v913
      %v915 = vpop.f32.mrf.mxu0
      %916 = vmatprep.mubr.f32.mxu0 0.0
      %917 = vmatmul.mubr.f32.gmra.mxu0 %v775
      %v918 = vpop.f32.mrf.mxu0
      %v919 = vadd.f32 0.0, %v918
      %v920 = vpop.f32.mrf.mxu0
      %921 = vmatprep.mubr.f32.mxu0 0.0
      %922 = vmatmul.mubr.f32.gmra.mxu0 %v776
      %v923 = vpop.f32.mrf.mxu0
      %v924 = vadd.f32 0.0, %v923
      %v925 = vpop.f32.mrf.mxu0
      %926 = vmatprep.mubr.f32.mxu0 0.0
      %927 = vmatmul.mubr.f32.gmra.mxu0 %v777
      %v928 = vpop.f32.mrf.mxu0
      %v929 = vadd.f32 0.0, %v928
      %v930 = vpop.f32.mrf.mxu0
      %931 = vmatprep.mubr.f32.mxu0 0.0
      %932 = vmatmul.mubr.f32.gmra.mxu0 %v778
      %v933 = vpop.f32.mrf.mxu0
      %v934 = vadd.f32 0.0, %v933
      %v935 = vpop.f32.mrf.mxu0
      %936 = vmatprep.mubr.f32.mxu0 0.0
      %937 = vmatmul.mubr.f32.gmra.mxu0 %v779
      %v938 = vpop.f32.mrf.mxu0
      %v939 = vadd.f32 0.0, %v938
      %v940 = vpop.f32.mrf.mxu0
      %941 = vmatprep.mubr.f32.mxu0 0.0
      %942 = vmatmul.mubr.f32.gmra.mxu0 %v780
      %v943 = vpop.f32.mrf.mxu0
      %v944 = vadd.f32 0.0, %v943
      %v945 = vpop.f32.mrf.mxu0
      %946 = vmatprep.mubr.f32.mxu0 0.0
      %947 = vmatmul.mubr.f32.gmra.mxu0 %v781
      %v948 = vpop.f32.mrf.mxu0
      %v949 = vadd.f32 0.0, %v948
      %v950 = vpop.f32.mrf.mxu0
      %951 = vmatprep.mubr.f32.mxu0 0.0
      %952 = vmatmul.mubr.f32.gmra.mxu0 %v782
      %v953 = vpop.f32.mrf.mxu0
      %v954 = vadd.f32 0.0, %v953
      %v955 = vpop.f32.mrf.mxu0
      %956 = vmatprep.mubr.f32.mxu0 0.0
      %957 = vmatmul.mubr.f32.gmra.mxu0 %v783
      %v958 = vpop.f32.mrf.mxu0
      %v959 = vadd.f32 0.0, %v958
      %v960 = vpop.f32.mrf.mxu0
      %961 = vmatprep.mubr.f32.mxu0 0.0
      %962 = vmatmul.mubr.f32.gmra.mxu0 %v784
      %v963 = vpop.f32.mrf.mxu0
      %v964 = vadd.f32 0.0, %v963
      %v965 = vpop.f32.mrf.mxu0
      %966 = vmatprep.mubr.f32.mxu0 0.0
      %967 = vmatmul.mubr.f32.gmra.mxu0 %v785
      %v968 = vpop.f32.mrf.mxu0
      %v969 = vadd.f32 0.0, %v968
      %v970 = vpop.f32.mrf.mxu0
      %971 = vmatprep.mubr.f32.mxu0 0.0
      %972 = vmatmul.mubr.f32.gmra.mxu0 %v786
      %v973 = vpop.f32.mrf.mxu0
      %v974 = vadd.f32 0.0, %v973
      %v975 = vpop.f32.mrf.mxu0
      %976 = vmatprep.mubr.f32.mxu0 0.0
      %977 = vmatmul.mubr.f32.gmra.mxu0 %v787
      %v978 = vpop.f32.mrf.mxu0
      %v979 = vadd.f32 0.0, %v978
      %v980 = vpop.f32.mrf.mxu0
      %981 = vmatprep.mubr.f32.mxu0 0.0
      %982 = vmatmul.mubr.f32.gmra.mxu0 %v788
      %v983 = vpop.f32.mrf.mxu0
      %v984 = vadd.f32 0.0, %v983
      %v985 = vpop.f32.mrf.mxu0
      %986 = vmatprep.mubr.f32.mxu0 0.0
      %987 = vmatmul.mubr.f32.gmra.mxu0 %v789
      %v988 = vpop.f32.mrf.mxu0
      %v989 = vadd.f32 0.0, %v988
      %v990 = vpop.f32.mrf.mxu0
      %991 = vmatprep.mubr.f32.mxu0 0.0
      %992 = vmatmul.mubr.f32.gmra.mxu0 %v790
      %v993 = vpop.f32.mrf.mxu0
      %v994 = vadd.f32 0.0, %v993
      %v995 = vpop.f32.mrf.mxu0
      %996 = vmatprep.mubr.f32.mxu0 0.0
      %997 = vmatmul.mubr.f32.gmra.mxu0 %v791
      %v998 = vpop.f32.mrf.mxu0
      %v999 = vadd.f32 0.0, %v998
      %v1000 = vpop.f32.mrf.mxu0
      %1001 = vmatprep.mubr.f32.mxu0 0.0
      %1002 = vmatmul.mubr.f32.gmra.mxu0 %v792
      %v1003 = vpop.f32.mrf.mxu0
      %v1004 = vadd.f32 0.0, %v1003
      %v1005 = vpop.f32.mrf.mxu0
      %1006 = vmatprep.mubr.f32.mxu0 0.0
      %1007 = vmatmul.mubr.f32.gmra.mxu0 %v793
      %v1008 = vpop.f32.mrf.mxu0
      %v1009 = vadd.f32 0.0, %v1008
      %v1010 = vpop.f32.mrf.mxu0
      %1011 = vmatprep.mubr.f32.mxu0 0.0
      %1012 = vmatmul.mubr.f32.gmra.mxu0 %v794
      %v1013 = vpop.f32.mrf.mxu0
      %v1014 = vadd.f32 0.0, %v1013
      %v1015 = vpop.f32.mrf.mxu0
      %1016 = vmatprep.mubr.f32.mxu0 0.0
      %1017 = vmatmul.mubr.f32.gmra.mxu0 %v795
      %v1018 = vpop.f32.mrf.mxu0
      %v1019 = vadd.f32 0.0, %v1018
      %v1020 = vpop.f32.mrf.mxu0
      %1021 = vmatprep.mubr.f32.mxu0 0.0
      %1022 = vmatmul.mubr.f32.gmra.mxu0 %v796
      %v1023 = vpop.f32.mrf.mxu0
      %v1024 = vadd.f32 0.0, %v1023
      %v1025 = vpop.f32.mrf.mxu0
      %1026 = vmatprep.mubr.f32.mxu0 0.0
      %1027 = vmatmul.mubr.f32.gmra.mxu0 %v797
      %v1028 = vpop.f32.mrf.mxu0
      %v1029 = vadd.f32 0.0, %v1028
      %v1030 = vpop.f32.mrf.mxu0
      %1031 = vmatprep.mubr.f32.mxu0 0.0
      %1032 = vmatmul.mubr.f32.gmra.mxu0 %v798
      %v1033 = vpop.f32.mrf.mxu0
      %v1034 = vadd.f32 0.0, %v1033
      %v1035 = vpop.f32.mrf.mxu0
      %1036 = vmatprep.mubr.f32.mxu0 0.0
      %1037 = vmatmul.mubr.f32.gmra.mxu0 %v799
      %v1038 = vpop.f32.mrf.mxu0
      %v1039 = vadd.f32 0.0, %v1038
      %v1040 = vpop.f32.mrf.mxu0
      %1041 = vmatprep.mubr.f32.mxu0 0.0
      %1042 = vmatmul.mubr.f32.gmra.mxu0 %v800
      %v1043 = vpop.f32.mrf.mxu0
      %v1044 = vadd.f32 0.0, %v1043
      %v1045 = vpop.f32.mrf.mxu0
      %1046 = vmatprep.mubr.f32.mxu0 0.0
      %1047 = vmatmul.mubr.f32.gmra.mxu0 %v801
      %v1048 = vpop.f32.mrf.mxu0
      %v1049 = vadd.f32 0.0, %v1048
      %v1050 = vpop.f32.mrf.mxu0
      %1051 = vmatprep.mubr.f32.mxu0 0.0
      %1052 = vmatmul.mubr.f32.gmra.mxu0 %v802
      %v1053 = vpop.f32.mrf.mxu0
      %v1054 = vadd.f32 0.0, %v1053
      %v1055 = vpop.f32.mrf.mxu0
      %1056 = vmatprep.mubr.f32.mxu0 0.0
      %1057 = vmatmul.mubr.f32.gmra.mxu0 %v803
      %v1058 = vpop.f32.mrf.mxu0
      %v1059 = vadd.f32 0.0, %v1058
      %v1060 = vpop.f32.mrf.mxu0
      %1061 = vmatprep.mubr.f32.mxu0 0.0
      %1062 = vmatmul.mubr.f32.gmra.mxu0 %v804
      %v1063 = vpop.f32.mrf.mxu0
      %v1064 = vadd.f32 0.0, %v1063
      %v1065 = vpop.f32.mrf.mxu0
      %1066 = vdwg.mxu0
      %v1067 = vadd.f32 %v591, %v889
      %v1068 = vadd.f32 %v596, %v894
      %v1069 = vadd.f32 %v601, %v899
      %v1070 = vadd.f32 %v606, %v904
      %v1071 = vadd.f32 %v611, %v909
      %v1072 = vadd.f32 %v616, %v914
      %v1073 = vadd.f32 %v621, %v919
      %v1074 = vadd.f32 %v626, %v924
      %v1075 = vadd.f32 %v631, %v929
      %v1076 = vadd.f32 %v636, %v934
      %v1077 = vadd.f32 %v641, %v939
      %v1078 = vadd.f32 %v646, %v944
      %v1079 = vadd.f32 %v651, %v949
      %v1080 = vadd.f32 %v656, %v954
      %v1081 = vadd.f32 %v661, %v959
      %v1082 = vadd.f32 %v666, %v964
      %v1083 = vadd.f32 %v671, %v969
      %v1084 = vadd.f32 %v676, %v974
      %v1085 = vadd.f32 %v681, %v979
      %v1086 = vadd.f32 %v686, %v984
      %v1087 = vadd.f32 %v691, %v989
      %v1088 = vadd.f32 %v696, %v994
      %v1089 = vadd.f32 %v701, %v999
      %v1090 = vadd.f32 %v706, %v1004
      %v1091 = vadd.f32 %v711, %v1009
      %v1092 = vadd.f32 %v716, %v1014
      %v1093 = vadd.f32 %v721, %v1019
      %v1094 = vadd.f32 %v726, %v1024
      %v1095 = vadd.f32 %v731, %v1029
      %v1096 = vadd.f32 %v736, %v1034
      %v1097 = vadd.f32 %v741, %v1039
      %v1098 = vadd.f32 %v746, %v1044
      %v1099 = vadd.f32 %v751, %v1049
      %v1100 = vadd.f32 %v756, %v1054
      %v1101 = vadd.f32 %v761, %v1059
      %v1102 = vadd.f32 %v766, %v1064
      %v1103 = vld [vmem:[%s166 + $0x12] sm:$0xff]
      %v1104 = vld [vmem:[%s166 + $0x1a] sm:$0xff]
      %v1105 = vld [vmem:[%s166 + $0x22] sm:$0xff]
      %v1106 = vld [vmem:[%s166 + $0x2a] sm:$0xff]
      %v1107 = vld [vmem:[%s166 + $0x32] sm:$0xff]
      %v1108 = vld [vmem:[%s166 + $0x3a] sm:$0xff]
      %v1109 = vld [vmem:[%s166 + $0x42] sm:$0xff]
      %v1110 = vld [vmem:[%s166 + $0x4a] sm:$0xff]
      %v1111 = vld [vmem:[%s166 + $0x52] sm:$0xff]
      %v1112 = vld [vmem:[%s166 + $0x5a] sm:$0xff]
      %v1113 = vld [vmem:[%s166 + $0x62] sm:$0xff]
      %v1114 = vld [vmem:[%s166 + $0x6a] sm:$0xff]
      %v1115 = vld [vmem:[%s166 + $0x72] sm:$0xff]
      %v1116 = vld [vmem:[%s166 + $0x7a] sm:$0xff]
      %v1117 = vld [vmem:[%s166 + $0x82] sm:$0xff]
      %v1118 = vld [vmem:[%s166 + $0x8a] sm:$0xff]
      %v1119 = vld [vmem:[%s166 + $0x92] sm:$0xff]
      %v1120 = vld [vmem:[%s166 + $0x9a] sm:$0xff]
      %v1121 = vld [vmem:[%s166 + $0xa2] sm:$0xff]
      %v1122 = vld [vmem:[%s166 + $0xaa] sm:$0xff]
      %v1123 = vld [vmem:[%s166 + $0xb2] sm:$0xff]
      %v1124 = vld [vmem:[%s166 + $0xba] sm:$0xff]
      %v1125 = vld [vmem:[%s166 + $0xc2] sm:$0xff]
      %v1126 = vld [vmem:[%s166 + $0xca] sm:$0xff]
      %v1127 = vld [vmem:[%s166 + $0xd2] sm:$0xff]
      %v1128 = vld [vmem:[%s166 + $0xda] sm:$0xff]
      %v1129 = vld [vmem:[%s166 + $0xe2] sm:$0xff]
      %v1130 = vld [vmem:[%s166 + $0xea] sm:$0xff]
      %v1131 = vld [vmem:[%s166 + $0xf2] sm:$0xff]
      %v1132 = vld [vmem:[%s166 + $0xfa] sm:$0xff]
      %v1133 = vld [vmem:[%s166 + $0x102] sm:$0xff]
      %v1134 = vld [vmem:[%s166 + $0x10a] sm:$0xff]
      %v1135 = vld [vmem:[%s166 + $0x112] sm:$0xff]
      %v1136 = vld [vmem:[%s166 + $0x11a] sm:$0xff]
      %v1137 = vld [vmem:[%s166 + $0x122] sm:$0xff]
      %v1138 = vld [vmem:[%s166 + $0x12a] sm:$0xff]
      %s1139 = scalar_lea.vmem %s1, 384
      %v1140 = vld [vmem:[%s1139] sm:$0xff]
      %v1141 = vld [vmem:[%s1139 + $0x8] sm:$0xff]
      %v1142 = vld [vmem:[%s1139 + $0x10] sm:$0xff]
      %v1143 = vld [vmem:[%s1139 + $0x18] sm:$0xff]
      %v1144 = vld [vmem:[%s1139 + $0x20] sm:$0xff]
      %v1145 = vld [vmem:[%s1139 + $0x28] sm:$0xff]
      %v1146 = vld [vmem:[%s1139 + $0x30] sm:$0xff]
      %v1147 = vld [vmem:[%s1139 + $0x38] sm:$0xff]
      %v1148 = vld [vmem:[%s1139 + $0x40] sm:$0xff]
      %v1149 = vld [vmem:[%s1139 + $0x48] sm:$0xff]
      %v1150 = vld [vmem:[%s1139 + $0x50] sm:$0xff]
      %v1151 = vld [vmem:[%s1139 + $0x58] sm:$0xff]
      %v1152 = vld [vmem:[%s1139 + $0x60] sm:$0xff]
      %v1153 = vld [vmem:[%s1139 + $0x68] sm:$0xff]
      %v1154 = vld [vmem:[%s1139 + $0x70] sm:$0xff]
      %v1155 = vld [vmem:[%s1139 + $0x78] sm:$0xff]
      %1156 = vmatprep.subr.mxu0 0.0
      %1157 = vmatpush1.msra.mxu0 %v1155
      %1158 = vmatprep.subr.mxu0 0.0
      %1159 = vmatpush1.msra.mxu0 %v1154
      %1160 = vmatprep.subr.mxu0 0.0
      %1161 = vmatpush1.msra.mxu0 %v1153
      %1162 = vmatprep.subr.mxu0 0.0
      %1163 = vmatpush1.msra.mxu0 %v1152
      %1164 = vmatprep.subr.mxu0 0.0
      %1165 = vmatpush1.msra.mxu0 %v1151
      %1166 = vmatprep.subr.mxu0 0.0
      %1167 = vmatpush1.msra.mxu0 %v1150
      %1168 = vmatprep.subr.mxu0 0.0
      %1169 = vmatpush1.msra.mxu0 %v1149
      %1170 = vmatprep.subr.mxu0 0.0
      %1171 = vmatpush1.msra.mxu0 %v1148
      %1172 = vmatprep.subr.mxu0 0.0
      %1173 = vmatpush1.msra.mxu0 %v1147
      %1174 = vmatprep.subr.mxu0 0.0
      %1175 = vmatpush1.msra.mxu0 %v1146
      %1176 = vmatprep.subr.mxu0 0.0
      %1177 = vmatpush1.msra.mxu0 %v1145
      %1178 = vmatprep.subr.mxu0 0.0
      %1179 = vmatpush1.msra.mxu0 %v1144
      %1180 = vmatprep.subr.mxu0 0.0
      %1181 = vmatpush1.msra.mxu0 %v1143
      %1182 = vmatprep.subr.mxu0 0.0
      %1183 = vmatpush1.msra.mxu0 %v1142
      %1184 = vmatprep.subr.mxu0 0.0
      %1185 = vmatpush1.msra.mxu0 %v1141
      %1186 = vmatprep.subr.mxu0 0.0
      %1187 = vmatpush1.msra.mxu0 %v1140
      %1188 = vmatprep.subr.mxu0 0.0
      %1189 = vmatpush2.msra.mxu0 0.0
      %1190 = vmatprep.subr.mxu0 0.0
      %1191 = vmatpush2.msra.mxu0 0.0
      %1192 = vmatprep.subr.mxu0 0.0
      %1193 = vmatpush2.msra.mxu0 0.0
      %1194 = vmatprep.subr.mxu0 0.0
      %1195 = vmatpush2.msra.mxu0 0.0
      %1196 = vmatprep.subr.mxu0 0.0
      %1197 = vmatpush2.msra.mxu0 0.0
      %1198 = vmatprep.subr.mxu0 0.0
      %1199 = vmatpush2.msra.mxu0 0.0
      %1200 = vmatprep.subr.mxu0 0.0
      %1201 = vmatpush2.msra.mxu0 0.0
      %1202 = vmatprep.subr.mxu0 0.0
      %1203 = vmatpush2.msra.mxu0 0.0
      %1204 = vmatprep.subr.mxu0 0.0
      %1205 = vmatpush2.msra.mxu0 0.0
      %1206 = vmatprep.subr.mxu0 0.0
      %1207 = vmatpush2.msra.mxu0 0.0
      %1208 = vmatprep.subr.mxu0 0.0
      %1209 = vmatpush2.msra.mxu0 0.0
      %1210 = vmatprep.subr.mxu0 0.0
      %1211 = vmatpush2.msra.mxu0 0.0
      %1212 = vmatprep.subr.mxu0 0.0
      %1213 = vmatpush2.msra.mxu0 0.0
      %1214 = vmatprep.subr.mxu0 0.0
      %1215 = vmatpush2.msra.mxu0 0.0
      %1216 = vmatprep.subr.mxu0 0.0
      %1217 = vmatpush2.msra.mxu0 0.0
      %1218 = vmatprep.subr.mxu0 0.0
      %1219 = vmatpush2.msra.mxu0 0.0
      %1220 = vmatprep.mubr.f32.mxu0 0.0
      %1221 = vmatmul.mubr.f32.gmra.mxu0 %v1103
      %v1222 = vpop.f32.mrf.mxu0
      %v1223 = vadd.f32 0.0, %v1222
      %v1224 = vpop.f32.mrf.mxu0
      %1225 = vmatprep.mubr.f32.mxu0 0.0
      %1226 = vmatmul.mubr.f32.gmra.mxu0 %v1104
      %v1227 = vpop.f32.mrf.mxu0
      %v1228 = vadd.f32 0.0, %v1227
      %v1229 = vpop.f32.mrf.mxu0
      %1230 = vmatprep.mubr.f32.mxu0 0.0
      %1231 = vmatmul.mubr.f32.gmra.mxu0 %v1105
      %v1232 = vpop.f32.mrf.mxu0
      %v1233 = vadd.f32 0.0, %v1232
      %v1234 = vpop.f32.mrf.mxu0
      %1235 = vmatprep.mubr.f32.mxu0 0.0
      %1236 = vmatmul.mubr.f32.gmra.mxu0 %v1106
      %v1237 = vpop.f32.mrf.mxu0
      %v1238 = vadd.f32 0.0, %v1237
      %v1239 = vpop.f32.mrf.mxu0
      %1240 = vmatprep.mubr.f32.mxu0 0.0
      %1241 = vmatmul.mubr.f32.gmra.mxu0 %v1107
      %v1242 = vpop.f32.mrf.mxu0
      %v1243 = vadd.f32 0.0, %v1242
      %v1244 = vpop.f32.mrf.mxu0
      %1245 = vmatprep.mubr.f32.mxu0 0.0
      %1246 = vmatmul.mubr.f32.gmra.mxu0 %v1108
      %v1247 = vpop.f32.mrf.mxu0
      %v1248 = vadd.f32 0.0, %v1247
      %v1249 = vpop.f32.mrf.mxu0
      %1250 = vmatprep.mubr.f32.mxu0 0.0
      %1251 = vmatmul.mubr.f32.gmra.mxu0 %v1109
      %v1252 = vpop.f32.mrf.mxu0
      %v1253 = vadd.f32 0.0, %v1252
      %v1254 = vpop.f32.mrf.mxu0
      %1255 = vmatprep.mubr.f32.mxu0 0.0
      %1256 = vmatmul.mubr.f32.gmra.mxu0 %v1110
      %v1257 = vpop.f32.mrf.mxu0
      %v1258 = vadd.f32 0.0, %v1257
      %v1259 = vpop.f32.mrf.mxu0
      %1260 = vmatprep.mubr.f32.mxu0 0.0
      %1261 = vmatmul.mubr.f32.gmra.mxu0 %v1111
      %v1262 = vpop.f32.mrf.mxu0
      %v1263 = vadd.f32 0.0, %v1262
      %v1264 = vpop.f32.mrf.mxu0
      %1265 = vmatprep.mubr.f32.mxu0 0.0
      %1266 = vmatmul.mubr.f32.gmra.mxu0 %v1112
      %v1267 = vpop.f32.mrf.mxu0
      %v1268 = vadd.f32 0.0, %v1267
      %v1269 = vpop.f32.mrf.mxu0
      %1270 = vmatprep.mubr.f32.mxu0 0.0
      %1271 = vmatmul.mubr.f32.gmra.mxu0 %v1113
      %v1272 = vpop.f32.mrf.mxu0
      %v1273 = vadd.f32 0.0, %v1272
      %v1274 = vpop.f32.mrf.mxu0
      %1275 = vmatprep.mubr.f32.mxu0 0.0
      %1276 = vmatmul.mubr.f32.gmra.mxu0 %v1114
      %v1277 = vpop.f32.mrf.mxu0
      %v1278 = vadd.f32 0.0, %v1277
      %v1279 = vpop.f32.mrf.mxu0
      %1280 = vmatprep.mubr.f32.mxu0 0.0
      %1281 = vmatmul.mubr.f32.gmra.mxu0 %v1115
      %v1282 = vpop.f32.mrf.mxu0
      %v1283 = vadd.f32 0.0, %v1282
      %v1284 = vpop.f32.mrf.mxu0
      %1285 = vmatprep.mubr.f32.mxu0 0.0
      %1286 = vmatmul.mubr.f32.gmra.mxu0 %v1116
      %v1287 = vpop.f32.mrf.mxu0
      %v1288 = vadd.f32 0.0, %v1287
      %v1289 = vpop.f32.mrf.mxu0
      %1290 = vmatprep.mubr.f32.mxu0 0.0
      %1291 = vmatmul.mubr.f32.gmra.mxu0 %v1117
      %v1292 = vpop.f32.mrf.mxu0
      %v1293 = vadd.f32 0.0, %v1292
      %v1294 = vpop.f32.mrf.mxu0
      %1295 = vmatprep.mubr.f32.mxu0 0.0
      %1296 = vmatmul.mubr.f32.gmra.mxu0 %v1118
      %v1297 = vpop.f32.mrf.mxu0
      %v1298 = vadd.f32 0.0, %v1297
      %v1299 = vpop.f32.mrf.mxu0
      %1300 = vmatprep.mubr.f32.mxu0 0.0
      %1301 = vmatmul.mubr.f32.gmra.mxu0 %v1119
      %v1302 = vpop.f32.mrf.mxu0
      %v1303 = vadd.f32 0.0, %v1302
      %v1304 = vpop.f32.mrf.mxu0
      %1305 = vmatprep.mubr.f32.mxu0 0.0
      %1306 = vmatmul.mubr.f32.gmra.mxu0 %v1120
      %v1307 = vpop.f32.mrf.mxu0
      %v1308 = vadd.f32 0.0, %v1307
      %v1309 = vpop.f32.mrf.mxu0
      %1310 = vmatprep.mubr.f32.mxu0 0.0
      %1311 = vmatmul.mubr.f32.gmra.mxu0 %v1121
      %v1312 = vpop.f32.mrf.mxu0
      %v1313 = vadd.f32 0.0, %v1312
      %v1314 = vpop.f32.mrf.mxu0
      %1315 = vmatprep.mubr.f32.mxu0 0.0
      %1316 = vmatmul.mubr.f32.gmra.mxu0 %v1122
      %v1317 = vpop.f32.mrf.mxu0
      %v1318 = vadd.f32 0.0, %v1317
      %v1319 = vpop.f32.mrf.mxu0
      %1320 = vmatprep.mubr.f32.mxu0 0.0
      %1321 = vmatmul.mubr.f32.gmra.mxu0 %v1123
      %v1322 = vpop.f32.mrf.mxu0
      %v1323 = vadd.f32 0.0, %v1322
      %v1324 = vpop.f32.mrf.mxu0
      %1325 = vmatprep.mubr.f32.mxu0 0.0
      %1326 = vmatmul.mubr.f32.gmra.mxu0 %v1124
      %v1327 = vpop.f32.mrf.mxu0
      %v1328 = vadd.f32 0.0, %v1327
      %v1329 = vpop.f32.mrf.mxu0
      %1330 = vmatprep.mubr.f32.mxu0 0.0
      %1331 = vmatmul.mubr.f32.gmra.mxu0 %v1125
      %v1332 = vpop.f32.mrf.mxu0
      %v1333 = vadd.f32 0.0, %v1332
      %v1334 = vpop.f32.mrf.mxu0
      %1335 = vmatprep.mubr.f32.mxu0 0.0
      %1336 = vmatmul.mubr.f32.gmra.mxu0 %v1126
      %v1337 = vpop.f32.mrf.mxu0
      %v1338 = vadd.f32 0.0, %v1337
      %v1339 = vpop.f32.mrf.mxu0
      %1340 = vmatprep.mubr.f32.mxu0 0.0
      %1341 = vmatmul.mubr.f32.gmra.mxu0 %v1127
      %v1342 = vpop.f32.mrf.mxu0
      %v1343 = vadd.f32 0.0, %v1342
      %v1344 = vpop.f32.mrf.mxu0
      %1345 = vmatprep.mubr.f32.mxu0 0.0
      %1346 = vmatmul.mubr.f32.gmra.mxu0 %v1128
      %v1347 = vpop.f32.mrf.mxu0
      %v1348 = vadd.f32 0.0, %v1347
      %v1349 = vpop.f32.mrf.mxu0
      %1350 = vmatprep.mubr.f32.mxu0 0.0
      %1351 = vmatmul.mubr.f32.gmra.mxu0 %v1129
      %v1352 = vpop.f32.mrf.mxu0
      %v1353 = vadd.f32 0.0, %v1352
      %v1354 = vpop.f32.mrf.mxu0
      %1355 = vmatprep.mubr.f32.mxu0 0.0
      %1356 = vmatmul.mubr.f32.gmra.mxu0 %v1130
      %v1357 = vpop.f32.mrf.mxu0
      %v1358 = vadd.f32 0.0, %v1357
      %v1359 = vpop.f32.mrf.mxu0
      %1360 = vmatprep.mubr.f32.mxu0 0.0
      %1361 = vmatmul.mubr.f32.gmra.mxu0 %v1131
      %v1362 = vpop.f32.mrf.mxu0
      %v1363 = vadd.f32 0.0, %v1362
      %v1364 = vpop.f32.mrf.mxu0
      %1365 = vmatprep.mubr.f32.mxu0 0.0
      %1366 = vmatmul.mubr.f32.gmra.mxu0 %v1132
      %v1367 = vpop.f32.mrf.mxu0
      %v1368 = vadd.f32 0.0, %v1367
      %v1369 = vpop.f32.mrf.mxu0
      %1370 = vmatprep.mubr.f32.mxu0 0.0
      %1371 = vmatmul.mubr.f32.gmra.mxu0 %v1133
      %v1372 = vpop.f32.mrf.mxu0
      %v1373 = vadd.f32 0.0, %v1372
      %v1374 = vpop.f32.mrf.mxu0
      %1375 = vmatprep.mubr.f32.mxu0 0.0
      %1376 = vmatmul.mubr.f32.gmra.mxu0 %v1134
      %v1377 = vpop.f32.mrf.mxu0
      %v1378 = vadd.f32 0.0, %v1377
      %v1379 = vpop.f32.mrf.mxu0
      %1380 = vmatprep.mubr.f32.mxu0 0.0
      %1381 = vmatmul.mubr.f32.gmra.mxu0 %v1135
      %v1382 = vpop.f32.mrf.mxu0
      %v1383 = vadd.f32 0.0, %v1382
      %v1384 = vpop.f32.mrf.mxu0
      %1385 = vmatprep.mubr.f32.mxu0 0.0
      %1386 = vmatmul.mubr.f32.gmra.mxu0 %v1136
      %v1387 = vpop.f32.mrf.mxu0
      %v1388 = vadd.f32 0.0, %v1387
      %v1389 = vpop.f32.mrf.mxu0
      %1390 = vmatprep.mubr.f32.mxu0 0.0
      %1391 = vmatmul.mubr.f32.gmra.mxu0 %v1137
      %v1392 = vpop.f32.mrf.mxu0
      %v1393 = vadd.f32 0.0, %v1392
      %v1394 = vpop.f32.mrf.mxu0
      %1395 = vmatprep.mubr.f32.mxu0 0.0
      %1396 = vmatmul.mubr.f32.gmra.mxu0 %v1138
      %v1397 = vpop.f32.mrf.mxu0
      %v1398 = vadd.f32 0.0, %v1397
      %v1399 = vpop.f32.mrf.mxu0
      %1400 = vdwg.mxu0
      %v1401 = vadd.f32 %v1067, %v1223
      %v1402 = vadd.f32 %v1068, %v1228
      %v1403 = vadd.f32 %v1069, %v1233
      %v1404 = vadd.f32 %v1070, %v1238
      %v1405 = vadd.f32 %v1071, %v1243
      %v1406 = vadd.f32 %v1072, %v1248
      %v1407 = vadd.f32 %v1073, %v1253
      %v1408 = vadd.f32 %v1074, %v1258
      %v1409 = vadd.f32 %v1075, %v1263
      %v1410 = vadd.f32 %v1076, %v1268
      %v1411 = vadd.f32 %v1077, %v1273
      %v1412 = vadd.f32 %v1078, %v1278
      %v1413 = vadd.f32 %v1079, %v1283
      %v1414 = vadd.f32 %v1080, %v1288
      %v1415 = vadd.f32 %v1081, %v1293
      %v1416 = vadd.f32 %v1082, %v1298
      %v1417 = vadd.f32 %v1083, %v1303
      %v1418 = vadd.f32 %v1084, %v1308
      %v1419 = vadd.f32 %v1085, %v1313
      %v1420 = vadd.f32 %v1086, %v1318
      %v1421 = vadd.f32 %v1087, %v1323
      %v1422 = vadd.f32 %v1088, %v1328
      %v1423 = vadd.f32 %v1089, %v1333
      %v1424 = vadd.f32 %v1090, %v1338
      %v1425 = vadd.f32 %v1091, %v1343
      %v1426 = vadd.f32 %v1092, %v1348
      %v1427 = vadd.f32 %v1093, %v1353
      %v1428 = vadd.f32 %v1094, %v1358
      %v1429 = vadd.f32 %v1095, %v1363
      %v1430 = vadd.f32 %v1096, %v1368
      %v1431 = vadd.f32 %v1097, %v1373
      %v1432 = vadd.f32 %v1098, %v1378
      %v1433 = vadd.f32 %v1099, %v1383
      %v1434 = vadd.f32 %v1100, %v1388
      %v1435 = vadd.f32 %v1101, %v1393
      %v1436 = vadd.f32 %v1102, %v1398
      %v1437 = vld [vmem:[%s166 + $0x13] sm:$0xff]
      %v1438 = vld [vmem:[%s166 + $0x1b] sm:$0xff]
      %v1439 = vld [vmem:[%s166 + $0x23] sm:$0xff]
      %v1440 = vld [vmem:[%s166 + $0x2b] sm:$0xff]
      %v1441 = vld [vmem:[%s166 + $0x33] sm:$0xff]
      %v1442 = vld [vmem:[%s166 + $0x3b] sm:$0xff]
      %v1443 = vld [vmem:[%s166 + $0x43] sm:$0xff]
      %v1444 = vld [vmem:[%s166 + $0x4b] sm:$0xff]
      %v1445 = vld [vmem:[%s166 + $0x53] sm:$0xff]
      %v1446 = vld [vmem:[%s166 + $0x5b] sm:$0xff]
      %v1447 = vld [vmem:[%s166 + $0x63] sm:$0xff]
      %v1448 = vld [vmem:[%s166 + $0x6b] sm:$0xff]
      %v1449 = vld [vmem:[%s166 + $0x73] sm:$0xff]
      %v1450 = vld [vmem:[%s166 + $0x7b] sm:$0xff]
      %v1451 = vld [vmem:[%s166 + $0x83] sm:$0xff]
      %v1452 = vld [vmem:[%s166 + $0x8b] sm:$0xff]
      %v1453 = vld [vmem:[%s166 + $0x93] sm:$0xff]
      %v1454 = vld [vmem:[%s166 + $0x9b] sm:$0xff]
      %v1455 = vld [vmem:[%s166 + $0xa3] sm:$0xff]
      %v1456 = vld [vmem:[%s166 + $0xab] sm:$0xff]
      %v1457 = vld [vmem:[%s166 + $0xb3] sm:$0xff]
      %v1458 = vld [vmem:[%s166 + $0xbb] sm:$0xff]
      %v1459 = vld [vmem:[%s166 + $0xc3] sm:$0xff]
      %v1460 = vld [vmem:[%s166 + $0xcb] sm:$0xff]
      %v1461 = vld [vmem:[%s166 + $0xd3] sm:$0xff]
      %v1462 = vld [vmem:[%s166 + $0xdb] sm:$0xff]
      %v1463 = vld [vmem:[%s166 + $0xe3] sm:$0xff]
      %v1464 = vld [vmem:[%s166 + $0xeb] sm:$0xff]
      %v1465 = vld [vmem:[%s166 + $0xf3] sm:$0xff]
      %v1466 = vld [vmem:[%s166 + $0xfb] sm:$0xff]
      %v1467 = vld [vmem:[%s166 + $0x103] sm:$0xff]
      %v1468 = vld [vmem:[%s166 + $0x10b] sm:$0xff]
      %v1469 = vld [vmem:[%s166 + $0x113] sm:$0xff]
      %v1470 = vld [vmem:[%s166 + $0x11b] sm:$0xff]
      %v1471 = vld [vmem:[%s166 + $0x123] sm:$0xff]
      %v1472 = vld [vmem:[%s166 + $0x12b] sm:$0xff]
      %s1473 = scalar_lea.vmem %s1, 512
      %v1474 = vld [vmem:[%s1473] sm:$0xff]
      %v1475 = vld [vmem:[%s1473 + $0x8] sm:$0xff]
      %v1476 = vld [vmem:[%s1473 + $0x10] sm:$0xff]
      %v1477 = vld [vmem:[%s1473 + $0x18] sm:$0xff]
      %v1478 = vld [vmem:[%s1473 + $0x20] sm:$0xff]
      %v1479 = vld [vmem:[%s1473 + $0x28] sm:$0xff]
      %v1480 = vld [vmem:[%s1473 + $0x30] sm:$0xff]
      %v1481 = vld [vmem:[%s1473 + $0x38] sm:$0xff]
      %v1482 = vld [vmem:[%s1473 + $0x40] sm:$0xff]
      %v1483 = vld [vmem:[%s1473 + $0x48] sm:$0xff]
      %v1484 = vld [vmem:[%s1473 + $0x50] sm:$0xff]
      %v1485 = vld [vmem:[%s1473 + $0x58] sm:$0xff]
      %v1486 = vld [vmem:[%s1473 + $0x60] sm:$0xff]
      %v1487 = vld [vmem:[%s1473 + $0x68] sm:$0xff]
      %v1488 = vld [vmem:[%s1473 + $0x70] sm:$0xff]
      %v1489 = vld [vmem:[%s1473 + $0x78] sm:$0xff]
      %1490 = vmatprep.subr.mxu0 0.0
      %1491 = vmatpush1.msra.mxu0 %v1489
      %1492 = vmatprep.subr.mxu0 0.0
      %1493 = vmatpush1.msra.mxu0 %v1488
      %1494 = vmatprep.subr.mxu0 0.0
      %1495 = vmatpush1.msra.mxu0 %v1487
      %1496 = vmatprep.subr.mxu0 0.0
      %1497 = vmatpush1.msra.mxu0 %v1486
      %1498 = vmatprep.subr.mxu0 0.0
      %1499 = vmatpush1.msra.mxu0 %v1485
      %1500 = vmatprep.subr.mxu0 0.0
      %1501 = vmatpush1.msra.mxu0 %v1484
      %1502 = vmatprep.subr.mxu0 0.0
      %1503 = vmatpush1.msra.mxu0 %v1483
      %1504 = vmatprep.subr.mxu0 0.0
      %1505 = vmatpush1.msra.mxu0 %v1482
      %1506 = vmatprep.subr.mxu0 0.0
      %1507 = vmatpush1.msra.mxu0 %v1481
      %1508 = vmatprep.subr.mxu0 0.0
      %1509 = vmatpush1.msra.mxu0 %v1480
      %1510 = vmatprep.subr.mxu0 0.0
      %1511 = vmatpush1.msra.mxu0 %v1479
      %1512 = vmatprep.subr.mxu0 0.0
      %1513 = vmatpush1.msra.mxu0 %v1478
      %1514 = vmatprep.subr.mxu0 0.0
      %1515 = vmatpush1.msra.mxu0 %v1477
      %1516 = vmatprep.subr.mxu0 0.0
      %1517 = vmatpush1.msra.mxu0 %v1476
      %1518 = vmatprep.subr.mxu0 0.0
      %1519 = vmatpush1.msra.mxu0 %v1475
      %1520 = vmatprep.subr.mxu0 0.0
      %1521 = vmatpush1.msra.mxu0 %v1474
      %1522 = vmatprep.subr.mxu0 0.0
      %1523 = vmatpush2.msra.mxu0 0.0
      %1524 = vmatprep.subr.mxu0 0.0
      %1525 = vmatpush2.msra.mxu0 0.0
      %1526 = vmatprep.subr.mxu0 0.0
      %1527 = vmatpush2.msra.mxu0 0.0
      %1528 = vmatprep.subr.mxu0 0.0
      %1529 = vmatpush2.msra.mxu0 0.0
      %1530 = vmatprep.subr.mxu0 0.0
      %1531 = vmatpush2.msra.mxu0 0.0
      %1532 = vmatprep.subr.mxu0 0.0
      %1533 = vmatpush2.msra.mxu0 0.0
      %1534 = vmatprep.subr.mxu0 0.0
      %1535 = vmatpush2.msra.mxu0 0.0
      %1536 = vmatprep.subr.mxu0 0.0
      %1537 = vmatpush2.msra.mxu0 0.0
      %1538 = vmatprep.subr.mxu0 0.0
      %1539 = vmatpush2.msra.mxu0 0.0
      %1540 = vmatprep.subr.mxu0 0.0
      %1541 = vmatpush2.msra.mxu0 0.0
      %1542 = vmatprep.subr.mxu0 0.0
      %1543 = vmatpush2.msra.mxu0 0.0
      %1544 = vmatprep.subr.mxu0 0.0
      %1545 = vmatpush2.msra.mxu0 0.0
      %1546 = vmatprep.subr.mxu0 0.0
      %1547 = vmatpush2.msra.mxu0 0.0
      %1548 = vmatprep.subr.mxu0 0.0
      %1549 = vmatpush2.msra.mxu0 0.0
      %1550 = vmatprep.subr.mxu0 0.0
      %1551 = vmatpush2.msra.mxu0 0.0
      %1552 = vmatprep.subr.mxu0 0.0
      %1553 = vmatpush2.msra.mxu0 0.0
      %1554 = vmatprep.mubr.f32.mxu0 0.0
      %1555 = vmatmul.mubr.f32.gmra.mxu0 %v1437
      %v1556 = vpop.f32.mrf.mxu0
      %v1557 = vadd.f32 0.0, %v1556
      %v1558 = vpop.f32.mrf.mxu0
      %1559 = vmatprep.mubr.f32.mxu0 0.0
      %1560 = vmatmul.mubr.f32.gmra.mxu0 %v1438
      %v1561 = vpop.f32.mrf.mxu0
      %v1562 = vadd.f32 0.0, %v1561
      %v1563 = vpop.f32.mrf.mxu0
      %1564 = vmatprep.mubr.f32.mxu0 0.0
      %1565 = vmatmul.mubr.f32.gmra.mxu0 %v1439
      %v1566 = vpop.f32.mrf.mxu0
      %v1567 = vadd.f32 0.0, %v1566
      %v1568 = vpop.f32.mrf.mxu0
      %1569 = vmatprep.mubr.f32.mxu0 0.0
      %1570 = vmatmul.mubr.f32.gmra.mxu0 %v1440
      %v1571 = vpop.f32.mrf.mxu0
      %v1572 = vadd.f32 0.0, %v1571
      %v1573 = vpop.f32.mrf.mxu0
      %1574 = vmatprep.mubr.f32.mxu0 0.0
      %1575 = vmatmul.mubr.f32.gmra.mxu0 %v1441
      %v1576 = vpop.f32.mrf.mxu0
      %v1577 = vadd.f32 0.0, %v1576
      %v1578 = vpop.f32.mrf.mxu0
      %1579 = vmatprep.mubr.f32.mxu0 0.0
      %1580 = vmatmul.mubr.f32.gmra.mxu0 %v1442
      %v1581 = vpop.f32.mrf.mxu0
      %v1582 = vadd.f32 0.0, %v1581
      %v1583 = vpop.f32.mrf.mxu0
      %1584 = vmatprep.mubr.f32.mxu0 0.0
      %1585 = vmatmul.mubr.f32.gmra.mxu0 %v1443
      %v1586 = vpop.f32.mrf.mxu0
      %v1587 = vadd.f32 0.0, %v1586
      %v1588 = vpop.f32.mrf.mxu0
      %1589 = vmatprep.mubr.f32.mxu0 0.0
      %1590 = vmatmul.mubr.f32.gmra.mxu0 %v1444
      %v1591 = vpop.f32.mrf.mxu0
      %v1592 = vadd.f32 0.0, %v1591
      %v1593 = vpop.f32.mrf.mxu0
      %1594 = vmatprep.mubr.f32.mxu0 0.0
      %1595 = vmatmul.mubr.f32.gmra.mxu0 %v1445
      %v1596 = vpop.f32.mrf.mxu0
      %v1597 = vadd.f32 0.0, %v1596
      %v1598 = vpop.f32.mrf.mxu0
      %1599 = vmatprep.mubr.f32.mxu0 0.0
      %1600 = vmatmul.mubr.f32.gmra.mxu0 %v1446
      %v1601 = vpop.f32.mrf.mxu0
      %v1602 = vadd.f32 0.0, %v1601
      %v1603 = vpop.f32.mrf.mxu0
      %1604 = vmatprep.mubr.f32.mxu0 0.0
      %1605 = vmatmul.mubr.f32.gmra.mxu0 %v1447
      %v1606 = vpop.f32.mrf.mxu0
      %v1607 = vadd.f32 0.0, %v1606
      %v1608 = vpop.f32.mrf.mxu0
      %1609 = vmatprep.mubr.f32.mxu0 0.0
      %1610 = vmatmul.mubr.f32.gmra.mxu0 %v1448
      %v1611 = vpop.f32.mrf.mxu0
      %v1612 = vadd.f32 0.0, %v1611
      %v1613 = vpop.f32.mrf.mxu0
      %1614 = vmatprep.mubr.f32.mxu0 0.0
      %1615 = vmatmul.mubr.f32.gmra.mxu0 %v1449
      %v1616 = vpop.f32.mrf.mxu0
      %v1617 = vadd.f32 0.0, %v1616
      %v1618 = vpop.f32.mrf.mxu0
      %1619 = vmatprep.mubr.f32.mxu0 0.0
      %1620 = vmatmul.mubr.f32.gmra.mxu0 %v1450
      %v1621 = vpop.f32.mrf.mxu0
      %v1622 = vadd.f32 0.0, %v1621
      %v1623 = vpop.f32.mrf.mxu0
      %1624 = vmatprep.mubr.f32.mxu0 0.0
      %1625 = vmatmul.mubr.f32.gmra.mxu0 %v1451
      %v1626 = vpop.f32.mrf.mxu0
      %v1627 = vadd.f32 0.0, %v1626
      %v1628 = vpop.f32.mrf.mxu0
      %1629 = vmatprep.mubr.f32.mxu0 0.0
      %1630 = vmatmul.mubr.f32.gmra.mxu0 %v1452
      %v1631 = vpop.f32.mrf.mxu0
      %v1632 = vadd.f32 0.0, %v1631
      %v1633 = vpop.f32.mrf.mxu0
      %1634 = vmatprep.mubr.f32.mxu0 0.0
      %1635 = vmatmul.mubr.f32.gmra.mxu0 %v1453
      %v1636 = vpop.f32.mrf.mxu0
      %v1637 = vadd.f32 0.0, %v1636
      %v1638 = vpop.f32.mrf.mxu0
      %1639 = vmatprep.mubr.f32.mxu0 0.0
      %1640 = vmatmul.mubr.f32.gmra.mxu0 %v1454
      %v1641 = vpop.f32.mrf.mxu0
      %v1642 = vadd.f32 0.0, %v1641
      %v1643 = vpop.f32.mrf.mxu0
      %1644 = vmatprep.mubr.f32.mxu0 0.0
      %1645 = vmatmul.mubr.f32.gmra.mxu0 %v1455
      %v1646 = vpop.f32.mrf.mxu0
      %v1647 = vadd.f32 0.0, %v1646
      %v1648 = vpop.f32.mrf.mxu0
      %1649 = vmatprep.mubr.f32.mxu0 0.0
      %1650 = vmatmul.mubr.f32.gmra.mxu0 %v1456
      %v1651 = vpop.f32.mrf.mxu0
      %v1652 = vadd.f32 0.0, %v1651
      %v1653 = vpop.f32.mrf.mxu0
      %1654 = vmatprep.mubr.f32.mxu0 0.0
      %1655 = vmatmul.mubr.f32.gmra.mxu0 %v1457
      %v1656 = vpop.f32.mrf.mxu0
      %v1657 = vadd.f32 0.0, %v1656
      %v1658 = vpop.f32.mrf.mxu0
      %1659 = vmatprep.mubr.f32.mxu0 0.0
      %1660 = vmatmul.mubr.f32.gmra.mxu0 %v1458
      %v1661 = vpop.f32.mrf.mxu0
      %v1662 = vadd.f32 0.0, %v1661
      %v1663 = vpop.f32.mrf.mxu0
      %1664 = vmatprep.mubr.f32.mxu0 0.0
      %1665 = vmatmul.mubr.f32.gmra.mxu0 %v1459
      %v1666 = vpop.f32.mrf.mxu0
      %v1667 = vadd.f32 0.0, %v1666
      %v1668 = vpop.f32.mrf.mxu0
      %1669 = vmatprep.mubr.f32.mxu0 0.0
      %1670 = vmatmul.mubr.f32.gmra.mxu0 %v1460
      %v1671 = vpop.f32.mrf.mxu0
      %v1672 = vadd.f32 0.0, %v1671
      %v1673 = vpop.f32.mrf.mxu0
      %1674 = vmatprep.mubr.f32.mxu0 0.0
      %1675 = vmatmul.mubr.f32.gmra.mxu0 %v1461
      %v1676 = vpop.f32.mrf.mxu0
      %v1677 = vadd.f32 0.0, %v1676
      %v1678 = vpop.f32.mrf.mxu0
      %1679 = vmatprep.mubr.f32.mxu0 0.0
      %1680 = vmatmul.mubr.f32.gmra.mxu0 %v1462
      %v1681 = vpop.f32.mrf.mxu0
      %v1682 = vadd.f32 0.0, %v1681
      %v1683 = vpop.f32.mrf.mxu0
      %1684 = vmatprep.mubr.f32.mxu0 0.0
      %1685 = vmatmul.mubr.f32.gmra.mxu0 %v1463
      %v1686 = vpop.f32.mrf.mxu0
      %v1687 = vadd.f32 0.0, %v1686
      %v1688 = vpop.f32.mrf.mxu0
      %1689 = vmatprep.mubr.f32.mxu0 0.0
      %1690 = vmatmul.mubr.f32.gmra.mxu0 %v1464
      %v1691 = vpop.f32.mrf.mxu0
      %v1692 = vadd.f32 0.0, %v1691
      %v1693 = vpop.f32.mrf.mxu0
      %1694 = vmatprep.mubr.f32.mxu0 0.0
      %1695 = vmatmul.mubr.f32.gmra.mxu0 %v1465
      %v1696 = vpop.f32.mrf.mxu0
      %v1697 = vadd.f32 0.0, %v1696
      %v1698 = vpop.f32.mrf.mxu0
      %1699 = vmatprep.mubr.f32.mxu0 0.0
      %1700 = vmatmul.mubr.f32.gmra.mxu0 %v1466
      %v1701 = vpop.f32.mrf.mxu0
      %v1702 = vadd.f32 0.0, %v1701
      %v1703 = vpop.f32.mrf.mxu0
      %1704 = vmatprep.mubr.f32.mxu0 0.0
      %1705 = vmatmul.mubr.f32.gmra.mxu0 %v1467
      %v1706 = vpop.f32.mrf.mxu0
      %v1707 = vadd.f32 0.0, %v1706
      %v1708 = vpop.f32.mrf.mxu0
      %1709 = vmatprep.mubr.f32.mxu0 0.0
      %1710 = vmatmul.mubr.f32.gmra.mxu0 %v1468
      %v1711 = vpop.f32.mrf.mxu0
      %v1712 = vadd.f32 0.0, %v1711
      %v1713 = vpop.f32.mrf.mxu0
      %1714 = vmatprep.mubr.f32.mxu0 0.0
      %1715 = vmatmul.mubr.f32.gmra.mxu0 %v1469
      %v1716 = vpop.f32.mrf.mxu0
      %v1717 = vadd.f32 0.0, %v1716
      %v1718 = vpop.f32.mrf.mxu0
      %1719 = vmatprep.mubr.f32.mxu0 0.0
      %1720 = vmatmul.mubr.f32.gmra.mxu0 %v1470
      %v1721 = vpop.f32.mrf.mxu0
      %v1722 = vadd.f32 0.0, %v1721
      %v1723 = vpop.f32.mrf.mxu0
      %1724 = vmatprep.mubr.f32.mxu0 0.0
      %1725 = vmatmul.mubr.f32.gmra.mxu0 %v1471
      %v1726 = vpop.f32.mrf.mxu0
      %v1727 = vadd.f32 0.0, %v1726
      %v1728 = vpop.f32.mrf.mxu0
      %1729 = vmatprep.mubr.f32.mxu0 0.0
      %1730 = vmatmul.mubr.f32.gmra.mxu0 %v1472
      %v1731 = vpop.f32.mrf.mxu0
      %v1732 = vadd.f32 0.0, %v1731
      %v1733 = vpop.f32.mrf.mxu0
      %1734 = vdwg.mxu0
      %v1735 = vadd.f32 %v1401, %v1557
      %v1736 = vadd.f32 %v1402, %v1562
      %v1737 = vadd.f32 %v1403, %v1567
      %v1738 = vadd.f32 %v1404, %v1572
      %v1739 = vadd.f32 %v1405, %v1577
      %v1740 = vadd.f32 %v1406, %v1582
      %v1741 = vadd.f32 %v1407, %v1587
      %v1742 = vadd.f32 %v1408, %v1592
      %v1743 = vadd.f32 %v1409, %v1597
      %v1744 = vadd.f32 %v1410, %v1602
      %v1745 = vadd.f32 %v1411, %v1607
      %v1746 = vadd.f32 %v1412, %v1612
      %v1747 = vadd.f32 %v1413, %v1617
      %v1748 = vadd.f32 %v1414, %v1622
      %v1749 = vadd.f32 %v1415, %v1627
      %v1750 = vadd.f32 %v1416, %v1632
      %v1751 = vadd.f32 %v1417, %v1637
      %v1752 = vadd.f32 %v1418, %v1642
      %v1753 = vadd.f32 %v1419, %v1647
      %v1754 = vadd.f32 %v1420, %v1652
      %v1755 = vadd.f32 %v1421, %v1657
      %v1756 = vadd.f32 %v1422, %v1662
      %v1757 = vadd.f32 %v1423, %v1667
      %v1758 = vadd.f32 %v1424, %v1672
      %v1759 = vadd.f32 %v1425, %v1677
      %v1760 = vadd.f32 %v1426, %v1682
      %v1761 = vadd.f32 %v1427, %v1687
      %v1762 = vadd.f32 %v1428, %v1692
      %v1763 = vadd.f32 %v1429, %v1697
      %v1764 = vadd.f32 %v1430, %v1702
      %v1765 = vadd.f32 %v1431, %v1707
      %v1766 = vadd.f32 %v1432, %v1712
      %v1767 = vadd.f32 %v1433, %v1717
      %v1768 = vadd.f32 %v1434, %v1722
      %v1769 = vadd.f32 %v1435, %v1727
      %v1770 = vadd.f32 %v1436, %v1732
      %v1771 = vld [vmem:[%s166 + $0x14] sm:$0xff]
      %v1772 = vld [vmem:[%s166 + $0x1c] sm:$0xff]
      %v1773 = vld [vmem:[%s166 + $0x24] sm:$0xff]
      %v1774 = vld [vmem:[%s166 + $0x2c] sm:$0xff]
      %v1775 = vld [vmem:[%s166 + $0x34] sm:$0xff]
      %v1776 = vld [vmem:[%s166 + $0x3c] sm:$0xff]
      %v1777 = vld [vmem:[%s166 + $0x44] sm:$0xff]
      %v1778 = vld [vmem:[%s166 + $0x4c] sm:$0xff]
      %v1779 = vld [vmem:[%s166 + $0x54] sm:$0xff]
      %v1780 = vld [vmem:[%s166 + $0x5c] sm:$0xff]
      %v1781 = vld [vmem:[%s166 + $0x64] sm:$0xff]
      %v1782 = vld [vmem:[%s166 + $0x6c] sm:$0xff]
      %v1783 = vld [vmem:[%s166 + $0x74] sm:$0xff]
      %v1784 = vld [vmem:[%s166 + $0x7c] sm:$0xff]
      %v1785 = vld [vmem:[%s166 + $0x84] sm:$0xff]
      %v1786 = vld [vmem:[%s166 + $0x8c] sm:$0xff]
      %v1787 = vld [vmem:[%s166 + $0x94] sm:$0xff]
      %v1788 = vld [vmem:[%s166 + $0x9c] sm:$0xff]
      %v1789 = vld [vmem:[%s166 + $0xa4] sm:$0xff]
      %v1790 = vld [vmem:[%s166 + $0xac] sm:$0xff]
      %v1791 = vld [vmem:[%s166 + $0xb4] sm:$0xff]
      %v1792 = vld [vmem:[%s166 + $0xbc] sm:$0xff]
      %v1793 = vld [vmem:[%s166 + $0xc4] sm:$0xff]
      %v1794 = vld [vmem:[%s166 + $0xcc] sm:$0xff]
      %v1795 = vld [vmem:[%s166 + $0xd4] sm:$0xff]
      %v1796 = vld [vmem:[%s166 + $0xdc] sm:$0xff]
      %v1797 = vld [vmem:[%s166 + $0xe4] sm:$0xff]
      %v1798 = vld [vmem:[%s166 + $0xec] sm:$0xff]
      %v1799 = vld [vmem:[%s166 + $0xf4] sm:$0xff]
      %v1800 = vld [vmem:[%s166 + $0xfc] sm:$0xff]
      %v1801 = vld [vmem:[%s166 + $0x104] sm:$0xff]
      %v1802 = vld [vmem:[%s166 + $0x10c] sm:$0xff]
      %v1803 = vld [vmem:[%s166 + $0x114] sm:$0xff]
      %v1804 = vld [vmem:[%s166 + $0x11c] sm:$0xff]
      %v1805 = vld [vmem:[%s166 + $0x124] sm:$0xff]
      %v1806 = vld [vmem:[%s166 + $0x12c] sm:$0xff]
      %s1807 = scalar_lea.vmem %s1, 640
      %v1808 = vld [vmem:[%s1807] sm:$0xff]
      %v1809 = vld [vmem:[%s1807 + $0x8] sm:$0xff]
      %v1810 = vld [vmem:[%s1807 + $0x10] sm:$0xff]
      %v1811 = vld [vmem:[%s1807 + $0x18] sm:$0xff]
      %v1812 = vld [vmem:[%s1807 + $0x20] sm:$0xff]
      %v1813 = vld [vmem:[%s1807 + $0x28] sm:$0xff]
      %v1814 = vld [vmem:[%s1807 + $0x30] sm:$0xff]
      %v1815 = vld [vmem:[%s1807 + $0x38] sm:$0xff]
      %v1816 = vld [vmem:[%s1807 + $0x40] sm:$0xff]
      %v1817 = vld [vmem:[%s1807 + $0x48] sm:$0xff]
      %v1818 = vld [vmem:[%s1807 + $0x50] sm:$0xff]
      %v1819 = vld [vmem:[%s1807 + $0x58] sm:$0xff]
      %v1820 = vld [vmem:[%s1807 + $0x60] sm:$0xff]
      %v1821 = vld [vmem:[%s1807 + $0x68] sm:$0xff]
      %v1822 = vld [vmem:[%s1807 + $0x70] sm:$0xff]
      %v1823 = vld [vmem:[%s1807 + $0x78] sm:$0xff]
      %1824 = vmatprep.subr.mxu0 0.0
      %1825 = vmatpush1.msra.mxu0 %v1823
      %1826 = vmatprep.subr.mxu0 0.0
      %1827 = vmatpush1.msra.mxu0 %v1822
      %1828 = vmatprep.subr.mxu0 0.0
      %1829 = vmatpush1.msra.mxu0 %v1821
      %1830 = vmatprep.subr.mxu0 0.0
      %1831 = vmatpush1.msra.mxu0 %v1820
      %1832 = vmatprep.subr.mxu0 0.0
      %1833 = vmatpush1.msra.mxu0 %v1819
      %1834 = vmatprep.subr.mxu0 0.0
      %1835 = vmatpush1.msra.mxu0 %v1818
      %1836 = vmatprep.subr.mxu0 0.0
      %1837 = vmatpush1.msra.mxu0 %v1817
      %1838 = vmatprep.subr.mxu0 0.0
      %1839 = vmatpush1.msra.mxu0 %v1816
      %1840 = vmatprep.subr.mxu0 0.0
      %1841 = vmatpush1.msra.mxu0 %v1815
      %1842 = vmatprep.subr.mxu0 0.0
      %1843 = vmatpush1.msra.mxu0 %v1814
      %1844 = vmatprep.subr.mxu0 0.0
      %1845 = vmatpush1.msra.mxu0 %v1813
      %1846 = vmatprep.subr.mxu0 0.0
      %1847 = vmatpush1.msra.mxu0 %v1812
      %1848 = vmatprep.subr.mxu0 0.0
      %1849 = vmatpush1.msra.mxu0 %v1811
      %1850 = vmatprep.subr.mxu0 0.0
      %1851 = vmatpush1.msra.mxu0 %v1810
      %1852 = vmatprep.subr.mxu0 0.0
      %1853 = vmatpush1.msra.mxu0 %v1809
      %1854 = vmatprep.subr.mxu0 0.0
      %1855 = vmatpush1.msra.mxu0 %v1808
      %1856 = vmatprep.subr.mxu0 0.0
      %1857 = vmatpush2.msra.mxu0 0.0
      %1858 = vmatprep.subr.mxu0 0.0
      %1859 = vmatpush2.msra.mxu0 0.0
      %1860 = vmatprep.subr.mxu0 0.0
      %1861 = vmatpush2.msra.mxu0 0.0
      %1862 = vmatprep.subr.mxu0 0.0
      %1863 = vmatpush2.msra.mxu0 0.0
      %1864 = vmatprep.subr.mxu0 0.0
      %1865 = vmatpush2.msra.mxu0 0.0
      %1866 = vmatprep.subr.mxu0 0.0
      %1867 = vmatpush2.msra.mxu0 0.0
      %1868 = vmatprep.subr.mxu0 0.0
      %1869 = vmatpush2.msra.mxu0 0.0
      %1870 = vmatprep.subr.mxu0 0.0
      %1871 = vmatpush2.msra.mxu0 0.0
      %1872 = vmatprep.subr.mxu0 0.0
      %1873 = vmatpush2.msra.mxu0 0.0
      %1874 = vmatprep.subr.mxu0 0.0
      %1875 = vmatpush2.msra.mxu0 0.0
      %1876 = vmatprep.subr.mxu0 0.0
      %1877 = vmatpush2.msra.mxu0 0.0
      %1878 = vmatprep.subr.mxu0 0.0
      %1879 = vmatpush2.msra.mxu0 0.0
      %1880 = vmatprep.subr.mxu0 0.0
      %1881 = vmatpush2.msra.mxu0 0.0
      %1882 = vmatprep.subr.mxu0 0.0
      %1883 = vmatpush2.msra.mxu0 0.0
      %1884 = vmatprep.subr.mxu0 0.0
      %1885 = vmatpush2.msra.mxu0 0.0
      %1886 = vmatprep.subr.mxu0 0.0
      %1887 = vmatpush2.msra.mxu0 0.0
      %1888 = vmatprep.mubr.f32.mxu0 0.0
      %1889 = vmatmul.mubr.f32.gmra.mxu0 %v1771
      %v1890 = vpop.f32.mrf.mxu0
      %v1891 = vadd.f32 0.0, %v1890
      %v1892 = vpop.f32.mrf.mxu0
      %1893 = vmatprep.mubr.f32.mxu0 0.0
      %1894 = vmatmul.mubr.f32.gmra.mxu0 %v1772
      %v1895 = vpop.f32.mrf.mxu0
      %v1896 = vadd.f32 0.0, %v1895
      %v1897 = vpop.f32.mrf.mxu0
      %1898 = vmatprep.mubr.f32.mxu0 0.0
      %1899 = vmatmul.mubr.f32.gmra.mxu0 %v1773
      %v1900 = vpop.f32.mrf.mxu0
      %v1901 = vadd.f32 0.0, %v1900
      %v1902 = vpop.f32.mrf.mxu0
      %1903 = vmatprep.mubr.f32.mxu0 0.0
      %1904 = vmatmul.mubr.f32.gmra.mxu0 %v1774
      %v1905 = vpop.f32.mrf.mxu0
      %v1906 = vadd.f32 0.0, %v1905
      %v1907 = vpop.f32.mrf.mxu0
      %1908 = vmatprep.mubr.f32.mxu0 0.0
      %1909 = vmatmul.mubr.f32.gmra.mxu0 %v1775
      %v1910 = vpop.f32.mrf.mxu0
      %v1911 = vadd.f32 0.0, %v1910
      %v1912 = vpop.f32.mrf.mxu0
      %1913 = vmatprep.mubr.f32.mxu0 0.0
      %1914 = vmatmul.mubr.f32.gmra.mxu0 %v1776
      %v1915 = vpop.f32.mrf.mxu0
      %v1916 = vadd.f32 0.0, %v1915
      %v1917 = vpop.f32.mrf.mxu0
      %1918 = vmatprep.mubr.f32.mxu0 0.0
      %1919 = vmatmul.mubr.f32.gmra.mxu0 %v1777
      %v1920 = vpop.f32.mrf.mxu0
      %v1921 = vadd.f32 0.0, %v1920
      %v1922 = vpop.f32.mrf.mxu0
      %1923 = vmatprep.mubr.f32.mxu0 0.0
      %1924 = vmatmul.mubr.f32.gmra.mxu0 %v1778
      %v1925 = vpop.f32.mrf.mxu0
      %v1926 = vadd.f32 0.0, %v1925
      %v1927 = vpop.f32.mrf.mxu0
      %1928 = vmatprep.mubr.f32.mxu0 0.0
      %1929 = vmatmul.mubr.f32.gmra.mxu0 %v1779
      %v1930 = vpop.f32.mrf.mxu0
      %v1931 = vadd.f32 0.0, %v1930
      %v1932 = vpop.f32.mrf.mxu0
      %1933 = vmatprep.mubr.f32.mxu0 0.0
      %1934 = vmatmul.mubr.f32.gmra.mxu0 %v1780
      %v1935 = vpop.f32.mrf.mxu0
      %v1936 = vadd.f32 0.0, %v1935
      %v1937 = vpop.f32.mrf.mxu0
      %1938 = vmatprep.mubr.f32.mxu0 0.0
      %1939 = vmatmul.mubr.f32.gmra.mxu0 %v1781
      %v1940 = vpop.f32.mrf.mxu0
      %v1941 = vadd.f32 0.0, %v1940
      %v1942 = vpop.f32.mrf.mxu0
      %1943 = vmatprep.mubr.f32.mxu0 0.0
      %1944 = vmatmul.mubr.f32.gmra.mxu0 %v1782
      %v1945 = vpop.f32.mrf.mxu0
      %v1946 = vadd.f32 0.0, %v1945
      %v1947 = vpop.f32.mrf.mxu0
      %1948 = vmatprep.mubr.f32.mxu0 0.0
      %1949 = vmatmul.mubr.f32.gmra.mxu0 %v1783
      %v1950 = vpop.f32.mrf.mxu0
      %v1951 = vadd.f32 0.0, %v1950
      %v1952 = vpop.f32.mrf.mxu0
      %1953 = vmatprep.mubr.f32.mxu0 0.0
      %1954 = vmatmul.mubr.f32.gmra.mxu0 %v1784
      %v1955 = vpop.f32.mrf.mxu0
      %v1956 = vadd.f32 0.0, %v1955
      %v1957 = vpop.f32.mrf.mxu0
      %1958 = vmatprep.mubr.f32.mxu0 0.0
      %1959 = vmatmul.mubr.f32.gmra.mxu0 %v1785
      %v1960 = vpop.f32.mrf.mxu0
      %v1961 = vadd.f32 0.0, %v1960
      %v1962 = vpop.f32.mrf.mxu0
      %1963 = vmatprep.mubr.f32.mxu0 0.0
      %1964 = vmatmul.mubr.f32.gmra.mxu0 %v1786
      %v1965 = vpop.f32.mrf.mxu0
      %v1966 = vadd.f32 0.0, %v1965
      %v1967 = vpop.f32.mrf.mxu0
      %1968 = vmatprep.mubr.f32.mxu0 0.0
      %1969 = vmatmul.mubr.f32.gmra.mxu0 %v1787
      %v1970 = vpop.f32.mrf.mxu0
      %v1971 = vadd.f32 0.0, %v1970
      %v1972 = vpop.f32.mrf.mxu0
      %1973 = vmatprep.mubr.f32.mxu0 0.0
      %1974 = vmatmul.mubr.f32.gmra.mxu0 %v1788
      %v1975 = vpop.f32.mrf.mxu0
      %v1976 = vadd.f32 0.0, %v1975
      %v1977 = vpop.f32.mrf.mxu0
      %1978 = vmatprep.mubr.f32.mxu0 0.0
      %1979 = vmatmul.mubr.f32.gmra.mxu0 %v1789
      %v1980 = vpop.f32.mrf.mxu0
      %v1981 = vadd.f32 0.0, %v1980
      %v1982 = vpop.f32.mrf.mxu0
      %1983 = vmatprep.mubr.f32.mxu0 0.0
      %1984 = vmatmul.mubr.f32.gmra.mxu0 %v1790
      %v1985 = vpop.f32.mrf.mxu0
      %v1986 = vadd.f32 0.0, %v1985
      %v1987 = vpop.f32.mrf.mxu0
      %1988 = vmatprep.mubr.f32.mxu0 0.0
      %1989 = vmatmul.mubr.f32.gmra.mxu0 %v1791
      %v1990 = vpop.f32.mrf.mxu0
      %v1991 = vadd.f32 0.0, %v1990
      %v1992 = vpop.f32.mrf.mxu0
      %1993 = vmatprep.mubr.f32.mxu0 0.0
      %1994 = vmatmul.mubr.f32.gmra.mxu0 %v1792
      %v1995 = vpop.f32.mrf.mxu0
      %v1996 = vadd.f32 0.0, %v1995
      %v1997 = vpop.f32.mrf.mxu0
      %1998 = vmatprep.mubr.f32.mxu0 0.0
      %1999 = vmatmul.mubr.f32.gmra.mxu0 %v1793
      %v2000 = vpop.f32.mrf.mxu0
      %v2001 = vadd.f32 0.0, %v2000
      %v2002 = vpop.f32.mrf.mxu0
      %2003 = vmatprep.mubr.f32.mxu0 0.0
      %2004 = vmatmul.mubr.f32.gmra.mxu0 %v1794
      %v2005 = vpop.f32.mrf.mxu0
      %v2006 = vadd.f32 0.0, %v2005
      %v2007 = vpop.f32.mrf.mxu0
      %2008 = vmatprep.mubr.f32.mxu0 0.0
      %2009 = vmatmul.mubr.f32.gmra.mxu0 %v1795
      %v2010 = vpop.f32.mrf.mxu0
      %v2011 = vadd.f32 0.0, %v2010
      %v2012 = vpop.f32.mrf.mxu0
      %2013 = vmatprep.mubr.f32.mxu0 0.0
      %2014 = vmatmul.mubr.f32.gmra.mxu0 %v1796
      %v2015 = vpop.f32.mrf.mxu0
      %v2016 = vadd.f32 0.0, %v2015
      %v2017 = vpop.f32.mrf.mxu0
      %2018 = vmatprep.mubr.f32.mxu0 0.0
      %2019 = vmatmul.mubr.f32.gmra.mxu0 %v1797
      %v2020 = vpop.f32.mrf.mxu0
      %v2021 = vadd.f32 0.0, %v2020
      %v2022 = vpop.f32.mrf.mxu0
      %2023 = vmatprep.mubr.f32.mxu0 0.0
      %2024 = vmatmul.mubr.f32.gmra.mxu0 %v1798
      %v2025 = vpop.f32.mrf.mxu0
      %v2026 = vadd.f32 0.0, %v2025
      %v2027 = vpop.f32.mrf.mxu0
      %2028 = vmatprep.mubr.f32.mxu0 0.0
      %2029 = vmatmul.mubr.f32.gmra.mxu0 %v1799
      %v2030 = vpop.f32.mrf.mxu0
      %v2031 = vadd.f32 0.0, %v2030
      %v2032 = vpop.f32.mrf.mxu0
      %2033 = vmatprep.mubr.f32.mxu0 0.0
      %2034 = vmatmul.mubr.f32.gmra.mxu0 %v1800
      %v2035 = vpop.f32.mrf.mxu0
      %v2036 = vadd.f32 0.0, %v2035
      %v2037 = vpop.f32.mrf.mxu0
      %2038 = vmatprep.mubr.f32.mxu0 0.0
      %2039 = vmatmul.mubr.f32.gmra.mxu0 %v1801
      %v2040 = vpop.f32.mrf.mxu0
      %v2041 = vadd.f32 0.0, %v2040
      %v2042 = vpop.f32.mrf.mxu0
      %2043 = vmatprep.mubr.f32.mxu0 0.0
      %2044 = vmatmul.mubr.f32.gmra.mxu0 %v1802
      %v2045 = vpop.f32.mrf.mxu0
      %v2046 = vadd.f32 0.0, %v2045
      %v2047 = vpop.f32.mrf.mxu0
      %2048 = vmatprep.mubr.f32.mxu0 0.0
      %2049 = vmatmul.mubr.f32.gmra.mxu0 %v1803
      %v2050 = vpop.f32.mrf.mxu0
      %v2051 = vadd.f32 0.0, %v2050
      %v2052 = vpop.f32.mrf.mxu0
      %2053 = vmatprep.mubr.f32.mxu0 0.0
      %2054 = vmatmul.mubr.f32.gmra.mxu0 %v1804
      %v2055 = vpop.f32.mrf.mxu0
      %v2056 = vadd.f32 0.0, %v2055
      %v2057 = vpop.f32.mrf.mxu0
      %2058 = vmatprep.mubr.f32.mxu0 0.0
      %2059 = vmatmul.mubr.f32.gmra.mxu0 %v1805
      %v2060 = vpop.f32.mrf.mxu0
      %v2061 = vadd.f32 0.0, %v2060
      %v2062 = vpop.f32.mrf.mxu0
      %2063 = vmatprep.mubr.f32.mxu0 0.0
      %2064 = vmatmul.mubr.f32.gmra.mxu0 %v1806
      %v2065 = vpop.f32.mrf.mxu0
      %v2066 = vadd.f32 0.0, %v2065
      %v2067 = vpop.f32.mrf.mxu0
      %2068 = vdwg.mxu0
      %v2069 = vadd.f32 %v1735, %v1891
      %v2070 = vadd.f32 %v1736, %v1896
      %v2071 = vadd.f32 %v1737, %v1901
      %v2072 = vadd.f32 %v1738, %v1906
      %v2073 = vadd.f32 %v1739, %v1911
      %v2074 = vadd.f32 %v1740, %v1916
      %v2075 = vadd.f32 %v1741, %v1921
      %v2076 = vadd.f32 %v1742, %v1926
      %v2077 = vadd.f32 %v1743, %v1931
      %v2078 = vadd.f32 %v1744, %v1936
      %v2079 = vadd.f32 %v1745, %v1941
      %v2080 = vadd.f32 %v1746, %v1946
      %v2081 = vadd.f32 %v1747, %v1951
      %v2082 = vadd.f32 %v1748, %v1956
      %v2083 = vadd.f32 %v1749, %v1961
      %v2084 = vadd.f32 %v1750, %v1966
      %v2085 = vadd.f32 %v1751, %v1971
      %v2086 = vadd.f32 %v1752, %v1976
      %v2087 = vadd.f32 %v1753, %v1981
      %v2088 = vadd.f32 %v1754, %v1986
      %v2089 = vadd.f32 %v1755, %v1991
      %v2090 = vadd.f32 %v1756, %v1996
      %v2091 = vadd.f32 %v1757, %v2001
      %v2092 = vadd.f32 %v1758, %v2006
      %v2093 = vadd.f32 %v1759, %v2011
      %v2094 = vadd.f32 %v1760, %v2016
      %v2095 = vadd.f32 %v1761, %v2021
      %v2096 = vadd.f32 %v1762, %v2026
      %v2097 = vadd.f32 %v1763, %v2031
      %v2098 = vadd.f32 %v1764, %v2036
      %v2099 = vadd.f32 %v1765, %v2041
      %v2100 = vadd.f32 %v1766, %v2046
      %v2101 = vadd.f32 %v1767, %v2051
      %v2102 = vadd.f32 %v1768, %v2056
      %v2103 = vadd.f32 %v1769, %v2061
      %v2104 = vadd.f32 %v1770, %v2066
      %v2105 = vld [vmem:[%s166 + $0x24] sm:$0xff]
      %v2106 = vld [vmem:[%s166 + $0x2c] sm:$0xff]
      %v2107 = vld [vmem:[%s166 + $0x34] sm:$0xff]
      %v2108 = vld [vmem:[%s166 + $0x3c] sm:$0xff]
      %v2109 = vld [vmem:[%s166 + $0x44] sm:$0xff]
      %v2110 = vld [vmem:[%s166 + $0x4c] sm:$0xff]
      %v2111 = vld [vmem:[%s166 + $0x54] sm:$0xff]
      %v2112 = vld [vmem:[%s166 + $0x5c] sm:$0xff]
      %v2113 = vld [vmem:[%s166 + $0x64] sm:$0xff]
      %v2114 = vld [vmem:[%s166 + $0x6c] sm:$0xff]
      %v2115 = vld [vmem:[%s166 + $0x74] sm:$0xff]
      %v2116 = vld [vmem:[%s166 + $0x7c] sm:$0xff]
      %v2117 = vld [vmem:[%s166 + $0x84] sm:$0xff]
      %v2118 = vld [vmem:[%s166 + $0x8c] sm:$0xff]
      %v2119 = vld [vmem:[%s166 + $0x94] sm:$0xff]
      %v2120 = vld [vmem:[%s166 + $0x9c] sm:$0xff]
      %v2121 = vld [vmem:[%s166 + $0xa4] sm:$0xff]
      %v2122 = vld [vmem:[%s166 + $0xac] sm:$0xff]
      %v2123 = vld [vmem:[%s166 + $0xb4] sm:$0xff]
      %v2124 = vld [vmem:[%s166 + $0xbc] sm:$0xff]
      %v2125 = vld [vmem:[%s166 + $0xc4] sm:$0xff]
      %v2126 = vld [vmem:[%s166 + $0xcc] sm:$0xff]
      %v2127 = vld [vmem:[%s166 + $0xd4] sm:$0xff]
      %v2128 = vld [vmem:[%s166 + $0xdc] sm:$0xff]
      %v2129 = vld [vmem:[%s166 + $0xe4] sm:$0xff]
      %v2130 = vld [vmem:[%s166 + $0xec] sm:$0xff]
      %v2131 = vld [vmem:[%s166 + $0xf4] sm:$0xff]
      %v2132 = vld [vmem:[%s166 + $0xfc] sm:$0xff]
      %v2133 = vld [vmem:[%s166 + $0x104] sm:$0xff]
      %v2134 = vld [vmem:[%s166 + $0x10c] sm:$0xff]
      %v2135 = vld [vmem:[%s166 + $0x114] sm:$0xff]
      %v2136 = vld [vmem:[%s166 + $0x11c] sm:$0xff]
      %v2137 = vld [vmem:[%s166 + $0x124] sm:$0xff]
      %v2138 = vld [vmem:[%s166 + $0x12c] sm:$0xff]
      %v2139 = vld [vmem:[%s166 + $0x134] sm:$0xff]
      %v2140 = vld [vmem:[%s166 + $0x13c] sm:$0xff]
      %s2141 = scalar_lea.vmem %s1, 768
      %v2142 = vld [vmem:[%s2141] sm:$0xff]
      %v2143 = vld [vmem:[%s2141 + $0x8] sm:$0xff]
      %v2144 = vld [vmem:[%s2141 + $0x10] sm:$0xff]
      %v2145 = vld [vmem:[%s2141 + $0x18] sm:$0xff]
      %v2146 = vld [vmem:[%s2141 + $0x20] sm:$0xff]
      %v2147 = vld [vmem:[%s2141 + $0x28] sm:$0xff]
      %v2148 = vld [vmem:[%s2141 + $0x30] sm:$0xff]
      %v2149 = vld [vmem:[%s2141 + $0x38] sm:$0xff]
      %v2150 = vld [vmem:[%s2141 + $0x40] sm:$0xff]
      %v2151 = vld [vmem:[%s2141 + $0x48] sm:$0xff]
      %v2152 = vld [vmem:[%s2141 + $0x50] sm:$0xff]
      %v2153 = vld [vmem:[%s2141 + $0x58] sm:$0xff]
      %v2154 = vld [vmem:[%s2141 + $0x60] sm:$0xff]
      %v2155 = vld [vmem:[%s2141 + $0x68] sm:$0xff]
      %v2156 = vld [vmem:[%s2141 + $0x70] sm:$0xff]
      %v2157 = vld [vmem:[%s2141 + $0x78] sm:$0xff]
      %2158 = vmatprep.subr.mxu0 0.0
      %2159 = vmatpush1.msra.mxu0 %v2157
      %2160 = vmatprep.subr.mxu0 0.0
      %2161 = vmatpush1.msra.mxu0 %v2156
      %2162 = vmatprep.subr.mxu0 0.0
      %2163 = vmatpush1.msra.mxu0 %v2155
      %2164 = vmatprep.subr.mxu0 0.0
      %2165 = vmatpush1.msra.mxu0 %v2154
      %2166 = vmatprep.subr.mxu0 0.0
      %2167 = vmatpush1.msra.mxu0 %v2153
      %2168 = vmatprep.subr.mxu0 0.0
      %2169 = vmatpush1.msra.mxu0 %v2152
      %2170 = vmatprep.subr.mxu0 0.0
      %2171 = vmatpush1.msra.mxu0 %v2151
      %2172 = vmatprep.subr.mxu0 0.0
      %2173 = vmatpush1.msra.mxu0 %v2150
      %2174 = vmatprep.subr.mxu0 0.0
      %2175 = vmatpush1.msra.mxu0 %v2149
      %2176 = vmatprep.subr.mxu0 0.0
      %2177 = vmatpush1.msra.mxu0 %v2148
      %2178 = vmatprep.subr.mxu0 0.0
      %2179 = vmatpush1.msra.mxu0 %v2147
      %2180 = vmatprep.subr.mxu0 0.0
      %2181 = vmatpush1.msra.mxu0 %v2146
      %2182 = vmatprep.subr.mxu0 0.0
      %2183 = vmatpush1.msra.mxu0 %v2145
      %2184 = vmatprep.subr.mxu0 0.0
      %2185 = vmatpush1.msra.mxu0 %v2144
      %2186 = vmatprep.subr.mxu0 0.0
      %2187 = vmatpush1.msra.mxu0 %v2143
      %2188 = vmatprep.subr.mxu0 0.0
      %2189 = vmatpush1.msra.mxu0 %v2142
      %2190 = vmatprep.subr.mxu0 0.0
      %2191 = vmatpush2.msra.mxu0 0.0
      %2192 = vmatprep.subr.mxu0 0.0
      %2193 = vmatpush2.msra.mxu0 0.0
      %2194 = vmatprep.subr.mxu0 0.0
      %2195 = vmatpush2.msra.mxu0 0.0
      %2196 = vmatprep.subr.mxu0 0.0
      %2197 = vmatpush2.msra.mxu0 0.0
      %2198 = vmatprep.subr.mxu0 0.0
      %2199 = vmatpush2.msra.mxu0 0.0
      %2200 = vmatprep.subr.mxu0 0.0
      %2201 = vmatpush2.msra.mxu0 0.0
      %2202 = vmatprep.subr.mxu0 0.0
      %2203 = vmatpush2.msra.mxu0 0.0
      %2204 = vmatprep.subr.mxu0 0.0
      %2205 = vmatpush2.msra.mxu0 0.0
      %2206 = vmatprep.subr.mxu0 0.0
      %2207 = vmatpush2.msra.mxu0 0.0
      %2208 = vmatprep.subr.mxu0 0.0
      %2209 = vmatpush2.msra.mxu0 0.0
      %2210 = vmatprep.subr.mxu0 0.0
      %2211 = vmatpush2.msra.mxu0 0.0
      %2212 = vmatprep.subr.mxu0 0.0
      %2213 = vmatpush2.msra.mxu0 0.0
      %2214 = vmatprep.subr.mxu0 0.0
      %2215 = vmatpush2.msra.mxu0 0.0
      %2216 = vmatprep.subr.mxu0 0.0
      %2217 = vmatpush2.msra.mxu0 0.0
      %2218 = vmatprep.subr.mxu0 0.0
      %2219 = vmatpush2.msra.mxu0 0.0
      %2220 = vmatprep.subr.mxu0 0.0
      %2221 = vmatpush2.msra.mxu0 0.0
      %2222 = vmatprep.mubr.f32.mxu0 0.0
      %2223 = vmatmul.mubr.f32.gmra.mxu0 %v2105
      %v2224 = vpop.f32.mrf.mxu0
      %v2225 = vadd.f32 0.0, %v2224
      %v2226 = vpop.f32.mrf.mxu0
      %2227 = vmatprep.mubr.f32.mxu0 0.0
      %2228 = vmatmul.mubr.f32.gmra.mxu0 %v2106
      %v2229 = vpop.f32.mrf.mxu0
      %v2230 = vadd.f32 0.0, %v2229
      %v2231 = vpop.f32.mrf.mxu0
      %2232 = vmatprep.mubr.f32.mxu0 0.0
      %2233 = vmatmul.mubr.f32.gmra.mxu0 %v2107
      %v2234 = vpop.f32.mrf.mxu0
      %v2235 = vadd.f32 0.0, %v2234
      %v2236 = vpop.f32.mrf.mxu0
      %2237 = vmatprep.mubr.f32.mxu0 0.0
      %2238 = vmatmul.mubr.f32.gmra.mxu0 %v2108
      %v2239 = vpop.f32.mrf.mxu0
      %v2240 = vadd.f32 0.0, %v2239
      %v2241 = vpop.f32.mrf.mxu0
      %2242 = vmatprep.mubr.f32.mxu0 0.0
      %2243 = vmatmul.mubr.f32.gmra.mxu0 %v2109
      %v2244 = vpop.f32.mrf.mxu0
      %v2245 = vadd.f32 0.0, %v2244
      %v2246 = vpop.f32.mrf.mxu0
      %2247 = vmatprep.mubr.f32.mxu0 0.0
      %2248 = vmatmul.mubr.f32.gmra.mxu0 %v2110
      %v2249 = vpop.f32.mrf.mxu0
      %v2250 = vadd.f32 0.0, %v2249
      %v2251 = vpop.f32.mrf.mxu0
      %2252 = vmatprep.mubr.f32.mxu0 0.0
      %2253 = vmatmul.mubr.f32.gmra.mxu0 %v2111
      %v2254 = vpop.f32.mrf.mxu0
      %v2255 = vadd.f32 0.0, %v2254
      %v2256 = vpop.f32.mrf.mxu0
      %2257 = vmatprep.mubr.f32.mxu0 0.0
      %2258 = vmatmul.mubr.f32.gmra.mxu0 %v2112
      %v2259 = vpop.f32.mrf.mxu0
      %v2260 = vadd.f32 0.0, %v2259
      %v2261 = vpop.f32.mrf.mxu0
      %2262 = vmatprep.mubr.f32.mxu0 0.0
      %2263 = vmatmul.mubr.f32.gmra.mxu0 %v2113
      %v2264 = vpop.f32.mrf.mxu0
      %v2265 = vadd.f32 0.0, %v2264
      %v2266 = vpop.f32.mrf.mxu0
      %2267 = vmatprep.mubr.f32.mxu0 0.0
      %2268 = vmatmul.mubr.f32.gmra.mxu0 %v2114
      %v2269 = vpop.f32.mrf.mxu0
      %v2270 = vadd.f32 0.0, %v2269
      %v2271 = vpop.f32.mrf.mxu0
      %2272 = vmatprep.mubr.f32.mxu0 0.0
      %2273 = vmatmul.mubr.f32.gmra.mxu0 %v2115
      %v2274 = vpop.f32.mrf.mxu0
      %v2275 = vadd.f32 0.0, %v2274
      %v2276 = vpop.f32.mrf.mxu0
      %2277 = vmatprep.mubr.f32.mxu0 0.0
      %2278 = vmatmul.mubr.f32.gmra.mxu0 %v2116
      %v2279 = vpop.f32.mrf.mxu0
      %v2280 = vadd.f32 0.0, %v2279
      %v2281 = vpop.f32.mrf.mxu0
      %2282 = vmatprep.mubr.f32.mxu0 0.0
      %2283 = vmatmul.mubr.f32.gmra.mxu0 %v2117
      %v2284 = vpop.f32.mrf.mxu0
      %v2285 = vadd.f32 0.0, %v2284
      %v2286 = vpop.f32.mrf.mxu0
      %2287 = vmatprep.mubr.f32.mxu0 0.0
      %2288 = vmatmul.mubr.f32.gmra.mxu0 %v2118
      %v2289 = vpop.f32.mrf.mxu0
      %v2290 = vadd.f32 0.0, %v2289
      %v2291 = vpop.f32.mrf.mxu0
      %2292 = vmatprep.mubr.f32.mxu0 0.0
      %2293 = vmatmul.mubr.f32.gmra.mxu0 %v2119
      %v2294 = vpop.f32.mrf.mxu0
      %v2295 = vadd.f32 0.0, %v2294
      %v2296 = vpop.f32.mrf.mxu0
      %2297 = vmatprep.mubr.f32.mxu0 0.0
      %2298 = vmatmul.mubr.f32.gmra.mxu0 %v2120
      %v2299 = vpop.f32.mrf.mxu0
      %v2300 = vadd.f32 0.0, %v2299
      %v2301 = vpop.f32.mrf.mxu0
      %2302 = vmatprep.mubr.f32.mxu0 0.0
      %2303 = vmatmul.mubr.f32.gmra.mxu0 %v2121
      %v2304 = vpop.f32.mrf.mxu0
      %v2305 = vadd.f32 0.0, %v2304
      %v2306 = vpop.f32.mrf.mxu0
      %2307 = vmatprep.mubr.f32.mxu0 0.0
      %2308 = vmatmul.mubr.f32.gmra.mxu0 %v2122
      %v2309 = vpop.f32.mrf.mxu0
      %v2310 = vadd.f32 0.0, %v2309
      %v2311 = vpop.f32.mrf.mxu0
      %2312 = vmatprep.mubr.f32.mxu0 0.0
      %2313 = vmatmul.mubr.f32.gmra.mxu0 %v2123
      %v2314 = vpop.f32.mrf.mxu0
      %v2315 = vadd.f32 0.0, %v2314
      %v2316 = vpop.f32.mrf.mxu0
      %2317 = vmatprep.mubr.f32.mxu0 0.0
      %2318 = vmatmul.mubr.f32.gmra.mxu0 %v2124
      %v2319 = vpop.f32.mrf.mxu0
      %v2320 = vadd.f32 0.0, %v2319
      %v2321 = vpop.f32.mrf.mxu0
      %2322 = vmatprep.mubr.f32.mxu0 0.0
      %2323 = vmatmul.mubr.f32.gmra.mxu0 %v2125
      %v2324 = vpop.f32.mrf.mxu0
      %v2325 = vadd.f32 0.0, %v2324
      %v2326 = vpop.f32.mrf.mxu0
      %2327 = vmatprep.mubr.f32.mxu0 0.0
      %2328 = vmatmul.mubr.f32.gmra.mxu0 %v2126
      %v2329 = vpop.f32.mrf.mxu0
      %v2330 = vadd.f32 0.0, %v2329
      %v2331 = vpop.f32.mrf.mxu0
      %2332 = vmatprep.mubr.f32.mxu0 0.0
      %2333 = vmatmul.mubr.f32.gmra.mxu0 %v2127
      %v2334 = vpop.f32.mrf.mxu0
      %v2335 = vadd.f32 0.0, %v2334
      %v2336 = vpop.f32.mrf.mxu0
      %2337 = vmatprep.mubr.f32.mxu0 0.0
      %2338 = vmatmul.mubr.f32.gmra.mxu0 %v2128
      %v2339 = vpop.f32.mrf.mxu0
      %v2340 = vadd.f32 0.0, %v2339
      %v2341 = vpop.f32.mrf.mxu0
      %2342 = vmatprep.mubr.f32.mxu0 0.0
      %2343 = vmatmul.mubr.f32.gmra.mxu0 %v2129
      %v2344 = vpop.f32.mrf.mxu0
      %v2345 = vadd.f32 0.0, %v2344
      %v2346 = vpop.f32.mrf.mxu0
      %2347 = vmatprep.mubr.f32.mxu0 0.0
      %2348 = vmatmul.mubr.f32.gmra.mxu0 %v2130
      %v2349 = vpop.f32.mrf.mxu0
      %v2350 = vadd.f32 0.0, %v2349
      %v2351 = vpop.f32.mrf.mxu0
      %2352 = vmatprep.mubr.f32.mxu0 0.0
      %2353 = vmatmul.mubr.f32.gmra.mxu0 %v2131
      %v2354 = vpop.f32.mrf.mxu0
      %v2355 = vadd.f32 0.0, %v2354
      %v2356 = vpop.f32.mrf.mxu0
      %2357 = vmatprep.mubr.f32.mxu0 0.0
      %2358 = vmatmul.mubr.f32.gmra.mxu0 %v2132
      %v2359 = vpop.f32.mrf.mxu0
      %v2360 = vadd.f32 0.0, %v2359
      %v2361 = vpop.f32.mrf.mxu0
      %2362 = vmatprep.mubr.f32.mxu0 0.0
      %2363 = vmatmul.mubr.f32.gmra.mxu0 %v2133
      %v2364 = vpop.f32.mrf.mxu0
      %v2365 = vadd.f32 0.0, %v2364
      %v2366 = vpop.f32.mrf.mxu0
      %2367 = vmatprep.mubr.f32.mxu0 0.0
      %2368 = vmatmul.mubr.f32.gmra.mxu0 %v2134
      %v2369 = vpop.f32.mrf.mxu0
      %v2370 = vadd.f32 0.0, %v2369
      %v2371 = vpop.f32.mrf.mxu0
      %2372 = vmatprep.mubr.f32.mxu0 0.0
      %2373 = vmatmul.mubr.f32.gmra.mxu0 %v2135
      %v2374 = vpop.f32.mrf.mxu0
      %v2375 = vadd.f32 0.0, %v2374
      %v2376 = vpop.f32.mrf.mxu0
      %2377 = vmatprep.mubr.f32.mxu0 0.0
      %2378 = vmatmul.mubr.f32.gmra.mxu0 %v2136
      %v2379 = vpop.f32.mrf.mxu0
      %v2380 = vadd.f32 0.0, %v2379
      %v2381 = vpop.f32.mrf.mxu0
      %2382 = vmatprep.mubr.f32.mxu0 0.0
      %2383 = vmatmul.mubr.f32.gmra.mxu0 %v2137
      %v2384 = vpop.f32.mrf.mxu0
      %v2385 = vadd.f32 0.0, %v2384
      %v2386 = vpop.f32.mrf.mxu0
      %2387 = vmatprep.mubr.f32.mxu0 0.0
      %2388 = vmatmul.mubr.f32.gmra.mxu0 %v2138
      %v2389 = vpop.f32.mrf.mxu0
      %v2390 = vadd.f32 0.0, %v2389
      %v2391 = vpop.f32.mrf.mxu0
      %2392 = vmatprep.mubr.f32.mxu0 0.0
      %2393 = vmatmul.mubr.f32.gmra.mxu0 %v2139
      %v2394 = vpop.f32.mrf.mxu0
      %v2395 = vadd.f32 0.0, %v2394
      %v2396 = vpop.f32.mrf.mxu0
      %2397 = vmatprep.mubr.f32.mxu0 0.0
      %2398 = vmatmul.mubr.f32.gmra.mxu0 %v2140
      %v2399 = vpop.f32.mrf.mxu0
      %v2400 = vadd.f32 0.0, %v2399
      %v2401 = vpop.f32.mrf.mxu0
      %2402 = vdwg.mxu0
      %v2403 = vadd.f32 %v2069, %v2225
      %v2404 = vadd.f32 %v2070, %v2230
      %v2405 = vadd.f32 %v2071, %v2235
      %v2406 = vadd.f32 %v2072, %v2240
      %v2407 = vadd.f32 %v2073, %v2245
      %v2408 = vadd.f32 %v2074, %v2250
      %v2409 = vadd.f32 %v2075, %v2255
      %v2410 = vadd.f32 %v2076, %v2260
      %v2411 = vadd.f32 %v2077, %v2265
      %v2412 = vadd.f32 %v2078, %v2270
      %v2413 = vadd.f32 %v2079, %v2275
      %v2414 = vadd.f32 %v2080, %v2280
      %v2415 = vadd.f32 %v2081, %v2285
      %v2416 = vadd.f32 %v2082, %v2290
      %v2417 = vadd.f32 %v2083, %v2295
      %v2418 = vadd.f32 %v2084, %v2300
      %v2419 = vadd.f32 %v2085, %v2305
      %v2420 = vadd.f32 %v2086, %v2310
      %v2421 = vadd.f32 %v2087, %v2315
      %v2422 = vadd.f32 %v2088, %v2320
      %v2423 = vadd.f32 %v2089, %v2325
      %v2424 = vadd.f32 %v2090, %v2330
      %v2425 = vadd.f32 %v2091, %v2335
      %v2426 = vadd.f32 %v2092, %v2340
      %v2427 = vadd.f32 %v2093, %v2345
      %v2428 = vadd.f32 %v2094, %v2350
      %v2429 = vadd.f32 %v2095, %v2355
      %v2430 = vadd.f32 %v2096, %v2360
      %v2431 = vadd.f32 %v2097, %v2365
      %v2432 = vadd.f32 %v2098, %v2370
      %v2433 = vadd.f32 %v2099, %v2375
      %v2434 = vadd.f32 %v2100, %v2380
      %v2435 = vadd.f32 %v2101, %v2385
      %v2436 = vadd.f32 %v2102, %v2390
      %v2437 = vadd.f32 %v2103, %v2395
      %v2438 = vadd.f32 %v2104, %v2400
      %v2439 = vld [vmem:[%s166 + $0x25] sm:$0xff]
      %v2440 = vld [vmem:[%s166 + $0x2d] sm:$0xff]
      %v2441 = vld [vmem:[%s166 + $0x35] sm:$0xff]
      %v2442 = vld [vmem:[%s166 + $0x3d] sm:$0xff]
      %v2443 = vld [vmem:[%s166 + $0x45] sm:$0xff]
      %v2444 = vld [vmem:[%s166 + $0x4d] sm:$0xff]
      %v2445 = vld [vmem:[%s166 + $0x55] sm:$0xff]
      %v2446 = vld [vmem:[%s166 + $0x5d] sm:$0xff]
      %v2447 = vld [vmem:[%s166 + $0x65] sm:$0xff]
      %v2448 = vld [vmem:[%s166 + $0x6d] sm:$0xff]
      %v2449 = vld [vmem:[%s166 + $0x75] sm:$0xff]
      %v2450 = vld [vmem:[%s166 + $0x7d] sm:$0xff]
      %v2451 = vld [vmem:[%s166 + $0x85] sm:$0xff]
      %v2452 = vld [vmem:[%s166 + $0x8d] sm:$0xff]
      %v2453 = vld [vmem:[%s166 + $0x95] sm:$0xff]
      %v2454 = vld [vmem:[%s166 + $0x9d] sm:$0xff]
      %v2455 = vld [vmem:[%s166 + $0xa5] sm:$0xff]
      %v2456 = vld [vmem:[%s166 + $0xad] sm:$0xff]
      %v2457 = vld [vmem:[%s166 + $0xb5] sm:$0xff]
      %v2458 = vld [vmem:[%s166 + $0xbd] sm:$0xff]
      %v2459 = vld [vmem:[%s166 + $0xc5] sm:$0xff]
      %v2460 = vld [vmem:[%s166 + $0xcd] sm:$0xff]
      %v2461 = vld [vmem:[%s166 + $0xd5] sm:$0xff]
      %v2462 = vld [vmem:[%s166 + $0xdd] sm:$0xff]
      %v2463 = vld [vmem:[%s166 + $0xe5] sm:$0xff]
      %v2464 = vld [vmem:[%s166 + $0xed] sm:$0xff]
      %v2465 = vld [vmem:[%s166 + $0xf5] sm:$0xff]
      %v2466 = vld [vmem:[%s166 + $0xfd] sm:$0xff]
      %v2467 = vld [vmem:[%s166 + $0x105] sm:$0xff]
      %v2468 = vld [vmem:[%s166 + $0x10d] sm:$0xff]
      %v2469 = vld [vmem:[%s166 + $0x115] sm:$0xff]
      %v2470 = vld [vmem:[%s166 + $0x11d] sm:$0xff]
      %v2471 = vld [vmem:[%s166 + $0x125] sm:$0xff]
      %v2472 = vld [vmem:[%s166 + $0x12d] sm:$0xff]
      %v2473 = vld [vmem:[%s166 + $0x135] sm:$0xff]
      %v2474 = vld [vmem:[%s166 + $0x13d] sm:$0xff]
      %s2475 = scalar_lea.vmem %s1, 896
      %v2476 = vld [vmem:[%s2475] sm:$0xff]
      %v2477 = vld [vmem:[%s2475 + $0x8] sm:$0xff]
      %v2478 = vld [vmem:[%s2475 + $0x10] sm:$0xff]
      %v2479 = vld [vmem:[%s2475 + $0x18] sm:$0xff]
      %v2480 = vld [vmem:[%s2475 + $0x20] sm:$0xff]
      %v2481 = vld [vmem:[%s2475 + $0x28] sm:$0xff]
      %v2482 = vld [vmem:[%s2475 + $0x30] sm:$0xff]
      %v2483 = vld [vmem:[%s2475 + $0x38] sm:$0xff]
      %v2484 = vld [vmem:[%s2475 + $0x40] sm:$0xff]
      %v2485 = vld [vmem:[%s2475 + $0x48] sm:$0xff]
      %v2486 = vld [vmem:[%s2475 + $0x50] sm:$0xff]
      %v2487 = vld [vmem:[%s2475 + $0x58] sm:$0xff]
      %v2488 = vld [vmem:[%s2475 + $0x60] sm:$0xff]
      %v2489 = vld [vmem:[%s2475 + $0x68] sm:$0xff]
      %v2490 = vld [vmem:[%s2475 + $0x70] sm:$0xff]
      %v2491 = vld [vmem:[%s2475 + $0x78] sm:$0xff]
      %2492 = vmatprep.subr.mxu0 0.0
      %2493 = vmatpush1.msra.mxu0 %v2491
      %2494 = vmatprep.subr.mxu0 0.0
      %2495 = vmatpush1.msra.mxu0 %v2490
      %2496 = vmatprep.subr.mxu0 0.0
      %2497 = vmatpush1.msra.mxu0 %v2489
      %2498 = vmatprep.subr.mxu0 0.0
      %2499 = vmatpush1.msra.mxu0 %v2488
      %2500 = vmatprep.subr.mxu0 0.0
      %2501 = vmatpush1.msra.mxu0 %v2487
      %2502 = vmatprep.subr.mxu0 0.0
      %2503 = vmatpush1.msra.mxu0 %v2486
      %2504 = vmatprep.subr.mxu0 0.0
      %2505 = vmatpush1.msra.mxu0 %v2485
      %2506 = vmatprep.subr.mxu0 0.0
      %2507 = vmatpush1.msra.mxu0 %v2484
      %2508 = vmatprep.subr.mxu0 0.0
      %2509 = vmatpush1.msra.mxu0 %v2483
      %2510 = vmatprep.subr.mxu0 0.0
      %2511 = vmatpush1.msra.mxu0 %v2482
      %2512 = vmatprep.subr.mxu0 0.0
      %2513 = vmatpush1.msra.mxu0 %v2481
      %2514 = vmatprep.subr.mxu0 0.0
      %2515 = vmatpush1.msra.mxu0 %v2480
      %2516 = vmatprep.subr.mxu0 0.0
      %2517 = vmatpush1.msra.mxu0 %v2479
      %2518 = vmatprep.subr.mxu0 0.0
      %2519 = vmatpush1.msra.mxu0 %v2478
      %2520 = vmatprep.subr.mxu0 0.0
      %2521 = vmatpush1.msra.mxu0 %v2477
      %2522 = vmatprep.subr.mxu0 0.0
      %2523 = vmatpush1.msra.mxu0 %v2476
      %2524 = vmatprep.subr.mxu0 0.0
      %2525 = vmatpush2.msra.mxu0 0.0
      %2526 = vmatprep.subr.mxu0 0.0
      %2527 = vmatpush2.msra.mxu0 0.0
      %2528 = vmatprep.subr.mxu0 0.0
      %2529 = vmatpush2.msra.mxu0 0.0
      %2530 = vmatprep.subr.mxu0 0.0
      %2531 = vmatpush2.msra.mxu0 0.0
      %2532 = vmatprep.subr.mxu0 0.0
      %2533 = vmatpush2.msra.mxu0 0.0
      %2534 = vmatprep.subr.mxu0 0.0
      %2535 = vmatpush2.msra.mxu0 0.0
      %2536 = vmatprep.subr.mxu0 0.0
      %2537 = vmatpush2.msra.mxu0 0.0
      %2538 = vmatprep.subr.mxu0 0.0
      %2539 = vmatpush2.msra.mxu0 0.0
      %2540 = vmatprep.subr.mxu0 0.0
      %2541 = vmatpush2.msra.mxu0 0.0
      %2542 = vmatprep.subr.mxu0 0.0
      %2543 = vmatpush2.msra.mxu0 0.0
      %2544 = vmatprep.subr.mxu0 0.0
      %2545 = vmatpush2.msra.mxu0 0.0
      %2546 = vmatprep.subr.mxu0 0.0
      %2547 = vmatpush2.msra.mxu0 0.0
      %2548 = vmatprep.subr.mxu0 0.0
      %2549 = vmatpush2.msra.mxu0 0.0
      %2550 = vmatprep.subr.mxu0 0.0
      %2551 = vmatpush2.msra.mxu0 0.0
      %2552 = vmatprep.subr.mxu0 0.0
      %2553 = vmatpush2.msra.mxu0 0.0
      %2554 = vmatprep.subr.mxu0 0.0
      %2555 = vmatpush2.msra.mxu0 0.0
      %2556 = vmatprep.mubr.f32.mxu0 0.0
      %2557 = vmatmul.mubr.f32.gmra.mxu0 %v2439
      %v2558 = vpop.f32.mrf.mxu0
      %v2559 = vadd.f32 0.0, %v2558
      %v2560 = vpop.f32.mrf.mxu0
      %2561 = vmatprep.mubr.f32.mxu0 0.0
      %2562 = vmatmul.mubr.f32.gmra.mxu0 %v2440
      %v2563 = vpop.f32.mrf.mxu0
      %v2564 = vadd.f32 0.0, %v2563
      %v2565 = vpop.f32.mrf.mxu0
      %2566 = vmatprep.mubr.f32.mxu0 0.0
      %2567 = vmatmul.mubr.f32.gmra.mxu0 %v2441
      %v2568 = vpop.f32.mrf.mxu0
      %v2569 = vadd.f32 0.0, %v2568
      %v2570 = vpop.f32.mrf.mxu0
      %2571 = vmatprep.mubr.f32.mxu0 0.0
      %2572 = vmatmul.mubr.f32.gmra.mxu0 %v2442
      %v2573 = vpop.f32.mrf.mxu0
      %v2574 = vadd.f32 0.0, %v2573
      %v2575 = vpop.f32.mrf.mxu0
      %2576 = vmatprep.mubr.f32.mxu0 0.0
      %2577 = vmatmul.mubr.f32.gmra.mxu0 %v2443
      %v2578 = vpop.f32.mrf.mxu0
      %v2579 = vadd.f32 0.0, %v2578
      %v2580 = vpop.f32.mrf.mxu0
      %2581 = vmatprep.mubr.f32.mxu0 0.0
      %2582 = vmatmul.mubr.f32.gmra.mxu0 %v2444
      %v2583 = vpop.f32.mrf.mxu0
      %v2584 = vadd.f32 0.0, %v2583
      %v2585 = vpop.f32.mrf.mxu0
      %2586 = vmatprep.mubr.f32.mxu0 0.0
      %2587 = vmatmul.mubr.f32.gmra.mxu0 %v2445
      %v2588 = vpop.f32.mrf.mxu0
      %v2589 = vadd.f32 0.0, %v2588
      %v2590 = vpop.f32.mrf.mxu0
      %2591 = vmatprep.mubr.f32.mxu0 0.0
      %2592 = vmatmul.mubr.f32.gmra.mxu0 %v2446
      %v2593 = vpop.f32.mrf.mxu0
      %v2594 = vadd.f32 0.0, %v2593
      %v2595 = vpop.f32.mrf.mxu0
      %2596 = vmatprep.mubr.f32.mxu0 0.0
      %2597 = vmatmul.mubr.f32.gmra.mxu0 %v2447
      %v2598 = vpop.f32.mrf.mxu0
      %v2599 = vadd.f32 0.0, %v2598
      %v2600 = vpop.f32.mrf.mxu0
      %2601 = vmatprep.mubr.f32.mxu0 0.0
      %2602 = vmatmul.mubr.f32.gmra.mxu0 %v2448
      %v2603 = vpop.f32.mrf.mxu0
      %v2604 = vadd.f32 0.0, %v2603
      %v2605 = vpop.f32.mrf.mxu0
      %2606 = vmatprep.mubr.f32.mxu0 0.0
      %2607 = vmatmul.mubr.f32.gmra.mxu0 %v2449
      %v2608 = vpop.f32.mrf.mxu0
      %v2609 = vadd.f32 0.0, %v2608
      %v2610 = vpop.f32.mrf.mxu0
      %2611 = vmatprep.mubr.f32.mxu0 0.0
      %2612 = vmatmul.mubr.f32.gmra.mxu0 %v2450
      %v2613 = vpop.f32.mrf.mxu0
      %v2614 = vadd.f32 0.0, %v2613
      %v2615 = vpop.f32.mrf.mxu0
      %2616 = vmatprep.mubr.f32.mxu0 0.0
      %2617 = vmatmul.mubr.f32.gmra.mxu0 %v2451
      %v2618 = vpop.f32.mrf.mxu0
      %v2619 = vadd.f32 0.0, %v2618
      %v2620 = vpop.f32.mrf.mxu0
      %2621 = vmatprep.mubr.f32.mxu0 0.0
      %2622 = vmatmul.mubr.f32.gmra.mxu0 %v2452
      %v2623 = vpop.f32.mrf.mxu0
      %v2624 = vadd.f32 0.0, %v2623
      %v2625 = vpop.f32.mrf.mxu0
      %2626 = vmatprep.mubr.f32.mxu0 0.0
      %2627 = vmatmul.mubr.f32.gmra.mxu0 %v2453
      %v2628 = vpop.f32.mrf.mxu0
      %v2629 = vadd.f32 0.0, %v2628
      %v2630 = vpop.f32.mrf.mxu0
      %2631 = vmatprep.mubr.f32.mxu0 0.0
      %2632 = vmatmul.mubr.f32.gmra.mxu0 %v2454
      %v2633 = vpop.f32.mrf.mxu0
      %v2634 = vadd.f32 0.0, %v2633
      %v2635 = vpop.f32.mrf.mxu0
      %2636 = vmatprep.mubr.f32.mxu0 0.0
      %2637 = vmatmul.mubr.f32.gmra.mxu0 %v2455
      %v2638 = vpop.f32.mrf.mxu0
      %v2639 = vadd.f32 0.0, %v2638
      %v2640 = vpop.f32.mrf.mxu0
      %2641 = vmatprep.mubr.f32.mxu0 0.0
      %2642 = vmatmul.mubr.f32.gmra.mxu0 %v2456
      %v2643 = vpop.f32.mrf.mxu0
      %v2644 = vadd.f32 0.0, %v2643
      %v2645 = vpop.f32.mrf.mxu0
      %2646 = vmatprep.mubr.f32.mxu0 0.0
      %2647 = vmatmul.mubr.f32.gmra.mxu0 %v2457
      %v2648 = vpop.f32.mrf.mxu0
      %v2649 = vadd.f32 0.0, %v2648
      %v2650 = vpop.f32.mrf.mxu0
      %2651 = vmatprep.mubr.f32.mxu0 0.0
      %2652 = vmatmul.mubr.f32.gmra.mxu0 %v2458
      %v2653 = vpop.f32.mrf.mxu0
      %v2654 = vadd.f32 0.0, %v2653
      %v2655 = vpop.f32.mrf.mxu0
      %2656 = vmatprep.mubr.f32.mxu0 0.0
      %2657 = vmatmul.mubr.f32.gmra.mxu0 %v2459
      %v2658 = vpop.f32.mrf.mxu0
      %v2659 = vadd.f32 0.0, %v2658
      %v2660 = vpop.f32.mrf.mxu0
      %2661 = vmatprep.mubr.f32.mxu0 0.0
      %2662 = vmatmul.mubr.f32.gmra.mxu0 %v2460
      %v2663 = vpop.f32.mrf.mxu0
      %v2664 = vadd.f32 0.0, %v2663
      %v2665 = vpop.f32.mrf.mxu0
      %2666 = vmatprep.mubr.f32.mxu0 0.0
      %2667 = vmatmul.mubr.f32.gmra.mxu0 %v2461
      %v2668 = vpop.f32.mrf.mxu0
      %v2669 = vadd.f32 0.0, %v2668
      %v2670 = vpop.f32.mrf.mxu0
      %2671 = vmatprep.mubr.f32.mxu0 0.0
      %2672 = vmatmul.mubr.f32.gmra.mxu0 %v2462
      %v2673 = vpop.f32.mrf.mxu0
      %v2674 = vadd.f32 0.0, %v2673
      %v2675 = vpop.f32.mrf.mxu0
      %2676 = vmatprep.mubr.f32.mxu0 0.0
      %2677 = vmatmul.mubr.f32.gmra.mxu0 %v2463
      %v2678 = vpop.f32.mrf.mxu0
      %v2679 = vadd.f32 0.0, %v2678
      %v2680 = vpop.f32.mrf.mxu0
      %2681 = vmatprep.mubr.f32.mxu0 0.0
      %2682 = vmatmul.mubr.f32.gmra.mxu0 %v2464
      %v2683 = vpop.f32.mrf.mxu0
      %v2684 = vadd.f32 0.0, %v2683
      %v2685 = vpop.f32.mrf.mxu0
      %2686 = vmatprep.mubr.f32.mxu0 0.0
      %2687 = vmatmul.mubr.f32.gmra.mxu0 %v2465
      %v2688 = vpop.f32.mrf.mxu0
      %v2689 = vadd.f32 0.0, %v2688
      %v2690 = vpop.f32.mrf.mxu0
      %2691 = vmatprep.mubr.f32.mxu0 0.0
      %2692 = vmatmul.mubr.f32.gmra.mxu0 %v2466
      %v2693 = vpop.f32.mrf.mxu0
      %v2694 = vadd.f32 0.0, %v2693
      %v2695 = vpop.f32.mrf.mxu0
      %2696 = vmatprep.mubr.f32.mxu0 0.0
      %2697 = vmatmul.mubr.f32.gmra.mxu0 %v2467
      %v2698 = vpop.f32.mrf.mxu0
      %v2699 = vadd.f32 0.0, %v2698
      %v2700 = vpop.f32.mrf.mxu0
      %2701 = vmatprep.mubr.f32.mxu0 0.0
      %2702 = vmatmul.mubr.f32.gmra.mxu0 %v2468
      %v2703 = vpop.f32.mrf.mxu0
      %v2704 = vadd.f32 0.0, %v2703
      %v2705 = vpop.f32.mrf.mxu0
      %2706 = vmatprep.mubr.f32.mxu0 0.0
      %2707 = vmatmul.mubr.f32.gmra.mxu0 %v2469
      %v2708 = vpop.f32.mrf.mxu0
      %v2709 = vadd.f32 0.0, %v2708
      %v2710 = vpop.f32.mrf.mxu0
      %2711 = vmatprep.mubr.f32.mxu0 0.0
      %2712 = vmatmul.mubr.f32.gmra.mxu0 %v2470
      %v2713 = vpop.f32.mrf.mxu0
      %v2714 = vadd.f32 0.0, %v2713
      %v2715 = vpop.f32.mrf.mxu0
      %2716 = vmatprep.mubr.f32.mxu0 0.0
      %2717 = vmatmul.mubr.f32.gmra.mxu0 %v2471
      %v2718 = vpop.f32.mrf.mxu0
      %v2719 = vadd.f32 0.0, %v2718
      %v2720 = vpop.f32.mrf.mxu0
      %2721 = vmatprep.mubr.f32.mxu0 0.0
      %2722 = vmatmul.mubr.f32.gmra.mxu0 %v2472
      %v2723 = vpop.f32.mrf.mxu0
      %v2724 = vadd.f32 0.0, %v2723
      %v2725 = vpop.f32.mrf.mxu0
      %2726 = vmatprep.mubr.f32.mxu0 0.0
      %2727 = vmatmul.mubr.f32.gmra.mxu0 %v2473
      %v2728 = vpop.f32.mrf.mxu0
      %v2729 = vadd.f32 0.0, %v2728
      %v2730 = vpop.f32.mrf.mxu0
      %2731 = vmatprep.mubr.f32.mxu0 0.0
      %2732 = vmatmul.mubr.f32.gmra.mxu0 %v2474
      %v2733 = vpop.f32.mrf.mxu0
      %v2734 = vadd.f32 0.0, %v2733
      %v2735 = vpop.f32.mrf.mxu0
      %2736 = vdwg.mxu0
      %v2737 = vadd.f32 %v2403, %v2559
      %v2738 = vadd.f32 %v2404, %v2564
      %v2739 = vadd.f32 %v2405, %v2569
      %v2740 = vadd.f32 %v2406, %v2574
      %v2741 = vadd.f32 %v2407, %v2579
      %v2742 = vadd.f32 %v2408, %v2584
      %v2743 = vadd.f32 %v2409, %v2589
      %v2744 = vadd.f32 %v2410, %v2594
      %v2745 = vadd.f32 %v2411, %v2599
      %v2746 = vadd.f32 %v2412, %v2604
      %v2747 = vadd.f32 %v2413, %v2609
      %v2748 = vadd.f32 %v2414, %v2614
      %v2749 = vadd.f32 %v2415, %v2619
      %v2750 = vadd.f32 %v2416, %v2624
      %v2751 = vadd.f32 %v2417, %v2629
      %v2752 = vadd.f32 %v2418, %v2634
      %v2753 = vadd.f32 %v2419, %v2639
      %v2754 = vadd.f32 %v2420, %v2644
      %v2755 = vadd.f32 %v2421, %v2649
      %v2756 = vadd.f32 %v2422, %v2654
      %v2757 = vadd.f32 %v2423, %v2659
      %v2758 = vadd.f32 %v2424, %v2664
      %v2759 = vadd.f32 %v2425, %v2669
      %v2760 = vadd.f32 %v2426, %v2674
      %v2761 = vadd.f32 %v2427, %v2679
      %v2762 = vadd.f32 %v2428, %v2684
      %v2763 = vadd.f32 %v2429, %v2689
      %v2764 = vadd.f32 %v2430, %v2694
      %v2765 = vadd.f32 %v2431, %v2699
      %v2766 = vadd.f32 %v2432, %v2704
      %v2767 = vadd.f32 %v2433, %v2709
      %v2768 = vadd.f32 %v2434, %v2714
      %v2769 = vadd.f32 %v2435, %v2719
      %v2770 = vadd.f32 %v2436, %v2724
      %v2771 = vadd.f32 %v2437, %v2729
      %v2772 = vadd.f32 %v2438, %v2734
      %v2773 = vld [vmem:[%s166 + $0x26] sm:$0xff]
      %v2774 = vld [vmem:[%s166 + $0x2e] sm:$0xff]
      %v2775 = vld [vmem:[%s166 + $0x36] sm:$0xff]
      %v2776 = vld [vmem:[%s166 + $0x3e] sm:$0xff]
      %v2777 = vld [vmem:[%s166 + $0x46] sm:$0xff]
      %v2778 = vld [vmem:[%s166 + $0x4e] sm:$0xff]
      %v2779 = vld [vmem:[%s166 + $0x56] sm:$0xff]
      %v2780 = vld [vmem:[%s166 + $0x5e] sm:$0xff]
      %v2781 = vld [vmem:[%s166 + $0x66] sm:$0xff]
      %v2782 = vld [vmem:[%s166 + $0x6e] sm:$0xff]
      %v2783 = vld [vmem:[%s166 + $0x76] sm:$0xff]
      %v2784 = vld [vmem:[%s166 + $0x7e] sm:$0xff]
      %v2785 = vld [vmem:[%s166 + $0x86] sm:$0xff]
      %v2786 = vld [vmem:[%s166 + $0x8e] sm:$0xff]
      %v2787 = vld [vmem:[%s166 + $0x96] sm:$0xff]
      %v2788 = vld [vmem:[%s166 + $0x9e] sm:$0xff]
      %v2789 = vld [vmem:[%s166 + $0xa6] sm:$0xff]
      %v2790 = vld [vmem:[%s166 + $0xae] sm:$0xff]
      %v2791 = vld [vmem:[%s166 + $0xb6] sm:$0xff]
      %v2792 = vld [vmem:[%s166 + $0xbe] sm:$0xff]
      %v2793 = vld [vmem:[%s166 + $0xc6] sm:$0xff]
      %v2794 = vld [vmem:[%s166 + $0xce] sm:$0xff]
      %v2795 = vld [vmem:[%s166 + $0xd6] sm:$0xff]
      %v2796 = vld [vmem:[%s166 + $0xde] sm:$0xff]
      %v2797 = vld [vmem:[%s166 + $0xe6] sm:$0xff]
      %v2798 = vld [vmem:[%s166 + $0xee] sm:$0xff]
      %v2799 = vld [vmem:[%s166 + $0xf6] sm:$0xff]
      %v2800 = vld [vmem:[%s166 + $0xfe] sm:$0xff]
      %v2801 = vld [vmem:[%s166 + $0x106] sm:$0xff]
      %v2802 = vld [vmem:[%s166 + $0x10e] sm:$0xff]
      %v2803 = vld [vmem:[%s166 + $0x116] sm:$0xff]
      %v2804 = vld [vmem:[%s166 + $0x11e] sm:$0xff]
      %v2805 = vld [vmem:[%s166 + $0x126] sm:$0xff]
      %v2806 = vld [vmem:[%s166 + $0x12e] sm:$0xff]
      %v2807 = vld [vmem:[%s166 + $0x136] sm:$0xff]
      %v2808 = vld [vmem:[%s166 + $0x13e] sm:$0xff]
      %s2809 = scalar_lea.vmem %s1, 1024
      %v2810 = vld [vmem:[%s2809] sm:$0xff]
      %v2811 = vld [vmem:[%s2809 + $0x8] sm:$0xff]
      %v2812 = vld [vmem:[%s2809 + $0x10] sm:$0xff]
      %v2813 = vld [vmem:[%s2809 + $0x18] sm:$0xff]
      %v2814 = vld [vmem:[%s2809 + $0x20] sm:$0xff]
      %v2815 = vld [vmem:[%s2809 + $0x28] sm:$0xff]
      %v2816 = vld [vmem:[%s2809 + $0x30] sm:$0xff]
      %v2817 = vld [vmem:[%s2809 + $0x38] sm:$0xff]
      %v2818 = vld [vmem:[%s2809 + $0x40] sm:$0xff]
      %v2819 = vld [vmem:[%s2809 + $0x48] sm:$0xff]
      %v2820 = vld [vmem:[%s2809 + $0x50] sm:$0xff]
      %v2821 = vld [vmem:[%s2809 + $0x58] sm:$0xff]
      %v2822 = vld [vmem:[%s2809 + $0x60] sm:$0xff]
      %v2823 = vld [vmem:[%s2809 + $0x68] sm:$0xff]
      %v2824 = vld [vmem:[%s2809 + $0x70] sm:$0xff]
      %v2825 = vld [vmem:[%s2809 + $0x78] sm:$0xff]
      %2826 = vmatprep.subr.mxu0 0.0
      %2827 = vmatpush1.msra.mxu0 %v2825
      %2828 = vmatprep.subr.mxu0 0.0
      %2829 = vmatpush1.msra.mxu0 %v2824
      %2830 = vmatprep.subr.mxu0 0.0
      %2831 = vmatpush1.msra.mxu0 %v2823
      %2832 = vmatprep.subr.mxu0 0.0
      %2833 = vmatpush1.msra.mxu0 %v2822
      %2834 = vmatprep.subr.mxu0 0.0
      %2835 = vmatpush1.msra.mxu0 %v2821
      %2836 = vmatprep.subr.mxu0 0.0
      %2837 = vmatpush1.msra.mxu0 %v2820
      %2838 = vmatprep.subr.mxu0 0.0
      %2839 = vmatpush1.msra.mxu0 %v2819
      %2840 = vmatprep.subr.mxu0 0.0
      %2841 = vmatpush1.msra.mxu0 %v2818
      %2842 = vmatprep.subr.mxu0 0.0
      %2843 = vmatpush1.msra.mxu0 %v2817
      %2844 = vmatprep.subr.mxu0 0.0
      %2845 = vmatpush1.msra.mxu0 %v2816
      %2846 = vmatprep.subr.mxu0 0.0
      %2847 = vmatpush1.msra.mxu0 %v2815
      %2848 = vmatprep.subr.mxu0 0.0
      %2849 = vmatpush1.msra.mxu0 %v2814
      %2850 = vmatprep.subr.mxu0 0.0
      %2851 = vmatpush1.msra.mxu0 %v2813
      %2852 = vmatprep.subr.mxu0 0.0
      %2853 = vmatpush1.msra.mxu0 %v2812
      %2854 = vmatprep.subr.mxu0 0.0
      %2855 = vmatpush1.msra.mxu0 %v2811
      %2856 = vmatprep.subr.mxu0 0.0
      %2857 = vmatpush1.msra.mxu0 %v2810
      %2858 = vmatprep.subr.mxu0 0.0
      %2859 = vmatpush2.msra.mxu0 0.0
      %2860 = vmatprep.subr.mxu0 0.0
      %2861 = vmatpush2.msra.mxu0 0.0
      %2862 = vmatprep.subr.mxu0 0.0
      %2863 = vmatpush2.msra.mxu0 0.0
      %2864 = vmatprep.subr.mxu0 0.0
      %2865 = vmatpush2.msra.mxu0 0.0
      %2866 = vmatprep.subr.mxu0 0.0
      %2867 = vmatpush2.msra.mxu0 0.0
      %2868 = vmatprep.subr.mxu0 0.0
      %2869 = vmatpush2.msra.mxu0 0.0
      %2870 = vmatprep.subr.mxu0 0.0
      %2871 = vmatpush2.msra.mxu0 0.0
      %2872 = vmatprep.subr.mxu0 0.0
      %2873 = vmatpush2.msra.mxu0 0.0
      %2874 = vmatprep.subr.mxu0 0.0
      %2875 = vmatpush2.msra.mxu0 0.0
      %2876 = vmatprep.subr.mxu0 0.0
      %2877 = vmatpush2.msra.mxu0 0.0
      %2878 = vmatprep.subr.mxu0 0.0
      %2879 = vmatpush2.msra.mxu0 0.0
      %2880 = vmatprep.subr.mxu0 0.0
      %2881 = vmatpush2.msra.mxu0 0.0
      %2882 = vmatprep.subr.mxu0 0.0
      %2883 = vmatpush2.msra.mxu0 0.0
      %2884 = vmatprep.subr.mxu0 0.0
      %2885 = vmatpush2.msra.mxu0 0.0
      %2886 = vmatprep.subr.mxu0 0.0
      %2887 = vmatpush2.msra.mxu0 0.0
      %2888 = vmatprep.subr.mxu0 0.0
      %2889 = vmatpush2.msra.mxu0 0.0
      %2890 = vmatprep.mubr.f32.mxu0 0.0
      %2891 = vmatmul.mubr.f32.gmra.mxu0 %v2773
      %v2892 = vpop.f32.mrf.mxu0
      %v2893 = vadd.f32 0.0, %v2892
      %v2894 = vpop.f32.mrf.mxu0
      %2895 = vmatprep.mubr.f32.mxu0 0.0
      %2896 = vmatmul.mubr.f32.gmra.mxu0 %v2774
      %v2897 = vpop.f32.mrf.mxu0
      %v2898 = vadd.f32 0.0, %v2897
      %v2899 = vpop.f32.mrf.mxu0
      %2900 = vmatprep.mubr.f32.mxu0 0.0
      %2901 = vmatmul.mubr.f32.gmra.mxu0 %v2775
      %v2902 = vpop.f32.mrf.mxu0
      %v2903 = vadd.f32 0.0, %v2902
      %v2904 = vpop.f32.mrf.mxu0
      %2905 = vmatprep.mubr.f32.mxu0 0.0
      %2906 = vmatmul.mubr.f32.gmra.mxu0 %v2776
      %v2907 = vpop.f32.mrf.mxu0
      %v2908 = vadd.f32 0.0, %v2907
      %v2909 = vpop.f32.mrf.mxu0
      %2910 = vmatprep.mubr.f32.mxu0 0.0
      %2911 = vmatmul.mubr.f32.gmra.mxu0 %v2777
      %v2912 = vpop.f32.mrf.mxu0
      %v2913 = vadd.f32 0.0, %v2912
      %v2914 = vpop.f32.mrf.mxu0
      %2915 = vmatprep.mubr.f32.mxu0 0.0
      %2916 = vmatmul.mubr.f32.gmra.mxu0 %v2778
      %v2917 = vpop.f32.mrf.mxu0
      %v2918 = vadd.f32 0.0, %v2917
      %v2919 = vpop.f32.mrf.mxu0
      %2920 = vmatprep.mubr.f32.mxu0 0.0
      %2921 = vmatmul.mubr.f32.gmra.mxu0 %v2779
      %v2922 = vpop.f32.mrf.mxu0
      %v2923 = vadd.f32 0.0, %v2922
      %v2924 = vpop.f32.mrf.mxu0
      %2925 = vmatprep.mubr.f32.mxu0 0.0
      %2926 = vmatmul.mubr.f32.gmra.mxu0 %v2780
      %v2927 = vpop.f32.mrf.mxu0
      %v2928 = vadd.f32 0.0, %v2927
      %v2929 = vpop.f32.mrf.mxu0
      %2930 = vmatprep.mubr.f32.mxu0 0.0
      %2931 = vmatmul.mubr.f32.gmra.mxu0 %v2781
      %v2932 = vpop.f32.mrf.mxu0
      %v2933 = vadd.f32 0.0, %v2932
      %v2934 = vpop.f32.mrf.mxu0
      %2935 = vmatprep.mubr.f32.mxu0 0.0
      %2936 = vmatmul.mubr.f32.gmra.mxu0 %v2782
      %v2937 = vpop.f32.mrf.mxu0
      %v2938 = vadd.f32 0.0, %v2937
      %v2939 = vpop.f32.mrf.mxu0
      %2940 = vmatprep.mubr.f32.mxu0 0.0
      %2941 = vmatmul.mubr.f32.gmra.mxu0 %v2783
      %v2942 = vpop.f32.mrf.mxu0
      %v2943 = vadd.f32 0.0, %v2942
      %v2944 = vpop.f32.mrf.mxu0
      %2945 = vmatprep.mubr.f32.mxu0 0.0
      %2946 = vmatmul.mubr.f32.gmra.mxu0 %v2784
      %v2947 = vpop.f32.mrf.mxu0
      %v2948 = vadd.f32 0.0, %v2947
      %v2949 = vpop.f32.mrf.mxu0
      %2950 = vmatprep.mubr.f32.mxu0 0.0
      %2951 = vmatmul.mubr.f32.gmra.mxu0 %v2785
      %v2952 = vpop.f32.mrf.mxu0
      %v2953 = vadd.f32 0.0, %v2952
      %v2954 = vpop.f32.mrf.mxu0
      %2955 = vmatprep.mubr.f32.mxu0 0.0
      %2956 = vmatmul.mubr.f32.gmra.mxu0 %v2786
      %v2957 = vpop.f32.mrf.mxu0
      %v2958 = vadd.f32 0.0, %v2957
      %v2959 = vpop.f32.mrf.mxu0
      %2960 = vmatprep.mubr.f32.mxu0 0.0
      %2961 = vmatmul.mubr.f32.gmra.mxu0 %v2787
      %v2962 = vpop.f32.mrf.mxu0
      %v2963 = vadd.f32 0.0, %v2962
      %v2964 = vpop.f32.mrf.mxu0
      %2965 = vmatprep.mubr.f32.mxu0 0.0
      %2966 = vmatmul.mubr.f32.gmra.mxu0 %v2788
      %v2967 = vpop.f32.mrf.mxu0
      %v2968 = vadd.f32 0.0, %v2967
      %v2969 = vpop.f32.mrf.mxu0
      %2970 = vmatprep.mubr.f32.mxu0 0.0
      %2971 = vmatmul.mubr.f32.gmra.mxu0 %v2789
      %v2972 = vpop.f32.mrf.mxu0
      %v2973 = vadd.f32 0.0, %v2972
      %v2974 = vpop.f32.mrf.mxu0
      %2975 = vmatprep.mubr.f32.mxu0 0.0
      %2976 = vmatmul.mubr.f32.gmra.mxu0 %v2790
      %v2977 = vpop.f32.mrf.mxu0
      %v2978 = vadd.f32 0.0, %v2977
      %v2979 = vpop.f32.mrf.mxu0
      %2980 = vmatprep.mubr.f32.mxu0 0.0
      %2981 = vmatmul.mubr.f32.gmra.mxu0 %v2791
      %v2982 = vpop.f32.mrf.mxu0
      %v2983 = vadd.f32 0.0, %v2982
      %v2984 = vpop.f32.mrf.mxu0
      %2985 = vmatprep.mubr.f32.mxu0 0.0
      %2986 = vmatmul.mubr.f32.gmra.mxu0 %v2792
      %v2987 = vpop.f32.mrf.mxu0
      %v2988 = vadd.f32 0.0, %v2987
      %v2989 = vpop.f32.mrf.mxu0
      %2990 = vmatprep.mubr.f32.mxu0 0.0
      %2991 = vmatmul.mubr.f32.gmra.mxu0 %v2793
      %v2992 = vpop.f32.mrf.mxu0
      %v2993 = vadd.f32 0.0, %v2992
      %v2994 = vpop.f32.mrf.mxu0
      %2995 = vmatprep.mubr.f32.mxu0 0.0
      %2996 = vmatmul.mubr.f32.gmra.mxu0 %v2794
      %v2997 = vpop.f32.mrf.mxu0
      %v2998 = vadd.f32 0.0, %v2997
      %v2999 = vpop.f32.mrf.mxu0
      %3000 = vmatprep.mubr.f32.mxu0 0.0
      %3001 = vmatmul.mubr.f32.gmra.mxu0 %v2795
      %v3002 = vpop.f32.mrf.mxu0
      %v3003 = vadd.f32 0.0, %v3002
      %v3004 = vpop.f32.mrf.mxu0
      %3005 = vmatprep.mubr.f32.mxu0 0.0
      %3006 = vmatmul.mubr.f32.gmra.mxu0 %v2796
      %v3007 = vpop.f32.mrf.mxu0
      %v3008 = vadd.f32 0.0, %v3007
      %v3009 = vpop.f32.mrf.mxu0
      %3010 = vmatprep.mubr.f32.mxu0 0.0
      %3011 = vmatmul.mubr.f32.gmra.mxu0 %v2797
      %v3012 = vpop.f32.mrf.mxu0
      %v3013 = vadd.f32 0.0, %v3012
      %v3014 = vpop.f32.mrf.mxu0
      %3015 = vmatprep.mubr.f32.mxu0 0.0
      %3016 = vmatmul.mubr.f32.gmra.mxu0 %v2798
      %v3017 = vpop.f32.mrf.mxu0
      %v3018 = vadd.f32 0.0, %v3017
      %v3019 = vpop.f32.mrf.mxu0
      %3020 = vmatprep.mubr.f32.mxu0 0.0
      %3021 = vmatmul.mubr.f32.gmra.mxu0 %v2799
      %v3022 = vpop.f32.mrf.mxu0
      %v3023 = vadd.f32 0.0, %v3022
      %v3024 = vpop.f32.mrf.mxu0
      %3025 = vmatprep.mubr.f32.mxu0 0.0
      %3026 = vmatmul.mubr.f32.gmra.mxu0 %v2800
      %v3027 = vpop.f32.mrf.mxu0
      %v3028 = vadd.f32 0.0, %v3027
      %v3029 = vpop.f32.mrf.mxu0
      %3030 = vmatprep.mubr.f32.mxu0 0.0
      %3031 = vmatmul.mubr.f32.gmra.mxu0 %v2801
      %v3032 = vpop.f32.mrf.mxu0
      %v3033 = vadd.f32 0.0, %v3032
      %v3034 = vpop.f32.mrf.mxu0
      %3035 = vmatprep.mubr.f32.mxu0 0.0
      %3036 = vmatmul.mubr.f32.gmra.mxu0 %v2802
      %v3037 = vpop.f32.mrf.mxu0
      %v3038 = vadd.f32 0.0, %v3037
      %v3039 = vpop.f32.mrf.mxu0
      %3040 = vmatprep.mubr.f32.mxu0 0.0
      %3041 = vmatmul.mubr.f32.gmra.mxu0 %v2803
      %v3042 = vpop.f32.mrf.mxu0
      %v3043 = vadd.f32 0.0, %v3042
      %v3044 = vpop.f32.mrf.mxu0
      %3045 = vmatprep.mubr.f32.mxu0 0.0
      %3046 = vmatmul.mubr.f32.gmra.mxu0 %v2804
      %v3047 = vpop.f32.mrf.mxu0
      %v3048 = vadd.f32 0.0, %v3047
      %v3049 = vpop.f32.mrf.mxu0
      %3050 = vmatprep.mubr.f32.mxu0 0.0
      %3051 = vmatmul.mubr.f32.gmra.mxu0 %v2805
      %v3052 = vpop.f32.mrf.mxu0
      %v3053 = vadd.f32 0.0, %v3052
      %v3054 = vpop.f32.mrf.mxu0
      %3055 = vmatprep.mubr.f32.mxu0 0.0
      %3056 = vmatmul.mubr.f32.gmra.mxu0 %v2806
      %v3057 = vpop.f32.mrf.mxu0
      %v3058 = vadd.f32 0.0, %v3057
      %v3059 = vpop.f32.mrf.mxu0
      %3060 = vmatprep.mubr.f32.mxu0 0.0
      %3061 = vmatmul.mubr.f32.gmra.mxu0 %v2807
      %v3062 = vpop.f32.mrf.mxu0
      %v3063 = vadd.f32 0.0, %v3062
      %v3064 = vpop.f32.mrf.mxu0
      %3065 = vmatprep.mubr.f32.mxu0 0.0
      %3066 = vmatmul.mubr.f32.gmra.mxu0 %v2808
      %v3067 = vpop.f32.mrf.mxu0
      %v3068 = vadd.f32 0.0, %v3067
      %v3069 = vpop.f32.mrf.mxu0
      %3070 = vdwg.mxu0
      %v3071 = vadd.f32 %v2737, %v2893
      %v3072 = vadd.f32 %v2738, %v2898
      %v3073 = vadd.f32 %v2739, %v2903
      %v3074 = vadd.f32 %v2740, %v2908
      %v3075 = vadd.f32 %v2741, %v2913
      %v3076 = vadd.f32 %v2742, %v2918
      %v3077 = vadd.f32 %v2743, %v2923
      %v3078 = vadd.f32 %v2744, %v2928
      %v3079 = vadd.f32 %v2745, %v2933
      %v3080 = vadd.f32 %v2746, %v2938
      %v3081 = vadd.f32 %v2747, %v2943
      %v3082 = vadd.f32 %v2748, %v2948
      %v3083 = vadd.f32 %v2749, %v2953
      %v3084 = vadd.f32 %v2750, %v2958
      %v3085 = vadd.f32 %v2751, %v2963
      %v3086 = vadd.f32 %v2752, %v2968
      %v3087 = vadd.f32 %v2753, %v2973
      %v3088 = vadd.f32 %v2754, %v2978
      %v3089 = vadd.f32 %v2755, %v2983
      %v3090 = vadd.f32 %v2756, %v2988
      %v3091 = vadd.f32 %v2757, %v2993
      %v3092 = vadd.f32 %v2758, %v2998
      %v3093 = vadd.f32 %v2759, %v3003
      %v3094 = vadd.f32 %v2760, %v3008
      %v3095 = vadd.f32 %v2761, %v3013
      %v3096 = vadd.f32 %v2762, %v3018
      %v3097 = vadd.f32 %v2763, %v3023
      %v3098 = vadd.f32 %v2764, %v3028
      %v3099 = vadd.f32 %v2765, %v3033
      %v3100 = vadd.f32 %v2766, %v3038
      %v3101 = vadd.f32 %v2767, %v3043
      %v3102 = vadd.f32 %v2768, %v3048
      %v3103 = vadd.f32 %v2769, %v3053
      %v3104 = vadd.f32 %v2770, %v3058
      %v3105 = vadd.f32 %v2771, %v3063
      %v3106 = vadd.f32 %v2772, %v3068
      %v3107 = vld [vmem:[%s2] sm:$0x1]
      %v3109 = vlaneseq
      %v3110 = vshrl.u32 %v3109, 7
      %v3111 = vsub.s32 0, %v3110
      %v3112 = vrot.slane %v3107, %v3111
      %v3114 = vadd.f32 %v3071, %v3112
      %v3115 = vadd.f32 %v3072, %v3112
      %v3116 = vadd.f32 %v3073, %v3112
      %v3117 = vadd.f32 %v3074, %v3112
      %v3118 = vadd.f32 %v3075, %v3112
      %v3119 = vadd.f32 %v3076, %v3112
      %v3120 = vadd.f32 %v3077, %v3112
      %v3121 = vadd.f32 %v3078, %v3112
      %v3122 = vadd.f32 %v3079, %v3112
      %v3123 = vadd.f32 %v3080, %v3112
      %v3124 = vadd.f32 %v3081, %v3112
      %v3125 = vadd.f32 %v3082, %v3112
      %v3126 = vadd.f32 %v3083, %v3112
      %v3127 = vadd.f32 %v3084, %v3112
      %v3128 = vadd.f32 %v3085, %v3112
      %v3129 = vadd.f32 %v3086, %v3112
      %v3130 = vadd.f32 %v3087, %v3112
      %v3131 = vadd.f32 %v3088, %v3112
      %v3132 = vadd.f32 %v3089, %v3112
      %v3133 = vadd.f32 %v3090, %v3112
      %v3134 = vadd.f32 %v3091, %v3112
      %v3135 = vadd.f32 %v3092, %v3112
      %v3136 = vadd.f32 %v3093, %v3112
      %v3137 = vadd.f32 %v3094, %v3112
      %v3138 = vadd.f32 %v3095, %v3112
      %v3139 = vadd.f32 %v3096, %v3112
      %v3140 = vadd.f32 %v3097, %v3112
      %v3141 = vadd.f32 %v3098, %v3112
      %v3142 = vadd.f32 %v3099, %v3112
      %v3143 = vadd.f32 %v3100, %v3112
      %v3144 = vadd.f32 %v3101, %v3112
      %v3145 = vadd.f32 %v3102, %v3112
      %v3146 = vadd.f32 %v3103, %v3112
      %v3147 = vadd.f32 %v3104, %v3112
      %v3148 = vadd.f32 %v3105, %v3112
      %v3149 = vadd.f32 %v3106, %v3112
      %v3150 = vmax.f32 %v3114, 0.0
      %v3151 = vmax.f32 %v3115, 0.0
      %v3152 = vmax.f32 %v3116, 0.0
      %v3153 = vmax.f32 %v3117, 0.0
      %v3154 = vmax.f32 %v3118, 0.0
      %v3155 = vmax.f32 %v3119, 0.0
      %v3156 = vmax.f32 %v3120, 0.0
      %v3157 = vmax.f32 %v3121, 0.0
      %v3158 = vmax.f32 %v3122, 0.0
      %v3159 = vmax.f32 %v3123, 0.0
      %v3160 = vmax.f32 %v3124, 0.0
      %v3161 = vmax.f32 %v3125, 0.0
      %v3162 = vmax.f32 %v3126, 0.0
      %v3163 = vmax.f32 %v3127, 0.0
      %v3164 = vmax.f32 %v3128, 0.0
      %v3165 = vmax.f32 %v3129, 0.0
      %v3166 = vmax.f32 %v3130, 0.0
      %v3167 = vmax.f32 %v3131, 0.0
      %v3168 = vmax.f32 %v3132, 0.0
      %v3169 = vmax.f32 %v3133, 0.0
      %v3170 = vmax.f32 %v3134, 0.0
      %v3171 = vmax.f32 %v3135, 0.0
      %v3172 = vmax.f32 %v3136, 0.0
      %v3173 = vmax.f32 %v3137, 0.0
      %v3174 = vmax.f32 %v3138, 0.0
      %v3175 = vmax.f32 %v3139, 0.0
      %v3176 = vmax.f32 %v3140, 0.0
      %v3177 = vmax.f32 %v3141, 0.0
      %v3178 = vmax.f32 %v3142, 0.0
      %v3179 = vmax.f32 %v3143, 0.0
      %v3180 = vmax.f32 %v3144, 0.0
      %v3181 = vmax.f32 %v3145, 0.0
      %v3182 = vmax.f32 %v3146, 0.0
      %v3183 = vmax.f32 %v3147, 0.0
      %v3184 = vmax.f32 %v3148, 0.0
      %v3185 = vmax.f32 %v3149, 0.0
      %3186 = vst [vmem:[%s172] sm:$0xff] %v3150
      %3187 = vst [vmem:[%s172 + $0x8] sm:$0xff] %v3151
      %3188 = vst [vmem:[%s172 + $0x10] sm:$0xff] %v3152
      %3189 = vst [vmem:[%s172 + $0x18] sm:$0xff] %v3153
      %3190 = vst [vmem:[%s172 + $0x20] sm:$0xff] %v3154
      %3191 = vst [vmem:[%s172 + $0x28] sm:$0xff] %v3155
      %3192 = vst [vmem:[%s172 + $0x30] sm:$0xff] %v3156
      %3193 = vst [vmem:[%s172 + $0x38] sm:$0xff] %v3157
      %3194 = vst [vmem:[%s172 + $0x40] sm:$0xff] %v3158
      %3195 = vst [vmem:[%s172 + $0x48] sm:$0xff] %v3159
      %3196 = vst [vmem:[%s172 + $0x50] sm:$0xff] %v3160
      %3197 = vst [vmem:[%s172 + $0x58] sm:$0xff] %v3161
      %3198 = vst [vmem:[%s172 + $0x60] sm:$0xff] %v3162
      %3199 = vst [vmem:[%s172 + $0x68] sm:$0xff] %v3163
      %3200 = vst [vmem:[%s172 + $0x70] sm:$0xff] %v3164
      %3201 = vst [vmem:[%s172 + $0x78] sm:$0xff] %v3165
      %3202 = vst [vmem:[%s172 + $0x80] sm:$0xff] %v3166
      %3203 = vst [vmem:[%s172 + $0x88] sm:$0xff] %v3167
      %3204 = vst [vmem:[%s172 + $0x90] sm:$0xff] %v3168
      %3205 = vst [vmem:[%s172 + $0x98] sm:$0xff] %v3169
      %3206 = vst [vmem:[%s172 + $0xa0] sm:$0xff] %v3170
      %3207 = vst [vmem:[%s172 + $0xa8] sm:$0xff] %v3171
      %3208 = vst [vmem:[%s172 + $0xb0] sm:$0xff] %v3172
      %3209 = vst [vmem:[%s172 + $0xb8] sm:$0xff] %v3173
      %3210 = vst [vmem:[%s172 + $0xc0] sm:$0xff] %v3174
      %3211 = vst [vmem:[%s172 + $0xc8] sm:$0xff] %v3175
      %3212 = vst [vmem:[%s172 + $0xd0] sm:$0xff] %v3176
      %3213 = vst [vmem:[%s172 + $0xd8] sm:$0xff] %v3177
      %3214 = vst [vmem:[%s172 + $0xe0] sm:$0xff] %v3178
      %3215 = vst [vmem:[%s172 + $0xe8] sm:$0xff] %v3179
      %3216 = vst [vmem:[%s172 + $0xf0] sm:$0xff] %v3180
      %3217 = vst [vmem:[%s172 + $0xf8] sm:$0xff] %v3181
      %3218 = vst [vmem:[%s172 + $0x100] sm:$0xff] %v3182
      %3219 = vst [vmem:[%s172 + $0x108] sm:$0xff] %v3183
      %3220 = vst [vmem:[%s172 + $0x110] sm:$0xff] %v3184
      %3221 = vst [vmem:[%s172 + $0x118] sm:$0xff] %v3185
      %s3222 = smul.u32 36, %s14
      %p3223 = scmp.lt.s32.totalorder %s3222, 71
      %s3224 = scalar_select %p3223, %s3222, 71
      %s3225 = smul.addr %s3224, 8
      %s3226 = scalar_lea.vmem %s3, %s3225
      // Predicated region
      $region33: #{basic_block_forward.2} parent=31 // pred_check
        %p3227 = pneg %p100
      $region34: #{basic_block_forward.2} parent=31 // pred_check_branch
        %3229 = sbr.rel (%p3227) target = $region36
      $region35: #{basic_block_forward.2} parent=31 // pred_region
        %s3230 = smul.u32 36, %s14
      $region36: #{basic_block_forward.2} parent=31 // pred_fallthru
        _
    $region32: #{basic_block_forward.2} parent=5 // pred_fallthru
      _
    %p3231 = scmp.le.s32.totalorder 2, %s9
    // Predicated region
    $region37: #{basic_block_forward.2} parent=5 // pred_check
      %p3232 = pneg %p3231
    $region38: #{basic_block_forward.2} parent=5 // pred_check_branch
      %3234 = sbr.rel (%p3232) target = $region40
    $region39: #{basic_block_forward.2} parent=5 // pred_region
      %s3235 = ssub.s32 %s9, 2
      // Predicated region
      $region41: #{basic_block_forward.2} parent=39 // pred_check
        %p3236 = pneg %p106
      $region42: #{basic_block_forward.2} parent=39 // pred_check_branch
        %3238 = sbr.rel (%p3236) target = $region44
      $region43: #{basic_block_forward.2} parent=39 // pred_region
        %s3239 = smul.u32 36, %s15
        %p3240 = scmp.lt.s32.totalorder %s3239, 71
        %s3241 = scalar_select %p3240, %s3239, 71
        %s3242 = smul.addr %s3241, 8
        %s3243 = scalar_lea.vmem %s3, %s3242
      $region44: #{basic_block_forward.2} parent=39 // pred_fallthru
        _
    $region40: #{basic_block_forward.2} parent=5 // pred_fallthru
      _
  $region6: #{basic_block_forward.2} parent=0 // loop_footer
    %s13 = sadd.s32 1, %s9
  $region7: #{basic_block_forward.2} parent=0 // loop_footer_branch
    %8 = sbr.rel target = $region3
  $region8: #{basic_block_forward.2} parent=0 // loop_exit
    _

// kernel: basic_block_forward.3
$region0: #{basic_block_forward.3}
  #allocation0 [shape = 'u32[]', space=smem, size = 0x4, offset = 0x4, fixed_abs, tag = 'smem constant byte address 0x4 - core index']
  #allocation1 [shape = 'u32[144,128]{1,0:T(1,128)}', space=vmem, size = 0x12000, scoped, tag = 'internal scratch']
  %s0 = inlined_call_operand.vmem [shape: f32[656,128], index: 0, kind: input, shape index: {}]
  %s1 = inlined_call_operand.vmem [shape: f32[9,128,128], index: 1, kind: input, shape index: {}]
  %s2 = inlined_call_operand.vmem [shape: f32[1,128], index: 2, kind: input, shape index: {}]
  %s3 = inlined_call_operand.vmem [shape: f32[656,128], index: 3, kind: input, shape index: {}]
  %s4 = inlined_call_operand.vmem [shape: f32[576,128], index: 4, kind: output, shape index: {}]
  %s5 = sld [smem:[#allocation0]]
  $region49: #{basic_block_forward.3} parent=0
    _
  %s7 = ssub.s32 1, %s5
  %s8 = scalar_select 0, %s7, %s5
  loop: start=0, step=1, limit=4
  $region2: #{basic_block_forward.3} parent=0 // loop_pre_header
    _
  $region3: #{basic_block_forward.3} parent=0 // loop_header
    %s10 = sphi 0, %s14
    %p11 = scmp.ge.s32.totalorder %s10, 4
    %s20 = sphi 0, %s22
    %s23 = sphi 0, %s20
    %s24 = sphi 0, %s23
    %s40 = sphi 0, %s24
    %s44 = sphi 0, %s44
    %s46 = sphi 0, %s44
    %s47 = sphi 0, %s46
    %s61 = sphi 0, %s47
    %s65 = sphi 0, %s65
    %s67 = sphi 0, %s65
    %s68 = sphi 0, %s67
    %s82 = sphi 0, %s68
    %s88 = sphi 0, %s90
    %s91 = sphi 0, %s88
    %s92 = sphi 0, %s91
    %s108 = sphi 0, %s92
    %s114 = sphi 0, %s116
    %s117 = sphi 0, %s114
    %s118 = sphi 0, %s117
    %s134 = sphi 0, %s118
  $region4: #{basic_block_forward.3} parent=0 // loop_header_branch
    %13 = sbr.rel (%p11) target = $region8
  $region5: #{basic_block_forward.3} parent=0 // loop_body
    %s15 = ssub.s32 %s10, 1
    %s16 = ssub.s32 %s10, 2
    %s17 = sadd.s32 %s10, 1
    %s18 = ssub.s32 %s10, %s17
    %p19 = scmp.eq.s32.totalorder %s18, 0
    %s21 = sadd.s32 %s20, 1
    %s22 = scalar_select %p19, %s20, %s21
    %p25 = pneg %p19
    %p26 = scmp.eq.s32.totalorder %s10, 1
    %p27 = por %p25, %p26
    %p28 = scmp.ne.s32.totalorder %s20, %s23
    %p29 = scmp.eq.s32.totalorder %s10, 0
    %p30 = por %p28, %p29
    %p31 = scmp.ne.s32.totalorder %s20, %s23
    %p32 = scmp.eq.s32.totalorder %s15, 1
    %p33 = por %p31, %p32
    %p34 = scmp.ne.s32.totalorder %s23, %s24
    %p35 = scmp.eq.s32.totalorder %s15, 0
    %p36 = por %p34, %p35
    %p37 = scmp.ne.s32.totalorder %s23, %s24
    %p38 = scmp.eq.s32.totalorder %s16, 1
    %p39 = por %p37, %p38
    %p41 = scmp.ne.s32.totalorder %s24, %s40
    %p42 = scmp.eq.s32.totalorder %s16, 0
    %p43 = por %p41, %p42
    %s45 = sadd.s32 %s44, 1
    %p48 = scmp.eq.s32.totalorder %s10, 1
    %p49 = scmp.ne.s32.totalorder %s44, %s46
    %p50 = scmp.eq.s32.totalorder %s10, 0
    %p51 = por %p49, %p50
    %p52 = scmp.ne.s32.totalorder %s44, %s46
    %p53 = scmp.eq.s32.totalorder %s15, 1
    %p54 = por %p52, %p53
    %p55 = scmp.ne.s32.totalorder %s46, %s47
    %p56 = scmp.eq.s32.totalorder %s15, 0
    %p57 = por %p55, %p56
    %p58 = scmp.ne.s32.totalorder %s46, %s47
    %p59 = scmp.eq.s32.totalorder %s16, 1
    %p60 = por %p58, %p59
    %p62 = scmp.ne.s32.totalorder %s47, %s61
    %p63 = scmp.eq.s32.totalorder %s16, 0
    %p64 = por %p62, %p63
    %s66 = sadd.s32 %s65, 1
    %p69 = scmp.eq.s32.totalorder %s10, 1
    %p70 = scmp.ne.s32.totalorder %s65, %s67
    %p71 = scmp.eq.s32.totalorder %s10, 0
    %p72 = por %p70, %p71
    %p73 = scmp.ne.s32.totalorder %s65, %s67
    %p74 = scmp.eq.s32.totalorder %s15, 1
    %p75 = por %p73, %p74
    %p76 = scmp.ne.s32.totalorder %s67, %s68
    %p77 = scmp.eq.s32.totalorder %s15, 0
    %p78 = por %p76, %p77
    %p79 = scmp.ne.s32.totalorder %s67, %s68
    %p80 = scmp.eq.s32.totalorder %s16, 1
    %p81 = por %p79, %p80
    %p83 = scmp.ne.s32.totalorder %s68, %s82
    %p84 = scmp.eq.s32.totalorder %s16, 0
    %p85 = por %p83, %p84
    %s86 = ssub.s32 %s10, %s17
    %p87 = scmp.eq.s32.totalorder %s86, 0
    %s89 = sadd.s32 %s88, 1
    %s90 = scalar_select %p87, %s88, %s89
    %p93 = pneg %p87
    %p94 = scmp.eq.s32.totalorder %s10, 1
    %p95 = por %p93, %p94
    %p96 = scmp.ne.s32.totalorder %s88, %s91
    %p97 = scmp.eq.s32.totalorder %s10, 0
    %p98 = por %p96, %p97
    %p99 = scmp.ne.s32.totalorder %s88, %s91
    %p100 = scmp.eq.s32.totalorder %s15, 1
    %p101 = por %p99, %p100
    %p102 = scmp.ne.s32.totalorder %s91, %s92
    %p103 = scmp.eq.s32.totalorder %s15, 0
    %p104 = por %p102, %p103
    %p105 = scmp.ne.s32.totalorder %s91, %s92
    %p106 = scmp.eq.s32.totalorder %s16, 1
    %p107 = por %p105, %p106
    %p109 = scmp.ne.s32.totalorder %s92, %s108
    %p110 = scmp.eq.s32.totalorder %s16, 0
    %p111 = por %p109, %p110
    %s112 = ssub.s32 %s10, %s17
    %p113 = scmp.eq.s32.totalorder %s112, 0
    %s115 = sadd.s32 %s114, 1
    %s116 = scalar_select %p113, %s114, %s115
    %p119 = pneg %p113
    %p120 = scmp.eq.s32.totalorder %s10, 1
    %p121 = por %p119, %p120
    %p122 = scmp.ne.s32.totalorder %s114, %s117
    %p123 = scmp.eq.s32.totalorder %s10, 0
    %p124 = por %p122, %p123
    %p125 = scmp.ne.s32.totalorder %s114, %s117
    %p126 = scmp.eq.s32.totalorder %s15, 1
    %p127 = por %p125, %p126
    %p128 = scmp.ne.s32.totalorder %s117, %s118
    %p129 = scmp.eq.s32.totalorder %s15, 0
    %p130 = por %p128, %p129
    %p131 = scmp.ne.s32.totalorder %s117, %s118
    %p132 = scmp.eq.s32.totalorder %s16, 1
    %p133 = por %p131, %p132
    %p135 = scmp.ne.s32.totalorder %s118, %s134
    %p136 = scmp.eq.s32.totalorder %s16, 0
    %p137 = por %p135, %p136
    %p138 = scmp.le.s32.totalorder 1, %s10
    %p139 = scmp.lt.s32.totalorder %s10, 3
    %p140 = pnand %p138, %p139
    %p141 = pneg %p140
    // Predicated region
    $region9: #{basic_block_forward.3} parent=5 // pred_check
      _
    $region10: #{basic_block_forward.3} parent=5 // pred_check_branch
      %143 = sbr.rel (%p140) target = $region12
    $region11: #{basic_block_forward.3} parent=5 // pred_region
      %s144 = ssub.s32 %s10, 1
      // Predicated region
      $region13: #{basic_block_forward.3} parent=11 // pred_check
        %p145 = pneg %p57
      $region14: #{basic_block_forward.3} parent=11 // pred_check_branch
        %147 = sbr.rel (%p145) target = $region16
      $region15: #{basic_block_forward.3} parent=11 // pred_region
        _
      $region16: #{basic_block_forward.3} parent=11 // pred_fallthru
        _
      // Predicated region
      $region17: #{basic_block_forward.3} parent=11 // pred_check
        %p148 = pneg %p78
      $region18: #{basic_block_forward.3} parent=11 // pred_check_branch
        %150 = sbr.rel (%p148) target = $region20
      $region19: #{basic_block_forward.3} parent=11 // pred_region
        _
      $region20: #{basic_block_forward.3} parent=11 // pred_fallthru
        _
    $region12: #{basic_block_forward.3} parent=5 // pred_fallthru
      _
    %p151 = scmp.lt.s32.totalorder %s10, 2
    // Predicated region
    $region21: #{basic_block_forward.3} parent=5 // pred_check
      %p152 = pneg %p151
    $region22: #{basic_block_forward.3} parent=5 // pred_check_branch
      %154 = sbr.rel (%p152) target = $region24
    $region23: #{basic_block_forward.3} parent=5 // pred_region
      // Predicated region
      $region25: #{basic_block_forward.3} parent=23 // pred_check
        %p155 = pneg %p30
      $region26: #{basic_block_forward.3} parent=23 // pred_check_branch
        %157 = sbr.rel (%p155) target = $region28
      $region27: #{basic_block_forward.3} parent=23 // pred_region
        %s158 = smul.u32 41, %s10
        %p159 = scmp.lt.s32.totalorder %s158, 81
        %s160 = scalar_select %p159, %s158, 81
        %s161 = smul.addr %s160, 8
        %s162 = scalar_lea.vmem %s0, %s161
        %s163 = smul.u32 41, %s10
      $region28: #{basic_block_forward.3} parent=23 // pred_fallthru
        _
      // Predicated region
      $region29: #{basic_block_forward.3} parent=23 // pred_check
        %p164 = pneg %p98
      $region30: #{basic_block_forward.3} parent=23 // pred_check_branch
        %166 = sbr.rel (%p164) target = $region32
      $region31: #{basic_block_forward.3} parent=23 // pred_region
        %s167 = smul.u32 41, %s10
        %p168 = scmp.lt.s32.totalorder %s167, 81
        %s169 = scalar_select %p168, %s167, 81
        %s170 = smul.addr %s169, 8
        %s171 = scalar_lea.vmem %s3, %s170
        %s172 = smul.u32 41, %s10
      $region32: #{basic_block_forward.3} parent=23 // pred_fallthru
        _
    $region24: #{basic_block_forward.3} parent=5 // pred_fallthru
      _
    %p173 = scmp.le.s32.totalorder 1, %s10
    %p174 = scmp.lt.s32.totalorder %s10, 3
    %p175 = pnand %p173, %p174
    %p176 = pneg %p175
    // Predicated region
    $region33: #{basic_block_forward.3} parent=5 // pred_check
      _
    $region34: #{basic_block_forward.3} parent=5 // pred_check_branch
      %178 = sbr.rel (%p175) target = $region36
    $region35: #{basic_block_forward.3} parent=5 // pred_region
      %s179 = ssub.s32 %s10, 1
      %s180 = smul.u32 41, %s15
      %p181 = scmp.lt.s32.totalorder %s180, 81
      %s182 = scalar_select %p181, %s180, 81
      %s183 = smul.addr %s182, 8
      %s184 = scalar_lea.vmem %s0, %s183
      %p185 = pneg %p36
      %p186 = pneg %p33
      %p187 = pneg %p57
      %p188 = pneg %p54
      %p189 = pneg %p78
      %p190 = pneg %p75
      %s191 = smul.u32 41, %s15
      %p192 = scmp.lt.s32.totalorder %s191, 81
      %s193 = scalar_select %p192, %s191, 81
      %s194 = smul.addr %s193, 8
      %s195 = scalar_lea.vmem %s3, %s194
      %p196 = pneg %p104
      %p197 = pneg %p101
      %p198 = pneg %p130
      %p199 = pneg %p127
      %s200 = smul.u32 36, %s15
      %p201 = scmp.lt.s32.totalorder %s200, 71
      %s202 = scalar_select %p201, %s200, 71
      %s203 = smul.addr %s202, 8
      %s204 = scalar_lea.vmem %s4, %s203
      %s205 = smul.u32 41, %s15
      %p206 = scmp.lt.s32.totalorder %s205, 81
      %s207 = scalar_select %p206, %s205, 81
      %s208 = smul.addr %s207, 8
      %s209 = scalar_lea.vmem %s0, %s208
      %s210 = smul.u32 41, %s15
      %s211 = smul.u32 41, %s15
      %p212 = scmp.lt.s32.totalorder %s211, 81
      %s213 = scalar_select %p212, %s211, 81
      %s214 = smul.addr %s213, 8
      %s215 = scalar_lea.vmem %s3, %s214
      %s216 = smul.u32 41, %s15
      %s217 = smul.u32 36, %s15
      %p218 = scmp.lt.s32.totalorder %s217, 71
      %s219 = scalar_select %p218, %s217, 71
      %s220 = smul.addr %s219, 8
      %s221 = scalar_lea.vmem %s4, %s220
      %s222 = smul.u32 36, %s15
      %v223 = vld [vmem:[%s215 + $0x13] sm:$0xff]
      %v224 = vld [vmem:[%s215 + $0x1b] sm:$0xff]
      %v225 = vld [vmem:[%s215 + $0x23] sm:$0xff]
      %v226 = vld [vmem:[%s215 + $0x2b] sm:$0xff]
      %v227 = vld [vmem:[%s215 + $0x33] sm:$0xff]
      %v228 = vld [vmem:[%s215 + $0x3b] sm:$0xff]
      %v229 = vld [vmem:[%s215 + $0x43] sm:$0xff]
      %v230 = vld [vmem:[%s215 + $0x4b] sm:$0xff]
      %v231 = vld [vmem:[%s215 + $0x53] sm:$0xff]
      %v232 = vld [vmem:[%s215 + $0x5b] sm:$0xff]
      %v233 = vld [vmem:[%s215 + $0x63] sm:$0xff]
      %v234 = vld [vmem:[%s215 + $0x6b] sm:$0xff]
      %v235 = vld [vmem:[%s215 + $0x73] sm:$0xff]
      %v236 = vld [vmem:[%s215 + $0x7b] sm:$0xff]
      %v237 = vld [vmem:[%s215 + $0x83] sm:$0xff]
      %v238 = vld [vmem:[%s215 + $0x8b] sm:$0xff]
      %v239 = vld [vmem:[%s215 + $0x93] sm:$0xff]
      %v240 = vld [vmem:[%s215 + $0x9b] sm:$0xff]
      %v241 = vld [vmem:[%s215 + $0xa3] sm:$0xff]
      %v242 = vld [vmem:[%s215 + $0xab] sm:$0xff]
      %v243 = vld [vmem:[%s215 + $0xb3] sm:$0xff]
      %v244 = vld [vmem:[%s215 + $0xbb] sm:$0xff]
      %v245 = vld [vmem:[%s215 + $0xc3] sm:$0xff]
      %v246 = vld [vmem:[%s215 + $0xcb] sm:$0xff]
      %v247 = vld [vmem:[%s215 + $0xd3] sm:$0xff]
      %v248 = vld [vmem:[%s215 + $0xdb] sm:$0xff]
      %v249 = vld [vmem:[%s215 + $0xe3] sm:$0xff]
      %v250 = vld [vmem:[%s215 + $0xeb] sm:$0xff]
      %v251 = vld [vmem:[%s215 + $0xf3] sm:$0xff]
      %v252 = vld [vmem:[%s215 + $0xfb] sm:$0xff]
      %v253 = vld [vmem:[%s215 + $0x103] sm:$0xff]
      %v254 = vld [vmem:[%s215 + $0x10b] sm:$0xff]
      %v255 = vld [vmem:[%s215 + $0x113] sm:$0xff]
      %v256 = vld [vmem:[%s215 + $0x11b] sm:$0xff]
      %v257 = vld [vmem:[%s215 + $0x123] sm:$0xff]
      %v258 = vld [vmem:[%s215 + $0x12b] sm:$0xff]
      %v259 = vld [vmem:[%s209] sm:$0xff]
      %v260 = vld [vmem:[%s209 + $0x8] sm:$0xff]
      %v261 = vld [vmem:[%s209 + $0x10] sm:$0xff]
      %v262 = vld [vmem:[%s209 + $0x18] sm:$0xff]
      %v263 = vld [vmem:[%s209 + $0x20] sm:$0xff]
      %v264 = vld [vmem:[%s209 + $0x28] sm:$0xff]
      %v265 = vld [vmem:[%s209 + $0x30] sm:$0xff]
      %v266 = vld [vmem:[%s209 + $0x38] sm:$0xff]
      %v267 = vld [vmem:[%s209 + $0x40] sm:$0xff]
      %v268 = vld [vmem:[%s209 + $0x48] sm:$0xff]
      %v269 = vld [vmem:[%s209 + $0x50] sm:$0xff]
      %v270 = vld [vmem:[%s209 + $0x58] sm:$0xff]
      %v271 = vld [vmem:[%s209 + $0x60] sm:$0xff]
      %v272 = vld [vmem:[%s209 + $0x68] sm:$0xff]
      %v273 = vld [vmem:[%s209 + $0x70] sm:$0xff]
      %v274 = vld [vmem:[%s209 + $0x78] sm:$0xff]
      %v275 = vld [vmem:[%s209 + $0x80] sm:$0xff]
      %v276 = vld [vmem:[%s209 + $0x88] sm:$0xff]
      %v277 = vld [vmem:[%s209 + $0x90] sm:$0xff]
      %v278 = vld [vmem:[%s209 + $0x98] sm:$0xff]
      %v279 = vld [vmem:[%s209 + $0xa0] sm:$0xff]
      %v280 = vld [vmem:[%s209 + $0xa8] sm:$0xff]
      %v281 = vld [vmem:[%s209 + $0xb0] sm:$0xff]
      %v282 = vld [vmem:[%s209 + $0xb8] sm:$0xff]
      %v283 = vld [vmem:[%s209 + $0xc0] sm:$0xff]
      %v284 = vld [vmem:[%s209 + $0xc8] sm:$0xff]
      %v285 = vld [vmem:[%s209 + $0xd0] sm:$0xff]
      %v286 = vld [vmem:[%s209 + $0xd8] sm:$0xff]
      %v287 = vld [vmem:[%s209 + $0xe0] sm:$0xff]
      %v288 = vld [vmem:[%s209 + $0xe8] sm:$0xff]
      %v289 = vld [vmem:[%s209 + $0xf0] sm:$0xff]
      %v290 = vld [vmem:[%s209 + $0xf8] sm:$0xff]
      %v291 = vld [vmem:[%s209 + $0x100] sm:$0xff]
      %v292 = vld [vmem:[%s209 + $0x108] sm:$0xff]
      %v293 = vld [vmem:[%s209 + $0x110] sm:$0xff]
      %v294 = vld [vmem:[%s209 + $0x118] sm:$0xff]
      %v295 = vld [vmem:[%s1] sm:$0xff]
      %v296 = vld [vmem:[%s1 + $0x8] sm:$0xff]
      %v297 = vld [vmem:[%s1 + $0x10] sm:$0xff]
      %v298 = vld [vmem:[%s1 + $0x18] sm:$0xff]
      %v299 = vld [vmem:[%s1 + $0x20] sm:$0xff]
      %v300 = vld [vmem:[%s1 + $0x28] sm:$0xff]
      %v301 = vld [vmem:[%s1 + $0x30] sm:$0xff]
      %v302 = vld [vmem:[%s1 + $0x38] sm:$0xff]
      %v303 = vld [vmem:[%s1 + $0x40] sm:$0xff]
      %v304 = vld [vmem:[%s1 + $0x48] sm:$0xff]
      %v305 = vld [vmem:[%s1 + $0x50] sm:$0xff]
      %v306 = vld [vmem:[%s1 + $0x58] sm:$0xff]
      %v307 = vld [vmem:[%s1 + $0x60] sm:$0xff]
      %v308 = vld [vmem:[%s1 + $0x68] sm:$0xff]
      %v309 = vld [vmem:[%s1 + $0x70] sm:$0xff]
      %v310 = vld [vmem:[%s1 + $0x78] sm:$0xff]
      %v311 = vld [vmem:[%s209 + $0x1] sm:$0xff]
      %v312 = vld [vmem:[%s209 + $0x9] sm:$0xff]
      %v313 = vld [vmem:[%s209 + $0x11] sm:$0xff]
      %v314 = vld [vmem:[%s209 + $0x19] sm:$0xff]
      %v315 = vld [vmem:[%s209 + $0x21] sm:$0xff]
      %v316 = vld [vmem:[%s209 + $0x29] sm:$0xff]
      %v317 = vld [vmem:[%s209 + $0x31] sm:$0xff]
      %v318 = vld [vmem:[%s209 + $0x39] sm:$0xff]
      %v319 = vld [vmem:[%s209 + $0x41] sm:$0xff]
      %v320 = vld [vmem:[%s209 + $0x49] sm:$0xff]
      %v321 = vld [vmem:[%s209 + $0x51] sm:$0xff]
      %v322 = vld [vmem:[%s209 + $0x59] sm:$0xff]
      %v323 = vld [vmem:[%s209 + $0x61] sm:$0xff]
      %v324 = vld [vmem:[%s209 + $0x69] sm:$0xff]
      %v325 = vld [vmem:[%s209 + $0x71] sm:$0xff]
      %v326 = vld [vmem:[%s209 + $0x79] sm:$0xff]
      %v327 = vld [vmem:[%s209 + $0x81] sm:$0xff]
      %v328 = vld [vmem:[%s209 + $0x89] sm:$0xff]
      %v329 = vld [vmem:[%s209 + $0x91] sm:$0xff]
      %v330 = vld [vmem:[%s209 + $0x99] sm:$0xff]
      %v331 = vld [vmem:[%s209 + $0xa1] sm:$0xff]
      %v332 = vld [vmem:[%s209 + $0xa9] sm:$0xff]
      %v333 = vld [vmem:[%s209 + $0xb1] sm:$0xff]
      %v334 = vld [vmem:[%s209 + $0xb9] sm:$0xff]
      %v335 = vld [vmem:[%s209 + $0xc1] sm:$0xff]
      %v336 = vld [vmem:[%s209 + $0xc9] sm:$0xff]
      %v337 = vld [vmem:[%s209 + $0xd1] sm:$0xff]
      %v338 = vld [vmem:[%s209 + $0xd9] sm:$0xff]
      %v339 = vld [vmem:[%s209 + $0xe1] sm:$0xff]
      %v340 = vld [vmem:[%s209 + $0xe9] sm:$0xff]
      %v341 = vld [vmem:[%s209 + $0xf1] sm:$0xff]
      %v342 = vld [vmem:[%s209 + $0xf9] sm:$0xff]
      %v343 = vld [vmem:[%s209 + $0x101] sm:$0xff]
      %v344 = vld [vmem:[%s209 + $0x109] sm:$0xff]
      %v345 = vld [vmem:[%s209 + $0x111] sm:$0xff]
      %v346 = vld [vmem:[%s209 + $0x119] sm:$0xff]
      %s347 = scalar_lea.vmem %s1, 128
      %v348 = vld [vmem:[%s347] sm:$0xff]
      %v349 = vld [vmem:[%s347 + $0x8] sm:$0xff]
      %v350 = vld [vmem:[%s347 + $0x10] sm:$0xff]
      %v351 = vld [vmem:[%s347 + $0x18] sm:$0xff]
      %v352 = vld [vmem:[%s347 + $0x20] sm:$0xff]
      %v353 = vld [vmem:[%s347 + $0x28] sm:$0xff]
      %v354 = vld [vmem:[%s347 + $0x30] sm:$0xff]
      %v355 = vld [vmem:[%s347 + $0x38] sm:$0xff]
      %v356 = vld [vmem:[%s347 + $0x40] sm:$0xff]
      %v357 = vld [vmem:[%s347 + $0x48] sm:$0xff]
      %v358 = vld [vmem:[%s347 + $0x50] sm:$0xff]
      %v359 = vld [vmem:[%s347 + $0x58] sm:$0xff]
      %v360 = vld [vmem:[%s347 + $0x60] sm:$0xff]
      %v361 = vld [vmem:[%s347 + $0x68] sm:$0xff]
      %v362 = vld [vmem:[%s347 + $0x70] sm:$0xff]
      %v363 = vld [vmem:[%s347 + $0x78] sm:$0xff]
      %364 = vmatprep.subr.mxu0 0.0
      %365 = vmatpush1.msra.mxu0 %v363
      %366 = vmatprep.subr.mxu0 0.0
      %367 = vmatpush1.msra.mxu0 %v362
      %368 = vmatprep.subr.mxu0 0.0
      %369 = vmatpush1.msra.mxu0 %v361
      %370 = vmatprep.subr.mxu0 0.0
      %371 = vmatpush1.msra.mxu0 %v360
      %372 = vmatprep.subr.mxu0 0.0
      %373 = vmatpush1.msra.mxu0 %v359
      %374 = vmatprep.subr.mxu0 0.0
      %375 = vmatpush1.msra.mxu0 %v358
      %376 = vmatprep.subr.mxu0 0.0
      %377 = vmatpush1.msra.mxu0 %v357
      %378 = vmatprep.subr.mxu0 0.0
      %379 = vmatpush1.msra.mxu0 %v356
      %380 = vmatprep.subr.mxu0 0.0
      %381 = vmatpush1.msra.mxu0 %v355
      %382 = vmatprep.subr.mxu0 0.0
      %383 = vmatpush1.msra.mxu0 %v354
      %384 = vmatprep.subr.mxu0 0.0
      %385 = vmatpush1.msra.mxu0 %v353
      %386 = vmatprep.subr.mxu0 0.0
      %387 = vmatpush1.msra.mxu0 %v352
      %388 = vmatprep.subr.mxu0 0.0
      %389 = vmatpush1.msra.mxu0 %v351
      %390 = vmatprep.subr.mxu0 0.0
      %391 = vmatpush1.msra.mxu0 %v350
      %392 = vmatprep.subr.mxu0 0.0
      %393 = vmatpush1.msra.mxu0 %v349
      %394 = vmatprep.subr.mxu0 0.0
      %395 = vmatpush1.msra.mxu0 %v348
      %396 = vmatprep.subr.mxu0 0.0
      %397 = vmatpush2.msra.mxu0 0.0
      %398 = vmatprep.subr.mxu0 0.0
      %399 = vmatpush2.msra.mxu0 0.0
      %400 = vmatprep.subr.mxu0 0.0
      %401 = vmatpush2.msra.mxu0 0.0
      %402 = vmatprep.subr.mxu0 0.0
      %403 = vmatpush2.msra.mxu0 0.0
      %404 = vmatprep.subr.mxu0 0.0
      %405 = vmatpush2.msra.mxu0 0.0
      %406 = vmatprep.subr.mxu0 0.0
      %407 = vmatpush2.msra.mxu0 0.0
      %408 = vmatprep.subr.mxu0 0.0
      %409 = vmatpush2.msra.mxu0 0.0
      %410 = vmatprep.subr.mxu0 0.0
      %411 = vmatpush2.msra.mxu0 0.0
      %412 = vmatprep.subr.mxu0 0.0
      %413 = vmatpush2.msra.mxu0 0.0
      %414 = vmatprep.subr.mxu0 0.0
      %415 = vmatpush2.msra.mxu0 0.0
      %416 = vmatprep.subr.mxu0 0.0
      %417 = vmatpush2.msra.mxu0 0.0
      %418 = vmatprep.subr.mxu0 0.0
      %419 = vmatpush2.msra.mxu0 0.0
      %420 = vmatprep.subr.mxu0 0.0
      %421 = vmatpush2.msra.mxu0 0.0
      %422 = vmatprep.subr.mxu0 0.0
      %423 = vmatpush2.msra.mxu0 0.0
      %424 = vmatprep.subr.mxu0 0.0
      %425 = vmatpush2.msra.mxu0 0.0
      %426 = vmatprep.subr.mxu0 0.0
      %427 = vmatpush2.msra.mxu0 0.0
      %428 = vmatprep.mubr.f32.mxu0 0.0
      %429 = vmatmul.mubr.f32.gmra.mxu0 %v311
      %v430 = vpop.f32.mrf.mxu0
      %v431 = vadd.f32 0.0, %v430
      %v432 = vpop.f32.mrf.mxu0
      %433 = vmatprep.mubr.f32.mxu0 0.0
      %434 = vmatmul.mubr.f32.gmra.mxu0 %v312
      %v435 = vpop.f32.mrf.mxu0
      %v436 = vadd.f32 0.0, %v435
      %v437 = vpop.f32.mrf.mxu0
      %438 = vmatprep.mubr.f32.mxu0 0.0
      %439 = vmatmul.mubr.f32.gmra.mxu0 %v313
      %v440 = vpop.f32.mrf.mxu0
      %v441 = vadd.f32 0.0, %v440
      %v442 = vpop.f32.mrf.mxu0
      %443 = vmatprep.mubr.f32.mxu0 0.0
      %444 = vmatmul.mubr.f32.gmra.mxu0 %v314
      %v445 = vpop.f32.mrf.mxu0
      %v446 = vadd.f32 0.0, %v445
      %v447 = vpop.f32.mrf.mxu0
      %448 = vmatprep.mubr.f32.mxu0 0.0
      %449 = vmatmul.mubr.f32.gmra.mxu0 %v315
      %v450 = vpop.f32.mrf.mxu0
      %v451 = vadd.f32 0.0, %v450
      %v452 = vpop.f32.mrf.mxu0
      %453 = vmatprep.mubr.f32.mxu0 0.0
      %454 = vmatmul.mubr.f32.gmra.mxu0 %v316
      %v455 = vpop.f32.mrf.mxu0
      %v456 = vadd.f32 0.0, %v455
      %v457 = vpop.f32.mrf.mxu0
      %458 = vmatprep.mubr.f32.mxu0 0.0
      %459 = vmatmul.mubr.f32.gmra.mxu0 %v317
      %v460 = vpop.f32.mrf.mxu0
      %v461 = vadd.f32 0.0, %v460
      %v462 = vpop.f32.mrf.mxu0
      %463 = vmatprep.mubr.f32.mxu0 0.0
      %464 = vmatmul.mubr.f32.gmra.mxu0 %v318
      %v465 = vpop.f32.mrf.mxu0
      %v466 = vadd.f32 0.0, %v465
      %v467 = vpop.f32.mrf.mxu0
      %468 = vmatprep.mubr.f32.mxu0 0.0
      %469 = vmatmul.mubr.f32.gmra.mxu0 %v319
      %v470 = vpop.f32.mrf.mxu0
      %v471 = vadd.f32 0.0, %v470
      %v472 = vpop.f32.mrf.mxu0
      %473 = vmatprep.mubr.f32.mxu0 0.0
      %474 = vmatmul.mubr.f32.gmra.mxu0 %v320
      %v475 = vpop.f32.mrf.mxu0
      %v476 = vadd.f32 0.0, %v475
      %v477 = vpop.f32.mrf.mxu0
      %478 = vmatprep.mubr.f32.mxu0 0.0
      %479 = vmatmul.mubr.f32.gmra.mxu0 %v321
      %v480 = vpop.f32.mrf.mxu0
      %v481 = vadd.f32 0.0, %v480
      %v482 = vpop.f32.mrf.mxu0
      %483 = vmatprep.mubr.f32.mxu0 0.0
      %484 = vmatmul.mubr.f32.gmra.mxu0 %v322
      %v485 = vpop.f32.mrf.mxu0
      %v486 = vadd.f32 0.0, %v485
      %v487 = vpop.f32.mrf.mxu0
      %488 = vmatprep.mubr.f32.mxu0 0.0
      %489 = vmatmul.mubr.f32.gmra.mxu0 %v323
      %v490 = vpop.f32.mrf.mxu0
      %v491 = vadd.f32 0.0, %v490
      %v492 = vpop.f32.mrf.mxu0
      %493 = vmatprep.mubr.f32.mxu0 0.0
      %494 = vmatmul.mubr.f32.gmra.mxu0 %v324
      %v495 = vpop.f32.mrf.mxu0
      %v496 = vadd.f32 0.0, %v495
      %v497 = vpop.f32.mrf.mxu0
      %498 = vmatprep.mubr.f32.mxu0 0.0
      %499 = vmatmul.mubr.f32.gmra.mxu0 %v325
      %v500 = vpop.f32.mrf.mxu0
      %v501 = vadd.f32 0.0, %v500
      %v502 = vpop.f32.mrf.mxu0
      %503 = vmatprep.mubr.f32.mxu0 0.0
      %504 = vmatmul.mubr.f32.gmra.mxu0 %v326
      %v505 = vpop.f32.mrf.mxu0
      %v506 = vadd.f32 0.0, %v505
      %v507 = vpop.f32.mrf.mxu0
      %508 = vmatprep.mubr.f32.mxu0 0.0
      %509 = vmatmul.mubr.f32.gmra.mxu0 %v327
      %v510 = vpop.f32.mrf.mxu0
      %v511 = vadd.f32 0.0, %v510
      %v512 = vpop.f32.mrf.mxu0
      %513 = vmatprep.mubr.f32.mxu0 0.0
      %514 = vmatmul.mubr.f32.gmra.mxu0 %v328
      %v515 = vpop.f32.mrf.mxu0
      %v516 = vadd.f32 0.0, %v515
      %v517 = vpop.f32.mrf.mxu0
      %518 = vmatprep.mubr.f32.mxu0 0.0
      %519 = vmatmul.mubr.f32.gmra.mxu0 %v329
      %v520 = vpop.f32.mrf.mxu0
      %v521 = vadd.f32 0.0, %v520
      %v522 = vpop.f32.mrf.mxu0
      %523 = vmatprep.mubr.f32.mxu0 0.0
      %524 = vmatmul.mubr.f32.gmra.mxu0 %v330
      %v525 = vpop.f32.mrf.mxu0
      %v526 = vadd.f32 0.0, %v525
      %v527 = vpop.f32.mrf.mxu0
      %528 = vmatprep.mubr.f32.mxu0 0.0
      %529 = vmatmul.mubr.f32.gmra.mxu0 %v331
      %v530 = vpop.f32.mrf.mxu0
      %v531 = vadd.f32 0.0, %v530
      %v532 = vpop.f32.mrf.mxu0
      %533 = vmatprep.mubr.f32.mxu0 0.0
      %534 = vmatmul.mubr.f32.gmra.mxu0 %v332
      %v535 = vpop.f32.mrf.mxu0
      %v536 = vadd.f32 0.0, %v535
      %v537 = vpop.f32.mrf.mxu0
      %538 = vmatprep.mubr.f32.mxu0 0.0
      %539 = vmatmul.mubr.f32.gmra.mxu0 %v333
      %v540 = vpop.f32.mrf.mxu0
      %v541 = vadd.f32 0.0, %v540
      %v542 = vpop.f32.mrf.mxu0
      %543 = vmatprep.mubr.f32.mxu0 0.0
      %544 = vmatmul.mubr.f32.gmra.mxu0 %v334
      %v545 = vpop.f32.mrf.mxu0
      %v546 = vadd.f32 0.0, %v545
      %v547 = vpop.f32.mrf.mxu0
      %548 = vmatprep.mubr.f32.mxu0 0.0
      %549 = vmatmul.mubr.f32.gmra.mxu0 %v335
      %v550 = vpop.f32.mrf.mxu0
      %v551 = vadd.f32 0.0, %v550
      %v552 = vpop.f32.mrf.mxu0
      %553 = vmatprep.mubr.f32.mxu0 0.0
      %554 = vmatmul.mubr.f32.gmra.mxu0 %v336
      %v555 = vpop.f32.mrf.mxu0
      %v556 = vadd.f32 0.0, %v555
      %v557 = vpop.f32.mrf.mxu0
      %558 = vmatprep.mubr.f32.mxu0 0.0
      %559 = vmatmul.mubr.f32.gmra.mxu0 %v337
      %v560 = vpop.f32.mrf.mxu0
      %v561 = vadd.f32 0.0, %v560
      %v562 = vpop.f32.mrf.mxu0
      %563 = vmatprep.mubr.f32.mxu0 0.0
      %564 = vmatmul.mubr.f32.gmra.mxu0 %v338
      %v565 = vpop.f32.mrf.mxu0
      %v566 = vadd.f32 0.0, %v565
      %v567 = vpop.f32.mrf.mxu0
      %568 = vmatprep.mubr.f32.mxu0 0.0
      %569 = vmatmul.mubr.f32.gmra.mxu0 %v339
      %v570 = vpop.f32.mrf.mxu0
      %v571 = vadd.f32 0.0, %v570
      %v572 = vpop.f32.mrf.mxu0
      %573 = vmatprep.mubr.f32.mxu0 0.0
      %574 = vmatmul.mubr.f32.gmra.mxu0 %v340
      %v575 = vpop.f32.mrf.mxu0
      %v576 = vadd.f32 0.0, %v575
      %v577 = vpop.f32.mrf.mxu0
      %578 = vmatprep.mubr.f32.mxu0 0.0
      %579 = vmatmul.mubr.f32.gmra.mxu0 %v341
      %v580 = vpop.f32.mrf.mxu0
      %v581 = vadd.f32 0.0, %v580
      %v582 = vpop.f32.mrf.mxu0
      %583 = vmatprep.mubr.f32.mxu0 0.0
      %584 = vmatmul.mubr.f32.gmra.mxu0 %v342
      %v585 = vpop.f32.mrf.mxu0
      %v586 = vadd.f32 0.0, %v585
      %v587 = vpop.f32.mrf.mxu0
      %588 = vmatprep.mubr.f32.mxu0 0.0
      %589 = vmatmul.mubr.f32.gmra.mxu0 %v343
      %v590 = vpop.f32.mrf.mxu0
      %v591 = vadd.f32 0.0, %v590
      %v592 = vpop.f32.mrf.mxu0
      %593 = vmatprep.mubr.f32.mxu0 0.0
      %594 = vmatmul.mubr.f32.gmra.mxu0 %v344
      %v595 = vpop.f32.mrf.mxu0
      %v596 = vadd.f32 0.0, %v595
      %v597 = vpop.f32.mrf.mxu0
      %598 = vmatprep.mubr.f32.mxu0 0.0
      %599 = vmatmul.mubr.f32.gmra.mxu0 %v345
      %v600 = vpop.f32.mrf.mxu0
      %v601 = vadd.f32 0.0, %v600
      %v602 = vpop.f32.mrf.mxu0
      %603 = vmatprep.mubr.f32.mxu0 0.0
      %604 = vmatmul.mubr.f32.gmra.mxu0 %v346
      %v605 = vpop.f32.mrf.mxu0
      %v606 = vadd.f32 0.0, %v605
      %v607 = vpop.f32.mrf.mxu0
      %608 = vdwg.mxu0
      %609 = vmatprep.subr.mxu0 0.0
      %610 = vmatpush1.msra.mxu0 %v310
      %611 = vmatprep.subr.mxu0 0.0
      %612 = vmatpush1.msra.mxu0 %v309
      %613 = vmatprep.subr.mxu0 0.0
      %614 = vmatpush1.msra.mxu0 %v308
      %615 = vmatprep.subr.mxu0 0.0
      %616 = vmatpush1.msra.mxu0 %v307
      %617 = vmatprep.subr.mxu0 0.0
      %618 = vmatpush1.msra.mxu0 %v306
      %619 = vmatprep.subr.mxu0 0.0
      %620 = vmatpush1.msra.mxu0 %v305
      %621 = vmatprep.subr.mxu0 0.0
      %622 = vmatpush1.msra.mxu0 %v304
      %623 = vmatprep.subr.mxu0 0.0
      %624 = vmatpush1.msra.mxu0 %v303
      %625 = vmatprep.subr.mxu0 0.0
      %626 = vmatpush1.msra.mxu0 %v302
      %627 = vmatprep.subr.mxu0 0.0
      %628 = vmatpush1.msra.mxu0 %v301
      %629 = vmatprep.subr.mxu0 0.0
      %630 = vmatpush1.msra.mxu0 %v300
      %631 = vmatprep.subr.mxu0 0.0
      %632 = vmatpush1.msra.mxu0 %v299
      %633 = vmatprep.subr.mxu0 0.0
      %634 = vmatpush1.msra.mxu0 %v298
      %635 = vmatprep.subr.mxu0 0.0
      %636 = vmatpush1.msra.mxu0 %v297
      %637 = vmatprep.subr.mxu0 0.0
      %638 = vmatpush1.msra.mxu0 %v296
      %639 = vmatprep.subr.mxu0 0.0
      %640 = vmatpush1.msra.mxu0 %v295
      %641 = vmatprep.subr.mxu0 0.0
      %642 = vmatpush2.msra.mxu0 0.0
      %643 = vmatprep.subr.mxu0 0.0
      %644 = vmatpush2.msra.mxu0 0.0
      %645 = vmatprep.subr.mxu0 0.0
      %646 = vmatpush2.msra.mxu0 0.0
      %647 = vmatprep.subr.mxu0 0.0
      %648 = vmatpush2.msra.mxu0 0.0
      %649 = vmatprep.subr.mxu0 0.0
      %650 = vmatpush2.msra.mxu0 0.0
      %651 = vmatprep.subr.mxu0 0.0
      %652 = vmatpush2.msra.mxu0 0.0
      %653 = vmatprep.subr.mxu0 0.0
      %654 = vmatpush2.msra.mxu0 0.0
      %655 = vmatprep.subr.mxu0 0.0
      %656 = vmatpush2.msra.mxu0 0.0
      %657 = vmatprep.subr.mxu0 0.0
      %658 = vmatpush2.msra.mxu0 0.0
      %659 = vmatprep.subr.mxu0 0.0
      %660 = vmatpush2.msra.mxu0 0.0
      %661 = vmatprep.subr.mxu0 0.0
      %662 = vmatpush2.msra.mxu0 0.0
      %663 = vmatprep.subr.mxu0 0.0
      %664 = vmatpush2.msra.mxu0 0.0
      %665 = vmatprep.subr.mxu0 0.0
      %666 = vmatpush2.msra.mxu0 0.0
      %667 = vmatprep.subr.mxu0 0.0
      %668 = vmatpush2.msra.mxu0 0.0
      %669 = vmatprep.subr.mxu0 0.0
      %670 = vmatpush2.msra.mxu0 0.0
      %671 = vmatprep.subr.mxu0 0.0
      %672 = vmatpush2.msra.mxu0 0.0
      %673 = vmatprep.mubr.f32.mxu0 0.0
      %674 = vmatmul.mubr.f32.gmra.mxu0 %v259
      %v675 = vpop.f32.mrf.mxu0
      %v676 = vadd.f32 %v431, %v675
      %v677 = vpop.f32.mrf.mxu0
      %678 = vmatprep.mubr.f32.mxu0 0.0
      %679 = vmatmul.mubr.f32.gmra.mxu0 %v260
      %v680 = vpop.f32.mrf.mxu0
      %v681 = vadd.f32 %v436, %v680
      %v682 = vpop.f32.mrf.mxu0
      %683 = vmatprep.mubr.f32.mxu0 0.0
      %684 = vmatmul.mubr.f32.gmra.mxu0 %v261
      %v685 = vpop.f32.mrf.mxu0
      %v686 = vadd.f32 %v441, %v685
      %v687 = vpop.f32.mrf.mxu0
      %688 = vmatprep.mubr.f32.mxu0 0.0
      %689 = vmatmul.mubr.f32.gmra.mxu0 %v262
      %v690 = vpop.f32.mrf.mxu0
      %v691 = vadd.f32 %v446, %v690
      %v692 = vpop.f32.mrf.mxu0
      %693 = vmatprep.mubr.f32.mxu0 0.0
      %694 = vmatmul.mubr.f32.gmra.mxu0 %v263
      %v695 = vpop.f32.mrf.mxu0
      %v696 = vadd.f32 %v451, %v695
      %v697 = vpop.f32.mrf.mxu0
      %698 = vmatprep.mubr.f32.mxu0 0.0
      %699 = vmatmul.mubr.f32.gmra.mxu0 %v264
      %v700 = vpop.f32.mrf.mxu0
      %v701 = vadd.f32 %v456, %v700
      %v702 = vpop.f32.mrf.mxu0
      %703 = vmatprep.mubr.f32.mxu0 0.0
      %704 = vmatmul.mubr.f32.gmra.mxu0 %v265
      %v705 = vpop.f32.mrf.mxu0
      %v706 = vadd.f32 %v461, %v705
      %v707 = vpop.f32.mrf.mxu0
      %708 = vmatprep.mubr.f32.mxu0 0.0
      %709 = vmatmul.mubr.f32.gmra.mxu0 %v266
      %v710 = vpop.f32.mrf.mxu0
      %v711 = vadd.f32 %v466, %v710
      %v712 = vpop.f32.mrf.mxu0
      %713 = vmatprep.mubr.f32.mxu0 0.0
      %714 = vmatmul.mubr.f32.gmra.mxu0 %v267
      %v715 = vpop.f32.mrf.mxu0
      %v716 = vadd.f32 %v471, %v715
      %v717 = vpop.f32.mrf.mxu0
      %718 = vmatprep.mubr.f32.mxu0 0.0
      %719 = vmatmul.mubr.f32.gmra.mxu0 %v268
      %v720 = vpop.f32.mrf.mxu0
      %v721 = vadd.f32 %v476, %v720
      %v722 = vpop.f32.mrf.mxu0
      %723 = vmatprep.mubr.f32.mxu0 0.0
      %724 = vmatmul.mubr.f32.gmra.mxu0 %v269
      %v725 = vpop.f32.mrf.mxu0
      %v726 = vadd.f32 %v481, %v725
      %v727 = vpop.f32.mrf.mxu0
      %728 = vmatprep.mubr.f32.mxu0 0.0
      %729 = vmatmul.mubr.f32.gmra.mxu0 %v270
      %v730 = vpop.f32.mrf.mxu0
      %v731 = vadd.f32 %v486, %v730
      %v732 = vpop.f32.mrf.mxu0
      %733 = vmatprep.mubr.f32.mxu0 0.0
      %734 = vmatmul.mubr.f32.gmra.mxu0 %v271
      %v735 = vpop.f32.mrf.mxu0
      %v736 = vadd.f32 %v491, %v735
      %v737 = vpop.f32.mrf.mxu0
      %738 = vmatprep.mubr.f32.mxu0 0.0
      %739 = vmatmul.mubr.f32.gmra.mxu0 %v272
      %v740 = vpop.f32.mrf.mxu0
      %v741 = vadd.f32 %v496, %v740
      %v742 = vpop.f32.mrf.mxu0
      %743 = vmatprep.mubr.f32.mxu0 0.0
      %744 = vmatmul.mubr.f32.gmra.mxu0 %v273
      %v745 = vpop.f32.mrf.mxu0
      %v746 = vadd.f32 %v501, %v745
      %v747 = vpop.f32.mrf.mxu0
      %748 = vmatprep.mubr.f32.mxu0 0.0
      %749 = vmatmul.mubr.f32.gmra.mxu0 %v274
      %v750 = vpop.f32.mrf.mxu0
      %v751 = vadd.f32 %v506, %v750
      %v752 = vpop.f32.mrf.mxu0
      %753 = vmatprep.mubr.f32.mxu0 0.0
      %754 = vmatmul.mubr.f32.gmra.mxu0 %v275
      %v755 = vpop.f32.mrf.mxu0
      %v756 = vadd.f32 %v511, %v755
      %v757 = vpop.f32.mrf.mxu0
      %758 = vmatprep.mubr.f32.mxu0 0.0
      %759 = vmatmul.mubr.f32.gmra.mxu0 %v276
      %v760 = vpop.f32.mrf.mxu0
      %v761 = vadd.f32 %v516, %v760
      %v762 = vpop.f32.mrf.mxu0
      %763 = vmatprep.mubr.f32.mxu0 0.0
      %764 = vmatmul.mubr.f32.gmra.mxu0 %v277
      %v765 = vpop.f32.mrf.mxu0
      %v766 = vadd.f32 %v521, %v765
      %v767 = vpop.f32.mrf.mxu0
      %768 = vmatprep.mubr.f32.mxu0 0.0
      %769 = vmatmul.mubr.f32.gmra.mxu0 %v278
      %v770 = vpop.f32.mrf.mxu0
      %v771 = vadd.f32 %v526, %v770
      %v772 = vpop.f32.mrf.mxu0
      %773 = vmatprep.mubr.f32.mxu0 0.0
      %774 = vmatmul.mubr.f32.gmra.mxu0 %v279
      %v775 = vpop.f32.mrf.mxu0
      %v776 = vadd.f32 %v531, %v775
      %v777 = vpop.f32.mrf.mxu0
      %778 = vmatprep.mubr.f32.mxu0 0.0
      %779 = vmatmul.mubr.f32.gmra.mxu0 %v280
      %v780 = vpop.f32.mrf.mxu0
      %v781 = vadd.f32 %v536, %v780
      %v782 = vpop.f32.mrf.mxu0
      %783 = vmatprep.mubr.f32.mxu0 0.0
      %784 = vmatmul.mubr.f32.gmra.mxu0 %v281
      %v785 = vpop.f32.mrf.mxu0
      %v786 = vadd.f32 %v541, %v785
      %v787 = vpop.f32.mrf.mxu0
      %788 = vmatprep.mubr.f32.mxu0 0.0
      %789 = vmatmul.mubr.f32.gmra.mxu0 %v282
      %v790 = vpop.f32.mrf.mxu0
      %v791 = vadd.f32 %v546, %v790
      %v792 = vpop.f32.mrf.mxu0
      %793 = vmatprep.mubr.f32.mxu0 0.0
      %794 = vmatmul.mubr.f32.gmra.mxu0 %v283
      %v795 = vpop.f32.mrf.mxu0
      %v796 = vadd.f32 %v551, %v795
      %v797 = vpop.f32.mrf.mxu0
      %798 = vmatprep.mubr.f32.mxu0 0.0
      %799 = vmatmul.mubr.f32.gmra.mxu0 %v284
      %v800 = vpop.f32.mrf.mxu0
      %v801 = vadd.f32 %v556, %v800
      %v802 = vpop.f32.mrf.mxu0
      %803 = vmatprep.mubr.f32.mxu0 0.0
      %804 = vmatmul.mubr.f32.gmra.mxu0 %v285
      %v805 = vpop.f32.mrf.mxu0
      %v806 = vadd.f32 %v561, %v805
      %v807 = vpop.f32.mrf.mxu0
      %808 = vmatprep.mubr.f32.mxu0 0.0
      %809 = vmatmul.mubr.f32.gmra.mxu0 %v286
      %v810 = vpop.f32.mrf.mxu0
      %v811 = vadd.f32 %v566, %v810
      %v812 = vpop.f32.mrf.mxu0
      %813 = vmatprep.mubr.f32.mxu0 0.0
      %814 = vmatmul.mubr.f32.gmra.mxu0 %v287
      %v815 = vpop.f32.mrf.mxu0
      %v816 = vadd.f32 %v571, %v815
      %v817 = vpop.f32.mrf.mxu0
      %818 = vmatprep.mubr.f32.mxu0 0.0
      %819 = vmatmul.mubr.f32.gmra.mxu0 %v288
      %v820 = vpop.f32.mrf.mxu0
      %v821 = vadd.f32 %v576, %v820
      %v822 = vpop.f32.mrf.mxu0
      %823 = vmatprep.mubr.f32.mxu0 0.0
      %824 = vmatmul.mubr.f32.gmra.mxu0 %v289
      %v825 = vpop.f32.mrf.mxu0
      %v826 = vadd.f32 %v581, %v825
      %v827 = vpop.f32.mrf.mxu0
      %828 = vmatprep.mubr.f32.mxu0 0.0
      %829 = vmatmul.mubr.f32.gmra.mxu0 %v290
      %v830 = vpop.f32.mrf.mxu0
      %v831 = vadd.f32 %v586, %v830
      %v832 = vpop.f32.mrf.mxu0
      %833 = vmatprep.mubr.f32.mxu0 0.0
      %834 = vmatmul.mubr.f32.gmra.mxu0 %v291
      %v835 = vpop.f32.mrf.mxu0
      %v836 = vadd.f32 %v591, %v835
      %v837 = vpop.f32.mrf.mxu0
      %838 = vmatprep.mubr.f32.mxu0 0.0
      %839 = vmatmul.mubr.f32.gmra.mxu0 %v292
      %v840 = vpop.f32.mrf.mxu0
      %v841 = vadd.f32 %v596, %v840
      %v842 = vpop.f32.mrf.mxu0
      %843 = vmatprep.mubr.f32.mxu0 0.0
      %844 = vmatmul.mubr.f32.gmra.mxu0 %v293
      %v845 = vpop.f32.mrf.mxu0
      %v846 = vadd.f32 %v601, %v845
      %v847 = vpop.f32.mrf.mxu0
      %848 = vmatprep.mubr.f32.mxu0 0.0
      %849 = vmatmul.mubr.f32.gmra.mxu0 %v294
      %v850 = vpop.f32.mrf.mxu0
      %v851 = vadd.f32 %v606, %v850
      %v852 = vpop.f32.mrf.mxu0
      %853 = vdwg.mxu0
      %v854 = vld [vmem:[%s209 + $0x2] sm:$0xff]
      %v855 = vld [vmem:[%s209 + $0xa] sm:$0xff]
      %v856 = vld [vmem:[%s209 + $0x12] sm:$0xff]
      %v857 = vld [vmem:[%s209 + $0x1a] sm:$0xff]
      %v858 = vld [vmem:[%s209 + $0x22] sm:$0xff]
      %v859 = vld [vmem:[%s209 + $0x2a] sm:$0xff]
      %v860 = vld [vmem:[%s209 + $0x32] sm:$0xff]
      %v861 = vld [vmem:[%s209 + $0x3a] sm:$0xff]
      %v862 = vld [vmem:[%s209 + $0x42] sm:$0xff]
      %v863 = vld [vmem:[%s209 + $0x4a] sm:$0xff]
      %v864 = vld [vmem:[%s209 + $0x52] sm:$0xff]
      %v865 = vld [vmem:[%s209 + $0x5a] sm:$0xff]
      %v866 = vld [vmem:[%s209 + $0x62] sm:$0xff]
      %v867 = vld [vmem:[%s209 + $0x6a] sm:$0xff]
      %v868 = vld [vmem:[%s209 + $0x72] sm:$0xff]
      %v869 = vld [vmem:[%s209 + $0x7a] sm:$0xff]
      %v870 = vld [vmem:[%s209 + $0x82] sm:$0xff]
      %v871 = vld [vmem:[%s209 + $0x8a] sm:$0xff]
      %v872 = vld [vmem:[%s209 + $0x92] sm:$0xff]
      %v873 = vld [vmem:[%s209 + $0x9a] sm:$0xff]
      %v874 = vld [vmem:[%s209 + $0xa2] sm:$0xff]
      %v875 = vld [vmem:[%s209 + $0xaa] sm:$0xff]
      %v876 = vld [vmem:[%s209 + $0xb2] sm:$0xff]
      %v877 = vld [vmem:[%s209 + $0xba] sm:$0xff]
      %v878 = vld [vmem:[%s209 + $0xc2] sm:$0xff]
      %v879 = vld [vmem:[%s209 + $0xca] sm:$0xff]
      %v880 = vld [vmem:[%s209 + $0xd2] sm:$0xff]
      %v881 = vld [vmem:[%s209 + $0xda] sm:$0xff]
      %v882 = vld [vmem:[%s209 + $0xe2] sm:$0xff]
      %v883 = vld [vmem:[%s209 + $0xea] sm:$0xff]
      %v884 = vld [vmem:[%s209 + $0xf2] sm:$0xff]
      %v885 = vld [vmem:[%s209 + $0xfa] sm:$0xff]
      %v886 = vld [vmem:[%s209 + $0x102] sm:$0xff]
      %v887 = vld [vmem:[%s209 + $0x10a] sm:$0xff]
      %v888 = vld [vmem:[%s209 + $0x112] sm:$0xff]
      %v889 = vld [vmem:[%s209 + $0x11a] sm:$0xff]
      %s890 = scalar_lea.vmem %s1, 256
      %v891 = vld [vmem:[%s890] sm:$0xff]
      %v892 = vld [vmem:[%s890 + $0x8] sm:$0xff]
      %v893 = vld [vmem:[%s890 + $0x10] sm:$0xff]
      %v894 = vld [vmem:[%s890 + $0x18] sm:$0xff]
      %v895 = vld [vmem:[%s890 + $0x20] sm:$0xff]
      %v896 = vld [vmem:[%s890 + $0x28] sm:$0xff]
      %v897 = vld [vmem:[%s890 + $0x30] sm:$0xff]
      %v898 = vld [vmem:[%s890 + $0x38] sm:$0xff]
      %v899 = vld [vmem:[%s890 + $0x40] sm:$0xff]
      %v900 = vld [vmem:[%s890 + $0x48] sm:$0xff]
      %v901 = vld [vmem:[%s890 + $0x50] sm:$0xff]
      %v902 = vld [vmem:[%s890 + $0x58] sm:$0xff]
      %v903 = vld [vmem:[%s890 + $0x60] sm:$0xff]
      %v904 = vld [vmem:[%s890 + $0x68] sm:$0xff]
      %v905 = vld [vmem:[%s890 + $0x70] sm:$0xff]
      %v906 = vld [vmem:[%s890 + $0x78] sm:$0xff]
      %907 = vmatprep.subr.mxu0 0.0
      %908 = vmatpush1.msra.mxu0 %v906
      %909 = vmatprep.subr.mxu0 0.0
      %910 = vmatpush1.msra.mxu0 %v905
      %911 = vmatprep.subr.mxu0 0.0
      %912 = vmatpush1.msra.mxu0 %v904
      %913 = vmatprep.subr.mxu0 0.0
      %914 = vmatpush1.msra.mxu0 %v903
      %915 = vmatprep.subr.mxu0 0.0
      %916 = vmatpush1.msra.mxu0 %v902
      %917 = vmatprep.subr.mxu0 0.0
      %918 = vmatpush1.msra.mxu0 %v901
      %919 = vmatprep.subr.mxu0 0.0
      %920 = vmatpush1.msra.mxu0 %v900
      %921 = vmatprep.subr.mxu0 0.0
      %922 = vmatpush1.msra.mxu0 %v899
      %923 = vmatprep.subr.mxu0 0.0
      %924 = vmatpush1.msra.mxu0 %v898
      %925 = vmatprep.subr.mxu0 0.0
      %926 = vmatpush1.msra.mxu0 %v897
      %927 = vmatprep.subr.mxu0 0.0
      %928 = vmatpush1.msra.mxu0 %v896
      %929 = vmatprep.subr.mxu0 0.0
      %930 = vmatpush1.msra.mxu0 %v895
      %931 = vmatprep.subr.mxu0 0.0
      %932 = vmatpush1.msra.mxu0 %v894
      %933 = vmatprep.subr.mxu0 0.0
      %934 = vmatpush1.msra.mxu0 %v893
      %935 = vmatprep.subr.mxu0 0.0
      %936 = vmatpush1.msra.mxu0 %v892
      %937 = vmatprep.subr.mxu0 0.0
      %938 = vmatpush1.msra.mxu0 %v891
      %939 = vmatprep.subr.mxu0 0.0
      %940 = vmatpush2.msra.mxu0 0.0
      %941 = vmatprep.subr.mxu0 0.0
      %942 = vmatpush2.msra.mxu0 0.0
      %943 = vmatprep.subr.mxu0 0.0
      %944 = vmatpush2.msra.mxu0 0.0
      %945 = vmatprep.subr.mxu0 0.0
      %946 = vmatpush2.msra.mxu0 0.0
      %947 = vmatprep.subr.mxu0 0.0
      %948 = vmatpush2.msra.mxu0 0.0
      %949 = vmatprep.subr.mxu0 0.0
      %950 = vmatpush2.msra.mxu0 0.0
      %951 = vmatprep.subr.mxu0 0.0
      %952 = vmatpush2.msra.mxu0 0.0
      %953 = vmatprep.subr.mxu0 0.0
      %954 = vmatpush2.msra.mxu0 0.0
      %955 = vmatprep.subr.mxu0 0.0
      %956 = vmatpush2.msra.mxu0 0.0
      %957 = vmatprep.subr.mxu0 0.0
      %958 = vmatpush2.msra.mxu0 0.0
      %959 = vmatprep.subr.mxu0 0.0
      %960 = vmatpush2.msra.mxu0 0.0
      %961 = vmatprep.subr.mxu0 0.0
      %962 = vmatpush2.msra.mxu0 0.0
      %963 = vmatprep.subr.mxu0 0.0
      %964 = vmatpush2.msra.mxu0 0.0
      %965 = vmatprep.subr.mxu0 0.0
      %966 = vmatpush2.msra.mxu0 0.0
      %967 = vmatprep.subr.mxu0 0.0
      %968 = vmatpush2.msra.mxu0 0.0
      %969 = vmatprep.subr.mxu0 0.0
      %970 = vmatpush2.msra.mxu0 0.0
      %971 = vmatprep.mubr.f32.mxu0 0.0
      %972 = vmatmul.mubr.f32.gmra.mxu0 %v854
      %v973 = vpop.f32.mrf.mxu0
      %v974 = vadd.f32 0.0, %v973
      %v975 = vpop.f32.mrf.mxu0
      %976 = vmatprep.mubr.f32.mxu0 0.0
      %977 = vmatmul.mubr.f32.gmra.mxu0 %v855
      %v978 = vpop.f32.mrf.mxu0
      %v979 = vadd.f32 0.0, %v978
      %v980 = vpop.f32.mrf.mxu0
      %981 = vmatprep.mubr.f32.mxu0 0.0
      %982 = vmatmul.mubr.f32.gmra.mxu0 %v856
      %v983 = vpop.f32.mrf.mxu0
      %v984 = vadd.f32 0.0, %v983
      %v985 = vpop.f32.mrf.mxu0
      %986 = vmatprep.mubr.f32.mxu0 0.0
      %987 = vmatmul.mubr.f32.gmra.mxu0 %v857
      %v988 = vpop.f32.mrf.mxu0
      %v989 = vadd.f32 0.0, %v988
      %v990 = vpop.f32.mrf.mxu0
      %991 = vmatprep.mubr.f32.mxu0 0.0
      %992 = vmatmul.mubr.f32.gmra.mxu0 %v858
      %v993 = vpop.f32.mrf.mxu0
      %v994 = vadd.f32 0.0, %v993
      %v995 = vpop.f32.mrf.mxu0
      %996 = vmatprep.mubr.f32.mxu0 0.0
      %997 = vmatmul.mubr.f32.gmra.mxu0 %v859
      %v998 = vpop.f32.mrf.mxu0
      %v999 = vadd.f32 0.0, %v998
      %v1000 = vpop.f32.mrf.mxu0
      %1001 = vmatprep.mubr.f32.mxu0 0.0
      %1002 = vmatmul.mubr.f32.gmra.mxu0 %v860
      %v1003 = vpop.f32.mrf.mxu0
      %v1004 = vadd.f32 0.0, %v1003
      %v1005 = vpop.f32.mrf.mxu0
      %1006 = vmatprep.mubr.f32.mxu0 0.0
      %1007 = vmatmul.mubr.f32.gmra.mxu0 %v861
      %v1008 = vpop.f32.mrf.mxu0
      %v1009 = vadd.f32 0.0, %v1008
      %v1010 = vpop.f32.mrf.mxu0
      %1011 = vmatprep.mubr.f32.mxu0 0.0
      %1012 = vmatmul.mubr.f32.gmra.mxu0 %v862
      %v1013 = vpop.f32.mrf.mxu0
      %v1014 = vadd.f32 0.0, %v1013
      %v1015 = vpop.f32.mrf.mxu0
      %1016 = vmatprep.mubr.f32.mxu0 0.0
      %1017 = vmatmul.mubr.f32.gmra.mxu0 %v863
      %v1018 = vpop.f32.mrf.mxu0
      %v1019 = vadd.f32 0.0, %v1018
      %v1020 = vpop.f32.mrf.mxu0
      %1021 = vmatprep.mubr.f32.mxu0 0.0
      %1022 = vmatmul.mubr.f32.gmra.mxu0 %v864
      %v1023 = vpop.f32.mrf.mxu0
      %v1024 = vadd.f32 0.0, %v1023
      %v1025 = vpop.f32.mrf.mxu0
      %1026 = vmatprep.mubr.f32.mxu0 0.0
      %1027 = vmatmul.mubr.f32.gmra.mxu0 %v865
      %v1028 = vpop.f32.mrf.mxu0
      %v1029 = vadd.f32 0.0, %v1028
      %v1030 = vpop.f32.mrf.mxu0
      %1031 = vmatprep.mubr.f32.mxu0 0.0
      %1032 = vmatmul.mubr.f32.gmra.mxu0 %v866
      %v1033 = vpop.f32.mrf.mxu0
      %v1034 = vadd.f32 0.0, %v1033
      %v1035 = vpop.f32.mrf.mxu0
      %1036 = vmatprep.mubr.f32.mxu0 0.0
      %1037 = vmatmul.mubr.f32.gmra.mxu0 %v867
      %v1038 = vpop.f32.mrf.mxu0
      %v1039 = vadd.f32 0.0, %v1038
      %v1040 = vpop.f32.mrf.mxu0
      %1041 = vmatprep.mubr.f32.mxu0 0.0
      %1042 = vmatmul.mubr.f32.gmra.mxu0 %v868
      %v1043 = vpop.f32.mrf.mxu0
      %v1044 = vadd.f32 0.0, %v1043
      %v1045 = vpop.f32.mrf.mxu0
      %1046 = vmatprep.mubr.f32.mxu0 0.0
      %1047 = vmatmul.mubr.f32.gmra.mxu0 %v869
      %v1048 = vpop.f32.mrf.mxu0
      %v1049 = vadd.f32 0.0, %v1048
      %v1050 = vpop.f32.mrf.mxu0
      %1051 = vmatprep.mubr.f32.mxu0 0.0
      %1052 = vmatmul.mubr.f32.gmra.mxu0 %v870
      %v1053 = vpop.f32.mrf.mxu0
      %v1054 = vadd.f32 0.0, %v1053
      %v1055 = vpop.f32.mrf.mxu0
      %1056 = vmatprep.mubr.f32.mxu0 0.0
      %1057 = vmatmul.mubr.f32.gmra.mxu0 %v871
      %v1058 = vpop.f32.mrf.mxu0
      %v1059 = vadd.f32 0.0, %v1058
      %v1060 = vpop.f32.mrf.mxu0
      %1061 = vmatprep.mubr.f32.mxu0 0.0
      %1062 = vmatmul.mubr.f32.gmra.mxu0 %v872
      %v1063 = vpop.f32.mrf.mxu0
      %v1064 = vadd.f32 0.0, %v1063
      %v1065 = vpop.f32.mrf.mxu0
      %1066 = vmatprep.mubr.f32.mxu0 0.0
      %1067 = vmatmul.mubr.f32.gmra.mxu0 %v873
      %v1068 = vpop.f32.mrf.mxu0
      %v1069 = vadd.f32 0.0, %v1068
      %v1070 = vpop.f32.mrf.mxu0
      %1071 = vmatprep.mubr.f32.mxu0 0.0
      %1072 = vmatmul.mubr.f32.gmra.mxu0 %v874
      %v1073 = vpop.f32.mrf.mxu0
      %v1074 = vadd.f32 0.0, %v1073
      %v1075 = vpop.f32.mrf.mxu0
      %1076 = vmatprep.mubr.f32.mxu0 0.0
      %1077 = vmatmul.mubr.f32.gmra.mxu0 %v875
      %v1078 = vpop.f32.mrf.mxu0
      %v1079 = vadd.f32 0.0, %v1078
      %v1080 = vpop.f32.mrf.mxu0
      %1081 = vmatprep.mubr.f32.mxu0 0.0
      %1082 = vmatmul.mubr.f32.gmra.mxu0 %v876
      %v1083 = vpop.f32.mrf.mxu0
      %v1084 = vadd.f32 0.0, %v1083
      %v1085 = vpop.f32.mrf.mxu0
      %1086 = vmatprep.mubr.f32.mxu0 0.0
      %1087 = vmatmul.mubr.f32.gmra.mxu0 %v877
      %v1088 = vpop.f32.mrf.mxu0
      %v1089 = vadd.f32 0.0, %v1088
      %v1090 = vpop.f32.mrf.mxu0
      %1091 = vmatprep.mubr.f32.mxu0 0.0
      %1092 = vmatmul.mubr.f32.gmra.mxu0 %v878
      %v1093 = vpop.f32.mrf.mxu0
      %v1094 = vadd.f32 0.0, %v1093
      %v1095 = vpop.f32.mrf.mxu0
      %1096 = vmatprep.mubr.f32.mxu0 0.0
      %1097 = vmatmul.mubr.f32.gmra.mxu0 %v879
      %v1098 = vpop.f32.mrf.mxu0
      %v1099 = vadd.f32 0.0, %v1098
      %v1100 = vpop.f32.mrf.mxu0
      %1101 = vmatprep.mubr.f32.mxu0 0.0
      %1102 = vmatmul.mubr.f32.gmra.mxu0 %v880
      %v1103 = vpop.f32.mrf.mxu0
      %v1104 = vadd.f32 0.0, %v1103
      %v1105 = vpop.f32.mrf.mxu0
      %1106 = vmatprep.mubr.f32.mxu0 0.0
      %1107 = vmatmul.mubr.f32.gmra.mxu0 %v881
      %v1108 = vpop.f32.mrf.mxu0
      %v1109 = vadd.f32 0.0, %v1108
      %v1110 = vpop.f32.mrf.mxu0
      %1111 = vmatprep.mubr.f32.mxu0 0.0
      %1112 = vmatmul.mubr.f32.gmra.mxu0 %v882
      %v1113 = vpop.f32.mrf.mxu0
      %v1114 = vadd.f32 0.0, %v1113
      %v1115 = vpop.f32.mrf.mxu0
      %1116 = vmatprep.mubr.f32.mxu0 0.0
      %1117 = vmatmul.mubr.f32.gmra.mxu0 %v883
      %v1118 = vpop.f32.mrf.mxu0
      %v1119 = vadd.f32 0.0, %v1118
      %v1120 = vpop.f32.mrf.mxu0
      %1121 = vmatprep.mubr.f32.mxu0 0.0
      %1122 = vmatmul.mubr.f32.gmra.mxu0 %v884
      %v1123 = vpop.f32.mrf.mxu0
      %v1124 = vadd.f32 0.0, %v1123
      %v1125 = vpop.f32.mrf.mxu0
      %1126 = vmatprep.mubr.f32.mxu0 0.0
      %1127 = vmatmul.mubr.f32.gmra.mxu0 %v885
      %v1128 = vpop.f32.mrf.mxu0
      %v1129 = vadd.f32 0.0, %v1128
      %v1130 = vpop.f32.mrf.mxu0
      %1131 = vmatprep.mubr.f32.mxu0 0.0
      %1132 = vmatmul.mubr.f32.gmra.mxu0 %v886
      %v1133 = vpop.f32.mrf.mxu0
      %v1134 = vadd.f32 0.0, %v1133
      %v1135 = vpop.f32.mrf.mxu0
      %1136 = vmatprep.mubr.f32.mxu0 0.0
      %1137 = vmatmul.mubr.f32.gmra.mxu0 %v887
      %v1138 = vpop.f32.mrf.mxu0
      %v1139 = vadd.f32 0.0, %v1138
      %v1140 = vpop.f32.mrf.mxu0
      %1141 = vmatprep.mubr.f32.mxu0 0.0
      %1142 = vmatmul.mubr.f32.gmra.mxu0 %v888
      %v1143 = vpop.f32.mrf.mxu0
      %v1144 = vadd.f32 0.0, %v1143
      %v1145 = vpop.f32.mrf.mxu0
      %1146 = vmatprep.mubr.f32.mxu0 0.0
      %1147 = vmatmul.mubr.f32.gmra.mxu0 %v889
      %v1148 = vpop.f32.mrf.mxu0
      %v1149 = vadd.f32 0.0, %v1148
      %v1150 = vpop.f32.mrf.mxu0
      %1151 = vdwg.mxu0
      %v1152 = vadd.f32 %v676, %v974
      %v1153 = vadd.f32 %v681, %v979
      %v1154 = vadd.f32 %v686, %v984
      %v1155 = vadd.f32 %v691, %v989
      %v1156 = vadd.f32 %v696, %v994
      %v1157 = vadd.f32 %v701, %v999
      %v1158 = vadd.f32 %v706, %v1004
      %v1159 = vadd.f32 %v711, %v1009
      %v1160 = vadd.f32 %v716, %v1014
      %v1161 = vadd.f32 %v721, %v1019
      %v1162 = vadd.f32 %v726, %v1024
      %v1163 = vadd.f32 %v731, %v1029
      %v1164 = vadd.f32 %v736, %v1034
      %v1165 = vadd.f32 %v741, %v1039
      %v1166 = vadd.f32 %v746, %v1044
      %v1167 = vadd.f32 %v751, %v1049
      %v1168 = vadd.f32 %v756, %v1054
      %v1169 = vadd.f32 %v761, %v1059
      %v1170 = vadd.f32 %v766, %v1064
      %v1171 = vadd.f32 %v771, %v1069
      %v1172 = vadd.f32 %v776, %v1074
      %v1173 = vadd.f32 %v781, %v1079
      %v1174 = vadd.f32 %v786, %v1084
      %v1175 = vadd.f32 %v791, %v1089
      %v1176 = vadd.f32 %v796, %v1094
      %v1177 = vadd.f32 %v801, %v1099
      %v1178 = vadd.f32 %v806, %v1104
      %v1179 = vadd.f32 %v811, %v1109
      %v1180 = vadd.f32 %v816, %v1114
      %v1181 = vadd.f32 %v821, %v1119
      %v1182 = vadd.f32 %v826, %v1124
      %v1183 = vadd.f32 %v831, %v1129
      %v1184 = vadd.f32 %v836, %v1134
      %v1185 = vadd.f32 %v841, %v1139
      %v1186 = vadd.f32 %v846, %v1144
      %v1187 = vadd.f32 %v851, %v1149
      %v1188 = vld [vmem:[%s209 + $0x12] sm:$0xff]
      %v1189 = vld [vmem:[%s209 + $0x1a] sm:$0xff]
      %v1190 = vld [vmem:[%s209 + $0x22] sm:$0xff]
      %v1191 = vld [vmem:[%s209 + $0x2a] sm:$0xff]
      %v1192 = vld [vmem:[%s209 + $0x32] sm:$0xff]
      %v1193 = vld [vmem:[%s209 + $0x3a] sm:$0xff]
      %v1194 = vld [vmem:[%s209 + $0x42] sm:$0xff]
      %v1195 = vld [vmem:[%s209 + $0x4a] sm:$0xff]
      %v1196 = vld [vmem:[%s209 + $0x52] sm:$0xff]
      %v1197 = vld [vmem:[%s209 + $0x5a] sm:$0xff]
      %v1198 = vld [vmem:[%s209 + $0x62] sm:$0xff]
      %v1199 = vld [vmem:[%s209 + $0x6a] sm:$0xff]
      %v1200 = vld [vmem:[%s209 + $0x72] sm:$0xff]
      %v1201 = vld [vmem:[%s209 + $0x7a] sm:$0xff]
      %v1202 = vld [vmem:[%s209 + $0x82] sm:$0xff]
      %v1203 = vld [vmem:[%s209 + $0x8a] sm:$0xff]
      %v1204 = vld [vmem:[%s209 + $0x92] sm:$0xff]
      %v1205 = vld [vmem:[%s209 + $0x9a] sm:$0xff]
      %v1206 = vld [vmem:[%s209 + $0xa2] sm:$0xff]
      %v1207 = vld [vmem:[%s209 + $0xaa] sm:$0xff]
      %v1208 = vld [vmem:[%s209 + $0xb2] sm:$0xff]
      %v1209 = vld [vmem:[%s209 + $0xba] sm:$0xff]
      %v1210 = vld [vmem:[%s209 + $0xc2] sm:$0xff]
      %v1211 = vld [vmem:[%s209 + $0xca] sm:$0xff]
      %v1212 = vld [vmem:[%s209 + $0xd2] sm:$0xff]
      %v1213 = vld [vmem:[%s209 + $0xda] sm:$0xff]
      %v1214 = vld [vmem:[%s209 + $0xe2] sm:$0xff]
      %v1215 = vld [vmem:[%s209 + $0xea] sm:$0xff]
      %v1216 = vld [vmem:[%s209 + $0xf2] sm:$0xff]
      %v1217 = vld [vmem:[%s209 + $0xfa] sm:$0xff]
      %v1218 = vld [vmem:[%s209 + $0x102] sm:$0xff]
      %v1219 = vld [vmem:[%s209 + $0x10a] sm:$0xff]
      %v1220 = vld [vmem:[%s209 + $0x112] sm:$0xff]
      %v1221 = vld [vmem:[%s209 + $0x11a] sm:$0xff]
      %v1222 = vld [vmem:[%s209 + $0x122] sm:$0xff]
      %v1223 = vld [vmem:[%s209 + $0x12a] sm:$0xff]
      %s1224 = scalar_lea.vmem %s1, 384
      %v1225 = vld [vmem:[%s1224] sm:$0xff]
      %v1226 = vld [vmem:[%s1224 + $0x8] sm:$0xff]
      %v1227 = vld [vmem:[%s1224 + $0x10] sm:$0xff]
      %v1228 = vld [vmem:[%s1224 + $0x18] sm:$0xff]
      %v1229 = vld [vmem:[%s1224 + $0x20] sm:$0xff]
      %v1230 = vld [vmem:[%s1224 + $0x28] sm:$0xff]
      %v1231 = vld [vmem:[%s1224 + $0x30] sm:$0xff]
      %v1232 = vld [vmem:[%s1224 + $0x38] sm:$0xff]
      %v1233 = vld [vmem:[%s1224 + $0x40] sm:$0xff]
      %v1234 = vld [vmem:[%s1224 + $0x48] sm:$0xff]
      %v1235 = vld [vmem:[%s1224 + $0x50] sm:$0xff]
      %v1236 = vld [vmem:[%s1224 + $0x58] sm:$0xff]
      %v1237 = vld [vmem:[%s1224 + $0x60] sm:$0xff]
      %v1238 = vld [vmem:[%s1224 + $0x68] sm:$0xff]
      %v1239 = vld [vmem:[%s1224 + $0x70] sm:$0xff]
      %v1240 = vld [vmem:[%s1224 + $0x78] sm:$0xff]
      %1241 = vmatprep.subr.mxu0 0.0
      %1242 = vmatpush1.msra.mxu0 %v1240
      %1243 = vmatprep.subr.mxu0 0.0
      %1244 = vmatpush1.msra.mxu0 %v1239
      %1245 = vmatprep.subr.mxu0 0.0
      %1246 = vmatpush1.msra.mxu0 %v1238
      %1247 = vmatprep.subr.mxu0 0.0
      %1248 = vmatpush1.msra.mxu0 %v1237
      %1249 = vmatprep.subr.mxu0 0.0
      %1250 = vmatpush1.msra.mxu0 %v1236
      %1251 = vmatprep.subr.mxu0 0.0
      %1252 = vmatpush1.msra.mxu0 %v1235
      %1253 = vmatprep.subr.mxu0 0.0
      %1254 = vmatpush1.msra.mxu0 %v1234
      %1255 = vmatprep.subr.mxu0 0.0
      %1256 = vmatpush1.msra.mxu0 %v1233
      %1257 = vmatprep.subr.mxu0 0.0
      %1258 = vmatpush1.msra.mxu0 %v1232
      %1259 = vmatprep.subr.mxu0 0.0
      %1260 = vmatpush1.msra.mxu0 %v1231
      %1261 = vmatprep.subr.mxu0 0.0
      %1262 = vmatpush1.msra.mxu0 %v1230
      %1263 = vmatprep.subr.mxu0 0.0
      %1264 = vmatpush1.msra.mxu0 %v1229
      %1265 = vmatprep.subr.mxu0 0.0
      %1266 = vmatpush1.msra.mxu0 %v1228
      %1267 = vmatprep.subr.mxu0 0.0
      %1268 = vmatpush1.msra.mxu0 %v1227
      %1269 = vmatprep.subr.mxu0 0.0
      %1270 = vmatpush1.msra.mxu0 %v1226
      %1271 = vmatprep.subr.mxu0 0.0
      %1272 = vmatpush1.msra.mxu0 %v1225
      %1273 = vmatprep.subr.mxu0 0.0
      %1274 = vmatpush2.msra.mxu0 0.0
      %1275 = vmatprep.subr.mxu0 0.0
      %1276 = vmatpush2.msra.mxu0 0.0
      %1277 = vmatprep.subr.mxu0 0.0
      %1278 = vmatpush2.msra.mxu0 0.0
      %1279 = vmatprep.subr.mxu0 0.0
      %1280 = vmatpush2.msra.mxu0 0.0
      %1281 = vmatprep.subr.mxu0 0.0
      %1282 = vmatpush2.msra.mxu0 0.0
      %1283 = vmatprep.subr.mxu0 0.0
      %1284 = vmatpush2.msra.mxu0 0.0
      %1285 = vmatprep.subr.mxu0 0.0
      %1286 = vmatpush2.msra.mxu0 0.0
      %1287 = vmatprep.subr.mxu0 0.0
      %1288 = vmatpush2.msra.mxu0 0.0
      %1289 = vmatprep.subr.mxu0 0.0
      %1290 = vmatpush2.msra.mxu0 0.0
      %1291 = vmatprep.subr.mxu0 0.0
      %1292 = vmatpush2.msra.mxu0 0.0
      %1293 = vmatprep.subr.mxu0 0.0
      %1294 = vmatpush2.msra.mxu0 0.0
      %1295 = vmatprep.subr.mxu0 0.0
      %1296 = vmatpush2.msra.mxu0 0.0
      %1297 = vmatprep.subr.mxu0 0.0
      %1298 = vmatpush2.msra.mxu0 0.0
      %1299 = vmatprep.subr.mxu0 0.0
      %1300 = vmatpush2.msra.mxu0 0.0
      %1301 = vmatprep.subr.mxu0 0.0
      %1302 = vmatpush2.msra.mxu0 0.0
      %1303 = vmatprep.subr.mxu0 0.0
      %1304 = vmatpush2.msra.mxu0 0.0
      %1305 = vmatprep.mubr.f32.mxu0 0.0
      %1306 = vmatmul.mubr.f32.gmra.mxu0 %v1188
      %v1307 = vpop.f32.mrf.mxu0
      %v1308 = vadd.f32 0.0, %v1307
      %v1309 = vpop.f32.mrf.mxu0
      %1310 = vmatprep.mubr.f32.mxu0 0.0
      %1311 = vmatmul.mubr.f32.gmra.mxu0 %v1189
      %v1312 = vpop.f32.mrf.mxu0
      %v1313 = vadd.f32 0.0, %v1312
      %v1314 = vpop.f32.mrf.mxu0
      %1315 = vmatprep.mubr.f32.mxu0 0.0
      %1316 = vmatmul.mubr.f32.gmra.mxu0 %v1190
      %v1317 = vpop.f32.mrf.mxu0
      %v1318 = vadd.f32 0.0, %v1317
      %v1319 = vpop.f32.mrf.mxu0
      %1320 = vmatprep.mubr.f32.mxu0 0.0
      %1321 = vmatmul.mubr.f32.gmra.mxu0 %v1191
      %v1322 = vpop.f32.mrf.mxu0
      %v1323 = vadd.f32 0.0, %v1322
      %v1324 = vpop.f32.mrf.mxu0
      %1325 = vmatprep.mubr.f32.mxu0 0.0
      %1326 = vmatmul.mubr.f32.gmra.mxu0 %v1192
      %v1327 = vpop.f32.mrf.mxu0
      %v1328 = vadd.f32 0.0, %v1327
      %v1329 = vpop.f32.mrf.mxu0
      %1330 = vmatprep.mubr.f32.mxu0 0.0
      %1331 = vmatmul.mubr.f32.gmra.mxu0 %v1193
      %v1332 = vpop.f32.mrf.mxu0
      %v1333 = vadd.f32 0.0, %v1332
      %v1334 = vpop.f32.mrf.mxu0
      %1335 = vmatprep.mubr.f32.mxu0 0.0
      %1336 = vmatmul.mubr.f32.gmra.mxu0 %v1194
      %v1337 = vpop.f32.mrf.mxu0
      %v1338 = vadd.f32 0.0, %v1337
      %v1339 = vpop.f32.mrf.mxu0
      %1340 = vmatprep.mubr.f32.mxu0 0.0
      %1341 = vmatmul.mubr.f32.gmra.mxu0 %v1195
      %v1342 = vpop.f32.mrf.mxu0
      %v1343 = vadd.f32 0.0, %v1342
      %v1344 = vpop.f32.mrf.mxu0
      %1345 = vmatprep.mubr.f32.mxu0 0.0
      %1346 = vmatmul.mubr.f32.gmra.mxu0 %v1196
      %v1347 = vpop.f32.mrf.mxu0
      %v1348 = vadd.f32 0.0, %v1347
      %v1349 = vpop.f32.mrf.mxu0
      %1350 = vmatprep.mubr.f32.mxu0 0.0
      %1351 = vmatmul.mubr.f32.gmra.mxu0 %v1197
      %v1352 = vpop.f32.mrf.mxu0
      %v1353 = vadd.f32 0.0, %v1352
      %v1354 = vpop.f32.mrf.mxu0
      %1355 = vmatprep.mubr.f32.mxu0 0.0
      %1356 = vmatmul.mubr.f32.gmra.mxu0 %v1198
      %v1357 = vpop.f32.mrf.mxu0
      %v1358 = vadd.f32 0.0, %v1357
      %v1359 = vpop.f32.mrf.mxu0
      %1360 = vmatprep.mubr.f32.mxu0 0.0
      %1361 = vmatmul.mubr.f32.gmra.mxu0 %v1199
      %v1362 = vpop.f32.mrf.mxu0
      %v1363 = vadd.f32 0.0, %v1362
      %v1364 = vpop.f32.mrf.mxu0
      %1365 = vmatprep.mubr.f32.mxu0 0.0
      %1366 = vmatmul.mubr.f32.gmra.mxu0 %v1200
      %v1367 = vpop.f32.mrf.mxu0
      %v1368 = vadd.f32 0.0, %v1367
      %v1369 = vpop.f32.mrf.mxu0
      %1370 = vmatprep.mubr.f32.mxu0 0.0
      %1371 = vmatmul.mubr.f32.gmra.mxu0 %v1201
      %v1372 = vpop.f32.mrf.mxu0
      %v1373 = vadd.f32 0.0, %v1372
      %v1374 = vpop.f32.mrf.mxu0
      %1375 = vmatprep.mubr.f32.mxu0 0.0
      %1376 = vmatmul.mubr.f32.gmra.mxu0 %v1202
      %v1377 = vpop.f32.mrf.mxu0
      %v1378 = vadd.f32 0.0, %v1377
      %v1379 = vpop.f32.mrf.mxu0
      %1380 = vmatprep.mubr.f32.mxu0 0.0
      %1381 = vmatmul.mubr.f32.gmra.mxu0 %v1203
      %v1382 = vpop.f32.mrf.mxu0
      %v1383 = vadd.f32 0.0, %v1382
      %v1384 = vpop.f32.mrf.mxu0
      %1385 = vmatprep.mubr.f32.mxu0 0.0
      %1386 = vmatmul.mubr.f32.gmra.mxu0 %v1204
      %v1387 = vpop.f32.mrf.mxu0
      %v1388 = vadd.f32 0.0, %v1387
      %v1389 = vpop.f32.mrf.mxu0
      %1390 = vmatprep.mubr.f32.mxu0 0.0
      %1391 = vmatmul.mubr.f32.gmra.mxu0 %v1205
      %v1392 = vpop.f32.mrf.mxu0
      %v1393 = vadd.f32 0.0, %v1392
      %v1394 = vpop.f32.mrf.mxu0
      %1395 = vmatprep.mubr.f32.mxu0 0.0
      %1396 = vmatmul.mubr.f32.gmra.mxu0 %v1206
      %v1397 = vpop.f32.mrf.mxu0
      %v1398 = vadd.f32 0.0, %v1397
      %v1399 = vpop.f32.mrf.mxu0
      %1400 = vmatprep.mubr.f32.mxu0 0.0
      %1401 = vmatmul.mubr.f32.gmra.mxu0 %v1207
      %v1402 = vpop.f32.mrf.mxu0
      %v1403 = vadd.f32 0.0, %v1402
      %v1404 = vpop.f32.mrf.mxu0
      %1405 = vmatprep.mubr.f32.mxu0 0.0
      %1406 = vmatmul.mubr.f32.gmra.mxu0 %v1208
      %v1407 = vpop.f32.mrf.mxu0
      %v1408 = vadd.f32 0.0, %v1407
      %v1409 = vpop.f32.mrf.mxu0
      %1410 = vmatprep.mubr.f32.mxu0 0.0
      %1411 = vmatmul.mubr.f32.gmra.mxu0 %v1209
      %v1412 = vpop.f32.mrf.mxu0
      %v1413 = vadd.f32 0.0, %v1412
      %v1414 = vpop.f32.mrf.mxu0
      %1415 = vmatprep.mubr.f32.mxu0 0.0
      %1416 = vmatmul.mubr.f32.gmra.mxu0 %v1210
      %v1417 = vpop.f32.mrf.mxu0
      %v1418 = vadd.f32 0.0, %v1417
      %v1419 = vpop.f32.mrf.mxu0
      %1420 = vmatprep.mubr.f32.mxu0 0.0
      %1421 = vmatmul.mubr.f32.gmra.mxu0 %v1211
      %v1422 = vpop.f32.mrf.mxu0
      %v1423 = vadd.f32 0.0, %v1422
      %v1424 = vpop.f32.mrf.mxu0
      %1425 = vmatprep.mubr.f32.mxu0 0.0
      %1426 = vmatmul.mubr.f32.gmra.mxu0 %v1212
      %v1427 = vpop.f32.mrf.mxu0
      %v1428 = vadd.f32 0.0, %v1427
      %v1429 = vpop.f32.mrf.mxu0
      %1430 = vmatprep.mubr.f32.mxu0 0.0
      %1431 = vmatmul.mubr.f32.gmra.mxu0 %v1213
      %v1432 = vpop.f32.mrf.mxu0
      %v1433 = vadd.f32 0.0, %v1432
      %v1434 = vpop.f32.mrf.mxu0
      %1435 = vmatprep.mubr.f32.mxu0 0.0
      %1436 = vmatmul.mubr.f32.gmra.mxu0 %v1214
      %v1437 = vpop.f32.mrf.mxu0
      %v1438 = vadd.f32 0.0, %v1437
      %v1439 = vpop.f32.mrf.mxu0
      %1440 = vmatprep.mubr.f32.mxu0 0.0
      %1441 = vmatmul.mubr.f32.gmra.mxu0 %v1215
      %v1442 = vpop.f32.mrf.mxu0
      %v1443 = vadd.f32 0.0, %v1442
      %v1444 = vpop.f32.mrf.mxu0
      %1445 = vmatprep.mubr.f32.mxu0 0.0
      %1446 = vmatmul.mubr.f32.gmra.mxu0 %v1216
      %v1447 = vpop.f32.mrf.mxu0
      %v1448 = vadd.f32 0.0, %v1447
      %v1449 = vpop.f32.mrf.mxu0
      %1450 = vmatprep.mubr.f32.mxu0 0.0
      %1451 = vmatmul.mubr.f32.gmra.mxu0 %v1217
      %v1452 = vpop.f32.mrf.mxu0
      %v1453 = vadd.f32 0.0, %v1452
      %v1454 = vpop.f32.mrf.mxu0
      %1455 = vmatprep.mubr.f32.mxu0 0.0
      %1456 = vmatmul.mubr.f32.gmra.mxu0 %v1218
      %v1457 = vpop.f32.mrf.mxu0
      %v1458 = vadd.f32 0.0, %v1457
      %v1459 = vpop.f32.mrf.mxu0
      %1460 = vmatprep.mubr.f32.mxu0 0.0
      %1461 = vmatmul.mubr.f32.gmra.mxu0 %v1219
      %v1462 = vpop.f32.mrf.mxu0
      %v1463 = vadd.f32 0.0, %v1462
      %v1464 = vpop.f32.mrf.mxu0
      %1465 = vmatprep.mubr.f32.mxu0 0.0
      %1466 = vmatmul.mubr.f32.gmra.mxu0 %v1220
      %v1467 = vpop.f32.mrf.mxu0
      %v1468 = vadd.f32 0.0, %v1467
      %v1469 = vpop.f32.mrf.mxu0
      %1470 = vmatprep.mubr.f32.mxu0 0.0
      %1471 = vmatmul.mubr.f32.gmra.mxu0 %v1221
      %v1472 = vpop.f32.mrf.mxu0
      %v1473 = vadd.f32 0.0, %v1472
      %v1474 = vpop.f32.mrf.mxu0
      %1475 = vmatprep.mubr.f32.mxu0 0.0
      %1476 = vmatmul.mubr.f32.gmra.mxu0 %v1222
      %v1477 = vpop.f32.mrf.mxu0
      %v1478 = vadd.f32 0.0, %v1477
      %v1479 = vpop.f32.mrf.mxu0
      %1480 = vmatprep.mubr.f32.mxu0 0.0
      %1481 = vmatmul.mubr.f32.gmra.mxu0 %v1223
      %v1482 = vpop.f32.mrf.mxu0
      %v1483 = vadd.f32 0.0, %v1482
      %v1484 = vpop.f32.mrf.mxu0
      %1485 = vdwg.mxu0
      %v1486 = vadd.f32 %v1152, %v1308
      %v1487 = vadd.f32 %v1153, %v1313
      %v1488 = vadd.f32 %v1154, %v1318
      %v1489 = vadd.f32 %v1155, %v1323
      %v1490 = vadd.f32 %v1156, %v1328
      %v1491 = vadd.f32 %v1157, %v1333
      %v1492 = vadd.f32 %v1158, %v1338
      %v1493 = vadd.f32 %v1159, %v1343
      %v1494 = vadd.f32 %v1160, %v1348
      %v1495 = vadd.f32 %v1161, %v1353
      %v1496 = vadd.f32 %v1162, %v1358
      %v1497 = vadd.f32 %v1163, %v1363
      %v1498 = vadd.f32 %v1164, %v1368
      %v1499 = vadd.f32 %v1165, %v1373
      %v1500 = vadd.f32 %v1166, %v1378
      %v1501 = vadd.f32 %v1167, %v1383
      %v1502 = vadd.f32 %v1168, %v1388
      %v1503 = vadd.f32 %v1169, %v1393
      %v1504 = vadd.f32 %v1170, %v1398
      %v1505 = vadd.f32 %v1171, %v1403
      %v1506 = vadd.f32 %v1172, %v1408
      %v1507 = vadd.f32 %v1173, %v1413
      %v1508 = vadd.f32 %v1174, %v1418
      %v1509 = vadd.f32 %v1175, %v1423
      %v1510 = vadd.f32 %v1176, %v1428
      %v1511 = vadd.f32 %v1177, %v1433
      %v1512 = vadd.f32 %v1178, %v1438
      %v1513 = vadd.f32 %v1179, %v1443
      %v1514 = vadd.f32 %v1180, %v1448
      %v1515 = vadd.f32 %v1181, %v1453
      %v1516 = vadd.f32 %v1182, %v1458
      %v1517 = vadd.f32 %v1183, %v1463
      %v1518 = vadd.f32 %v1184, %v1468
      %v1519 = vadd.f32 %v1185, %v1473
      %v1520 = vadd.f32 %v1186, %v1478
      %v1521 = vadd.f32 %v1187, %v1483
      %v1522 = vld [vmem:[%s209 + $0x13] sm:$0xff]
      %v1523 = vld [vmem:[%s209 + $0x1b] sm:$0xff]
      %v1524 = vld [vmem:[%s209 + $0x23] sm:$0xff]
      %v1525 = vld [vmem:[%s209 + $0x2b] sm:$0xff]
      %v1526 = vld [vmem:[%s209 + $0x33] sm:$0xff]
      %v1527 = vld [vmem:[%s209 + $0x3b] sm:$0xff]
      %v1528 = vld [vmem:[%s209 + $0x43] sm:$0xff]
      %v1529 = vld [vmem:[%s209 + $0x4b] sm:$0xff]
      %v1530 = vld [vmem:[%s209 + $0x53] sm:$0xff]
      %v1531 = vld [vmem:[%s209 + $0x5b] sm:$0xff]
      %v1532 = vld [vmem:[%s209 + $0x63] sm:$0xff]
      %v1533 = vld [vmem:[%s209 + $0x6b] sm:$0xff]
      %v1534 = vld [vmem:[%s209 + $0x73] sm:$0xff]
      %v1535 = vld [vmem:[%s209 + $0x7b] sm:$0xff]
      %v1536 = vld [vmem:[%s209 + $0x83] sm:$0xff]
      %v1537 = vld [vmem:[%s209 + $0x8b] sm:$0xff]
      %v1538 = vld [vmem:[%s209 + $0x93] sm:$0xff]
      %v1539 = vld [vmem:[%s209 + $0x9b] sm:$0xff]
      %v1540 = vld [vmem:[%s209 + $0xa3] sm:$0xff]
      %v1541 = vld [vmem:[%s209 + $0xab] sm:$0xff]
      %v1542 = vld [vmem:[%s209 + $0xb3] sm:$0xff]
      %v1543 = vld [vmem:[%s209 + $0xbb] sm:$0xff]
      %v1544 = vld [vmem:[%s209 + $0xc3] sm:$0xff]
      %v1545 = vld [vmem:[%s209 + $0xcb] sm:$0xff]
      %v1546 = vld [vmem:[%s209 + $0xd3] sm:$0xff]
      %v1547 = vld [vmem:[%s209 + $0xdb] sm:$0xff]
      %v1548 = vld [vmem:[%s209 + $0xe3] sm:$0xff]
      %v1549 = vld [vmem:[%s209 + $0xeb] sm:$0xff]
      %v1550 = vld [vmem:[%s209 + $0xf3] sm:$0xff]
      %v1551 = vld [vmem:[%s209 + $0xfb] sm:$0xff]
      %v1552 = vld [vmem:[%s209 + $0x103] sm:$0xff]
      %v1553 = vld [vmem:[%s209 + $0x10b] sm:$0xff]
      %v1554 = vld [vmem:[%s209 + $0x113] sm:$0xff]
      %v1555 = vld [vmem:[%s209 + $0x11b] sm:$0xff]
      %v1556 = vld [vmem:[%s209 + $0x123] sm:$0xff]
      %v1557 = vld [vmem:[%s209 + $0x12b] sm:$0xff]
      %s1558 = scalar_lea.vmem %s1, 512
      %v1559 = vld [vmem:[%s1558] sm:$0xff]
      %v1560 = vld [vmem:[%s1558 + $0x8] sm:$0xff]
      %v1561 = vld [vmem:[%s1558 + $0x10] sm:$0xff]
      %v1562 = vld [vmem:[%s1558 + $0x18] sm:$0xff]
      %v1563 = vld [vmem:[%s1558 + $0x20] sm:$0xff]
      %v1564 = vld [vmem:[%s1558 + $0x28] sm:$0xff]
      %v1565 = vld [vmem:[%s1558 + $0x30] sm:$0xff]
      %v1566 = vld [vmem:[%s1558 + $0x38] sm:$0xff]
      %v1567 = vld [vmem:[%s1558 + $0x40] sm:$0xff]
      %v1568 = vld [vmem:[%s1558 + $0x48] sm:$0xff]
      %v1569 = vld [vmem:[%s1558 + $0x50] sm:$0xff]
      %v1570 = vld [vmem:[%s1558 + $0x58] sm:$0xff]
      %v1571 = vld [vmem:[%s1558 + $0x60] sm:$0xff]
      %v1572 = vld [vmem:[%s1558 + $0x68] sm:$0xff]
      %v1573 = vld [vmem:[%s1558 + $0x70] sm:$0xff]
      %v1574 = vld [vmem:[%s1558 + $0x78] sm:$0xff]
      %1575 = vmatprep.subr.mxu0 0.0
      %1576 = vmatpush1.msra.mxu0 %v1574
      %1577 = vmatprep.subr.mxu0 0.0
      %1578 = vmatpush1.msra.mxu0 %v1573
      %1579 = vmatprep.subr.mxu0 0.0
      %1580 = vmatpush1.msra.mxu0 %v1572
      %1581 = vmatprep.subr.mxu0 0.0
      %1582 = vmatpush1.msra.mxu0 %v1571
      %1583 = vmatprep.subr.mxu0 0.0
      %1584 = vmatpush1.msra.mxu0 %v1570
      %1585 = vmatprep.subr.mxu0 0.0
      %1586 = vmatpush1.msra.mxu0 %v1569
      %1587 = vmatprep.subr.mxu0 0.0
      %1588 = vmatpush1.msra.mxu0 %v1568
      %1589 = vmatprep.subr.mxu0 0.0
      %1590 = vmatpush1.msra.mxu0 %v1567
      %1591 = vmatprep.subr.mxu0 0.0
      %1592 = vmatpush1.msra.mxu0 %v1566
      %1593 = vmatprep.subr.mxu0 0.0
      %1594 = vmatpush1.msra.mxu0 %v1565
      %1595 = vmatprep.subr.mxu0 0.0
      %1596 = vmatpush1.msra.mxu0 %v1564
      %1597 = vmatprep.subr.mxu0 0.0
      %1598 = vmatpush1.msra.mxu0 %v1563
      %1599 = vmatprep.subr.mxu0 0.0
      %1600 = vmatpush1.msra.mxu0 %v1562
      %1601 = vmatprep.subr.mxu0 0.0
      %1602 = vmatpush1.msra.mxu0 %v1561
      %1603 = vmatprep.subr.mxu0 0.0
      %1604 = vmatpush1.msra.mxu0 %v1560
      %1605 = vmatprep.subr.mxu0 0.0
      %1606 = vmatpush1.msra.mxu0 %v1559
      %1607 = vmatprep.subr.mxu0 0.0
      %1608 = vmatpush2.msra.mxu0 0.0
      %1609 = vmatprep.subr.mxu0 0.0
      %1610 = vmatpush2.msra.mxu0 0.0
      %1611 = vmatprep.subr.mxu0 0.0
      %1612 = vmatpush2.msra.mxu0 0.0
      %1613 = vmatprep.subr.mxu0 0.0
      %1614 = vmatpush2.msra.mxu0 0.0
      %1615 = vmatprep.subr.mxu0 0.0
      %1616 = vmatpush2.msra.mxu0 0.0
      %1617 = vmatprep.subr.mxu0 0.0
      %1618 = vmatpush2.msra.mxu0 0.0
      %1619 = vmatprep.subr.mxu0 0.0
      %1620 = vmatpush2.msra.mxu0 0.0
      %1621 = vmatprep.subr.mxu0 0.0
      %1622 = vmatpush2.msra.mxu0 0.0
      %1623 = vmatprep.subr.mxu0 0.0
      %1624 = vmatpush2.msra.mxu0 0.0
      %1625 = vmatprep.subr.mxu0 0.0
      %1626 = vmatpush2.msra.mxu0 0.0
      %1627 = vmatprep.subr.mxu0 0.0
      %1628 = vmatpush2.msra.mxu0 0.0
      %1629 = vmatprep.subr.mxu0 0.0
      %1630 = vmatpush2.msra.mxu0 0.0
      %1631 = vmatprep.subr.mxu0 0.0
      %1632 = vmatpush2.msra.mxu0 0.0
      %1633 = vmatprep.subr.mxu0 0.0
      %1634 = vmatpush2.msra.mxu0 0.0
      %1635 = vmatprep.subr.mxu0 0.0
      %1636 = vmatpush2.msra.mxu0 0.0
      %1637 = vmatprep.subr.mxu0 0.0
      %1638 = vmatpush2.msra.mxu0 0.0
      %1639 = vmatprep.mubr.f32.mxu0 0.0
      %1640 = vmatmul.mubr.f32.gmra.mxu0 %v1522
      %v1641 = vpop.f32.mrf.mxu0
      %v1642 = vadd.f32 0.0, %v1641
      %v1643 = vpop.f32.mrf.mxu0
      %1644 = vmatprep.mubr.f32.mxu0 0.0
      %1645 = vmatmul.mubr.f32.gmra.mxu0 %v1523
      %v1646 = vpop.f32.mrf.mxu0
      %v1647 = vadd.f32 0.0, %v1646
      %v1648 = vpop.f32.mrf.mxu0
      %1649 = vmatprep.mubr.f32.mxu0 0.0
      %1650 = vmatmul.mubr.f32.gmra.mxu0 %v1524
      %v1651 = vpop.f32.mrf.mxu0
      %v1652 = vadd.f32 0.0, %v1651
      %v1653 = vpop.f32.mrf.mxu0
      %1654 = vmatprep.mubr.f32.mxu0 0.0
      %1655 = vmatmul.mubr.f32.gmra.mxu0 %v1525
      %v1656 = vpop.f32.mrf.mxu0
      %v1657 = vadd.f32 0.0, %v1656
      %v1658 = vpop.f32.mrf.mxu0
      %1659 = vmatprep.mubr.f32.mxu0 0.0
      %1660 = vmatmul.mubr.f32.gmra.mxu0 %v1526
      %v1661 = vpop.f32.mrf.mxu0
      %v1662 = vadd.f32 0.0, %v1661
      %v1663 = vpop.f32.mrf.mxu0
      %1664 = vmatprep.mubr.f32.mxu0 0.0
      %1665 = vmatmul.mubr.f32.gmra.mxu0 %v1527
      %v1666 = vpop.f32.mrf.mxu0
      %v1667 = vadd.f32 0.0, %v1666
      %v1668 = vpop.f32.mrf.mxu0
      %1669 = vmatprep.mubr.f32.mxu0 0.0
      %1670 = vmatmul.mubr.f32.gmra.mxu0 %v1528
      %v1671 = vpop.f32.mrf.mxu0
      %v1672 = vadd.f32 0.0, %v1671
      %v1673 = vpop.f32.mrf.mxu0
      %1674 = vmatprep.mubr.f32.mxu0 0.0
      %1675 = vmatmul.mubr.f32.gmra.mxu0 %v1529
      %v1676 = vpop.f32.mrf.mxu0
      %v1677 = vadd.f32 0.0, %v1676
      %v1678 = vpop.f32.mrf.mxu0
      %1679 = vmatprep.mubr.f32.mxu0 0.0
      %1680 = vmatmul.mubr.f32.gmra.mxu0 %v1530
      %v1681 = vpop.f32.mrf.mxu0
      %v1682 = vadd.f32 0.0, %v1681
      %v1683 = vpop.f32.mrf.mxu0
      %1684 = vmatprep.mubr.f32.mxu0 0.0
      %1685 = vmatmul.mubr.f32.gmra.mxu0 %v1531
      %v1686 = vpop.f32.mrf.mxu0
      %v1687 = vadd.f32 0.0, %v1686
      %v1688 = vpop.f32.mrf.mxu0
      %1689 = vmatprep.mubr.f32.mxu0 0.0
      %1690 = vmatmul.mubr.f32.gmra.mxu0 %v1532
      %v1691 = vpop.f32.mrf.mxu0
      %v1692 = vadd.f32 0.0, %v1691
      %v1693 = vpop.f32.mrf.mxu0
      %1694 = vmatprep.mubr.f32.mxu0 0.0
      %1695 = vmatmul.mubr.f32.gmra.mxu0 %v1533
      %v1696 = vpop.f32.mrf.mxu0
      %v1697 = vadd.f32 0.0, %v1696
      %v1698 = vpop.f32.mrf.mxu0
      %1699 = vmatprep.mubr.f32.mxu0 0.0
      %1700 = vmatmul.mubr.f32.gmra.mxu0 %v1534
      %v1701 = vpop.f32.mrf.mxu0
      %v1702 = vadd.f32 0.0, %v1701
      %v1703 = vpop.f32.mrf.mxu0
      %1704 = vmatprep.mubr.f32.mxu0 0.0
      %1705 = vmatmul.mubr.f32.gmra.mxu0 %v1535
      %v1706 = vpop.f32.mrf.mxu0
      %v1707 = vadd.f32 0.0, %v1706
      %v1708 = vpop.f32.mrf.mxu0
      %1709 = vmatprep.mubr.f32.mxu0 0.0
      %1710 = vmatmul.mubr.f32.gmra.mxu0 %v1536
      %v1711 = vpop.f32.mrf.mxu0
      %v1712 = vadd.f32 0.0, %v1711
      %v1713 = vpop.f32.mrf.mxu0
      %1714 = vmatprep.mubr.f32.mxu0 0.0
      %1715 = vmatmul.mubr.f32.gmra.mxu0 %v1537
      %v1716 = vpop.f32.mrf.mxu0
      %v1717 = vadd.f32 0.0, %v1716
      %v1718 = vpop.f32.mrf.mxu0
      %1719 = vmatprep.mubr.f32.mxu0 0.0
      %1720 = vmatmul.mubr.f32.gmra.mxu0 %v1538
      %v1721 = vpop.f32.mrf.mxu0
      %v1722 = vadd.f32 0.0, %v1721
      %v1723 = vpop.f32.mrf.mxu0
      %1724 = vmatprep.mubr.f32.mxu0 0.0
      %1725 = vmatmul.mubr.f32.gmra.mxu0 %v1539
      %v1726 = vpop.f32.mrf.mxu0
      %v1727 = vadd.f32 0.0, %v1726
      %v1728 = vpop.f32.mrf.mxu0
      %1729 = vmatprep.mubr.f32.mxu0 0.0
      %1730 = vmatmul.mubr.f32.gmra.mxu0 %v1540
      %v1731 = vpop.f32.mrf.mxu0
      %v1732 = vadd.f32 0.0, %v1731
      %v1733 = vpop.f32.mrf.mxu0
      %1734 = vmatprep.mubr.f32.mxu0 0.0
      %1735 = vmatmul.mubr.f32.gmra.mxu0 %v1541
      %v1736 = vpop.f32.mrf.mxu0
      %v1737 = vadd.f32 0.0, %v1736
      %v1738 = vpop.f32.mrf.mxu0
      %1739 = vmatprep.mubr.f32.mxu0 0.0
      %1740 = vmatmul.mubr.f32.gmra.mxu0 %v1542
      %v1741 = vpop.f32.mrf.mxu0
      %v1742 = vadd.f32 0.0, %v1741
      %v1743 = vpop.f32.mrf.mxu0
      %1744 = vmatprep.mubr.f32.mxu0 0.0
      %1745 = vmatmul.mubr.f32.gmra.mxu0 %v1543
      %v1746 = vpop.f32.mrf.mxu0
      %v1747 = vadd.f32 0.0, %v1746
      %v1748 = vpop.f32.mrf.mxu0
      %1749 = vmatprep.mubr.f32.mxu0 0.0
      %1750 = vmatmul.mubr.f32.gmra.mxu0 %v1544
      %v1751 = vpop.f32.mrf.mxu0
      %v1752 = vadd.f32 0.0, %v1751
      %v1753 = vpop.f32.mrf.mxu0
      %1754 = vmatprep.mubr.f32.mxu0 0.0
      %1755 = vmatmul.mubr.f32.gmra.mxu0 %v1545
      %v1756 = vpop.f32.mrf.mxu0
      %v1757 = vadd.f32 0.0, %v1756
      %v1758 = vpop.f32.mrf.mxu0
      %1759 = vmatprep.mubr.f32.mxu0 0.0
      %1760 = vmatmul.mubr.f32.gmra.mxu0 %v1546
      %v1761 = vpop.f32.mrf.mxu0
      %v1762 = vadd.f32 0.0, %v1761
      %v1763 = vpop.f32.mrf.mxu0
      %1764 = vmatprep.mubr.f32.mxu0 0.0
      %1765 = vmatmul.mubr.f32.gmra.mxu0 %v1547
      %v1766 = vpop.f32.mrf.mxu0
      %v1767 = vadd.f32 0.0, %v1766
      %v1768 = vpop.f32.mrf.mxu0
      %1769 = vmatprep.mubr.f32.mxu0 0.0
      %1770 = vmatmul.mubr.f32.gmra.mxu0 %v1548
      %v1771 = vpop.f32.mrf.mxu0
      %v1772 = vadd.f32 0.0, %v1771
      %v1773 = vpop.f32.mrf.mxu0
      %1774 = vmatprep.mubr.f32.mxu0 0.0
      %1775 = vmatmul.mubr.f32.gmra.mxu0 %v1549
      %v1776 = vpop.f32.mrf.mxu0
      %v1777 = vadd.f32 0.0, %v1776
      %v1778 = vpop.f32.mrf.mxu0
      %1779 = vmatprep.mubr.f32.mxu0 0.0
      %1780 = vmatmul.mubr.f32.gmra.mxu0 %v1550
      %v1781 = vpop.f32.mrf.mxu0
      %v1782 = vadd.f32 0.0, %v1781
      %v1783 = vpop.f32.mrf.mxu0
      %1784 = vmatprep.mubr.f32.mxu0 0.0
      %1785 = vmatmul.mubr.f32.gmra.mxu0 %v1551
      %v1786 = vpop.f32.mrf.mxu0
      %v1787 = vadd.f32 0.0, %v1786
      %v1788 = vpop.f32.mrf.mxu0
      %1789 = vmatprep.mubr.f32.mxu0 0.0
      %1790 = vmatmul.mubr.f32.gmra.mxu0 %v1552
      %v1791 = vpop.f32.mrf.mxu0
      %v1792 = vadd.f32 0.0, %v1791
      %v1793 = vpop.f32.mrf.mxu0
      %1794 = vmatprep.mubr.f32.mxu0 0.0
      %1795 = vmatmul.mubr.f32.gmra.mxu0 %v1553
      %v1796 = vpop.f32.mrf.mxu0
      %v1797 = vadd.f32 0.0, %v1796
      %v1798 = vpop.f32.mrf.mxu0
      %1799 = vmatprep.mubr.f32.mxu0 0.0
      %1800 = vmatmul.mubr.f32.gmra.mxu0 %v1554
      %v1801 = vpop.f32.mrf.mxu0
      %v1802 = vadd.f32 0.0, %v1801
      %v1803 = vpop.f32.mrf.mxu0
      %1804 = vmatprep.mubr.f32.mxu0 0.0
      %1805 = vmatmul.mubr.f32.gmra.mxu0 %v1555
      %v1806 = vpop.f32.mrf.mxu0
      %v1807 = vadd.f32 0.0, %v1806
      %v1808 = vpop.f32.mrf.mxu0
      %1809 = vmatprep.mubr.f32.mxu0 0.0
      %1810 = vmatmul.mubr.f32.gmra.mxu0 %v1556
      %v1811 = vpop.f32.mrf.mxu0
      %v1812 = vadd.f32 0.0, %v1811
      %v1813 = vpop.f32.mrf.mxu0
      %1814 = vmatprep.mubr.f32.mxu0 0.0
      %1815 = vmatmul.mubr.f32.gmra.mxu0 %v1557
      %v1816 = vpop.f32.mrf.mxu0
      %v1817 = vadd.f32 0.0, %v1816
      %v1818 = vpop.f32.mrf.mxu0
      %1819 = vdwg.mxu0
      %v1820 = vadd.f32 %v1486, %v1642
      %v1821 = vadd.f32 %v1487, %v1647
      %v1822 = vadd.f32 %v1488, %v1652
      %v1823 = vadd.f32 %v1489, %v1657
      %v1824 = vadd.f32 %v1490, %v1662
      %v1825 = vadd.f32 %v1491, %v1667
      %v1826 = vadd.f32 %v1492, %v1672
      %v1827 = vadd.f32 %v1493, %v1677
      %v1828 = vadd.f32 %v1494, %v1682
      %v1829 = vadd.f32 %v1495, %v1687
      %v1830 = vadd.f32 %v1496, %v1692
      %v1831 = vadd.f32 %v1497, %v1697
      %v1832 = vadd.f32 %v1498, %v1702
      %v1833 = vadd.f32 %v1499, %v1707
      %v1834 = vadd.f32 %v1500, %v1712
      %v1835 = vadd.f32 %v1501, %v1717
      %v1836 = vadd.f32 %v1502, %v1722
      %v1837 = vadd.f32 %v1503, %v1727
      %v1838 = vadd.f32 %v1504, %v1732
      %v1839 = vadd.f32 %v1505, %v1737
      %v1840 = vadd.f32 %v1506, %v1742
      %v1841 = vadd.f32 %v1507, %v1747
      %v1842 = vadd.f32 %v1508, %v1752
      %v1843 = vadd.f32 %v1509, %v1757
      %v1844 = vadd.f32 %v1510, %v1762
      %v1845 = vadd.f32 %v1511, %v1767
      %v1846 = vadd.f32 %v1512, %v1772
      %v1847 = vadd.f32 %v1513, %v1777
      %v1848 = vadd.f32 %v1514, %v1782
      %v1849 = vadd.f32 %v1515, %v1787
      %v1850 = vadd.f32 %v1516, %v1792
      %v1851 = vadd.f32 %v1517, %v1797
      %v1852 = vadd.f32 %v1518, %v1802
      %v1853 = vadd.f32 %v1519, %v1807
      %v1854 = vadd.f32 %v1520, %v1812
      %v1855 = vadd.f32 %v1521, %v1817
      %v1856 = vld [vmem:[%s209 + $0x14] sm:$0xff]
      %v1857 = vld [vmem:[%s209 + $0x1c] sm:$0xff]
      %v1858 = vld [vmem:[%s209 + $0x24] sm:$0xff]
      %v1859 = vld [vmem:[%s209 + $0x2c] sm:$0xff]
      %v1860 = vld [vmem:[%s209 + $0x34] sm:$0xff]
      %v1861 = vld [vmem:[%s209 + $0x3c] sm:$0xff]
      %v1862 = vld [vmem:[%s209 + $0x44] sm:$0xff]
      %v1863 = vld [vmem:[%s209 + $0x4c] sm:$0xff]
      %v1864 = vld [vmem:[%s209 + $0x54] sm:$0xff]
      %v1865 = vld [vmem:[%s209 + $0x5c] sm:$0xff]
      %v1866 = vld [vmem:[%s209 + $0x64] sm:$0xff]
      %v1867 = vld [vmem:[%s209 + $0x6c] sm:$0xff]
      %v1868 = vld [vmem:[%s209 + $0x74] sm:$0xff]
      %v1869 = vld [vmem:[%s209 + $0x7c] sm:$0xff]
      %v1870 = vld [vmem:[%s209 + $0x84] sm:$0xff]
      %v1871 = vld [vmem:[%s209 + $0x8c] sm:$0xff]
      %v1872 = vld [vmem:[%s209 + $0x94] sm:$0xff]
      %v1873 = vld [vmem:[%s209 + $0x9c] sm:$0xff]
      %v1874 = vld [vmem:[%s209 + $0xa4] sm:$0xff]
      %v1875 = vld [vmem:[%s209 + $0xac] sm:$0xff]
      %v1876 = vld [vmem:[%s209 + $0xb4] sm:$0xff]
      %v1877 = vld [vmem:[%s209 + $0xbc] sm:$0xff]
      %v1878 = vld [vmem:[%s209 + $0xc4] sm:$0xff]
      %v1879 = vld [vmem:[%s209 + $0xcc] sm:$0xff]
      %v1880 = vld [vmem:[%s209 + $0xd4] sm:$0xff]
      %v1881 = vld [vmem:[%s209 + $0xdc] sm:$0xff]
      %v1882 = vld [vmem:[%s209 + $0xe4] sm:$0xff]
      %v1883 = vld [vmem:[%s209 + $0xec] sm:$0xff]
      %v1884 = vld [vmem:[%s209 + $0xf4] sm:$0xff]
      %v1885 = vld [vmem:[%s209 + $0xfc] sm:$0xff]
      %v1886 = vld [vmem:[%s209 + $0x104] sm:$0xff]
      %v1887 = vld [vmem:[%s209 + $0x10c] sm:$0xff]
      %v1888 = vld [vmem:[%s209 + $0x114] sm:$0xff]
      %v1889 = vld [vmem:[%s209 + $0x11c] sm:$0xff]
      %v1890 = vld [vmem:[%s209 + $0x124] sm:$0xff]
      %v1891 = vld [vmem:[%s209 + $0x12c] sm:$0xff]
      %s1892 = scalar_lea.vmem %s1, 640
      %v1893 = vld [vmem:[%s1892] sm:$0xff]
      %v1894 = vld [vmem:[%s1892 + $0x8] sm:$0xff]
      %v1895 = vld [vmem:[%s1892 + $0x10] sm:$0xff]
      %v1896 = vld [vmem:[%s1892 + $0x18] sm:$0xff]
      %v1897 = vld [vmem:[%s1892 + $0x20] sm:$0xff]
      %v1898 = vld [vmem:[%s1892 + $0x28] sm:$0xff]
      %v1899 = vld [vmem:[%s1892 + $0x30] sm:$0xff]
      %v1900 = vld [vmem:[%s1892 + $0x38] sm:$0xff]
      %v1901 = vld [vmem:[%s1892 + $0x40] sm:$0xff]
      %v1902 = vld [vmem:[%s1892 + $0x48] sm:$0xff]
      %v1903 = vld [vmem:[%s1892 + $0x50] sm:$0xff]
      %v1904 = vld [vmem:[%s1892 + $0x58] sm:$0xff]
      %v1905 = vld [vmem:[%s1892 + $0x60] sm:$0xff]
      %v1906 = vld [vmem:[%s1892 + $0x68] sm:$0xff]
      %v1907 = vld [vmem:[%s1892 + $0x70] sm:$0xff]
      %v1908 = vld [vmem:[%s1892 + $0x78] sm:$0xff]
      %1909 = vmatprep.subr.mxu0 0.0
      %1910 = vmatpush1.msra.mxu0 %v1908
      %1911 = vmatprep.subr.mxu0 0.0
      %1912 = vmatpush1.msra.mxu0 %v1907
      %1913 = vmatprep.subr.mxu0 0.0
      %1914 = vmatpush1.msra.mxu0 %v1906
      %1915 = vmatprep.subr.mxu0 0.0
      %1916 = vmatpush1.msra.mxu0 %v1905
      %1917 = vmatprep.subr.mxu0 0.0
      %1918 = vmatpush1.msra.mxu0 %v1904
      %1919 = vmatprep.subr.mxu0 0.0
      %1920 = vmatpush1.msra.mxu0 %v1903
      %1921 = vmatprep.subr.mxu0 0.0
      %1922 = vmatpush1.msra.mxu0 %v1902
      %1923 = vmatprep.subr.mxu0 0.0
      %1924 = vmatpush1.msra.mxu0 %v1901
      %1925 = vmatprep.subr.mxu0 0.0
      %1926 = vmatpush1.msra.mxu0 %v1900
      %1927 = vmatprep.subr.mxu0 0.0
      %1928 = vmatpush1.msra.mxu0 %v1899
      %1929 = vmatprep.subr.mxu0 0.0
      %1930 = vmatpush1.msra.mxu0 %v1898
      %1931 = vmatprep.subr.mxu0 0.0
      %1932 = vmatpush1.msra.mxu0 %v1897
      %1933 = vmatprep.subr.mxu0 0.0
      %1934 = vmatpush1.msra.mxu0 %v1896
      %1935 = vmatprep.subr.mxu0 0.0
      %1936 = vmatpush1.msra.mxu0 %v1895
      %1937 = vmatprep.subr.mxu0 0.0
      %1938 = vmatpush1.msra.mxu0 %v1894
      %1939 = vmatprep.subr.mxu0 0.0
      %1940 = vmatpush1.msra.mxu0 %v1893
      %1941 = vmatprep.subr.mxu0 0.0
      %1942 = vmatpush2.msra.mxu0 0.0
      %1943 = vmatprep.subr.mxu0 0.0
      %1944 = vmatpush2.msra.mxu0 0.0
      %1945 = vmatprep.subr.mxu0 0.0
      %1946 = vmatpush2.msra.mxu0 0.0
      %1947 = vmatprep.subr.mxu0 0.0
      %1948 = vmatpush2.msra.mxu0 0.0
      %1949 = vmatprep.subr.mxu0 0.0
      %1950 = vmatpush2.msra.mxu0 0.0
      %1951 = vmatprep.subr.mxu0 0.0
      %1952 = vmatpush2.msra.mxu0 0.0
      %1953 = vmatprep.subr.mxu0 0.0
      %1954 = vmatpush2.msra.mxu0 0.0
      %1955 = vmatprep.subr.mxu0 0.0
      %1956 = vmatpush2.msra.mxu0 0.0
      %1957 = vmatprep.subr.mxu0 0.0
      %1958 = vmatpush2.msra.mxu0 0.0
      %1959 = vmatprep.subr.mxu0 0.0
      %1960 = vmatpush2.msra.mxu0 0.0
      %1961 = vmatprep.subr.mxu0 0.0
      %1962 = vmatpush2.msra.mxu0 0.0
      %1963 = vmatprep.subr.mxu0 0.0
      %1964 = vmatpush2.msra.mxu0 0.0
      %1965 = vmatprep.subr.mxu0 0.0
      %1966 = vmatpush2.msra.mxu0 0.0
      %1967 = vmatprep.subr.mxu0 0.0
      %1968 = vmatpush2.msra.mxu0 0.0
      %1969 = vmatprep.subr.mxu0 0.0
      %1970 = vmatpush2.msra.mxu0 0.0
      %1971 = vmatprep.subr.mxu0 0.0
      %1972 = vmatpush2.msra.mxu0 0.0
      %1973 = vmatprep.mubr.f32.mxu0 0.0
      %1974 = vmatmul.mubr.f32.gmra.mxu0 %v1856
      %v1975 = vpop.f32.mrf.mxu0
      %v1976 = vadd.f32 0.0, %v1975
      %v1977 = vpop.f32.mrf.mxu0
      %1978 = vmatprep.mubr.f32.mxu0 0.0
      %1979 = vmatmul.mubr.f32.gmra.mxu0 %v1857
      %v1980 = vpop.f32.mrf.mxu0
      %v1981 = vadd.f32 0.0, %v1980
      %v1982 = vpop.f32.mrf.mxu0
      %1983 = vmatprep.mubr.f32.mxu0 0.0
      %1984 = vmatmul.mubr.f32.gmra.mxu0 %v1858
      %v1985 = vpop.f32.mrf.mxu0
      %v1986 = vadd.f32 0.0, %v1985
      %v1987 = vpop.f32.mrf.mxu0
      %1988 = vmatprep.mubr.f32.mxu0 0.0
      %1989 = vmatmul.mubr.f32.gmra.mxu0 %v1859
      %v1990 = vpop.f32.mrf.mxu0
      %v1991 = vadd.f32 0.0, %v1990
      %v1992 = vpop.f32.mrf.mxu0
      %1993 = vmatprep.mubr.f32.mxu0 0.0
      %1994 = vmatmul.mubr.f32.gmra.mxu0 %v1860
      %v1995 = vpop.f32.mrf.mxu0
      %v1996 = vadd.f32 0.0, %v1995
      %v1997 = vpop.f32.mrf.mxu0
      %1998 = vmatprep.mubr.f32.mxu0 0.0
      %1999 = vmatmul.mubr.f32.gmra.mxu0 %v1861
      %v2000 = vpop.f32.mrf.mxu0
      %v2001 = vadd.f32 0.0, %v2000
      %v2002 = vpop.f32.mrf.mxu0
      %2003 = vmatprep.mubr.f32.mxu0 0.0
      %2004 = vmatmul.mubr.f32.gmra.mxu0 %v1862
      %v2005 = vpop.f32.mrf.mxu0
      %v2006 = vadd.f32 0.0, %v2005
      %v2007 = vpop.f32.mrf.mxu0
      %2008 = vmatprep.mubr.f32.mxu0 0.0
      %2009 = vmatmul.mubr.f32.gmra.mxu0 %v1863
      %v2010 = vpop.f32.mrf.mxu0
      %v2011 = vadd.f32 0.0, %v2010
      %v2012 = vpop.f32.mrf.mxu0
      %2013 = vmatprep.mubr.f32.mxu0 0.0
      %2014 = vmatmul.mubr.f32.gmra.mxu0 %v1864
      %v2015 = vpop.f32.mrf.mxu0
      %v2016 = vadd.f32 0.0, %v2015
      %v2017 = vpop.f32.mrf.mxu0
      %2018 = vmatprep.mubr.f32.mxu0 0.0
      %2019 = vmatmul.mubr.f32.gmra.mxu0 %v1865
      %v2020 = vpop.f32.mrf.mxu0
      %v2021 = vadd.f32 0.0, %v2020
      %v2022 = vpop.f32.mrf.mxu0
      %2023 = vmatprep.mubr.f32.mxu0 0.0
      %2024 = vmatmul.mubr.f32.gmra.mxu0 %v1866
      %v2025 = vpop.f32.mrf.mxu0
      %v2026 = vadd.f32 0.0, %v2025
      %v2027 = vpop.f32.mrf.mxu0
      %2028 = vmatprep.mubr.f32.mxu0 0.0
      %2029 = vmatmul.mubr.f32.gmra.mxu0 %v1867
      %v2030 = vpop.f32.mrf.mxu0
      %v2031 = vadd.f32 0.0, %v2030
      %v2032 = vpop.f32.mrf.mxu0
      %2033 = vmatprep.mubr.f32.mxu0 0.0
      %2034 = vmatmul.mubr.f32.gmra.mxu0 %v1868
      %v2035 = vpop.f32.mrf.mxu0
      %v2036 = vadd.f32 0.0, %v2035
      %v2037 = vpop.f32.mrf.mxu0
      %2038 = vmatprep.mubr.f32.mxu0 0.0
      %2039 = vmatmul.mubr.f32.gmra.mxu0 %v1869
      %v2040 = vpop.f32.mrf.mxu0
      %v2041 = vadd.f32 0.0, %v2040
      %v2042 = vpop.f32.mrf.mxu0
      %2043 = vmatprep.mubr.f32.mxu0 0.0
      %2044 = vmatmul.mubr.f32.gmra.mxu0 %v1870
      %v2045 = vpop.f32.mrf.mxu0
      %v2046 = vadd.f32 0.0, %v2045
      %v2047 = vpop.f32.mrf.mxu0
      %2048 = vmatprep.mubr.f32.mxu0 0.0
      %2049 = vmatmul.mubr.f32.gmra.mxu0 %v1871
      %v2050 = vpop.f32.mrf.mxu0
      %v2051 = vadd.f32 0.0, %v2050
      %v2052 = vpop.f32.mrf.mxu0
      %2053 = vmatprep.mubr.f32.mxu0 0.0
      %2054 = vmatmul.mubr.f32.gmra.mxu0 %v1872
      %v2055 = vpop.f32.mrf.mxu0
      %v2056 = vadd.f32 0.0, %v2055
      %v2057 = vpop.f32.mrf.mxu0
      %2058 = vmatprep.mubr.f32.mxu0 0.0
      %2059 = vmatmul.mubr.f32.gmra.mxu0 %v1873
      %v2060 = vpop.f32.mrf.mxu0
      %v2061 = vadd.f32 0.0, %v2060
      %v2062 = vpop.f32.mrf.mxu0
      %2063 = vmatprep.mubr.f32.mxu0 0.0
      %2064 = vmatmul.mubr.f32.gmra.mxu0 %v1874
      %v2065 = vpop.f32.mrf.mxu0
      %v2066 = vadd.f32 0.0, %v2065
      %v2067 = vpop.f32.mrf.mxu0
      %2068 = vmatprep.mubr.f32.mxu0 0.0
      %2069 = vmatmul.mubr.f32.gmra.mxu0 %v1875
      %v2070 = vpop.f32.mrf.mxu0
      %v2071 = vadd.f32 0.0, %v2070
      %v2072 = vpop.f32.mrf.mxu0
      %2073 = vmatprep.mubr.f32.mxu0 0.0
      %2074 = vmatmul.mubr.f32.gmra.mxu0 %v1876
      %v2075 = vpop.f32.mrf.mxu0
      %v2076 = vadd.f32 0.0, %v2075
      %v2077 = vpop.f32.mrf.mxu0
      %2078 = vmatprep.mubr.f32.mxu0 0.0
      %2079 = vmatmul.mubr.f32.gmra.mxu0 %v1877
      %v2080 = vpop.f32.mrf.mxu0
      %v2081 = vadd.f32 0.0, %v2080
      %v2082 = vpop.f32.mrf.mxu0
      %2083 = vmatprep.mubr.f32.mxu0 0.0
      %2084 = vmatmul.mubr.f32.gmra.mxu0 %v1878
      %v2085 = vpop.f32.mrf.mxu0
      %v2086 = vadd.f32 0.0, %v2085
      %v2087 = vpop.f32.mrf.mxu0
      %2088 = vmatprep.mubr.f32.mxu0 0.0
      %2089 = vmatmul.mubr.f32.gmra.mxu0 %v1879
      %v2090 = vpop.f32.mrf.mxu0
      %v2091 = vadd.f32 0.0, %v2090
      %v2092 = vpop.f32.mrf.mxu0
      %2093 = vmatprep.mubr.f32.mxu0 0.0
      %2094 = vmatmul.mubr.f32.gmra.mxu0 %v1880
      %v2095 = vpop.f32.mrf.mxu0
      %v2096 = vadd.f32 0.0, %v2095
      %v2097 = vpop.f32.mrf.mxu0
      %2098 = vmatprep.mubr.f32.mxu0 0.0
      %2099 = vmatmul.mubr.f32.gmra.mxu0 %v1881
      %v2100 = vpop.f32.mrf.mxu0
      %v2101 = vadd.f32 0.0, %v2100
      %v2102 = vpop.f32.mrf.mxu0
      %2103 = vmatprep.mubr.f32.mxu0 0.0
      %2104 = vmatmul.mubr.f32.gmra.mxu0 %v1882
      %v2105 = vpop.f32.mrf.mxu0
      %v2106 = vadd.f32 0.0, %v2105
      %v2107 = vpop.f32.mrf.mxu0
      %2108 = vmatprep.mubr.f32.mxu0 0.0
      %2109 = vmatmul.mubr.f32.gmra.mxu0 %v1883
      %v2110 = vpop.f32.mrf.mxu0
      %v2111 = vadd.f32 0.0, %v2110
      %v2112 = vpop.f32.mrf.mxu0
      %2113 = vmatprep.mubr.f32.mxu0 0.0
      %2114 = vmatmul.mubr.f32.gmra.mxu0 %v1884
      %v2115 = vpop.f32.mrf.mxu0
      %v2116 = vadd.f32 0.0, %v2115
      %v2117 = vpop.f32.mrf.mxu0
      %2118 = vmatprep.mubr.f32.mxu0 0.0
      %2119 = vmatmul.mubr.f32.gmra.mxu0 %v1885
      %v2120 = vpop.f32.mrf.mxu0
      %v2121 = vadd.f32 0.0, %v2120
      %v2122 = vpop.f32.mrf.mxu0
      %2123 = vmatprep.mubr.f32.mxu0 0.0
      %2124 = vmatmul.mubr.f32.gmra.mxu0 %v1886
      %v2125 = vpop.f32.mrf.mxu0
      %v2126 = vadd.f32 0.0, %v2125
      %v2127 = vpop.f32.mrf.mxu0
      %2128 = vmatprep.mubr.f32.mxu0 0.0
      %2129 = vmatmul.mubr.f32.gmra.mxu0 %v1887
      %v2130 = vpop.f32.mrf.mxu0
      %v2131 = vadd.f32 0.0, %v2130
      %v2132 = vpop.f32.mrf.mxu0
      %2133 = vmatprep.mubr.f32.mxu0 0.0
      %2134 = vmatmul.mubr.f32.gmra.mxu0 %v1888
      %v2135 = vpop.f32.mrf.mxu0
      %v2136 = vadd.f32 0.0, %v2135
      %v2137 = vpop.f32.mrf.mxu0
      %2138 = vmatprep.mubr.f32.mxu0 0.0
      %2139 = vmatmul.mubr.f32.gmra.mxu0 %v1889
      %v2140 = vpop.f32.mrf.mxu0
      %v2141 = vadd.f32 0.0, %v2140
      %v2142 = vpop.f32.mrf.mxu0
      %2143 = vmatprep.mubr.f32.mxu0 0.0
      %2144 = vmatmul.mubr.f32.gmra.mxu0 %v1890
      %v2145 = vpop.f32.mrf.mxu0
      %v2146 = vadd.f32 0.0, %v2145
      %v2147 = vpop.f32.mrf.mxu0
      %2148 = vmatprep.mubr.f32.mxu0 0.0
      %2149 = vmatmul.mubr.f32.gmra.mxu0 %v1891
      %v2150 = vpop.f32.mrf.mxu0
      %v2151 = vadd.f32 0.0, %v2150
      %v2152 = vpop.f32.mrf.mxu0
      %2153 = vdwg.mxu0
      %v2154 = vadd.f32 %v1820, %v1976
      %v2155 = vadd.f32 %v1821, %v1981
      %v2156 = vadd.f32 %v1822, %v1986
      %v2157 = vadd.f32 %v1823, %v1991
      %v2158 = vadd.f32 %v1824, %v1996
      %v2159 = vadd.f32 %v1825, %v2001
      %v2160 = vadd.f32 %v1826, %v2006
      %v2161 = vadd.f32 %v1827, %v2011
      %v2162 = vadd.f32 %v1828, %v2016
      %v2163 = vadd.f32 %v1829, %v2021
      %v2164 = vadd.f32 %v1830, %v2026
      %v2165 = vadd.f32 %v1831, %v2031
      %v2166 = vadd.f32 %v1832, %v2036
      %v2167 = vadd.f32 %v1833, %v2041
      %v2168 = vadd.f32 %v1834, %v2046
      %v2169 = vadd.f32 %v1835, %v2051
      %v2170 = vadd.f32 %v1836, %v2056
      %v2171 = vadd.f32 %v1837, %v2061
      %v2172 = vadd.f32 %v1838, %v2066
      %v2173 = vadd.f32 %v1839, %v2071
      %v2174 = vadd.f32 %v1840, %v2076
      %v2175 = vadd.f32 %v1841, %v2081
      %v2176 = vadd.f32 %v1842, %v2086
      %v2177 = vadd.f32 %v1843, %v2091
      %v2178 = vadd.f32 %v1844, %v2096
      %v2179 = vadd.f32 %v1845, %v2101
      %v2180 = vadd.f32 %v1846, %v2106
      %v2181 = vadd.f32 %v1847, %v2111
      %v2182 = vadd.f32 %v1848, %v2116
      %v2183 = vadd.f32 %v1849, %v2121
      %v2184 = vadd.f32 %v1850, %v2126
      %v2185 = vadd.f32 %v1851, %v2131
      %v2186 = vadd.f32 %v1852, %v2136
      %v2187 = vadd.f32 %v1853, %v2141
      %v2188 = vadd.f32 %v1854, %v2146
      %v2189 = vadd.f32 %v1855, %v2151
      %v2190 = vld [vmem:[%s209 + $0x24] sm:$0xff]
      %v2191 = vld [vmem:[%s209 + $0x2c] sm:$0xff]
      %v2192 = vld [vmem:[%s209 + $0x34] sm:$0xff]
      %v2193 = vld [vmem:[%s209 + $0x3c] sm:$0xff]
      %v2194 = vld [vmem:[%s209 + $0x44] sm:$0xff]
      %v2195 = vld [vmem:[%s209 + $0x4c] sm:$0xff]
      %v2196 = vld [vmem:[%s209 + $0x54] sm:$0xff]
      %v2197 = vld [vmem:[%s209 + $0x5c] sm:$0xff]
      %v2198 = vld [vmem:[%s209 + $0x64] sm:$0xff]
      %v2199 = vld [vmem:[%s209 + $0x6c] sm:$0xff]
      %v2200 = vld [vmem:[%s209 + $0x74] sm:$0xff]
      %v2201 = vld [vmem:[%s209 + $0x7c] sm:$0xff]
      %v2202 = vld [vmem:[%s209 + $0x84] sm:$0xff]
      %v2203 = vld [vmem:[%s209 + $0x8c] sm:$0xff]
      %v2204 = vld [vmem:[%s209 + $0x94] sm:$0xff]
      %v2205 = vld [vmem:[%s209 + $0x9c] sm:$0xff]
      %v2206 = vld [vmem:[%s209 + $0xa4] sm:$0xff]
      %v2207 = vld [vmem:[%s209 + $0xac] sm:$0xff]
      %v2208 = vld [vmem:[%s209 + $0xb4] sm:$0xff]
      %v2209 = vld [vmem:[%s209 + $0xbc] sm:$0xff]
      %v2210 = vld [vmem:[%s209 + $0xc4] sm:$0xff]
      %v2211 = vld [vmem:[%s209 + $0xcc] sm:$0xff]
      %v2212 = vld [vmem:[%s209 + $0xd4] sm:$0xff]
      %v2213 = vld [vmem:[%s209 + $0xdc] sm:$0xff]
      %v2214 = vld [vmem:[%s209 + $0xe4] sm:$0xff]
      %v2215 = vld [vmem:[%s209 + $0xec] sm:$0xff]
      %v2216 = vld [vmem:[%s209 + $0xf4] sm:$0xff]
      %v2217 = vld [vmem:[%s209 + $0xfc] sm:$0xff]
      %v2218 = vld [vmem:[%s209 + $0x104] sm:$0xff]
      %v2219 = vld [vmem:[%s209 + $0x10c] sm:$0xff]
      %v2220 = vld [vmem:[%s209 + $0x114] sm:$0xff]
      %v2221 = vld [vmem:[%s209 + $0x11c] sm:$0xff]
      %v2222 = vld [vmem:[%s209 + $0x124] sm:$0xff]
      %v2223 = vld [vmem:[%s209 + $0x12c] sm:$0xff]
      %v2224 = vld [vmem:[%s209 + $0x134] sm:$0xff]
      %v2225 = vld [vmem:[%s209 + $0x13c] sm:$0xff]
      %s2226 = scalar_lea.vmem %s1, 768
      %v2227 = vld [vmem:[%s2226] sm:$0xff]
      %v2228 = vld [vmem:[%s2226 + $0x8] sm:$0xff]
      %v2229 = vld [vmem:[%s2226 + $0x10] sm:$0xff]
      %v2230 = vld [vmem:[%s2226 + $0x18] sm:$0xff]
      %v2231 = vld [vmem:[%s2226 + $0x20] sm:$0xff]
      %v2232 = vld [vmem:[%s2226 + $0x28] sm:$0xff]
      %v2233 = vld [vmem:[%s2226 + $0x30] sm:$0xff]
      %v2234 = vld [vmem:[%s2226 + $0x38] sm:$0xff]
      %v2235 = vld [vmem:[%s2226 + $0x40] sm:$0xff]
      %v2236 = vld [vmem:[%s2226 + $0x48] sm:$0xff]
      %v2237 = vld [vmem:[%s2226 + $0x50] sm:$0xff]
      %v2238 = vld [vmem:[%s2226 + $0x58] sm:$0xff]
      %v2239 = vld [vmem:[%s2226 + $0x60] sm:$0xff]
      %v2240 = vld [vmem:[%s2226 + $0x68] sm:$0xff]
      %v2241 = vld [vmem:[%s2226 + $0x70] sm:$0xff]
      %v2242 = vld [vmem:[%s2226 + $0x78] sm:$0xff]
      %2243 = vmatprep.subr.mxu0 0.0
      %2244 = vmatpush1.msra.mxu0 %v2242
      %2245 = vmatprep.subr.mxu0 0.0
      %2246 = vmatpush1.msra.mxu0 %v2241
      %2247 = vmatprep.subr.mxu0 0.0
      %2248 = vmatpush1.msra.mxu0 %v2240
      %2249 = vmatprep.subr.mxu0 0.0
      %2250 = vmatpush1.msra.mxu0 %v2239
      %2251 = vmatprep.subr.mxu0 0.0
      %2252 = vmatpush1.msra.mxu0 %v2238
      %2253 = vmatprep.subr.mxu0 0.0
      %2254 = vmatpush1.msra.mxu0 %v2237
      %2255 = vmatprep.subr.mxu0 0.0
      %2256 = vmatpush1.msra.mxu0 %v2236
      %2257 = vmatprep.subr.mxu0 0.0
      %2258 = vmatpush1.msra.mxu0 %v2235
      %2259 = vmatprep.subr.mxu0 0.0
      %2260 = vmatpush1.msra.mxu0 %v2234
      %2261 = vmatprep.subr.mxu0 0.0
      %2262 = vmatpush1.msra.mxu0 %v2233
      %2263 = vmatprep.subr.mxu0 0.0
      %2264 = vmatpush1.msra.mxu0 %v2232
      %2265 = vmatprep.subr.mxu0 0.0
      %2266 = vmatpush1.msra.mxu0 %v2231
      %2267 = vmatprep.subr.mxu0 0.0
      %2268 = vmatpush1.msra.mxu0 %v2230
      %2269 = vmatprep.subr.mxu0 0.0
      %2270 = vmatpush1.msra.mxu0 %v2229
      %2271 = vmatprep.subr.mxu0 0.0
      %2272 = vmatpush1.msra.mxu0 %v2228
      %2273 = vmatprep.subr.mxu0 0.0
      %2274 = vmatpush1.msra.mxu0 %v2227
      %2275 = vmatprep.subr.mxu0 0.0
      %2276 = vmatpush2.msra.mxu0 0.0
      %2277 = vmatprep.subr.mxu0 0.0
      %2278 = vmatpush2.msra.mxu0 0.0
      %2279 = vmatprep.subr.mxu0 0.0
      %2280 = vmatpush2.msra.mxu0 0.0
      %2281 = vmatprep.subr.mxu0 0.0
      %2282 = vmatpush2.msra.mxu0 0.0
      %2283 = vmatprep.subr.mxu0 0.0
      %2284 = vmatpush2.msra.mxu0 0.0
      %2285 = vmatprep.subr.mxu0 0.0
      %2286 = vmatpush2.msra.mxu0 0.0
      %2287 = vmatprep.subr.mxu0 0.0
      %2288 = vmatpush2.msra.mxu0 0.0
      %2289 = vmatprep.subr.mxu0 0.0
      %2290 = vmatpush2.msra.mxu0 0.0
      %2291 = vmatprep.subr.mxu0 0.0
      %2292 = vmatpush2.msra.mxu0 0.0
      %2293 = vmatprep.subr.mxu0 0.0
      %2294 = vmatpush2.msra.mxu0 0.0
      %2295 = vmatprep.subr.mxu0 0.0
      %2296 = vmatpush2.msra.mxu0 0.0
      %2297 = vmatprep.subr.mxu0 0.0
      %2298 = vmatpush2.msra.mxu0 0.0
      %2299 = vmatprep.subr.mxu0 0.0
      %2300 = vmatpush2.msra.mxu0 0.0
      %2301 = vmatprep.subr.mxu0 0.0
      %2302 = vmatpush2.msra.mxu0 0.0
      %2303 = vmatprep.subr.mxu0 0.0
      %2304 = vmatpush2.msra.mxu0 0.0
      %2305 = vmatprep.subr.mxu0 0.0
      %2306 = vmatpush2.msra.mxu0 0.0
      %2307 = vmatprep.mubr.f32.mxu0 0.0
      %2308 = vmatmul.mubr.f32.gmra.mxu0 %v2190
      %v2309 = vpop.f32.mrf.mxu0
      %v2310 = vadd.f32 0.0, %v2309
      %v2311 = vpop.f32.mrf.mxu0
      %2312 = vmatprep.mubr.f32.mxu0 0.0
      %2313 = vmatmul.mubr.f32.gmra.mxu0 %v2191
      %v2314 = vpop.f32.mrf.mxu0
      %v2315 = vadd.f32 0.0, %v2314
      %v2316 = vpop.f32.mrf.mxu0
      %2317 = vmatprep.mubr.f32.mxu0 0.0
      %2318 = vmatmul.mubr.f32.gmra.mxu0 %v2192
      %v2319 = vpop.f32.mrf.mxu0
      %v2320 = vadd.f32 0.0, %v2319
      %v2321 = vpop.f32.mrf.mxu0
      %2322 = vmatprep.mubr.f32.mxu0 0.0
      %2323 = vmatmul.mubr.f32.gmra.mxu0 %v2193
      %v2324 = vpop.f32.mrf.mxu0
      %v2325 = vadd.f32 0.0, %v2324
      %v2326 = vpop.f32.mrf.mxu0
      %2327 = vmatprep.mubr.f32.mxu0 0.0
      %2328 = vmatmul.mubr.f32.gmra.mxu0 %v2194
      %v2329 = vpop.f32.mrf.mxu0
      %v2330 = vadd.f32 0.0, %v2329
      %v2331 = vpop.f32.mrf.mxu0
      %2332 = vmatprep.mubr.f32.mxu0 0.0
      %2333 = vmatmul.mubr.f32.gmra.mxu0 %v2195
      %v2334 = vpop.f32.mrf.mxu0
      %v2335 = vadd.f32 0.0, %v2334
      %v2336 = vpop.f32.mrf.mxu0
      %2337 = vmatprep.mubr.f32.mxu0 0.0
      %2338 = vmatmul.mubr.f32.gmra.mxu0 %v2196
      %v2339 = vpop.f32.mrf.mxu0
      %v2340 = vadd.f32 0.0, %v2339
      %v2341 = vpop.f32.mrf.mxu0
      %2342 = vmatprep.mubr.f32.mxu0 0.0
      %2343 = vmatmul.mubr.f32.gmra.mxu0 %v2197
      %v2344 = vpop.f32.mrf.mxu0
      %v2345 = vadd.f32 0.0, %v2344
      %v2346 = vpop.f32.mrf.mxu0
      %2347 = vmatprep.mubr.f32.mxu0 0.0
      %2348 = vmatmul.mubr.f32.gmra.mxu0 %v2198
      %v2349 = vpop.f32.mrf.mxu0
      %v2350 = vadd.f32 0.0, %v2349
      %v2351 = vpop.f32.mrf.mxu0
      %2352 = vmatprep.mubr.f32.mxu0 0.0
      %2353 = vmatmul.mubr.f32.gmra.mxu0 %v2199
      %v2354 = vpop.f32.mrf.mxu0
      %v2355 = vadd.f32 0.0, %v2354
      %v2356 = vpop.f32.mrf.mxu0
      %2357 = vmatprep.mubr.f32.mxu0 0.0
      %2358 = vmatmul.mubr.f32.gmra.mxu0 %v2200
      %v2359 = vpop.f32.mrf.mxu0
      %v2360 = vadd.f32 0.0, %v2359
      %v2361 = vpop.f32.mrf.mxu0
      %2362 = vmatprep.mubr.f32.mxu0 0.0
      %2363 = vmatmul.mubr.f32.gmra.mxu0 %v2201
      %v2364 = vpop.f32.mrf.mxu0
      %v2365 = vadd.f32 0.0, %v2364
      %v2366 = vpop.f32.mrf.mxu0
      %2367 = vmatprep.mubr.f32.mxu0 0.0
      %2368 = vmatmul.mubr.f32.gmra.mxu0 %v2202
      %v2369 = vpop.f32.mrf.mxu0
      %v2370 = vadd.f32 0.0, %v2369
      %v2371 = vpop.f32.mrf.mxu0
      %2372 = vmatprep.mubr.f32.mxu0 0.0
      %2373 = vmatmul.mubr.f32.gmra.mxu0 %v2203
      %v2374 = vpop.f32.mrf.mxu0
      %v2375 = vadd.f32 0.0, %v2374
      %v2376 = vpop.f32.mrf.mxu0
      %2377 = vmatprep.mubr.f32.mxu0 0.0
      %2378 = vmatmul.mubr.f32.gmra.mxu0 %v2204
      %v2379 = vpop.f32.mrf.mxu0
      %v2380 = vadd.f32 0.0, %v2379
      %v2381 = vpop.f32.mrf.mxu0
      %2382 = vmatprep.mubr.f32.mxu0 0.0
      %2383 = vmatmul.mubr.f32.gmra.mxu0 %v2205
      %v2384 = vpop.f32.mrf.mxu0
      %v2385 = vadd.f32 0.0, %v2384
      %v2386 = vpop.f32.mrf.mxu0
      %2387 = vmatprep.mubr.f32.mxu0 0.0
      %2388 = vmatmul.mubr.f32.gmra.mxu0 %v2206
      %v2389 = vpop.f32.mrf.mxu0
      %v2390 = vadd.f32 0.0, %v2389
      %v2391 = vpop.f32.mrf.mxu0
      %2392 = vmatprep.mubr.f32.mxu0 0.0
      %2393 = vmatmul.mubr.f32.gmra.mxu0 %v2207
      %v2394 = vpop.f32.mrf.mxu0
      %v2395 = vadd.f32 0.0, %v2394
      %v2396 = vpop.f32.mrf.mxu0
      %2397 = vmatprep.mubr.f32.mxu0 0.0
      %2398 = vmatmul.mubr.f32.gmra.mxu0 %v2208
      %v2399 = vpop.f32.mrf.mxu0
      %v2400 = vadd.f32 0.0, %v2399
      %v2401 = vpop.f32.mrf.mxu0
      %2402 = vmatprep.mubr.f32.mxu0 0.0
      %2403 = vmatmul.mubr.f32.gmra.mxu0 %v2209
      %v2404 = vpop.f32.mrf.mxu0
      %v2405 = vadd.f32 0.0, %v2404
      %v2406 = vpop.f32.mrf.mxu0
      %2407 = vmatprep.mubr.f32.mxu0 0.0
      %2408 = vmatmul.mubr.f32.gmra.mxu0 %v2210
      %v2409 = vpop.f32.mrf.mxu0
      %v2410 = vadd.f32 0.0, %v2409
      %v2411 = vpop.f32.mrf.mxu0
      %2412 = vmatprep.mubr.f32.mxu0 0.0
      %2413 = vmatmul.mubr.f32.gmra.mxu0 %v2211
      %v2414 = vpop.f32.mrf.mxu0
      %v2415 = vadd.f32 0.0, %v2414
      %v2416 = vpop.f32.mrf.mxu0
      %2417 = vmatprep.mubr.f32.mxu0 0.0
      %2418 = vmatmul.mubr.f32.gmra.mxu0 %v2212
      %v2419 = vpop.f32.mrf.mxu0
      %v2420 = vadd.f32 0.0, %v2419
      %v2421 = vpop.f32.mrf.mxu0
      %2422 = vmatprep.mubr.f32.mxu0 0.0
      %2423 = vmatmul.mubr.f32.gmra.mxu0 %v2213
      %v2424 = vpop.f32.mrf.mxu0
      %v2425 = vadd.f32 0.0, %v2424
      %v2426 = vpop.f32.mrf.mxu0
      %2427 = vmatprep.mubr.f32.mxu0 0.0
      %2428 = vmatmul.mubr.f32.gmra.mxu0 %v2214
      %v2429 = vpop.f32.mrf.mxu0
      %v2430 = vadd.f32 0.0, %v2429
      %v2431 = vpop.f32.mrf.mxu0
      %2432 = vmatprep.mubr.f32.mxu0 0.0
      %2433 = vmatmul.mubr.f32.gmra.mxu0 %v2215
      %v2434 = vpop.f32.mrf.mxu0
      %v2435 = vadd.f32 0.0, %v2434
      %v2436 = vpop.f32.mrf.mxu0
      %2437 = vmatprep.mubr.f32.mxu0 0.0
      %2438 = vmatmul.mubr.f32.gmra.mxu0 %v2216
      %v2439 = vpop.f32.mrf.mxu0
      %v2440 = vadd.f32 0.0, %v2439
      %v2441 = vpop.f32.mrf.mxu0
      %2442 = vmatprep.mubr.f32.mxu0 0.0
      %2443 = vmatmul.mubr.f32.gmra.mxu0 %v2217
      %v2444 = vpop.f32.mrf.mxu0
      %v2445 = vadd.f32 0.0, %v2444
      %v2446 = vpop.f32.mrf.mxu0
      %2447 = vmatprep.mubr.f32.mxu0 0.0
      %2448 = vmatmul.mubr.f32.gmra.mxu0 %v2218
      %v2449 = vpop.f32.mrf.mxu0
      %v2450 = vadd.f32 0.0, %v2449
      %v2451 = vpop.f32.mrf.mxu0
      %2452 = vmatprep.mubr.f32.mxu0 0.0
      %2453 = vmatmul.mubr.f32.gmra.mxu0 %v2219
      %v2454 = vpop.f32.mrf.mxu0
      %v2455 = vadd.f32 0.0, %v2454
      %v2456 = vpop.f32.mrf.mxu0
      %2457 = vmatprep.mubr.f32.mxu0 0.0
      %2458 = vmatmul.mubr.f32.gmra.mxu0 %v2220
      %v2459 = vpop.f32.mrf.mxu0
      %v2460 = vadd.f32 0.0, %v2459
      %v2461 = vpop.f32.mrf.mxu0
      %2462 = vmatprep.mubr.f32.mxu0 0.0
      %2463 = vmatmul.mubr.f32.gmra.mxu0 %v2221
      %v2464 = vpop.f32.mrf.mxu0
      %v2465 = vadd.f32 0.0, %v2464
      %v2466 = vpop.f32.mrf.mxu0
      %2467 = vmatprep.mubr.f32.mxu0 0.0
      %2468 = vmatmul.mubr.f32.gmra.mxu0 %v2222
      %v2469 = vpop.f32.mrf.mxu0
      %v2470 = vadd.f32 0.0, %v2469
      %v2471 = vpop.f32.mrf.mxu0
      %2472 = vmatprep.mubr.f32.mxu0 0.0
      %2473 = vmatmul.mubr.f32.gmra.mxu0 %v2223
      %v2474 = vpop.f32.mrf.mxu0
      %v2475 = vadd.f32 0.0, %v2474
      %v2476 = vpop.f32.mrf.mxu0
      %2477 = vmatprep.mubr.f32.mxu0 0.0
      %2478 = vmatmul.mubr.f32.gmra.mxu0 %v2224
      %v2479 = vpop.f32.mrf.mxu0
      %v2480 = vadd.f32 0.0, %v2479
      %v2481 = vpop.f32.mrf.mxu0
      %2482 = vmatprep.mubr.f32.mxu0 0.0
      %2483 = vmatmul.mubr.f32.gmra.mxu0 %v2225
      %v2484 = vpop.f32.mrf.mxu0
      %v2485 = vadd.f32 0.0, %v2484
      %v2486 = vpop.f32.mrf.mxu0
      %2487 = vdwg.mxu0
      %v2488 = vadd.f32 %v2154, %v2310
      %v2489 = vadd.f32 %v2155, %v2315
      %v2490 = vadd.f32 %v2156, %v2320
      %v2491 = vadd.f32 %v2157, %v2325
      %v2492 = vadd.f32 %v2158, %v2330
      %v2493 = vadd.f32 %v2159, %v2335
      %v2494 = vadd.f32 %v2160, %v2340
      %v2495 = vadd.f32 %v2161, %v2345
      %v2496 = vadd.f32 %v2162, %v2350
      %v2497 = vadd.f32 %v2163, %v2355
      %v2498 = vadd.f32 %v2164, %v2360
      %v2499 = vadd.f32 %v2165, %v2365
      %v2500 = vadd.f32 %v2166, %v2370
      %v2501 = vadd.f32 %v2167, %v2375
      %v2502 = vadd.f32 %v2168, %v2380
      %v2503 = vadd.f32 %v2169, %v2385
      %v2504 = vadd.f32 %v2170, %v2390
      %v2505 = vadd.f32 %v2171, %v2395
      %v2506 = vadd.f32 %v2172, %v2400
      %v2507 = vadd.f32 %v2173, %v2405
      %v2508 = vadd.f32 %v2174, %v2410
      %v2509 = vadd.f32 %v2175, %v2415
      %v2510 = vadd.f32 %v2176, %v2420
      %v2511 = vadd.f32 %v2177, %v2425
      %v2512 = vadd.f32 %v2178, %v2430
      %v2513 = vadd.f32 %v2179, %v2435
      %v2514 = vadd.f32 %v2180, %v2440
      %v2515 = vadd.f32 %v2181, %v2445
      %v2516 = vadd.f32 %v2182, %v2450
      %v2517 = vadd.f32 %v2183, %v2455
      %v2518 = vadd.f32 %v2184, %v2460
      %v2519 = vadd.f32 %v2185, %v2465
      %v2520 = vadd.f32 %v2186, %v2470
      %v2521 = vadd.f32 %v2187, %v2475
      %v2522 = vadd.f32 %v2188, %v2480
      %v2523 = vadd.f32 %v2189, %v2485
      %v2524 = vld [vmem:[%s209 + $0x25] sm:$0xff]
      %v2525 = vld [vmem:[%s209 + $0x2d] sm:$0xff]
      %v2526 = vld [vmem:[%s209 + $0x35] sm:$0xff]
      %v2527 = vld [vmem:[%s209 + $0x3d] sm:$0xff]
      %v2528 = vld [vmem:[%s209 + $0x45] sm:$0xff]
      %v2529 = vld [vmem:[%s209 + $0x4d] sm:$0xff]
      %v2530 = vld [vmem:[%s209 + $0x55] sm:$0xff]
      %v2531 = vld [vmem:[%s209 + $0x5d] sm:$0xff]
      %v2532 = vld [vmem:[%s209 + $0x65] sm:$0xff]
      %v2533 = vld [vmem:[%s209 + $0x6d] sm:$0xff]
      %v2534 = vld [vmem:[%s209 + $0x75] sm:$0xff]
      %v2535 = vld [vmem:[%s209 + $0x7d] sm:$0xff]
      %v2536 = vld [vmem:[%s209 + $0x85] sm:$0xff]
      %v2537 = vld [vmem:[%s209 + $0x8d] sm:$0xff]
      %v2538 = vld [vmem:[%s209 + $0x95] sm:$0xff]
      %v2539 = vld [vmem:[%s209 + $0x9d] sm:$0xff]
      %v2540 = vld [vmem:[%s209 + $0xa5] sm:$0xff]
      %v2541 = vld [vmem:[%s209 + $0xad] sm:$0xff]
      %v2542 = vld [vmem:[%s209 + $0xb5] sm:$0xff]
      %v2543 = vld [vmem:[%s209 + $0xbd] sm:$0xff]
      %v2544 = vld [vmem:[%s209 + $0xc5] sm:$0xff]
      %v2545 = vld [vmem:[%s209 + $0xcd] sm:$0xff]
      %v2546 = vld [vmem:[%s209 + $0xd5] sm:$0xff]
      %v2547 = vld [vmem:[%s209 + $0xdd] sm:$0xff]
      %v2548 = vld [vmem:[%s209 + $0xe5] sm:$0xff]
      %v2549 = vld [vmem:[%s209 + $0xed] sm:$0xff]
      %v2550 = vld [vmem:[%s209 + $0xf5] sm:$0xff]
      %v2551 = vld [vmem:[%s209 + $0xfd] sm:$0xff]
      %v2552 = vld [vmem:[%s209 + $0x105] sm:$0xff]
      %v2553 = vld [vmem:[%s209 + $0x10d] sm:$0xff]
      %v2554 = vld [vmem:[%s209 + $0x115] sm:$0xff]
      %v2555 = vld [vmem:[%s209 + $0x11d] sm:$0xff]
      %v2556 = vld [vmem:[%s209 + $0x125] sm:$0xff]
      %v2557 = vld [vmem:[%s209 + $0x12d] sm:$0xff]
      %v2558 = vld [vmem:[%s209 + $0x135] sm:$0xff]
      %v2559 = vld [vmem:[%s209 + $0x13d] sm:$0xff]
      %s2560 = scalar_lea.vmem %s1, 896
      %v2561 = vld [vmem:[%s2560] sm:$0xff]
      %v2562 = vld [vmem:[%s2560 + $0x8] sm:$0xff]
      %v2563 = vld [vmem:[%s2560 + $0x10] sm:$0xff]
      %v2564 = vld [vmem:[%s2560 + $0x18] sm:$0xff]
      %v2565 = vld [vmem:[%s2560 + $0x20] sm:$0xff]
      %v2566 = vld [vmem:[%s2560 + $0x28] sm:$0xff]
      %v2567 = vld [vmem:[%s2560 + $0x30] sm:$0xff]
      %v2568 = vld [vmem:[%s2560 + $0x38] sm:$0xff]
      %v2569 = vld [vmem:[%s2560 + $0x40] sm:$0xff]
      %v2570 = vld [vmem:[%s2560 + $0x48] sm:$0xff]
      %v2571 = vld [vmem:[%s2560 + $0x50] sm:$0xff]
      %v2572 = vld [vmem:[%s2560 + $0x58] sm:$0xff]
      %v2573 = vld [vmem:[%s2560 + $0x60] sm:$0xff]
      %v2574 = vld [vmem:[%s2560 + $0x68] sm:$0xff]
      %v2575 = vld [vmem:[%s2560 + $0x70] sm:$0xff]
      %v2576 = vld [vmem:[%s2560 + $0x78] sm:$0xff]
      %2577 = vmatprep.subr.mxu0 0.0
      %2578 = vmatpush1.msra.mxu0 %v2576
      %2579 = vmatprep.subr.mxu0 0.0
      %2580 = vmatpush1.msra.mxu0 %v2575
      %2581 = vmatprep.subr.mxu0 0.0
      %2582 = vmatpush1.msra.mxu0 %v2574
      %2583 = vmatprep.subr.mxu0 0.0
      %2584 = vmatpush1.msra.mxu0 %v2573
      %2585 = vmatprep.subr.mxu0 0.0
      %2586 = vmatpush1.msra.mxu0 %v2572
      %2587 = vmatprep.subr.mxu0 0.0
      %2588 = vmatpush1.msra.mxu0 %v2571
      %2589 = vmatprep.subr.mxu0 0.0
      %2590 = vmatpush1.msra.mxu0 %v2570
      %2591 = vmatprep.subr.mxu0 0.0
      %2592 = vmatpush1.msra.mxu0 %v2569
      %2593 = vmatprep.subr.mxu0 0.0
      %2594 = vmatpush1.msra.mxu0 %v2568
      %2595 = vmatprep.subr.mxu0 0.0
      %2596 = vmatpush1.msra.mxu0 %v2567
      %2597 = vmatprep.subr.mxu0 0.0
      %2598 = vmatpush1.msra.mxu0 %v2566
      %2599 = vmatprep.subr.mxu0 0.0
      %2600 = vmatpush1.msra.mxu0 %v2565
      %2601 = vmatprep.subr.mxu0 0.0
      %2602 = vmatpush1.msra.mxu0 %v2564
      %2603 = vmatprep.subr.mxu0 0.0
      %2604 = vmatpush1.msra.mxu0 %v2563
      %2605 = vmatprep.subr.mxu0 0.0
      %2606 = vmatpush1.msra.mxu0 %v2562
      %2607 = vmatprep.subr.mxu0 0.0
      %2608 = vmatpush1.msra.mxu0 %v2561
      %2609 = vmatprep.subr.mxu0 0.0
      %2610 = vmatpush2.msra.mxu0 0.0
      %2611 = vmatprep.subr.mxu0 0.0
      %2612 = vmatpush2.msra.mxu0 0.0
      %2613 = vmatprep.subr.mxu0 0.0
      %2614 = vmatpush2.msra.mxu0 0.0
      %2615 = vmatprep.subr.mxu0 0.0
      %2616 = vmatpush2.msra.mxu0 0.0
      %2617 = vmatprep.subr.mxu0 0.0
      %2618 = vmatpush2.msra.mxu0 0.0
      %2619 = vmatprep.subr.mxu0 0.0
      %2620 = vmatpush2.msra.mxu0 0.0
      %2621 = vmatprep.subr.mxu0 0.0
      %2622 = vmatpush2.msra.mxu0 0.0
      %2623 = vmatprep.subr.mxu0 0.0
      %2624 = vmatpush2.msra.mxu0 0.0
      %2625 = vmatprep.subr.mxu0 0.0
      %2626 = vmatpush2.msra.mxu0 0.0
      %2627 = vmatprep.subr.mxu0 0.0
      %2628 = vmatpush2.msra.mxu0 0.0
      %2629 = vmatprep.subr.mxu0 0.0
      %2630 = vmatpush2.msra.mxu0 0.0
      %2631 = vmatprep.subr.mxu0 0.0
      %2632 = vmatpush2.msra.mxu0 0.0
      %2633 = vmatprep.subr.mxu0 0.0
      %2634 = vmatpush2.msra.mxu0 0.0
      %2635 = vmatprep.subr.mxu0 0.0
      %2636 = vmatpush2.msra.mxu0 0.0
      %2637 = vmatprep.subr.mxu0 0.0
      %2638 = vmatpush2.msra.mxu0 0.0
      %2639 = vmatprep.subr.mxu0 0.0
      %2640 = vmatpush2.msra.mxu0 0.0
      %2641 = vmatprep.mubr.f32.mxu0 0.0
      %2642 = vmatmul.mubr.f32.gmra.mxu0 %v2524
      %v2643 = vpop.f32.mrf.mxu0
      %v2644 = vadd.f32 0.0, %v2643
      %v2645 = vpop.f32.mrf.mxu0
      %2646 = vmatprep.mubr.f32.mxu0 0.0
      %2647 = vmatmul.mubr.f32.gmra.mxu0 %v2525
      %v2648 = vpop.f32.mrf.mxu0
      %v2649 = vadd.f32 0.0, %v2648
      %v2650 = vpop.f32.mrf.mxu0
      %2651 = vmatprep.mubr.f32.mxu0 0.0
      %2652 = vmatmul.mubr.f32.gmra.mxu0 %v2526
      %v2653 = vpop.f32.mrf.mxu0
      %v2654 = vadd.f32 0.0, %v2653
      %v2655 = vpop.f32.mrf.mxu0
      %2656 = vmatprep.mubr.f32.mxu0 0.0
      %2657 = vmatmul.mubr.f32.gmra.mxu0 %v2527
      %v2658 = vpop.f32.mrf.mxu0
      %v2659 = vadd.f32 0.0, %v2658
      %v2660 = vpop.f32.mrf.mxu0
      %2661 = vmatprep.mubr.f32.mxu0 0.0
      %2662 = vmatmul.mubr.f32.gmra.mxu0 %v2528
      %v2663 = vpop.f32.mrf.mxu0
      %v2664 = vadd.f32 0.0, %v2663
      %v2665 = vpop.f32.mrf.mxu0
      %2666 = vmatprep.mubr.f32.mxu0 0.0
      %2667 = vmatmul.mubr.f32.gmra.mxu0 %v2529
      %v2668 = vpop.f32.mrf.mxu0
      %v2669 = vadd.f32 0.0, %v2668
      %v2670 = vpop.f32.mrf.mxu0
      %2671 = vmatprep.mubr.f32.mxu0 0.0
      %2672 = vmatmul.mubr.f32.gmra.mxu0 %v2530
      %v2673 = vpop.f32.mrf.mxu0
      %v2674 = vadd.f32 0.0, %v2673
      %v2675 = vpop.f32.mrf.mxu0
      %2676 = vmatprep.mubr.f32.mxu0 0.0
      %2677 = vmatmul.mubr.f32.gmra.mxu0 %v2531
      %v2678 = vpop.f32.mrf.mxu0
      %v2679 = vadd.f32 0.0, %v2678
      %v2680 = vpop.f32.mrf.mxu0
      %2681 = vmatprep.mubr.f32.mxu0 0.0
      %2682 = vmatmul.mubr.f32.gmra.mxu0 %v2532
      %v2683 = vpop.f32.mrf.mxu0
      %v2684 = vadd.f32 0.0, %v2683
      %v2685 = vpop.f32.mrf.mxu0
      %2686 = vmatprep.mubr.f32.mxu0 0.0
      %2687 = vmatmul.mubr.f32.gmra.mxu0 %v2533
      %v2688 = vpop.f32.mrf.mxu0
      %v2689 = vadd.f32 0.0, %v2688
      %v2690 = vpop.f32.mrf.mxu0
      %2691 = vmatprep.mubr.f32.mxu0 0.0
      %2692 = vmatmul.mubr.f32.gmra.mxu0 %v2534
      %v2693 = vpop.f32.mrf.mxu0
      %v2694 = vadd.f32 0.0, %v2693
      %v2695 = vpop.f32.mrf.mxu0
      %2696 = vmatprep.mubr.f32.mxu0 0.0
      %2697 = vmatmul.mubr.f32.gmra.mxu0 %v2535
      %v2698 = vpop.f32.mrf.mxu0
      %v2699 = vadd.f32 0.0, %v2698
      %v2700 = vpop.f32.mrf.mxu0
      %2701 = vmatprep.mubr.f32.mxu0 0.0
      %2702 = vmatmul.mubr.f32.gmra.mxu0 %v2536
      %v2703 = vpop.f32.mrf.mxu0
      %v2704 = vadd.f32 0.0, %v2703
      %v2705 = vpop.f32.mrf.mxu0
      %2706 = vmatprep.mubr.f32.mxu0 0.0
      %2707 = vmatmul.mubr.f32.gmra.mxu0 %v2537
      %v2708 = vpop.f32.mrf.mxu0
      %v2709 = vadd.f32 0.0, %v2708
      %v2710 = vpop.f32.mrf.mxu0
      %2711 = vmatprep.mubr.f32.mxu0 0.0
      %2712 = vmatmul.mubr.f32.gmra.mxu0 %v2538
      %v2713 = vpop.f32.mrf.mxu0
      %v2714 = vadd.f32 0.0, %v2713
      %v2715 = vpop.f32.mrf.mxu0
      %2716 = vmatprep.mubr.f32.mxu0 0.0
      %2717 = vmatmul.mubr.f32.gmra.mxu0 %v2539
      %v2718 = vpop.f32.mrf.mxu0
      %v2719 = vadd.f32 0.0, %v2718
      %v2720 = vpop.f32.mrf.mxu0
      %2721 = vmatprep.mubr.f32.mxu0 0.0
      %2722 = vmatmul.mubr.f32.gmra.mxu0 %v2540
      %v2723 = vpop.f32.mrf.mxu0
      %v2724 = vadd.f32 0.0, %v2723
      %v2725 = vpop.f32.mrf.mxu0
      %2726 = vmatprep.mubr.f32.mxu0 0.0
      %2727 = vmatmul.mubr.f32.gmra.mxu0 %v2541
      %v2728 = vpop.f32.mrf.mxu0
      %v2729 = vadd.f32 0.0, %v2728
      %v2730 = vpop.f32.mrf.mxu0
      %2731 = vmatprep.mubr.f32.mxu0 0.0
      %2732 = vmatmul.mubr.f32.gmra.mxu0 %v2542
      %v2733 = vpop.f32.mrf.mxu0
      %v2734 = vadd.f32 0.0, %v2733
      %v2735 = vpop.f32.mrf.mxu0
      %2736 = vmatprep.mubr.f32.mxu0 0.0
      %2737 = vmatmul.mubr.f32.gmra.mxu0 %v2543
      %v2738 = vpop.f32.mrf.mxu0
      %v2739 = vadd.f32 0.0, %v2738
      %v2740 = vpop.f32.mrf.mxu0
      %2741 = vmatprep.mubr.f32.mxu0 0.0
      %2742 = vmatmul.mubr.f32.gmra.mxu0 %v2544
      %v2743 = vpop.f32.mrf.mxu0
      %v2744 = vadd.f32 0.0, %v2743
      %v2745 = vpop.f32.mrf.mxu0
      %2746 = vmatprep.mubr.f32.mxu0 0.0
      %2747 = vmatmul.mubr.f32.gmra.mxu0 %v2545
      %v2748 = vpop.f32.mrf.mxu0
      %v2749 = vadd.f32 0.0, %v2748
      %v2750 = vpop.f32.mrf.mxu0
      %2751 = vmatprep.mubr.f32.mxu0 0.0
      %2752 = vmatmul.mubr.f32.gmra.mxu0 %v2546
      %v2753 = vpop.f32.mrf.mxu0
      %v2754 = vadd.f32 0.0, %v2753
      %v2755 = vpop.f32.mrf.mxu0
      %2756 = vmatprep.mubr.f32.mxu0 0.0
      %2757 = vmatmul.mubr.f32.gmra.mxu0 %v2547
      %v2758 = vpop.f32.mrf.mxu0
      %v2759 = vadd.f32 0.0, %v2758
      %v2760 = vpop.f32.mrf.mxu0
      %2761 = vmatprep.mubr.f32.mxu0 0.0
      %2762 = vmatmul.mubr.f32.gmra.mxu0 %v2548
      %v2763 = vpop.f32.mrf.mxu0
      %v2764 = vadd.f32 0.0, %v2763
      %v2765 = vpop.f32.mrf.mxu0
      %2766 = vmatprep.mubr.f32.mxu0 0.0
      %2767 = vmatmul.mubr.f32.gmra.mxu0 %v2549
      %v2768 = vpop.f32.mrf.mxu0
      %v2769 = vadd.f32 0.0, %v2768
      %v2770 = vpop.f32.mrf.mxu0
      %2771 = vmatprep.mubr.f32.mxu0 0.0
      %2772 = vmatmul.mubr.f32.gmra.mxu0 %v2550
      %v2773 = vpop.f32.mrf.mxu0
      %v2774 = vadd.f32 0.0, %v2773
      %v2775 = vpop.f32.mrf.mxu0
      %2776 = vmatprep.mubr.f32.mxu0 0.0
      %2777 = vmatmul.mubr.f32.gmra.mxu0 %v2551
      %v2778 = vpop.f32.mrf.mxu0
      %v2779 = vadd.f32 0.0, %v2778
      %v2780 = vpop.f32.mrf.mxu0
      %2781 = vmatprep.mubr.f32.mxu0 0.0
      %2782 = vmatmul.mubr.f32.gmra.mxu0 %v2552
      %v2783 = vpop.f32.mrf.mxu0
      %v2784 = vadd.f32 0.0, %v2783
      %v2785 = vpop.f32.mrf.mxu0
      %2786 = vmatprep.mubr.f32.mxu0 0.0
      %2787 = vmatmul.mubr.f32.gmra.mxu0 %v2553
      %v2788 = vpop.f32.mrf.mxu0
      %v2789 = vadd.f32 0.0, %v2788
      %v2790 = vpop.f32.mrf.mxu0
      %2791 = vmatprep.mubr.f32.mxu0 0.0
      %2792 = vmatmul.mubr.f32.gmra.mxu0 %v2554
      %v2793 = vpop.f32.mrf.mxu0
      %v2794 = vadd.f32 0.0, %v2793
      %v2795 = vpop.f32.mrf.mxu0
      %2796 = vmatprep.mubr.f32.mxu0 0.0
      %2797 = vmatmul.mubr.f32.gmra.mxu0 %v2555
      %v2798 = vpop.f32.mrf.mxu0
      %v2799 = vadd.f32 0.0, %v2798
      %v2800 = vpop.f32.mrf.mxu0
      %2801 = vmatprep.mubr.f32.mxu0 0.0
      %2802 = vmatmul.mubr.f32.gmra.mxu0 %v2556
      %v2803 = vpop.f32.mrf.mxu0
      %v2804 = vadd.f32 0.0, %v2803
      %v2805 = vpop.f32.mrf.mxu0
      %2806 = vmatprep.mubr.f32.mxu0 0.0
      %2807 = vmatmul.mubr.f32.gmra.mxu0 %v2557
      %v2808 = vpop.f32.mrf.mxu0
      %v2809 = vadd.f32 0.0, %v2808
      %v2810 = vpop.f32.mrf.mxu0
      %2811 = vmatprep.mubr.f32.mxu0 0.0
      %2812 = vmatmul.mubr.f32.gmra.mxu0 %v2558
      %v2813 = vpop.f32.mrf.mxu0
      %v2814 = vadd.f32 0.0, %v2813
      %v2815 = vpop.f32.mrf.mxu0
      %2816 = vmatprep.mubr.f32.mxu0 0.0
      %2817 = vmatmul.mubr.f32.gmra.mxu0 %v2559
      %v2818 = vpop.f32.mrf.mxu0
      %v2819 = vadd.f32 0.0, %v2818
      %v2820 = vpop.f32.mrf.mxu0
      %2821 = vdwg.mxu0
      %v2822 = vadd.f32 %v2488, %v2644
      %v2823 = vadd.f32 %v2489, %v2649
      %v2824 = vadd.f32 %v2490, %v2654
      %v2825 = vadd.f32 %v2491, %v2659
      %v2826 = vadd.f32 %v2492, %v2664
      %v2827 = vadd.f32 %v2493, %v2669
      %v2828 = vadd.f32 %v2494, %v2674
      %v2829 = vadd.f32 %v2495, %v2679
      %v2830 = vadd.f32 %v2496, %v2684
      %v2831 = vadd.f32 %v2497, %v2689
      %v2832 = vadd.f32 %v2498, %v2694
      %v2833 = vadd.f32 %v2499, %v2699
      %v2834 = vadd.f32 %v2500, %v2704
      %v2835 = vadd.f32 %v2501, %v2709
      %v2836 = vadd.f32 %v2502, %v2714
      %v2837 = vadd.f32 %v2503, %v2719
      %v2838 = vadd.f32 %v2504, %v2724
      %v2839 = vadd.f32 %v2505, %v2729
      %v2840 = vadd.f32 %v2506, %v2734
      %v2841 = vadd.f32 %v2507, %v2739
      %v2842 = vadd.f32 %v2508, %v2744
      %v2843 = vadd.f32 %v2509, %v2749
      %v2844 = vadd.f32 %v2510, %v2754
      %v2845 = vadd.f32 %v2511, %v2759
      %v2846 = vadd.f32 %v2512, %v2764
      %v2847 = vadd.f32 %v2513, %v2769
      %v2848 = vadd.f32 %v2514, %v2774
      %v2849 = vadd.f32 %v2515, %v2779
      %v2850 = vadd.f32 %v2516, %v2784
      %v2851 = vadd.f32 %v2517, %v2789
      %v2852 = vadd.f32 %v2518, %v2794
      %v2853 = vadd.f32 %v2519, %v2799
      %v2854 = vadd.f32 %v2520, %v2804
      %v2855 = vadd.f32 %v2521, %v2809
      %v2856 = vadd.f32 %v2522, %v2814
      %v2857 = vadd.f32 %v2523, %v2819
      %v2858 = vld [vmem:[%s209 + $0x26] sm:$0xff]
      %v2859 = vld [vmem:[%s209 + $0x2e] sm:$0xff]
      %v2860 = vld [vmem:[%s209 + $0x36] sm:$0xff]
      %v2861 = vld [vmem:[%s209 + $0x3e] sm:$0xff]
      %v2862 = vld [vmem:[%s209 + $0x46] sm:$0xff]
      %v2863 = vld [vmem:[%s209 + $0x4e] sm:$0xff]
      %v2864 = vld [vmem:[%s209 + $0x56] sm:$0xff]
      %v2865 = vld [vmem:[%s209 + $0x5e] sm:$0xff]
      %v2866 = vld [vmem:[%s209 + $0x66] sm:$0xff]
      %v2867 = vld [vmem:[%s209 + $0x6e] sm:$0xff]
      %v2868 = vld [vmem:[%s209 + $0x76] sm:$0xff]
      %v2869 = vld [vmem:[%s209 + $0x7e] sm:$0xff]
      %v2870 = vld [vmem:[%s209 + $0x86] sm:$0xff]
      %v2871 = vld [vmem:[%s209 + $0x8e] sm:$0xff]
      %v2872 = vld [vmem:[%s209 + $0x96] sm:$0xff]
      %v2873 = vld [vmem:[%s209 + $0x9e] sm:$0xff]
      %v2874 = vld [vmem:[%s209 + $0xa6] sm:$0xff]
      %v2875 = vld [vmem:[%s209 + $0xae] sm:$0xff]
      %v2876 = vld [vmem:[%s209 + $0xb6] sm:$0xff]
      %v2877 = vld [vmem:[%s209 + $0xbe] sm:$0xff]
      %v2878 = vld [vmem:[%s209 + $0xc6] sm:$0xff]
      %v2879 = vld [vmem:[%s209 + $0xce] sm:$0xff]
      %v2880 = vld [vmem:[%s209 + $0xd6] sm:$0xff]
      %v2881 = vld [vmem:[%s209 + $0xde] sm:$0xff]
      %v2882 = vld [vmem:[%s209 + $0xe6] sm:$0xff]
      %v2883 = vld [vmem:[%s209 + $0xee] sm:$0xff]
      %v2884 = vld [vmem:[%s209 + $0xf6] sm:$0xff]
      %v2885 = vld [vmem:[%s209 + $0xfe] sm:$0xff]
      %v2886 = vld [vmem:[%s209 + $0x106] sm:$0xff]
      %v2887 = vld [vmem:[%s209 + $0x10e] sm:$0xff]
      %v2888 = vld [vmem:[%s209 + $0x116] sm:$0xff]
      %v2889 = vld [vmem:[%s209 + $0x11e] sm:$0xff]
      %v2890 = vld [vmem:[%s209 + $0x126] sm:$0xff]
      %v2891 = vld [vmem:[%s209 + $0x12e] sm:$0xff]
      %v2892 = vld [vmem:[%s209 + $0x136] sm:$0xff]
      %v2893 = vld [vmem:[%s209 + $0x13e] sm:$0xff]
      %s2894 = scalar_lea.vmem %s1, 1024
      %v2895 = vld [vmem:[%s2894] sm:$0xff]
      %v2896 = vld [vmem:[%s2894 + $0x8] sm:$0xff]
      %v2897 = vld [vmem:[%s2894 + $0x10] sm:$0xff]
      %v2898 = vld [vmem:[%s2894 + $0x18] sm:$0xff]
      %v2899 = vld [vmem:[%s2894 + $0x20] sm:$0xff]
      %v2900 = vld [vmem:[%s2894 + $0x28] sm:$0xff]
      %v2901 = vld [vmem:[%s2894 + $0x30] sm:$0xff]
      %v2902 = vld [vmem:[%s2894 + $0x38] sm:$0xff]
      %v2903 = vld [vmem:[%s2894 + $0x40] sm:$0xff]
      %v2904 = vld [vmem:[%s2894 + $0x48] sm:$0xff]
      %v2905 = vld [vmem:[%s2894 + $0x50] sm:$0xff]
      %v2906 = vld [vmem:[%s2894 + $0x58] sm:$0xff]
      %v2907 = vld [vmem:[%s2894 + $0x60] sm:$0xff]
      %v2908 = vld [vmem:[%s2894 + $0x68] sm:$0xff]
      %v2909 = vld [vmem:[%s2894 + $0x70] sm:$0xff]
      %v2910 = vld [vmem:[%s2894 + $0x78] sm:$0xff]
      %2911 = vmatprep.subr.mxu0 0.0
      %2912 = vmatpush1.msra.mxu0 %v2910
      %2913 = vmatprep.subr.mxu0 0.0
      %2914 = vmatpush1.msra.mxu0 %v2909
      %2915 = vmatprep.subr.mxu0 0.0
      %2916 = vmatpush1.msra.mxu0 %v2908
      %2917 = vmatprep.subr.mxu0 0.0
      %2918 = vmatpush1.msra.mxu0 %v2907
      %2919 = vmatprep.subr.mxu0 0.0
      %2920 = vmatpush1.msra.mxu0 %v2906
      %2921 = vmatprep.subr.mxu0 0.0
      %2922 = vmatpush1.msra.mxu0 %v2905
      %2923 = vmatprep.subr.mxu0 0.0
      %2924 = vmatpush1.msra.mxu0 %v2904
      %2925 = vmatprep.subr.mxu0 0.0
      %2926 = vmatpush1.msra.mxu0 %v2903
      %2927 = vmatprep.subr.mxu0 0.0
      %2928 = vmatpush1.msra.mxu0 %v2902
      %2929 = vmatprep.subr.mxu0 0.0
      %2930 = vmatpush1.msra.mxu0 %v2901
      %2931 = vmatprep.subr.mxu0 0.0
      %2932 = vmatpush1.msra.mxu0 %v2900
      %2933 = vmatprep.subr.mxu0 0.0
      %2934 = vmatpush1.msra.mxu0 %v2899
      %2935 = vmatprep.subr.mxu0 0.0
      %2936 = vmatpush1.msra.mxu0 %v2898
      %2937 = vmatprep.subr.mxu0 0.0
      %2938 = vmatpush1.msra.mxu0 %v2897
      %2939 = vmatprep.subr.mxu0 0.0
      %2940 = vmatpush1.msra.mxu0 %v2896
      %2941 = vmatprep.subr.mxu0 0.0
      %2942 = vmatpush1.msra.mxu0 %v2895
      %2943 = vmatprep.subr.mxu0 0.0
      %2944 = vmatpush2.msra.mxu0 0.0
      %2945 = vmatprep.subr.mxu0 0.0
      %2946 = vmatpush2.msra.mxu0 0.0
      %2947 = vmatprep.subr.mxu0 0.0
      %2948 = vmatpush2.msra.mxu0 0.0
      %2949 = vmatprep.subr.mxu0 0.0
      %2950 = vmatpush2.msra.mxu0 0.0
      %2951 = vmatprep.subr.mxu0 0.0
      %2952 = vmatpush2.msra.mxu0 0.0
      %2953 = vmatprep.subr.mxu0 0.0
      %2954 = vmatpush2.msra.mxu0 0.0
      %2955 = vmatprep.subr.mxu0 0.0
      %2956 = vmatpush2.msra.mxu0 0.0
      %2957 = vmatprep.subr.mxu0 0.0
      %2958 = vmatpush2.msra.mxu0 0.0
      %2959 = vmatprep.subr.mxu0 0.0
      %2960 = vmatpush2.msra.mxu0 0.0
      %2961 = vmatprep.subr.mxu0 0.0
      %2962 = vmatpush2.msra.mxu0 0.0
      %2963 = vmatprep.subr.mxu0 0.0
      %2964 = vmatpush2.msra.mxu0 0.0
      %2965 = vmatprep.subr.mxu0 0.0
      %2966 = vmatpush2.msra.mxu0 0.0
      %2967 = vmatprep.subr.mxu0 0.0
      %2968 = vmatpush2.msra.mxu0 0.0
      %2969 = vmatprep.subr.mxu0 0.0
      %2970 = vmatpush2.msra.mxu0 0.0
      %2971 = vmatprep.subr.mxu0 0.0
      %2972 = vmatpush2.msra.mxu0 0.0
      %2973 = vmatprep.subr.mxu0 0.0
      %2974 = vmatpush2.msra.mxu0 0.0
      %2975 = vmatprep.mubr.f32.mxu0 0.0
      %2976 = vmatmul.mubr.f32.gmra.mxu0 %v2858
      %v2977 = vpop.f32.mrf.mxu0
      %v2978 = vadd.f32 0.0, %v2977
      %v2979 = vpop.f32.mrf.mxu0
      %2980 = vmatprep.mubr.f32.mxu0 0.0
      %2981 = vmatmul.mubr.f32.gmra.mxu0 %v2859
      %v2982 = vpop.f32.mrf.mxu0
      %v2983 = vadd.f32 0.0, %v2982
      %v2984 = vpop.f32.mrf.mxu0
      %2985 = vmatprep.mubr.f32.mxu0 0.0
      %2986 = vmatmul.mubr.f32.gmra.mxu0 %v2860
      %v2987 = vpop.f32.mrf.mxu0
      %v2988 = vadd.f32 0.0, %v2987
      %v2989 = vpop.f32.mrf.mxu0
      %2990 = vmatprep.mubr.f32.mxu0 0.0
      %2991 = vmatmul.mubr.f32.gmra.mxu0 %v2861
      %v2992 = vpop.f32.mrf.mxu0
      %v2993 = vadd.f32 0.0, %v2992
      %v2994 = vpop.f32.mrf.mxu0
      %2995 = vmatprep.mubr.f32.mxu0 0.0
      %2996 = vmatmul.mubr.f32.gmra.mxu0 %v2862
      %v2997 = vpop.f32.mrf.mxu0
      %v2998 = vadd.f32 0.0, %v2997
      %v2999 = vpop.f32.mrf.mxu0
      %3000 = vmatprep.mubr.f32.mxu0 0.0
      %3001 = vmatmul.mubr.f32.gmra.mxu0 %v2863
      %v3002 = vpop.f32.mrf.mxu0
      %v3003 = vadd.f32 0.0, %v3002
      %v3004 = vpop.f32.mrf.mxu0
      %3005 = vmatprep.mubr.f32.mxu0 0.0
      %3006 = vmatmul.mubr.f32.gmra.mxu0 %v2864
      %v3007 = vpop.f32.mrf.mxu0
      %v3008 = vadd.f32 0.0, %v3007
      %v3009 = vpop.f32.mrf.mxu0
      %3010 = vmatprep.mubr.f32.mxu0 0.0
      %3011 = vmatmul.mubr.f32.gmra.mxu0 %v2865
      %v3012 = vpop.f32.mrf.mxu0
      %v3013 = vadd.f32 0.0, %v3012
      %v3014 = vpop.f32.mrf.mxu0
      %3015 = vmatprep.mubr.f32.mxu0 0.0
      %3016 = vmatmul.mubr.f32.gmra.mxu0 %v2866
      %v3017 = vpop.f32.mrf.mxu0
      %v3018 = vadd.f32 0.0, %v3017
      %v3019 = vpop.f32.mrf.mxu0
      %3020 = vmatprep.mubr.f32.mxu0 0.0
      %3021 = vmatmul.mubr.f32.gmra.mxu0 %v2867
      %v3022 = vpop.f32.mrf.mxu0
      %v3023 = vadd.f32 0.0, %v3022
      %v3024 = vpop.f32.mrf.mxu0
      %3025 = vmatprep.mubr.f32.mxu0 0.0
      %3026 = vmatmul.mubr.f32.gmra.mxu0 %v2868
      %v3027 = vpop.f32.mrf.mxu0
      %v3028 = vadd.f32 0.0, %v3027
      %v3029 = vpop.f32.mrf.mxu0
      %3030 = vmatprep.mubr.f32.mxu0 0.0
      %3031 = vmatmul.mubr.f32.gmra.mxu0 %v2869
      %v3032 = vpop.f32.mrf.mxu0
      %v3033 = vadd.f32 0.0, %v3032
      %v3034 = vpop.f32.mrf.mxu0
      %3035 = vmatprep.mubr.f32.mxu0 0.0
      %3036 = vmatmul.mubr.f32.gmra.mxu0 %v2870
      %v3037 = vpop.f32.mrf.mxu0
      %v3038 = vadd.f32 0.0, %v3037
      %v3039 = vpop.f32.mrf.mxu0
      %3040 = vmatprep.mubr.f32.mxu0 0.0
      %3041 = vmatmul.mubr.f32.gmra.mxu0 %v2871
      %v3042 = vpop.f32.mrf.mxu0
      %v3043 = vadd.f32 0.0, %v3042
      %v3044 = vpop.f32.mrf.mxu0
      %3045 = vmatprep.mubr.f32.mxu0 0.0
      %3046 = vmatmul.mubr.f32.gmra.mxu0 %v2872
      %v3047 = vpop.f32.mrf.mxu0
      %v3048 = vadd.f32 0.0, %v3047
      %v3049 = vpop.f32.mrf.mxu0
      %3050 = vmatprep.mubr.f32.mxu0 0.0
      %3051 = vmatmul.mubr.f32.gmra.mxu0 %v2873
      %v3052 = vpop.f32.mrf.mxu0
      %v3053 = vadd.f32 0.0, %v3052
      %v3054 = vpop.f32.mrf.mxu0
      %3055 = vmatprep.mubr.f32.mxu0 0.0
      %3056 = vmatmul.mubr.f32.gmra.mxu0 %v2874
      %v3057 = vpop.f32.mrf.mxu0
      %v3058 = vadd.f32 0.0, %v3057
      %v3059 = vpop.f32.mrf.mxu0
      %3060 = vmatprep.mubr.f32.mxu0 0.0
      %3061 = vmatmul.mubr.f32.gmra.mxu0 %v2875
      %v3062 = vpop.f32.mrf.mxu0
      %v3063 = vadd.f32 0.0, %v3062
      %v3064 = vpop.f32.mrf.mxu0
      %3065 = vmatprep.mubr.f32.mxu0 0.0
      %3066 = vmatmul.mubr.f32.gmra.mxu0 %v2876
      %v3067 = vpop.f32.mrf.mxu0
      %v3068 = vadd.f32 0.0, %v3067
      %v3069 = vpop.f32.mrf.mxu0
      %3070 = vmatprep.mubr.f32.mxu0 0.0
      %3071 = vmatmul.mubr.f32.gmra.mxu0 %v2877
      %v3072 = vpop.f32.mrf.mxu0
      %v3073 = vadd.f32 0.0, %v3072
      %v3074 = vpop.f32.mrf.mxu0
      %3075 = vmatprep.mubr.f32.mxu0 0.0
      %3076 = vmatmul.mubr.f32.gmra.mxu0 %v2878
      %v3077 = vpop.f32.mrf.mxu0
      %v3078 = vadd.f32 0.0, %v3077
      %v3079 = vpop.f32.mrf.mxu0
      %3080 = vmatprep.mubr.f32.mxu0 0.0
      %3081 = vmatmul.mubr.f32.gmra.mxu0 %v2879
      %v3082 = vpop.f32.mrf.mxu0
      %v3083 = vadd.f32 0.0, %v3082
      %v3084 = vpop.f32.mrf.mxu0
      %3085 = vmatprep.mubr.f32.mxu0 0.0
      %3086 = vmatmul.mubr.f32.gmra.mxu0 %v2880
      %v3087 = vpop.f32.mrf.mxu0
      %v3088 = vadd.f32 0.0, %v3087
      %v3089 = vpop.f32.mrf.mxu0
      %3090 = vmatprep.mubr.f32.mxu0 0.0
      %3091 = vmatmul.mubr.f32.gmra.mxu0 %v2881
      %v3092 = vpop.f32.mrf.mxu0
      %v3093 = vadd.f32 0.0, %v3092
      %v3094 = vpop.f32.mrf.mxu0
      %3095 = vmatprep.mubr.f32.mxu0 0.0
      %3096 = vmatmul.mubr.f32.gmra.mxu0 %v2882
      %v3097 = vpop.f32.mrf.mxu0
      %v3098 = vadd.f32 0.0, %v3097
      %v3099 = vpop.f32.mrf.mxu0
      %3100 = vmatprep.mubr.f32.mxu0 0.0
      %3101 = vmatmul.mubr.f32.gmra.mxu0 %v2883
      %v3102 = vpop.f32.mrf.mxu0
      %v3103 = vadd.f32 0.0, %v3102
      %v3104 = vpop.f32.mrf.mxu0
      %3105 = vmatprep.mubr.f32.mxu0 0.0
      %3106 = vmatmul.mubr.f32.gmra.mxu0 %v2884
      %v3107 = vpop.f32.mrf.mxu0
      %v3108 = vadd.f32 0.0, %v3107
      %v3109 = vpop.f32.mrf.mxu0
      %3110 = vmatprep.mubr.f32.mxu0 0.0
      %3111 = vmatmul.mubr.f32.gmra.mxu0 %v2885
      %v3112 = vpop.f32.mrf.mxu0
      %v3113 = vadd.f32 0.0, %v3112
      %v3114 = vpop.f32.mrf.mxu0
      %3115 = vmatprep.mubr.f32.mxu0 0.0
      %3116 = vmatmul.mubr.f32.gmra.mxu0 %v2886
      %v3117 = vpop.f32.mrf.mxu0
      %v3118 = vadd.f32 0.0, %v3117
      %v3119 = vpop.f32.mrf.mxu0
      %3120 = vmatprep.mubr.f32.mxu0 0.0
      %3121 = vmatmul.mubr.f32.gmra.mxu0 %v2887
      %v3122 = vpop.f32.mrf.mxu0
      %v3123 = vadd.f32 0.0, %v3122
      %v3124 = vpop.f32.mrf.mxu0
      %3125 = vmatprep.mubr.f32.mxu0 0.0
      %3126 = vmatmul.mubr.f32.gmra.mxu0 %v2888
      %v3127 = vpop.f32.mrf.mxu0
      %v3128 = vadd.f32 0.0, %v3127
      %v3129 = vpop.f32.mrf.mxu0
      %3130 = vmatprep.mubr.f32.mxu0 0.0
      %3131 = vmatmul.mubr.f32.gmra.mxu0 %v2889
      %v3132 = vpop.f32.mrf.mxu0
      %v3133 = vadd.f32 0.0, %v3132
      %v3134 = vpop.f32.mrf.mxu0
      %3135 = vmatprep.mubr.f32.mxu0 0.0
      %3136 = vmatmul.mubr.f32.gmra.mxu0 %v2890
      %v3137 = vpop.f32.mrf.mxu0
      %v3138 = vadd.f32 0.0, %v3137
      %v3139 = vpop.f32.mrf.mxu0
      %3140 = vmatprep.mubr.f32.mxu0 0.0
      %3141 = vmatmul.mubr.f32.gmra.mxu0 %v2891
      %v3142 = vpop.f32.mrf.mxu0
      %v3143 = vadd.f32 0.0, %v3142
      %v3144 = vpop.f32.mrf.mxu0
      %3145 = vmatprep.mubr.f32.mxu0 0.0
      %3146 = vmatmul.mubr.f32.gmra.mxu0 %v2892
      %v3147 = vpop.f32.mrf.mxu0
      %v3148 = vadd.f32 0.0, %v3147
      %v3149 = vpop.f32.mrf.mxu0
      %3150 = vmatprep.mubr.f32.mxu0 0.0
      %3151 = vmatmul.mubr.f32.gmra.mxu0 %v2893
      %v3152 = vpop.f32.mrf.mxu0
      %v3153 = vadd.f32 0.0, %v3152
      %v3154 = vpop.f32.mrf.mxu0
      %3155 = vdwg.mxu0
      %v3156 = vadd.f32 %v2822, %v2978
      %v3157 = vadd.f32 %v2823, %v2983
      %v3158 = vadd.f32 %v2824, %v2988
      %v3159 = vadd.f32 %v2825, %v2993
      %v3160 = vadd.f32 %v2826, %v2998
      %v3161 = vadd.f32 %v2827, %v3003
      %v3162 = vadd.f32 %v2828, %v3008
      %v3163 = vadd.f32 %v2829, %v3013
      %v3164 = vadd.f32 %v2830, %v3018
      %v3165 = vadd.f32 %v2831, %v3023
      %v3166 = vadd.f32 %v2832, %v3028
      %v3167 = vadd.f32 %v2833, %v3033
      %v3168 = vadd.f32 %v2834, %v3038
      %v3169 = vadd.f32 %v2835, %v3043
      %v3170 = vadd.f32 %v2836, %v3048
      %v3171 = vadd.f32 %v2837, %v3053
      %v3172 = vadd.f32 %v2838, %v3058
      %v3173 = vadd.f32 %v2839, %v3063
      %v3174 = vadd.f32 %v2840, %v3068
      %v3175 = vadd.f32 %v2841, %v3073
      %v3176 = vadd.f32 %v2842, %v3078
      %v3177 = vadd.f32 %v2843, %v3083
      %v3178 = vadd.f32 %v2844, %v3088
      %v3179 = vadd.f32 %v2845, %v3093
      %v3180 = vadd.f32 %v2846, %v3098
      %v3181 = vadd.f32 %v2847, %v3103
      %v3182 = vadd.f32 %v2848, %v3108
      %v3183 = vadd.f32 %v2849, %v3113
      %v3184 = vadd.f32 %v2850, %v3118
      %v3185 = vadd.f32 %v2851, %v3123
      %v3186 = vadd.f32 %v2852, %v3128
      %v3187 = vadd.f32 %v2853, %v3133
      %v3188 = vadd.f32 %v2854, %v3138
      %v3189 = vadd.f32 %v2855, %v3143
      %v3190 = vadd.f32 %v2856, %v3148
      %v3191 = vadd.f32 %v2857, %v3153
      %v3192 = vld [vmem:[%s2] sm:$0x1]
      %v3194 = vlaneseq
      %v3195 = vshrl.u32 %v3194, 7
      %v3196 = vsub.s32 0, %v3195
      %v3197 = vrot.slane %v3192, %v3196
      %v3199 = vadd.f32 %v3156, %v3197
      %v3200 = vadd.f32 %v3157, %v3197
      %v3201 = vadd.f32 %v3158, %v3197
      %v3202 = vadd.f32 %v3159, %v3197
      %v3203 = vadd.f32 %v3160, %v3197
      %v3204 = vadd.f32 %v3161, %v3197
      %v3205 = vadd.f32 %v3162, %v3197
      %v3206 = vadd.f32 %v3163, %v3197
      %v3207 = vadd.f32 %v3164, %v3197
      %v3208 = vadd.f32 %v3165, %v3197
      %v3209 = vadd.f32 %v3166, %v3197
      %v3210 = vadd.f32 %v3167, %v3197
      %v3211 = vadd.f32 %v3168, %v3197
      %v3212 = vadd.f32 %v3169, %v3197
      %v3213 = vadd.f32 %v3170, %v3197
      %v3214 = vadd.f32 %v3171, %v3197
      %v3215 = vadd.f32 %v3172, %v3197
      %v3216 = vadd.f32 %v3173, %v3197
      %v3217 = vadd.f32 %v3174, %v3197
      %v3218 = vadd.f32 %v3175, %v3197
      %v3219 = vadd.f32 %v3176, %v3197
      %v3220 = vadd.f32 %v3177, %v3197
      %v3221 = vadd.f32 %v3178, %v3197
      %v3222 = vadd.f32 %v3179, %v3197
      %v3223 = vadd.f32 %v3180, %v3197
      %v3224 = vadd.f32 %v3181, %v3197
      %v3225 = vadd.f32 %v3182, %v3197
      %v3226 = vadd.f32 %v3183, %v3197
      %v3227 = vadd.f32 %v3184, %v3197
      %v3228 = vadd.f32 %v3185, %v3197
      %v3229 = vadd.f32 %v3186, %v3197
      %v3230 = vadd.f32 %v3187, %v3197
      %v3231 = vadd.f32 %v3188, %v3197
      %v3232 = vadd.f32 %v3189, %v3197
      %v3233 = vadd.f32 %v3190, %v3197
      %v3234 = vadd.f32 %v3191, %v3197
      %v3235 = vadd.f32 %v3199, %v223
      %v3236 = vadd.f32 %v3200, %v224
      %v3237 = vadd.f32 %v3201, %v225
      %v3238 = vadd.f32 %v3202, %v226
      %v3239 = vadd.f32 %v3203, %v227
      %v3240 = vadd.f32 %v3204, %v228
      %v3241 = vadd.f32 %v3205, %v229
      %v3242 = vadd.f32 %v3206, %v230
      %v3243 = vadd.f32 %v3207, %v231
      %v3244 = vadd.f32 %v3208, %v232
      %v3245 = vadd.f32 %v3209, %v233
      %v3246 = vadd.f32 %v3210, %v234
      %v3247 = vadd.f32 %v3211, %v235
      %v3248 = vadd.f32 %v3212, %v236
      %v3249 = vadd.f32 %v3213, %v237
      %v3250 = vadd.f32 %v3214, %v238
      %v3251 = vadd.f32 %v3215, %v239
      %v3252 = vadd.f32 %v3216, %v240
      %v3253 = vadd.f32 %v3217, %v241
      %v3254 = vadd.f32 %v3218, %v242
      %v3255 = vadd.f32 %v3219, %v243
      %v3256 = vadd.f32 %v3220, %v244
      %v3257 = vadd.f32 %v3221, %v245
      %v3258 = vadd.f32 %v3222, %v246
      %v3259 = vadd.f32 %v3223, %v247
      %v3260 = vadd.f32 %v3224, %v248
      %v3261 = vadd.f32 %v3225, %v249
      %v3262 = vadd.f32 %v3226, %v250
      %v3263 = vadd.f32 %v3227, %v251
      %v3264 = vadd.f32 %v3228, %v252
      %v3265 = vadd.f32 %v3229, %v253
      %v3266 = vadd.f32 %v3230, %v254
      %v3267 = vadd.f32 %v3231, %v255
      %v3268 = vadd.f32 %v3232, %v256
      %v3269 = vadd.f32 %v3233, %v257
      %v3270 = vadd.f32 %v3234, %v258
      %v3271 = vmax.f32 %v3235, 0.0
      %v3272 = vmax.f32 %v3236, 0.0
      %v3273 = vmax.f32 %v3237, 0.0
      %v3274 = vmax.f32 %v3238, 0.0
      %v3275 = vmax.f32 %v3239, 0.0
      %v3276 = vmax.f32 %v3240, 0.0
      %v3277 = vmax.f32 %v3241, 0.0
      %v3278 = vmax.f32 %v3242, 0.0
      %v3279 = vmax.f32 %v3243, 0.0
      %v3280 = vmax.f32 %v3244, 0.0
      %v3281 = vmax.f32 %v3245, 0.0
      %v3282 = vmax.f32 %v3246, 0.0
      %v3283 = vmax.f32 %v3247, 0.0
      %v3284 = vmax.f32 %v3248, 0.0
      %v3285 = vmax.f32 %v3249, 0.0
      %v3286 = vmax.f32 %v3250, 0.0
      %v3287 = vmax.f32 %v3251, 0.0
      %v3288 = vmax.f32 %v3252, 0.0
      %v3289 = vmax.f32 %v3253, 0.0
      %v3290 = vmax.f32 %v3254, 0.0
      %v3291 = vmax.f32 %v3255, 0.0
      %v3292 = vmax.f32 %v3256, 0.0
      %v3293 = vmax.f32 %v3257, 0.0
      %v3294 = vmax.f32 %v3258, 0.0
      %v3295 = vmax.f32 %v3259, 0.0
      %v3296 = vmax.f32 %v3260, 0.0
      %v3297 = vmax.f32 %v3261, 0.0
      %v3298 = vmax.f32 %v3262, 0.0
      %v3299 = vmax.f32 %v3263, 0.0
      %v3300 = vmax.f32 %v3264, 0.0
      %v3301 = vmax.f32 %v3265, 0.0
      %v3302 = vmax.f32 %v3266, 0.0
      %v3303 = vmax.f32 %v3267, 0.0
      %v3304 = vmax.f32 %v3268, 0.0
      %v3305 = vmax.f32 %v3269, 0.0
      %v3306 = vmax.f32 %v3270, 0.0
      %3307 = vst [vmem:[%s221] sm:$0xff] %v3271
      %3308 = vst [vmem:[%s221 + $0x8] sm:$0xff] %v3272
      %3309 = vst [vmem:[%s221 + $0x10] sm:$0xff] %v3273
      %3310 = vst [vmem:[%s221 + $0x18] sm:$0xff] %v3274
      %3311 = vst [vmem:[%s221 + $0x20] sm:$0xff] %v3275
      %3312 = vst [vmem:[%s221 + $0x28] sm:$0xff] %v3276
      %3313 = vst [vmem:[%s221 + $0x30] sm:$0xff] %v3277
      %3314 = vst [vmem:[%s221 + $0x38] sm:$0xff] %v3278
      %3315 = vst [vmem:[%s221 + $0x40] sm:$0xff] %v3279
      %3316 = vst [vmem:[%s221 + $0x48] sm:$0xff] %v3280
      %3317 = vst [vmem:[%s221 + $0x50] sm:$0xff] %v3281
      %3318 = vst [vmem:[%s221 + $0x58] sm:$0xff] %v3282
      %3319 = vst [vmem:[%s221 + $0x60] sm:$0xff] %v3283
      %3320 = vst [vmem:[%s221 + $0x68] sm:$0xff] %v3284
      %3321 = vst [vmem:[%s221 + $0x70] sm:$0xff] %v3285
      %3322 = vst [vmem:[%s221 + $0x78] sm:$0xff] %v3286
      %3323 = vst [vmem:[%s221 + $0x80] sm:$0xff] %v3287
      %3324 = vst [vmem:[%s221 + $0x88] sm:$0xff] %v3288
      %3325 = vst [vmem:[%s221 + $0x90] sm:$0xff] %v3289
      %3326 = vst [vmem:[%s221 + $0x98] sm:$0xff] %v3290
      %3327 = vst [vmem:[%s221 + $0xa0] sm:$0xff] %v3291
      %3328 = vst [vmem:[%s221 + $0xa8] sm:$0xff] %v3292
      %3329 = vst [vmem:[%s221 + $0xb0] sm:$0xff] %v3293
      %3330 = vst [vmem:[%s221 + $0xb8] sm:$0xff] %v3294
      %3331 = vst [vmem:[%s221 + $0xc0] sm:$0xff] %v3295
      %3332 = vst [vmem:[%s221 + $0xc8] sm:$0xff] %v3296
      %3333 = vst [vmem:[%s221 + $0xd0] sm:$0xff] %v3297
      %3334 = vst [vmem:[%s221 + $0xd8] sm:$0xff] %v3298
      %3335 = vst [vmem:[%s221 + $0xe0] sm:$0xff] %v3299
      %3336 = vst [vmem:[%s221 + $0xe8] sm:$0xff] %v3300
      %3337 = vst [vmem:[%s221 + $0xf0] sm:$0xff] %v3301
      %3338 = vst [vmem:[%s221 + $0xf8] sm:$0xff] %v3302
      %3339 = vst [vmem:[%s221 + $0x100] sm:$0xff] %v3303
      %3340 = vst [vmem:[%s221 + $0x108] sm:$0xff] %v3304
      %3341 = vst [vmem:[%s221 + $0x110] sm:$0xff] %v3305
      %3342 = vst [vmem:[%s221 + $0x118] sm:$0xff] %v3306
      %s3343 = smul.u32 36, %s15
      %p3344 = scmp.lt.s32.totalorder %s3343, 71
      %s3345 = scalar_select %p3344, %s3343, 71
      %s3346 = smul.addr %s3345, 8
      %s3347 = scalar_lea.vmem %s4, %s3346
      // Predicated region
      $region37: #{basic_block_forward.3} parent=35 // pred_check
        %p3348 = pneg %p127
      $region38: #{basic_block_forward.3} parent=35 // pred_check_branch
        %3350 = sbr.rel (%p3348) target = $region40
      $region39: #{basic_block_forward.3} parent=35 // pred_region
        %s3351 = smul.u32 36, %s15
      $region40: #{basic_block_forward.3} parent=35 // pred_fallthru
        _
    $region36: #{basic_block_forward.3} parent=5 // pred_fallthru
      _
    %p3352 = scmp.le.s32.totalorder 2, %s10
    // Predicated region
    $region41: #{basic_block_forward.3} parent=5 // pred_check
      %p3353 = pneg %p3352
    $region42: #{basic_block_forward.3} parent=5 // pred_check_branch
      %3355 = sbr.rel (%p3353) target = $region44
    $region43: #{basic_block_forward.3} parent=5 // pred_region
      %s3356 = ssub.s32 %s10, 2
      // Predicated region
      $region45: #{basic_block_forward.3} parent=43 // pred_check
        %p3357 = pneg %p133
      $region46: #{basic_block_forward.3} parent=43 // pred_check_branch
        %3359 = sbr.rel (%p3357) target = $region48
      $region47: #{basic_block_forward.3} parent=43 // pred_region
        %s3360 = smul.u32 36, %s16
        %p3361 = scmp.lt.s32.totalorder %s3360, 71
        %s3362 = scalar_select %p3361, %s3360, 71
        %s3363 = smul.addr %s3362, 8
        %s3364 = scalar_lea.vmem %s4, %s3363
      $region48: #{basic_block_forward.3} parent=43 // pred_fallthru
        _
    $region44: #{basic_block_forward.3} parent=5 // pred_fallthru
      _
  $region6: #{basic_block_forward.3} parent=0 // loop_footer
    %s14 = sadd.s32 1, %s10
  $region7: #{basic_block_forward.3} parent=0 // loop_footer_branch
    %9 = sbr.rel target = $region3
  $region8: #{basic_block_forward.3} parent=0 // loop_exit
    _

</llo_original>
